<compile_context>
chip_gen: v6e
topology: v6e:2x2x1
jax: 0.10.0
libtpu: 0.0.40
codegen_flags: <defaults>
</compile_context>

<pallas_src>
import functools

import jax
import jax.numpy as jnp
from jax.experimental import pallas as pl
from jax.experimental.pallas import tpu as pltpu


# ----------------------------- fused kernel -----------------------------

def _make_kernel(gb, n_drug, n_prot):
    bf16 = jnp.bfloat16
    f32 = jnp.float32

    def kernel(ad_ref, xd_ref, ap_ref, xp_ref,
               w1f_ref, b1f_ref, w1r_ref, b1r_ref, w2_ref, b2_ref,
               scale_ref, shift_ref, wxd_ref, bxd_ref,
               wg1_ref, bg1_ref, wg2_ref, bg2_ref, wl1_ref, bl1_ref,
               wfc1_ref, bfc1_ref, wfc2_ref, bfc2_ref, wout_ref, bout_ref,
               o_ref):
        # ---------------- drug branch: 5x (GINConv -> ReLU -> folded BN) ----------------
        a_d = ad_ref[0]                       # [gb*n_drug, gb*n_drug] bf16 block-diag 0/1
        h = xd_ref[0]                         # [gb*n_drug, 78] f32

        def gin(h, w1, b1, w2, b2, sc, sh):
            # GINConv(eps=0): nn((A+I) @ h); reassociated to (A+I) @ (h @ W1) so the
            # quadratic aggregation matmul is only dim(=32) wide.
            xw = jnp.dot(h.astype(bf16), w1, preferred_element_type=f32)
            agg = jnp.dot(a_d, xw.astype(bf16), preferred_element_type=f32) + xw
            t = jnp.maximum(agg + b1, 0.0)                                  # ReLU inside nn
            t = jnp.dot(t.astype(bf16), w2, preferred_element_type=f32) + b2
            t = jnp.maximum(t, 0.0)                                         # F.relu(conv(x))
            return t * sc + sh                                              # folded eval BatchNorm

        h = gin(h, w1f_ref[...], b1f_ref[...],
                w2_ref[0], b2_ref[0], scale_ref[0], shift_ref[0])
        for i in range(4):
            h = gin(h, w1r_ref[i], b1r_ref[i],
                    w2_ref[i + 1], b2_ref[i + 1], scale_ref[i + 1], shift_ref[i + 1])

        # global_add_pool per graph, then fc1_xd + ReLU.
        # TODO(synk): no node mask — assumes every graph really owns its n_drug rows
        # (zero-padded graphs would corrupt the pooled sums/maxes).
        hd = jnp.sum(h.reshape(gb, n_drug, h.shape[-1]), axis=1)            # [gb, 32]
        hd = jnp.dot(hd.astype(bf16), wxd_ref[...],
                     preferred_element_type=f32) + bxd_ref[...]
        hd = jnp.maximum(hd, 0.0)                                            # [gb, 128]

        # ---------------- protein branch: 2x (GCNConv -> ReLU) ----------------
        a_p = ap_ref[0]                       # [gb*n_prot, gb*n_prot] bf16 block-diag 0/1
        xp = xp_ref[0]                        # [gb*n_prot, 25] f32
        # Symmetric GCN normalisation of (A + I), folded into row scalings (no dense A_norm).
        deg = jnp.sum(a_p.astype(f32), axis=1, keepdims=True) + 1.0          # self loop
        dinv = jax.lax.rsqrt(deg)

        def gcn(hh, w, b):
            xw = jnp.dot(hh.astype(bf16), w, preferred_element_type=f32)
            z = dinv * xw
            agg = jnp.dot(a_p, z.astype(bf16), preferred_element_type=f32) + z   # (A+I) @ z
            return jnp.maximum(dinv * agg + b, 0.0)                          # bias + ReLU

        hp = gcn(xp, wg1_ref[...], bg1_ref[...])
        hp = gcn(hp, wg2_ref[...], bg2_ref[...])
        # global_max_pool per graph, then lin1 + ReLU.
        hp = jnp.max(hp.reshape(gb, n_prot, hp.shape[-1]), axis=1)           # [gb, 64]
        hp = jnp.dot(hp.astype(bf16), wl1_ref[...],
                     preferred_element_type=f32) + bl1_ref[...]
        hp = jnp.maximum(hp, 0.0)                                             # [gb, 128]

        # ---------------- head: concat + fc1 + fc2 + out (dropout = eval identity) ------------
        hc = jnp.concatenate([hd, hp], axis=1)                                # [gb, 256]
        y = jnp.dot(hc.astype(bf16), wfc1_ref[...],
                    preferred_element_type=f32) + bfc1_ref[...]               # K=256 single pass
        y = jnp.maximum(y, 0.0)
        y = jnp.dot(y.astype(bf16), wfc2_ref[...],
                    preferred_element_type=f32) + bfc2_ref[...]
        y = jnp.maximum(y, 0.0)
        y = jnp.dot(y.astype(bf16), wout_ref[...],
                    preferred_element_type=f32) + bout_ref[...]
        o_ref[...] = y.astype(o_ref.dtype)                                    # [gb, 1]

    return kernel


# ----------------------------- wrapper -----------------------------

_PARAM_ORDER = (
    "gin_w1_first", "gin_b1_first", "gin_w1_rest", "gin_b1_rest",
    "gin_w2", "gin_b2", "gin_scale", "gin_shift", "fc1_xd_w", "fc1_xd_b",
    "gcn1_w", "gcn1_b", "gcn2_w", "gcn2_b", "lin1_w", "lin1_b",
    "fc1_w", "fc1_b", "fc2_w", "fc2_b", "out_w", "out_b",
)


def _full_spec(a):
    """Full-array BlockSpec with a constant block index (weights stay VMEM-resident)."""
    return pl.BlockSpec(a.shape, lambda b, _nd=a.ndim: (0,) * _nd)


def _block_diag(adj, gb):
    """[G, n, n] per-graph 0/1 adjacency -> [G//gb, gb*n, gb*n] bf16 block-diagonal blocks."""
    g, n, _ = adj.shape
    nb = g // gb
    a = adj.astype(jnp.float32).reshape(nb, gb, n, n)
    eye = jnp.eye(gb, dtype=jnp.float32)
    bd = jnp.einsum("bgij,gh->bgihj", a, eye)          # zero off-diagonal graph blocks
    return bd.reshape(nb, gb * n, gb * n).astype(jnp.bfloat16)   # 0/1 exact in bf16


@functools.partial(jax.jit, static_argnames=("graphs_per_block",))
def gin_gcn_forward(params, x_drug, adj_drug, x_prot, adj_prot, graphs_per_block=16):
    """Fused GIN_GCNNet forward.

    x_*  : [G, n, F]  per-graph node features (equal-sized, contiguous graphs)
    adj_*: [G, n, n]  per-graph 0/1 adjacency (no self loops)
    Returns [G, 1] predictions (eval mode).
    """
    gb = graphs_per_block
    g, n_d, f_d = x_drug.shape
    _, n_p, f_p = x_prot.shape
    if g % gb:
        raise ValueError(f"num_graphs={g} must be divisible by graphs_per_block={gb}")
    nb = g // gb
    m_d, m_p = gb * n_d, gb * n_p                      # rows per block (target ~128-256)

    ad = _block_diag(adj_drug, gb)                     # [nb, m_d, m_d] bf16
    ap = _block_diag(adj_prot, gb)                     # [nb, m_p, m_p] bf16
    xd = x_drug.astype(jnp.float32).reshape(nb, m_d, f_d)
    xp = x_prot.astype(jnp.float32).reshape(nb, m_p, f_p)

    p_args = [params[k] for k in _PARAM_ORDER]
    out = pl.pallas_call(
        _make_kernel(gb, n_d, n_p),
        out_shape=jax.ShapeDtypeStruct((g, 1), jnp.float32),
        grid=(nb,),
        in_specs=[
            pl.BlockSpec((1, m_d, m_d), lambda b: (b, 0, 0)),
            pl.BlockSpec((1, m_d, f_d), lambda b: (b, 0, 0)),
            pl.BlockSpec((1, m_p, m_p), lambda b: (b, 0, 0)),
            pl.BlockSpec((1, m_p, f_p), lambda b: (b, 0, 0)),
        ] + [_full_spec(a) for a in p_args],
        out_specs=pl.BlockSpec((gb, 1), lambda b: (b, 0)),
        compiler_params=pltpu.CompilerParams(
            dimension_semantics=("parallel",),          # graph-block axis -> both v7x TCs
            vmem_limit_bytes=32 * 1024 * 1024,
        ),
    )(ad, xd, ap, xp, *p_args)
    return out


# ----------------------------- parameter init (PyTorch-Linear-like) -----------------------------

def _init_linear(key, fan_in, fan_out):
    kw, kb = jax.random.split(key)
    bound = 1.0 / float(fan_in) ** 0.5
    w = jax.random.uniform(kw, (fan_in, fan_out), jnp.float32, -bound, bound)
    b = jax.random.uniform(kb, (1, fan_out), jnp.float32, -bound, bound)
    return w, b


_WEIGHT_KEYS = frozenset({
    "gin_w1_first", "gin_w1_rest", "gin_w2", "fc1_xd_w",
    "gcn1_w", "gcn2_w", "lin1_w", "fc1_w", "fc2_w", "out_w",
})


def init_params(key):
    dim, output_dim = 32, 128
    num_features_xd, num_features_xt = 78, 25
    keys = jax.random.split(key, 12)

    w1s, b1s, w2s, b2s, scales, shifts = [], [], [], [], [], []
    in_dim = num_features_xd
    for i in range(5):
        k1, k2 = jax.random.split(keys[i])
        w1, b1 = _init_linear(k1, in_dim, dim)
        w2, b2 = _init_linear(k2, dim, dim)
        w1s.append(w1); b1s.append(b1); w2s.append(w2); b2s.append(b2)
        # BatchNorm1d eval (gamma=1, beta=0, mean=0, var=1) folded into scale/shift.
        gamma = jnp.ones((1, dim), jnp.float32)
        beta = jnp.zeros((1, dim), jnp.float32)
        mean = jnp.zeros((1, dim), jnp.float32)
        var = jnp.ones((1, dim), jnp.float32)
        scale = gamma * jax.lax.rsqrt(var + 1e-5)
        shift = beta - mean * scale
        scales.append(scale); shifts.append(shift)
        in_dim = dim

    fc1_xd_w, fc1_xd_b = _init_linear(keys[5], dim, output_dim)
    gcn1_w, gcn1_b = _init_linear(keys[6], num_features_xt, num_features_xt)
    gcn2_w, gcn2_b = _init_linear(keys[7], num_features_xt, 64)
    lin1_w, lin1_b = _init_linear(keys[8], 64, output_dim)
    fc1_w, fc1_b = _init_linear(keys[9], 256, 1024)
    fc2_w, fc2_b = _init_linear(keys[10], 1024, 256)
    out_w, out_b = _init_linear(keys[11], 256, 1)

    params = {
        "gin_w1_first": w1s[0], "gin_b1_first": b1s[0],
        "gin_w1_rest": jnp.stack(w1s[1:]), "gin_b1_rest": jnp.stack(b1s[1:]),
        "gin_w2": jnp.stack(w2s), "gin_b2": jnp.stack(b2s),
        "gin_scale": jnp.stack(scales), "gin_shift": jnp.stack(shifts),
        "fc1_xd_w": fc1_xd_w, "fc1_xd_b": fc1_xd_b,
        "gcn1_w": gcn1_w, "gcn1_b": gcn1_b,
        "gcn2_w": gcn2_w, "gcn2_b": gcn2_b,
        "lin1_w": lin1_w, "lin1_b": lin1_b,
        "fc1_w": fc1_w, "fc1_b": fc1_b,
        "fc2_w": fc2_w, "fc2_b": fc2_b,
        "out_w": out_w, "out_b": out_b,
    }
    # Pre-cast weight matrices to bf16 on the host; biases / BN scale & shift stay f32.
    return {k: (v.astype(jnp.bfloat16) if k in _WEIGHT_KEYS else v)
            for k, v in params.items()}


# ----------------------------- synthetic graph construction -----------------------------

def random_adj(key, num_graphs, nodes_per_graph):
    m = jax.random.bernoulli(
        key, 0.3, (num_graphs, nodes_per_graph, nodes_per_graph)).astype(jnp.float32)
    m = jnp.triu(m, 1)
    return m + jnp.swapaxes(m, -1, -2)        # symmetric, zero diagonal, 0/1 values


if __name__ == "__main__":
    key = jax.random.PRNGKey(0)
    k_par, k_xd, k_ad, k_xp, k_ap = jax.random.split(key, 5)

    num_graphs = 32            # 2 graph-blocks of 16 graphs -> even, parallel grid of length 2
    graphs_per_block = 16
    n_drug = 8                 # Gb * n = 128 rows per block -> full MXU sublane fill
    n_prot = 8

    params = init_params(k_par)

    x_drug = jax.random.normal(k_xd, (num_graphs, n_drug, 78), jnp.float32)
    adj_drug = random_adj(k_ad, num_graphs, n_drug)
    x_prot = jax.random.normal(k_xp, (num_graphs, n_prot, 25), jnp.float32)
    adj_prot = random_adj(k_ap, num_graphs, n_prot)

    out = gin_gcn_forward(params, x_drug, adj_drug, x_prot, adj_prot,
                          graphs_per_block=graphs_per_block)
    out = jax.block_until_ready(out)
    assert out.shape == (num_graphs, 1), out.shape
    print("KERNEL_OK")
</pallas_src>

<mosaic_0001>
module attributes {stable_mosaic.version = 11 : i64} {
  func.func @kernel(%arg0: i32, %arg1: memref<1x128x128xbf16, #tpu.memory_space<vmem>>, %arg2: memref<1x128x78xf32, #tpu.memory_space<vmem>>, %arg3: memref<1x128x128xbf16, #tpu.memory_space<vmem>>, %arg4: memref<1x128x25xf32, #tpu.memory_space<vmem>>, %arg5: memref<78x32xbf16, #tpu.memory_space<vmem>>, %arg6: memref<1x32xf32, #tpu.memory_space<vmem>>, %arg7: memref<4x32x32xbf16, #tpu.memory_space<vmem>>, %arg8: memref<4x1x32xf32, #tpu.memory_space<vmem>>, %arg9: memref<5x32x32xbf16, #tpu.memory_space<vmem>>, %arg10: memref<5x1x32xf32, #tpu.memory_space<vmem>>, %arg11: memref<5x1x32xf32, #tpu.memory_space<vmem>>, %arg12: memref<5x1x32xf32, #tpu.memory_space<vmem>>, %arg13: memref<32x128xbf16, #tpu.memory_space<vmem>>, %arg14: memref<1x128xf32, #tpu.memory_space<vmem>>, %arg15: memref<25x25xbf16, #tpu.memory_space<vmem>>, %arg16: memref<1x25xf32, #tpu.memory_space<vmem>>, %arg17: memref<25x64xbf16, #tpu.memory_space<vmem>>, %arg18: memref<1x64xf32, #tpu.memory_space<vmem>>, %arg19: memref<64x128xbf16, #tpu.memory_space<vmem>>, %arg20: memref<1x128xf32, #tpu.memory_space<vmem>>, %arg21: memref<256x1024xbf16, #tpu.memory_space<vmem>>, %arg22: memref<1x1024xf32, #tpu.memory_space<vmem>>, %arg23: memref<1024x256xbf16, #tpu.memory_space<vmem>>, %arg24: memref<1x256xf32, #tpu.memory_space<vmem>>, %arg25: memref<256x1xbf16, #tpu.memory_space<vmem>>, %arg26: memref<1x1xf32, #tpu.memory_space<vmem>>, %arg27: memref<16x1xf32, #tpu.memory_space<vmem>>) attributes {dimension_semantics = [#tpu.dimension_semantics<parallel>], iteration_bounds = array<i64: 2>, scalar_prefetch = 0 : i64, scratch_operands = 0 : i64, tpu.core_type = #tpu.core_type<tc>, window_params = [{transform_indices = @transform_0, window_bounds = array<i64: 1, 128, 128>}, {transform_indices = @transform_1, window_bounds = array<i64: 1, 128, 78>}, {transform_indices = @transform_2, window_bounds = array<i64: 1, 128, 128>}, {transform_indices = @transform_3, window_bounds = array<i64: 1, 128, 25>}, {pipeline_mode = #tpu.pipeline_mode<synchronous>, transform_indices = @transform_4, window_bounds = array<i64: 78, 32>}, {pipeline_mode = #tpu.pipeline_mode<synchronous>, transform_indices = @transform_5, window_bounds = array<i64: 1, 32>}, {pipeline_mode = #tpu.pipeline_mode<synchronous>, transform_indices = @transform_6, window_bounds = array<i64: 4, 32, 32>}, {pipeline_mode = #tpu.pipeline_mode<synchronous>, transform_indices = @transform_7, window_bounds = array<i64: 4, 1, 32>}, {pipeline_mode = #tpu.pipeline_mode<synchronous>, transform_indices = @transform_8, window_bounds = array<i64: 5, 32, 32>}, {pipeline_mode = #tpu.pipeline_mode<synchronous>, transform_indices = @transform_9, window_bounds = array<i64: 5, 1, 32>}, {pipeline_mode = #tpu.pipeline_mode<synchronous>, transform_indices = @transform_10, window_bounds = array<i64: 5, 1, 32>}, {pipeline_mode = #tpu.pipeline_mode<synchronous>, transform_indices = @transform_11, window_bounds = array<i64: 5, 1, 32>}, {pipeline_mode = #tpu.pipeline_mode<synchronous>, transform_indices = @transform_12, window_bounds = array<i64: 32, 128>}, {pipeline_mode = #tpu.pipeline_mode<synchronous>, transform_indices = @transform_13, window_bounds = array<i64: 1, 128>}, {pipeline_mode = #tpu.pipeline_mode<synchronous>, transform_indices = @transform_14, window_bounds = array<i64: 25, 25>}, {pipeline_mode = #tpu.pipeline_mode<synchronous>, transform_indices = @transform_15, window_bounds = array<i64: 1, 25>}, {pipeline_mode = #tpu.pipeline_mode<synchronous>, transform_indices = @transform_16, window_bounds = array<i64: 25, 64>}, {pipeline_mode = #tpu.pipeline_mode<synchronous>, transform_indices = @transform_17, window_bounds = array<i64: 1, 64>}, {pipeline_mode = #tpu.pipeline_mode<synchronous>, transform_indices = @transform_18, window_bounds = array<i64: 64, 128>}, {pipeline_mode = #tpu.pipeline_mode<synchronous>, transform_indices = @transform_19, window_bounds = array<i64: 1, 128>}, {pipeline_mode = #tpu.pipeline_mode<synchronous>, transform_indices = @transform_20, window_bounds = array<i64: 256, 1024>}, {pipeline_mode = #tpu.pipeline_mode<synchronous>, transform_indices = @transform_21, window_bounds = array<i64: 1, 1024>}, {pipeline_mode = #tpu.pipeline_mode<synchronous>, transform_indices = @transform_22, window_bounds = array<i64: 1024, 256>}, {pipeline_mode = #tpu.pipeline_mode<synchronous>, transform_indices = @transform_23, window_bounds = array<i64: 1, 256>}, {pipeline_mode = #tpu.pipeline_mode<synchronous>, transform_indices = @transform_24, window_bounds = array<i64: 256, 1>}, {pipeline_mode = #tpu.pipeline_mode<synchronous>, transform_indices = @transform_25, window_bounds = array<i64: 1, 1>}, {transform_indices = @transform_26, window_bounds = array<i64: 16, 1>}]} {
    %c0 = arith.constant 0 : index
    %c0_0 = arith.constant 0 : index
    %c0_1 = arith.constant 0 : index
    %0 = vector.load %arg1[%c0, %c0_0, %c0_1] : memref<1x128x128xbf16, #tpu.memory_space<vmem>>, vector<1x128x128xbf16>
    %1 = vector.shape_cast %0 : vector<1x128x128xbf16> to vector<128x128xbf16>
    %c0_2 = arith.constant 0 : index
    %c0_3 = arith.constant 0 : index
    %c0_4 = arith.constant 0 : index
    %2 = vector.load %arg2[%c0_2, %c0_3, %c0_4] : memref<1x128x78xf32, #tpu.memory_space<vmem>>, vector<1x128x78xf32>
    %3 = vector.shape_cast %2 : vector<1x128x78xf32> to vector<128x78xf32>
    %c0_5 = arith.constant 0 : index
    %c0_6 = arith.constant 0 : index
    %4 = vector.load %arg5[%c0_5, %c0_6] : memref<78x32xbf16, #tpu.memory_space<vmem>>, vector<78x32xbf16>
    %c0_7 = arith.constant 0 : index
    %c0_8 = arith.constant 0 : index
    %5 = vector.load %arg6[%c0_7, %c0_8] : memref<1x32xf32, #tpu.memory_space<vmem>>, vector<1x32xf32>
    %c0_9 = arith.constant 0 : index
    %c0_10 = arith.constant 0 : index
    %c0_11 = arith.constant 0 : index
    %6 = vector.load %arg9[%c0_9, %c0_10, %c0_11] : memref<5x32x32xbf16, #tpu.memory_space<vmem>>, vector<1x32x32xbf16>
    %7 = vector.shape_cast %6 : vector<1x32x32xbf16> to vector<32x32xbf16>
    %c0_12 = arith.constant 0 : index
    %c0_13 = arith.constant 0 : index
    %c0_14 = arith.constant 0 : index
    %8 = vector.load %arg10[%c0_12, %c0_13, %c0_14] : memref<5x1x32xf32, #tpu.memory_space<vmem>>, vector<1x1x32xf32>
    %9 = vector.shape_cast %8 : vector<1x1x32xf32> to vector<1x32xf32>
    %c0_15 = arith.constant 0 : index
    %c0_16 = arith.constant 0 : index
    %c0_17 = arith.constant 0 : index
    %10 = vector.load %arg11[%c0_15, %c0_16, %c0_17] : memref<5x1x32xf32, #tpu.memory_space<vmem>>, vector<1x1x32xf32>
    %11 = vector.shape_cast %10 : vector<1x1x32xf32> to vector<1x32xf32>
    %c0_18 = arith.constant 0 : index
    %c0_19 = arith.constant 0 : index
    %c0_20 = arith.constant 0 : index
    %12 = vector.load %arg12[%c0_18, %c0_19, %c0_20] : memref<5x1x32xf32, #tpu.memory_space<vmem>>, vector<1x1x32xf32>
    %13 = vector.shape_cast %12 : vector<1x1x32xf32> to vector<1x32xf32>
    %14 = arith.truncf %3 : vector<128x78xf32> to vector<128x78xbf16>
    %cst = arith.constant dense<0.000000e+00> : vector<128x32xf32>
    %15 = tpu.matmul %14, %4, %cst {dimension_numbers = #tpu.dot_dimension_numbers<[1], [0], [0], [1], [0, 0, 1, 1], [], []>} : vector<128x78xbf16>, vector<78x32xbf16>, vector<128x32xf32> -> vector<128x32xf32>
    %16 = arith.truncf %15 : vector<128x32xf32> to vector<128x32xbf16>
    %cst_21 = arith.constant dense<0.000000e+00> : vector<128x32xf32>
    %17 = tpu.matmul %1, %16, %cst_21 {dimension_numbers = #tpu.dot_dimension_numbers<[1], [0], [0], [1], [0, 0, 1, 1], [], []>} : vector<128x128xbf16>, vector<128x32xbf16>, vector<128x32xf32> -> vector<128x32xf32>
    %18 = arith.addf %17, %15 : vector<128x32xf32>
    %19 = vector.broadcast %5 : vector<1x32xf32> to vector<128x32xf32>
    %20 = arith.addf %18, %19 : vector<128x32xf32>
    %cst_22 = arith.constant 0.000000e+00 : f32
    %21 = vector.broadcast %cst_22 : f32 to vector<128x32xf32>
    %22 = arith.maximumf %20, %21 : vector<128x32xf32>
    %23 = arith.truncf %22 : vector<128x32xf32> to vector<128x32xbf16>
    %cst_23 = arith.constant dense<0.000000e+00> : vector<128x32xf32>
    %24 = tpu.matmul %23, %7, %cst_23 {dimension_numbers = #tpu.dot_dimension_numbers<[1], [0], [0], [1], [0, 0, 1, 1], [], []>} : vector<128x32xbf16>, vector<32x32xbf16>, vector<128x32xf32> -> vector<128x32xf32>
    %25 = vector.broadcast %9 : vector<1x32xf32> to vector<128x32xf32>
    %26 = arith.addf %24, %25 : vector<128x32xf32>
    %cst_24 = arith.constant 0.000000e+00 : f32
    %27 = vector.broadcast %cst_24 : f32 to vector<128x32xf32>
    %28 = arith.maximumf %26, %27 : vector<128x32xf32>
    %29 = vector.broadcast %11 : vector<1x32xf32> to vector<128x32xf32>
    %30 = arith.mulf %28, %29 : vector<128x32xf32>
    %31 = vector.broadcast %13 : vector<1x32xf32> to vector<128x32xf32>
    %32 = arith.addf %30, %31 : vector<128x32xf32>
    %c0_25 = arith.constant 0 : index
    %c0_26 = arith.constant 0 : index
    %c0_27 = arith.constant 0 : index
    %33 = vector.load %arg7[%c0_25, %c0_26, %c0_27] : memref<4x32x32xbf16, #tpu.memory_space<vmem>>, vector<1x32x32xbf16>
    %34 = vector.shape_cast %33 : vector<1x32x32xbf16> to vector<32x32xbf16>
    %c0_28 = arith.constant 0 : index
    %c0_29 = arith.constant 0 : index
    %c0_30 = arith.constant 0 : index
    %35 = vector.load %arg8[%c0_28, %c0_29, %c0_30] : memref<4x1x32xf32, #tpu.memory_space<vmem>>, vector<1x1x32xf32>
    %36 = vector.shape_cast %35 : vector<1x1x32xf32> to vector<1x32xf32>
    %c1 = arith.constant 1 : index
    %c0_31 = arith.constant 0 : index
    %c0_32 = arith.constant 0 : index
    %37 = vector.load %arg9[%c1, %c0_31, %c0_32] : memref<5x32x32xbf16, #tpu.memory_space<vmem>>, vector<1x32x32xbf16>
    %38 = vector.shape_cast %37 : vector<1x32x32xbf16> to vector<32x32xbf16>
    %c1_33 = arith.constant 1 : index
    %c0_34 = arith.constant 0 : index
    %c0_35 = arith.constant 0 : index
    %39 = vector.load %arg10[%c1_33, %c0_34, %c0_35] : memref<5x1x32xf32, #tpu.memory_space<vmem>>, vector<1x1x32xf32>
    %40 = vector.shape_cast %39 : vector<1x1x32xf32> to vector<1x32xf32>
    %c1_36 = arith.constant 1 : index
    %c0_37 = arith.constant 0 : index
    %c0_38 = arith.constant 0 : index
    %41 = vector.load %arg11[%c1_36, %c0_37, %c0_38] : memref<5x1x32xf32, #tpu.memory_space<vmem>>, vector<1x1x32xf32>
    %42 = vector.shape_cast %41 : vector<1x1x32xf32> to vector<1x32xf32>
    %c1_39 = arith.constant 1 : index
    %c0_40 = arith.constant 0 : index
    %c0_41 = arith.constant 0 : index
    %43 = vector.load %arg12[%c1_39, %c0_40, %c0_41] : memref<5x1x32xf32, #tpu.memory_space<vmem>>, vector<1x1x32xf32>
    %44 = vector.shape_cast %43 : vector<1x1x32xf32> to vector<1x32xf32>
    %45 = arith.truncf %32 : vector<128x32xf32> to vector<128x32xbf16>
    %cst_42 = arith.constant dense<0.000000e+00> : vector<128x32xf32>
    %46 = tpu.matmul %45, %34, %cst_42 {dimension_numbers = #tpu.dot_dimension_numbers<[1], [0], [0], [1], [0, 0, 1, 1], [], []>} : vector<128x32xbf16>, vector<32x32xbf16>, vector<128x32xf32> -> vector<128x32xf32>
    %47 = arith.truncf %46 : vector<128x32xf32> to vector<128x32xbf16>
    %cst_43 = arith.constant dense<0.000000e+00> : vector<128x32xf32>
    %48 = tpu.matmul %1, %47, %cst_43 {dimension_numbers = #tpu.dot_dimension_numbers<[1], [0], [0], [1], [0, 0, 1, 1], [], []>} : vector<128x128xbf16>, vector<128x32xbf16>, vector<128x32xf32> -> vector<128x32xf32>
    %49 = arith.addf %48, %46 : vector<128x32xf32>
    %50 = vector.broadcast %36 : vector<1x32xf32> to vector<128x32xf32>
    %51 = arith.addf %49, %50 : vector<128x32xf32>
    %cst_44 = arith.constant 0.000000e+00 : f32
    %52 = vector.broadcast %cst_44 : f32 to vector<128x32xf32>
    %53 = arith.maximumf %51, %52 : vector<128x32xf32>
    %54 = arith.truncf %53 : vector<128x32xf32> to vector<128x32xbf16>
    %cst_45 = arith.constant dense<0.000000e+00> : vector<128x32xf32>
    %55 = tpu.matmul %54, %38, %cst_45 {dimension_numbers = #tpu.dot_dimension_numbers<[1], [0], [0], [1], [0, 0, 1, 1], [], []>} : vector<128x32xbf16>, vector<32x32xbf16>, vector<128x32xf32> -> vector<128x32xf32>
    %56 = vector.broadcast %40 : vector<1x32xf32> to vector<128x32xf32>
    %57 = arith.addf %55, %56 : vector<128x32xf32>
    %cst_46 = arith.constant 0.000000e+00 : f32
    %58 = vector.broadcast %cst_46 : f32 to vector<128x32xf32>
    %59 = arith.maximumf %57, %58 : vector<128x32xf32>
    %60 = vector.broadcast %42 : vector<1x32xf32> to vector<128x32xf32>
    %61 = arith.mulf %59, %60 : vector<128x32xf32>
    %62 = vector.broadcast %44 : vector<1x32xf32> to vector<128x32xf32>
    %63 = arith.addf %61, %62 : vector<128x32xf32>
    %c1_47 = arith.constant 1 : index
    %c0_48 = arith.constant 0 : index
    %c0_49 = arith.constant 0 : index
    %64 = vector.load %arg7[%c1_47, %c0_48, %c0_49] : memref<4x32x32xbf16, #tpu.memory_space<vmem>>, vector<1x32x32xbf16>
    %65 = vector.shape_cast %64 : vector<1x32x32xbf16> to vector<32x32xbf16>
    %c1_50 = arith.constant 1 : index
    %c0_51 = arith.constant 0 : index
    %c0_52 = arith.constant 0 : index
    %66 = vector.load %arg8[%c1_50, %c0_51, %c0_52] : memref<4x1x32xf32, #tpu.memory_space<vmem>>, vector<1x1x32xf32>
    %67 = vector.shape_cast %66 : vector<1x1x32xf32> to vector<1x32xf32>
    %c2 = arith.constant 2 : index
    %c0_53 = arith.constant 0 : index
    %c0_54 = arith.constant 0 : index
    %68 = vector.load %arg9[%c2, %c0_53, %c0_54] : memref<5x32x32xbf16, #tpu.memory_space<vmem>>, vector<1x32x32xbf16>
    %69 = vector.shape_cast %68 : vector<1x32x32xbf16> to vector<32x32xbf16>
    %c2_55 = arith.constant 2 : index
    %c0_56 = arith.constant 0 : index
    %c0_57 = arith.constant 0 : index
    %70 = vector.load %arg10[%c2_55, %c0_56, %c0_57] : memref<5x1x32xf32, #tpu.memory_space<vmem>>, vector<1x1x32xf32>
    %71 = vector.shape_cast %70 : vector<1x1x32xf32> to vector<1x32xf32>
    %c2_58 = arith.constant 2 : index
    %c0_59 = arith.constant 0 : index
    %c0_60 = arith.constant 0 : index
    %72 = vector.load %arg11[%c2_58, %c0_59, %c0_60] : memref<5x1x32xf32, #tpu.memory_space<vmem>>, vector<1x1x32xf32>
    %73 = vector.shape_cast %72 : vector<1x1x32xf32> to vector<1x32xf32>
    %c2_61 = arith.constant 2 : index
    %c0_62 = arith.constant 0 : index
    %c0_63 = arith.constant 0 : index
    %74 = vector.load %arg12[%c2_61, %c0_62, %c0_63] : memref<5x1x32xf32, #tpu.memory_space<vmem>>, vector<1x1x32xf32>
    %75 = vector.shape_cast %74 : vector<1x1x32xf32> to vector<1x32xf32>
    %76 = arith.truncf %63 : vector<128x32xf32> to vector<128x32xbf16>
    %cst_64 = arith.constant dense<0.000000e+00> : vector<128x32xf32>
    %77 = tpu.matmul %76, %65, %cst_64 {dimension_numbers = #tpu.dot_dimension_numbers<[1], [0], [0], [1], [0, 0, 1, 1], [], []>} : vector<128x32xbf16>, vector<32x32xbf16>, vector<128x32xf32> -> vector<128x32xf32>
    %78 = arith.truncf %77 : vector<128x32xf32> to vector<128x32xbf16>
    %cst_65 = arith.constant dense<0.000000e+00> : vector<128x32xf32>
    %79 = tpu.matmul %1, %78, %cst_65 {dimension_numbers = #tpu.dot_dimension_numbers<[1], [0], [0], [1], [0, 0, 1, 1], [], []>} : vector<128x128xbf16>, vector<128x32xbf16>, vector<128x32xf32> -> vector<128x32xf32>
    %80 = arith.addf %79, %77 : vector<128x32xf32>
    %81 = vector.broadcast %67 : vector<1x32xf32> to vector<128x32xf32>
    %82 = arith.addf %80, %81 : vector<128x32xf32>
    %cst_66 = arith.constant 0.000000e+00 : f32
    %83 = vector.broadcast %cst_66 : f32 to vector<128x32xf32>
    %84 = arith.maximumf %82, %83 : vector<128x32xf32>
    %85 = arith.truncf %84 : vector<128x32xf32> to vector<128x32xbf16>
    %cst_67 = arith.constant dense<0.000000e+00> : vector<128x32xf32>
    %86 = tpu.matmul %85, %69, %cst_67 {dimension_numbers = #tpu.dot_dimension_numbers<[1], [0], [0], [1], [0, 0, 1, 1], [], []>} : vector<128x32xbf16>, vector<32x32xbf16>, vector<128x32xf32> -> vector<128x32xf32>
    %87 = vector.broadcast %71 : vector<1x32xf32> to vector<128x32xf32>
    %88 = arith.addf %86, %87 : vector<128x32xf32>
    %cst_68 = arith.constant 0.000000e+00 : f32
    %89 = vector.broadcast %cst_68 : f32 to vector<128x32xf32>
    %90 = arith.maximumf %88, %89 : vector<128x32xf32>
    %91 = vector.broadcast %73 : vector<1x32xf32> to vector<128x32xf32>
    %92 = arith.mulf %90, %91 : vector<128x32xf32>
    %93 = vector.broadcast %75 : vector<1x32xf32> to vector<128x32xf32>
    %94 = arith.addf %92, %93 : vector<128x32xf32>
    %c2_69 = arith.constant 2 : index
    %c0_70 = arith.constant 0 : index
    %c0_71 = arith.constant 0 : index
    %95 = vector.load %arg7[%c2_69, %c0_70, %c0_71] : memref<4x32x32xbf16, #tpu.memory_space<vmem>>, vector<1x32x32xbf16>
    %96 = vector.shape_cast %95 : vector<1x32x32xbf16> to vector<32x32xbf16>
    %c2_72 = arith.constant 2 : index
    %c0_73 = arith.constant 0 : index
    %c0_74 = arith.constant 0 : index
    %97 = vector.load %arg8[%c2_72, %c0_73, %c0_74] : memref<4x1x32xf32, #tpu.memory_space<vmem>>, vector<1x1x32xf32>
    %98 = vector.shape_cast %97 : vector<1x1x32xf32> to vector<1x32xf32>
    %c3 = arith.constant 3 : index
    %c0_75 = arith.constant 0 : index
    %c0_76 = arith.constant 0 : index
    %99 = vector.load %arg9[%c3, %c0_75, %c0_76] : memref<5x32x32xbf16, #tpu.memory_space<vmem>>, vector<1x32x32xbf16>
    %100 = vector.shape_cast %99 : vector<1x32x32xbf16> to vector<32x32xbf16>
    %c3_77 = arith.constant 3 : index
    %c0_78 = arith.constant 0 : index
    %c0_79 = arith.constant 0 : index
    %101 = vector.load %arg10[%c3_77, %c0_78, %c0_79] : memref<5x1x32xf32, #tpu.memory_space<vmem>>, vector<1x1x32xf32>
    %102 = vector.shape_cast %101 : vector<1x1x32xf32> to vector<1x32xf32>
    %c3_80 = arith.constant 3 : index
    %c0_81 = arith.constant 0 : index
    %c0_82 = arith.constant 0 : index
    %103 = vector.load %arg11[%c3_80, %c0_81, %c0_82] : memref<5x1x32xf32, #tpu.memory_space<vmem>>, vector<1x1x32xf32>
    %104 = vector.shape_cast %103 : vector<1x1x32xf32> to vector<1x32xf32>
    %c3_83 = arith.constant 3 : index
    %c0_84 = arith.constant 0 : index
    %c0_85 = arith.constant 0 : index
    %105 = vector.load %arg12[%c3_83, %c0_84, %c0_85] : memref<5x1x32xf32, #tpu.memory_space<vmem>>, vector<1x1x32xf32>
    %106 = vector.shape_cast %105 : vector<1x1x32xf32> to vector<1x32xf32>
    %107 = arith.truncf %94 : vector<128x32xf32> to vector<128x32xbf16>
    %cst_86 = arith.constant dense<0.000000e+00> : vector<128x32xf32>
    %108 = tpu.matmul %107, %96, %cst_86 {dimension_numbers = #tpu.dot_dimension_numbers<[1], [0], [0], [1], [0, 0, 1, 1], [], []>} : vector<128x32xbf16>, vector<32x32xbf16>, vector<128x32xf32> -> vector<128x32xf32>
    %109 = arith.truncf %108 : vector<128x32xf32> to vector<128x32xbf16>
    %cst_87 = arith.constant dense<0.000000e+00> : vector<128x32xf32>
    %110 = tpu.matmul %1, %109, %cst_87 {dimension_numbers = #tpu.dot_dimension_numbers<[1], [0], [0], [1], [0, 0, 1, 1], [], []>} : vector<128x128xbf16>, vector<128x32xbf16>, vector<128x32xf32> -> vector<128x32xf32>
    %111 = arith.addf %110, %108 : vector<128x32xf32>
    %112 = vector.broadcast %98 : vector<1x32xf32> to vector<128x32xf32>
    %113 = arith.addf %111, %112 : vector<128x32xf32>
    %cst_88 = arith.constant 0.000000e+00 : f32
    %114 = vector.broadcast %cst_88 : f32 to vector<128x32xf32>
    %115 = arith.maximumf %113, %114 : vector<128x32xf32>
    %116 = arith.truncf %115 : vector<128x32xf32> to vector<128x32xbf16>
    %cst_89 = arith.constant dense<0.000000e+00> : vector<128x32xf32>
    %117 = tpu.matmul %116, %100, %cst_89 {dimension_numbers = #tpu.dot_dimension_numbers<[1], [0], [0], [1], [0, 0, 1, 1], [], []>} : vector<128x32xbf16>, vector<32x32xbf16>, vector<128x32xf32> -> vector<128x32xf32>
    %118 = vector.broadcast %102 : vector<1x32xf32> to vector<128x32xf32>
    %119 = arith.addf %117, %118 : vector<128x32xf32>
    %cst_90 = arith.constant 0.000000e+00 : f32
    %120 = vector.broadcast %cst_90 : f32 to vector<128x32xf32>
    %121 = arith.maximumf %119, %120 : vector<128x32xf32>
    %122 = vector.broadcast %104 : vector<1x32xf32> to vector<128x32xf32>
    %123 = arith.mulf %121, %122 : vector<128x32xf32>
    %124 = vector.broadcast %106 : vector<1x32xf32> to vector<128x32xf32>
    %125 = arith.addf %123, %124 : vector<128x32xf32>
    %c3_91 = arith.constant 3 : index
    %c0_92 = arith.constant 0 : index
    %c0_93 = arith.constant 0 : index
    %126 = vector.load %arg7[%c3_91, %c0_92, %c0_93] : memref<4x32x32xbf16, #tpu.memory_space<vmem>>, vector<1x32x32xbf16>
    %127 = vector.shape_cast %126 : vector<1x32x32xbf16> to vector<32x32xbf16>
    %c3_94 = arith.constant 3 : index
    %c0_95 = arith.constant 0 : index
    %c0_96 = arith.constant 0 : index
    %128 = vector.load %arg8[%c3_94, %c0_95, %c0_96] : memref<4x1x32xf32, #tpu.memory_space<vmem>>, vector<1x1x32xf32>
    %129 = vector.shape_cast %128 : vector<1x1x32xf32> to vector<1x32xf32>
    %c4 = arith.constant 4 : index
    %c0_97 = arith.constant 0 : index
    %c0_98 = arith.constant 0 : index
    %130 = vector.load %arg9[%c4, %c0_97, %c0_98] : memref<5x32x32xbf16, #tpu.memory_space<vmem>>, vector<1x32x32xbf16>
    %131 = vector.shape_cast %130 : vector<1x32x32xbf16> to vector<32x32xbf16>
    %c4_99 = arith.constant 4 : index
    %c0_100 = arith.constant 0 : index
    %c0_101 = arith.constant 0 : index
    %132 = vector.load %arg10[%c4_99, %c0_100, %c0_101] : memref<5x1x32xf32, #tpu.memory_space<vmem>>, vector<1x1x32xf32>
    %133 = vector.shape_cast %132 : vector<1x1x32xf32> to vector<1x32xf32>
    %c4_102 = arith.constant 4 : index
    %c0_103 = arith.constant 0 : index
    %c0_104 = arith.constant 0 : index
    %134 = vector.load %arg11[%c4_102, %c0_103, %c0_104] : memref<5x1x32xf32, #tpu.memory_space<vmem>>, vector<1x1x32xf32>
    %135 = vector.shape_cast %134 : vector<1x1x32xf32> to vector<1x32xf32>
    %c4_105 = arith.constant 4 : index
    %c0_106 = arith.constant 0 : index
    %c0_107 = arith.constant 0 : index
    %136 = vector.load %arg12[%c4_105, %c0_106, %c0_107] : memref<5x1x32xf32, #tpu.memory_space<vmem>>, vector<1x1x32xf32>
    %137 = vector.shape_cast %136 : vector<1x1x32xf32> to vector<1x32xf32>
    %138 = arith.truncf %125 : vector<128x32xf32> to vector<128x32xbf16>
    %cst_108 = arith.constant dense<0.000000e+00> : vector<128x32xf32>
    %139 = tpu.matmul %138, %127, %cst_108 {dimension_numbers = #tpu.dot_dimension_numbers<[1], [0], [0], [1], [0, 0, 1, 1], [], []>} : vector<128x32xbf16>, vector<32x32xbf16>, vector<128x32xf32> -> vector<128x32xf32>
    %140 = arith.truncf %139 : vector<128x32xf32> to vector<128x32xbf16>
    %cst_109 = arith.constant dense<0.000000e+00> : vector<128x32xf32>
    %141 = tpu.matmul %1, %140, %cst_109 {dimension_numbers = #tpu.dot_dimension_numbers<[1], [0], [0], [1], [0, 0, 1, 1], [], []>} : vector<128x128xbf16>, vector<128x32xbf16>, vector<128x32xf32> -> vector<128x32xf32>
    %142 = arith.addf %141, %139 : vector<128x32xf32>
    %143 = vector.broadcast %129 : vector<1x32xf32> to vector<128x32xf32>
    %144 = arith.addf %142, %143 : vector<128x32xf32>
    %cst_110 = arith.constant 0.000000e+00 : f32
    %145 = vector.broadcast %cst_110 : f32 to vector<128x32xf32>
    %146 = arith.maximumf %144, %145 : vector<128x32xf32>
    %147 = arith.truncf %146 : vector<128x32xf32> to vector<128x32xbf16>
    %cst_111 = arith.constant dense<0.000000e+00> : vector<128x32xf32>
    %148 = tpu.matmul %147, %131, %cst_111 {dimension_numbers = #tpu.dot_dimension_numbers<[1], [0], [0], [1], [0, 0, 1, 1], [], []>} : vector<128x32xbf16>, vector<32x32xbf16>, vector<128x32xf32> -> vector<128x32xf32>
    %149 = vector.broadcast %133 : vector<1x32xf32> to vector<128x32xf32>
    %150 = arith.addf %148, %149 : vector<128x32xf32>
    %cst_112 = arith.constant 0.000000e+00 : f32
    %151 = vector.broadcast %cst_112 : f32 to vector<128x32xf32>
    %152 = arith.maximumf %150, %151 : vector<128x32xf32>
    %153 = vector.broadcast %135 : vector<1x32xf32> to vector<128x32xf32>
    %154 = arith.mulf %152, %153 : vector<128x32xf32>
    %155 = vector.broadcast %137 : vector<1x32xf32> to vector<128x32xf32>
    %156 = arith.addf %154, %155 : vector<128x32xf32>
    %157 = vector.shape_cast %156 : vector<128x32xf32> to vector<16x8x32xf32>
    %cst_113 = arith.constant dense<0.000000e+00> : vector<16x32xf32>
    %158 = vector.multi_reduction <add>, %157, %cst_113 [1] : vector<16x8x32xf32> to vector<16x32xf32>
    %159 = arith.truncf %158 : vector<16x32xf32> to vector<16x32xbf16>
    %c0_114 = arith.constant 0 : index
    %c0_115 = arith.constant 0 : index
    %160 = vector.load %arg13[%c0_114, %c0_115] : memref<32x128xbf16, #tpu.memory_space<vmem>>, vector<32x128xbf16>
    %cst_116 = arith.constant dense<0.000000e+00> : vector<16x128xf32>
    %161 = tpu.matmul %159, %160, %cst_116 {dimension_numbers = #tpu.dot_dimension_numbers<[1], [0], [0], [1], [0, 0, 1, 1], [], []>} : vector<16x32xbf16>, vector<32x128xbf16>, vector<16x128xf32> -> vector<16x128xf32>
    %c0_117 = arith.constant 0 : index
    %c0_118 = arith.constant 0 : index
    %162 = vector.load %arg14[%c0_117, %c0_118] : memref<1x128xf32, #tpu.memory_space<vmem>>, vector<1x128xf32>
    %163 = vector.broadcast %162 : vector<1x128xf32> to vector<16x128xf32>
    %164 = arith.addf %161, %163 : vector<16x128xf32>
    %cst_119 = arith.constant 0.000000e+00 : f32
    %165 = vector.broadcast %cst_119 : f32 to vector<16x128xf32>
    %166 = arith.maximumf %164, %165 : vector<16x128xf32>
    %c0_120 = arith.constant 0 : index
    %c0_121 = arith.constant 0 : index
    %c0_122 = arith.constant 0 : index
    %167 = vector.load %arg3[%c0_120, %c0_121, %c0_122] : memref<1x128x128xbf16, #tpu.memory_space<vmem>>, vector<1x128x128xbf16>
    %168 = vector.shape_cast %167 : vector<1x128x128xbf16> to vector<128x128xbf16>
    %c0_123 = arith.constant 0 : index
    %c0_124 = arith.constant 0 : index
    %c0_125 = arith.constant 0 : index
    %169 = vector.load %arg4[%c0_123, %c0_124, %c0_125] : memref<1x128x25xf32, #tpu.memory_space<vmem>>, vector<1x128x25xf32>
    %170 = vector.shape_cast %169 : vector<1x128x25xf32> to vector<128x25xf32>
    %171 = arith.extf %168 : vector<128x128xbf16> to vector<128x128xf32>
    %cst_126 = arith.constant dense<0.000000e+00> : vector<128xf32>
    %172 = vector.multi_reduction <add>, %171, %cst_126 [1] : vector<128x128xf32> to vector<128xf32>
    %173 = vector.shape_cast %172 : vector<128xf32> to vector<128x1xf32>
    %cst_127 = arith.constant 1.000000e+00 : f32
    %174 = vector.broadcast %cst_127 : f32 to vector<128x1xf32>
    %175 = arith.addf %173, %174 : vector<128x1xf32>
    %176 = math.rsqrt %175 : vector<128x1xf32>
    %c0_128 = arith.constant 0 : index
    %c0_129 = arith.constant 0 : index
    %177 = vector.load %arg15[%c0_128, %c0_129] : memref<25x25xbf16, #tpu.memory_space<vmem>>, vector<25x25xbf16>
    %c0_130 = arith.constant 0 : index
    %c0_131 = arith.constant 0 : index
    %178 = vector.load %arg16[%c0_130, %c0_131] : memref<1x25xf32, #tpu.memory_space<vmem>>, vector<1x25xf32>
    %179 = arith.truncf %170 : vector<128x25xf32> to vector<128x25xbf16>
    %cst_132 = arith.constant dense<0.000000e+00> : vector<128x25xf32>
    %180 = tpu.matmul %179, %177, %cst_132 {dimension_numbers = #tpu.dot_dimension_numbers<[1], [0], [0], [1], [0, 0, 1, 1], [], []>} : vector<128x25xbf16>, vector<25x25xbf16>, vector<128x25xf32> -> vector<128x25xf32>
    %181 = vector.broadcast %176 : vector<128x1xf32> to vector<128x25xf32>
    %182 = arith.mulf %181, %180 : vector<128x25xf32>
    %183 = arith.truncf %182 : vector<128x25xf32> to vector<128x25xbf16>
    %cst_133 = arith.constant dense<0.000000e+00> : vector<128x25xf32>
    %184 = tpu.matmul %168, %183, %cst_133 {dimension_numbers = #tpu.dot_dimension_numbers<[1], [0], [0], [1], [0, 0, 1, 1], [], []>} : vector<128x128xbf16>, vector<128x25xbf16>, vector<128x25xf32> -> vector<128x25xf32>
    %185 = arith.addf %184, %182 : vector<128x25xf32>
    %186 = vector.broadcast %176 : vector<128x1xf32> to vector<128x25xf32>
    %187 = arith.mulf %186, %185 : vector<128x25xf32>
    %188 = vector.broadcast %178 : vector<1x25xf32> to vector<128x25xf32>
    %189 = arith.addf %187, %188 : vector<128x25xf32>
    %cst_134 = arith.constant 0.000000e+00 : f32
    %190 = vector.broadcast %cst_134 : f32 to vector<128x25xf32>
    %191 = arith.maximumf %189, %190 : vector<128x25xf32>
    %c0_135 = arith.constant 0 : index
    %c0_136 = arith.constant 0 : index
    %192 = vector.load %arg17[%c0_135, %c0_136] : memref<25x64xbf16, #tpu.memory_space<vmem>>, vector<25x64xbf16>
    %c0_137 = arith.constant 0 : index
    %c0_138 = arith.constant 0 : index
    %193 = vector.load %arg18[%c0_137, %c0_138] : memref<1x64xf32, #tpu.memory_space<vmem>>, vector<1x64xf32>
    %194 = arith.truncf %191 : vector<128x25xf32> to vector<128x25xbf16>
    %cst_139 = arith.constant dense<0.000000e+00> : vector<128x64xf32>
    %195 = tpu.matmul %194, %192, %cst_139 {dimension_numbers = #tpu.dot_dimension_numbers<[1], [0], [0], [1], [0, 0, 1, 1], [], []>} : vector<128x25xbf16>, vector<25x64xbf16>, vector<128x64xf32> -> vector<128x64xf32>
    %196 = vector.broadcast %176 : vector<128x1xf32> to vector<128x64xf32>
    %197 = arith.mulf %196, %195 : vector<128x64xf32>
    %198 = arith.truncf %197 : vector<128x64xf32> to vector<128x64xbf16>
    %cst_140 = arith.constant dense<0.000000e+00> : vector<128x64xf32>
    %199 = tpu.matmul %168, %198, %cst_140 {dimension_numbers = #tpu.dot_dimension_numbers<[1], [0], [0], [1], [0, 0, 1, 1], [], []>} : vector<128x128xbf16>, vector<128x64xbf16>, vector<128x64xf32> -> vector<128x64xf32>
    %200 = arith.addf %199, %197 : vector<128x64xf32>
    %201 = vector.broadcast %176 : vector<128x1xf32> to vector<128x64xf32>
    %202 = arith.mulf %201, %200 : vector<128x64xf32>
    %203 = vector.broadcast %193 : vector<1x64xf32> to vector<128x64xf32>
    %204 = arith.addf %202, %203 : vector<128x64xf32>
    %cst_141 = arith.constant 0.000000e+00 : f32
    %205 = vector.broadcast %cst_141 : f32 to vector<128x64xf32>
    %206 = arith.maximumf %204, %205 : vector<128x64xf32>
    %207 = vector.shape_cast %206 : vector<128x64xf32> to vector<16x8x64xf32>
    %cst_142 = arith.constant dense<0xFF800000> : vector<16x64xf32>
    %208 = vector.multi_reduction <maximumf>, %207, %cst_142 [1] : vector<16x8x64xf32> to vector<16x64xf32>
    %209 = arith.truncf %208 : vector<16x64xf32> to vector<16x64xbf16>
    %c0_143 = arith.constant 0 : index
    %c0_144 = arith.constant 0 : index
    %210 = vector.load %arg19[%c0_143, %c0_144] : memref<64x128xbf16, #tpu.memory_space<vmem>>, vector<64x128xbf16>
    %cst_145 = arith.constant dense<0.000000e+00> : vector<16x128xf32>
    %211 = tpu.matmul %209, %210, %cst_145 {dimension_numbers = #tpu.dot_dimension_numbers<[1], [0], [0], [1], [0, 0, 1, 1], [], []>} : vector<16x64xbf16>, vector<64x128xbf16>, vector<16x128xf32> -> vector<16x128xf32>
    %c0_146 = arith.constant 0 : index
    %c0_147 = arith.constant 0 : index
    %212 = vector.load %arg20[%c0_146, %c0_147] : memref<1x128xf32, #tpu.memory_space<vmem>>, vector<1x128xf32>
    %213 = vector.broadcast %212 : vector<1x128xf32> to vector<16x128xf32>
    %214 = arith.addf %211, %213 : vector<16x128xf32>
    %cst_148 = arith.constant 0.000000e+00 : f32
    %215 = vector.broadcast %cst_148 : f32 to vector<16x128xf32>
    %216 = arith.maximumf %214, %215 : vector<16x128xf32>
    %217 = tpu.concatenate %166, %216 in 1 : vector<16x128xf32>, vector<16x128xf32> -> vector<16x256xf32>
    %218 = arith.truncf %217 : vector<16x256xf32> to vector<16x256xbf16>
    %c0_149 = arith.constant 0 : index
    %c0_150 = arith.constant 0 : index
    %219 = vector.load %arg21[%c0_149, %c0_150] : memref<256x1024xbf16, #tpu.memory_space<vmem>>, vector<256x1024xbf16>
    %cst_151 = arith.constant dense<0.000000e+00> : vector<16x1024xf32>
    %220 = tpu.matmul %218, %219, %cst_151 {dimension_numbers = #tpu.dot_dimension_numbers<[1], [0], [0], [1], [0, 0, 1, 1], [], []>} : vector<16x256xbf16>, vector<256x1024xbf16>, vector<16x1024xf32> -> vector<16x1024xf32>
    %c0_152 = arith.constant 0 : index
    %c0_153 = arith.constant 0 : index
    %221 = vector.load %arg22[%c0_152, %c0_153] : memref<1x1024xf32, #tpu.memory_space<vmem>>, vector<1x1024xf32>
    %222 = vector.broadcast %221 : vector<1x1024xf32> to vector<16x1024xf32>
    %223 = arith.addf %220, %222 : vector<16x1024xf32>
    %cst_154 = arith.constant 0.000000e+00 : f32
    %224 = vector.broadcast %cst_154 : f32 to vector<16x1024xf32>
    %225 = arith.maximumf %223, %224 : vector<16x1024xf32>
    %226 = arith.truncf %225 : vector<16x1024xf32> to vector<16x1024xbf16>
    %c0_155 = arith.constant 0 : index
    %c0_156 = arith.constant 0 : index
    %227 = vector.load %arg23[%c0_155, %c0_156] : memref<1024x256xbf16, #tpu.memory_space<vmem>>, vector<1024x256xbf16>
    %cst_157 = arith.constant dense<0.000000e+00> : vector<16x256xf32>
    %228 = tpu.matmul %226, %227, %cst_157 {dimension_numbers = #tpu.dot_dimension_numbers<[1], [0], [0], [1], [0, 0, 1, 1], [], []>} : vector<16x1024xbf16>, vector<1024x256xbf16>, vector<16x256xf32> -> vector<16x256xf32>
    %c0_158 = arith.constant 0 : index
    %c0_159 = arith.constant 0 : index
    %229 = vector.load %arg24[%c0_158, %c0_159] : memref<1x256xf32, #tpu.memory_space<vmem>>, vector<1x256xf32>
    %230 = vector.broadcast %229 : vector<1x256xf32> to vector<16x256xf32>
    %231 = arith.addf %228, %230 : vector<16x256xf32>
    %cst_160 = arith.constant 0.000000e+00 : f32
    %232 = vector.broadcast %cst_160 : f32 to vector<16x256xf32>
    %233 = arith.maximumf %231, %232 : vector<16x256xf32>
    %234 = arith.truncf %233 : vector<16x256xf32> to vector<16x256xbf16>
    %c0_161 = arith.constant 0 : index
    %c0_162 = arith.constant 0 : index
    %235 = vector.load %arg25[%c0_161, %c0_162] : memref<256x1xbf16, #tpu.memory_space<vmem>>, vector<256x1xbf16>
    %cst_163 = arith.constant dense<0.000000e+00> : vector<16x1xf32>
    %236 = tpu.matmul %234, %235, %cst_163 {dimension_numbers = #tpu.dot_dimension_numbers<[1], [0], [0], [1], [0, 0, 1, 1], [], []>} : vector<16x256xbf16>, vector<256x1xbf16>, vector<16x1xf32> -> vector<16x1xf32>
    %c0_164 = arith.constant 0 : index
    %c0_165 = arith.constant 0 : index
    %237 = vector.load %arg26[%c0_164, %c0_165] : memref<1x1xf32, #tpu.memory_space<vmem>>, vector<1x1xf32>
    %238 = vector.broadcast %237 : vector<1x1xf32> to vector<16x1xf32>
    %239 = arith.addf %236, %238 : vector<16x1xf32>
    %c0_166 = arith.constant 0 : index
    %c0_167 = arith.constant 0 : index
    %240 = vector.load %arg27[%c0_166, %c0_167] : memref<16x1xf32, #tpu.memory_space<vmem>>, vector<16x1xf32>
    tpu.vector_store %arg27[%c0_166, %c0_167], %239 {strides = array<i32>} : memref<16x1xf32, #tpu.memory_space<vmem>>, vector<16x1xf32>,
    return
  }
  func.func @transform_0(%arg0: i32) -> (i32, i32, i32) {
    %c0_i32 = arith.constant 0 : i32
    %c0_i32_0 = arith.constant 0 : i32
    %c0_i32_1 = arith.constant 0 : i32
    return %arg0, %c0_i32, %c0_i32_0 : i32, i32, i32
  }
  func.func @transform_1(%arg0: i32) -> (i32, i32, i32) {
    %c0_i32 = arith.constant 0 : i32
    %c0_i32_0 = arith.constant 0 : i32
    %c0_i32_1 = arith.constant 0 : i32
    return %arg0, %c0_i32, %c0_i32_0 : i32, i32, i32
  }
  func.func @transform_2(%arg0: i32) -> (i32, i32, i32) {
    %c0_i32 = arith.constant 0 : i32
    %c0_i32_0 = arith.constant 0 : i32
    %c0_i32_1 = arith.constant 0 : i32
    return %arg0, %c0_i32, %c0_i32_0 : i32, i32, i32
  }
  func.func @transform_3(%arg0: i32) -> (i32, i32, i32) {
    %c0_i32 = arith.constant 0 : i32
    %c0_i32_0 = arith.constant 0 : i32
    %c0_i32_1 = arith.constant 0 : i32
    return %arg0, %c0_i32, %c0_i32_0 : i32, i32, i32
  }
  func.func @transform_4(%arg0: i32) -> (i32, i32) {
    %c0_i32 = arith.constant 0 : i32
    %c0_i32_0 = arith.constant 0 : i32
    %c0_i32_1 = arith.constant 0 : i32
    return %c0_i32, %c0_i32_0 : i32, i32
  }
  func.func @transform_5(%arg0: i32) -> (i32, i32) {
    %c0_i32 = arith.constant 0 : i32
    %c0_i32_0 = arith.constant 0 : i32
    %c0_i32_1 = arith.constant 0 : i32
    return %c0_i32, %c0_i32_0 : i32, i32
  }
  func.func @transform_6(%arg0: i32) -> (i32, i32, i32) {
    %c0_i32 = arith.constant 0 : i32
    %c0_i32_0 = arith.constant 0 : i32
    %c0_i32_1 = arith.constant 0 : i32
    %c0_i32_2 = arith.constant 0 : i32
    return %c0_i32, %c0_i32_0, %c0_i32_1 : i32, i32, i32
  }
  func.func @transform_7(%arg0: i32) -> (i32, i32, i32) {
    %c0_i32 = arith.constant 0 : i32
    %c0_i32_0 = arith.constant 0 : i32
    %c0_i32_1 = arith.constant 0 : i32
    %c0_i32_2 = arith.constant 0 : i32
    return %c0_i32, %c0_i32_0, %c0_i32_1 : i32, i32, i32
  }
  func.func @transform_8(%arg0: i32) -> (i32, i32, i32) {
    %c0_i32 = arith.constant 0 : i32
    %c0_i32_0 = arith.constant 0 : i32
    %c0_i32_1 = arith.constant 0 : i32
    %c0_i32_2 = arith.constant 0 : i32
    return %c0_i32, %c0_i32_0, %c0_i32_1 : i32, i32, i32
  }
  func.func @transform_9(%arg0: i32) -> (i32, i32, i32) {
    %c0_i32 = arith.constant 0 : i32
    %c0_i32_0 = arith.constant 0 : i32
    %c0_i32_1 = arith.constant 0 : i32
    %c0_i32_2 = arith.constant 0 : i32
    return %c0_i32, %c0_i32_0, %c0_i32_1 : i32, i32, i32
  }
  func.func @transform_10(%arg0: i32) -> (i32, i32, i32) {
    %c0_i32 = arith.constant 0 : i32
    %c0_i32_0 = arith.constant 0 : i32
    %c0_i32_1 = arith.constant 0 : i32
    %c0_i32_2 = arith.constant 0 : i32
    return %c0_i32, %c0_i32_0, %c0_i32_1 : i32, i32, i32
  }
  func.func @transform_11(%arg0: i32) -> (i32, i32, i32) {
    %c0_i32 = arith.constant 0 : i32
    %c0_i32_0 = arith.constant 0 : i32
    %c0_i32_1 = arith.constant 0 : i32
    %c0_i32_2 = arith.constant 0 : i32
    return %c0_i32, %c0_i32_0, %c0_i32_1 : i32, i32, i32
  }
  func.func @transform_12(%arg0: i32) -> (i32, i32) {
    %c0_i32 = arith.constant 0 : i32
    %c0_i32_0 = arith.constant 0 : i32
    %c0_i32_1 = arith.constant 0 : i32
    return %c0_i32, %c0_i32_0 : i32, i32
  }
  func.func @transform_13(%arg0: i32) -> (i32, i32) {
    %c0_i32 = arith.constant 0 : i32
    %c0_i32_0 = arith.constant 0 : i32
    %c0_i32_1 = arith.constant 0 : i32
    return %c0_i32, %c0_i32_0 : i32, i32
  }
  func.func @transform_14(%arg0: i32) -> (i32, i32) {
    %c0_i32 = arith.constant 0 : i32
    %c0_i32_0 = arith.constant 0 : i32
    %c0_i32_1 = arith.constant 0 : i32
    return %c0_i32, %c0_i32_0 : i32, i32
  }
  func.func @transform_15(%arg0: i32) -> (i32, i32) {
    %c0_i32 = arith.constant 0 : i32
    %c0_i32_0 = arith.constant 0 : i32
    %c0_i32_1 = arith.constant 0 : i32
    return %c0_i32, %c0_i32_0 : i32, i32
  }
  func.func @transform_16(%arg0: i32) -> (i32, i32) {
    %c0_i32 = arith.constant 0 : i32
    %c0_i32_0 = arith.constant 0 : i32
    %c0_i32_1 = arith.constant 0 : i32
    return %c0_i32, %c0_i32_0 : i32, i32
  }
  func.func @transform_17(%arg0: i32) -> (i32, i32) {
    %c0_i32 = arith.constant 0 : i32
    %c0_i32_0 = arith.constant 0 : i32
    %c0_i32_1 = arith.constant 0 : i32
    return %c0_i32, %c0_i32_0 : i32, i32
  }
  func.func @transform_18(%arg0: i32) -> (i32, i32) {
    %c0_i32 = arith.constant 0 : i32
    %c0_i32_0 = arith.constant 0 : i32
    %c0_i32_1 = arith.constant 0 : i32
    return %c0_i32, %c0_i32_0 : i32, i32
  }
  func.func @transform_19(%arg0: i32) -> (i32, i32) {
    %c0_i32 = arith.constant 0 : i32
    %c0_i32_0 = arith.constant 0 : i32
    %c0_i32_1 = arith.constant 0 : i32
    return %c0_i32, %c0_i32_0 : i32, i32
  }
  func.func @transform_20(%arg0: i32) -> (i32, i32) {
    %c0_i32 = arith.constant 0 : i32
    %c0_i32_0 = arith.constant 0 : i32
    %c0_i32_1 = arith.constant 0 : i32
    return %c0_i32, %c0_i32_0 : i32, i32
  }
  func.func @transform_21(%arg0: i32) -> (i32, i32) {
    %c0_i32 = arith.constant 0 : i32
    %c0_i32_0 = arith.constant 0 : i32
    %c0_i32_1 = arith.constant 0 : i32
    return %c0_i32, %c0_i32_0 : i32, i32
  }
  func.func @transform_22(%arg0: i32) -> (i32, i32) {
    %c0_i32 = arith.constant 0 : i32
    %c0_i32_0 = arith.constant 0 : i32
    %c0_i32_1 = arith.constant 0 : i32
    return %c0_i32, %c0_i32_0 : i32, i32
  }
  func.func @transform_23(%arg0: i32) -> (i32, i32) {
    %c0_i32 = arith.constant 0 : i32
    %c0_i32_0 = arith.constant 0 : i32
    %c0_i32_1 = arith.constant 0 : i32
    return %c0_i32, %c0_i32_0 : i32, i32
  }
  func.func @transform_24(%arg0: i32) -> (i32, i32) {
    %c0_i32 = arith.constant 0 : i32
    %c0_i32_0 = arith.constant 0 : i32
    %c0_i32_1 = arith.constant 0 : i32
    return %c0_i32, %c0_i32_0 : i32, i32
  }
  func.func @transform_25(%arg0: i32) -> (i32, i32) {
    %c0_i32 = arith.constant 0 : i32
    %c0_i32_0 = arith.constant 0 : i32
    %c0_i32_1 = arith.constant 0 : i32
    return %c0_i32, %c0_i32_0 : i32, i32
  }
  func.func @transform_26(%arg0: i32) -> (i32, i32) {
    %c0_i32 = arith.constant 0 : i32
    %c0_i32_0 = arith.constant 0 : i32
    return %arg0, %c0_i32 : i32, i32
  }
}

</mosaic_0001>

<llo_original>
// kernel: gin_gcn_forward.1
$region0: #{gin_gcn_forward.1}
  #allocation0 [shape = 'u32[]', space=smem, size = 0x4, offset = 0x4, fixed_abs, tag = 'smem constant byte address 0x4 - core index']
  #allocation1 [shape = 'u32[144,128]{1,0:T(1,128)}', space=vmem, size = 0x12000, scoped, tag = 'internal scratch']
  #allocation2 [shape = 'f32[1,1]{1,0:T(1,128)S(1)}', space=vmem, size = 0x200, scoped, tag = 'scoped memory for gin_gcn_forward.1']
  %s0 = inlined_call_operand.vmem [shape: bf16[2,128,128], index: 0, kind: input, shape index: {}]
  %s1 = inlined_call_operand.vmem [shape: f32[2,128,78], index: 1, kind: input, shape index: {}]
  %s2 = inlined_call_operand.vmem [shape: bf16[2,128,128], index: 2, kind: input, shape index: {}]
  %s3 = inlined_call_operand.vmem [shape: f32[2,128,25], index: 3, kind: input, shape index: {}]
  %s4 = inlined_call_operand.vmem [shape: bf16[78,32], index: 4, kind: input, shape index: {}]
  %s5 = inlined_call_operand.vmem [shape: f32[1,32], index: 5, kind: input, shape index: {}]
  %s6 = inlined_call_operand.vmem [shape: bf16[4,32,32], index: 6, kind: input, shape index: {}]
  %s7 = inlined_call_operand.vmem [shape: f32[4,1,32], index: 7, kind: input, shape index: {}]
  %s8 = inlined_call_operand.vmem [shape: bf16[5,32,32], index: 8, kind: input, shape index: {}]
  %s9 = inlined_call_operand.vmem [shape: f32[5,1,32], index: 9, kind: input, shape index: {}]
  %s10 = inlined_call_operand.vmem [shape: f32[5,1,32], index: 10, kind: input, shape index: {}]
  %s11 = inlined_call_operand.vmem [shape: f32[5,1,32], index: 11, kind: input, shape index: {}]
  %s12 = inlined_call_operand.vmem [shape: bf16[32,128], index: 12, kind: input, shape index: {}]
  %s13 = inlined_call_operand.vmem [shape: f32[1,128], index: 13, kind: input, shape index: {}]
  %s14 = inlined_call_operand.vmem [shape: bf16[25,25], index: 14, kind: input, shape index: {}]
  %s15 = inlined_call_operand.vmem [shape: f32[1,25], index: 15, kind: input, shape index: {}]
  %s16 = inlined_call_operand.vmem [shape: bf16[25,64], index: 16, kind: input, shape index: {}]
  %s17 = inlined_call_operand.vmem [shape: f32[1,64], index: 17, kind: input, shape index: {}]
  %s18 = inlined_call_operand.vmem [shape: bf16[64,128], index: 18, kind: input, shape index: {}]
  %s19 = inlined_call_operand.vmem [shape: f32[1,128], index: 19, kind: input, shape index: {}]
  %s20 = inlined_call_operand.vmem [shape: bf16[256,1024], index: 20, kind: input, shape index: {}]
  %s21 = inlined_call_operand.vmem [shape: f32[1,1024], index: 21, kind: input, shape index: {}]
  %s22 = inlined_call_operand.vmem [shape: bf16[1024,256], index: 22, kind: input, shape index: {}]
  %s23 = inlined_call_operand.vmem [shape: f32[1,256], index: 23, kind: input, shape index: {}]
  %s24 = inlined_call_operand.vmem [shape: bf16[256,1], index: 24, kind: input, shape index: {}]
  %s25 = inlined_call_operand.<no memory space> [shape: f32[1,1], index: 25, kind: input, shape index: {}]
  %s26 = inlined_call_operand.vmem [shape: f32[32,1], index: 26, kind: output, shape index: {}]
  %s27 = sld [smem:[#allocation0]]
  $region137: #{gin_gcn_forward.1} parent=0
    _
  %s29 = ssub.s32 1, %s27
  %s30 = scalar_select 0, %s29, %s27
  %v31 = vstv %s25
  %32 = vst [vmem:[#allocation2] sm:$0x1] %v31
  loop: start=0, step=1, limit=4
  $region2: #{gin_gcn_forward.1} parent=0 // loop_pre_header
    _
  $region3: #{gin_gcn_forward.1} parent=0 // loop_header
    %s34 = sphi 0, %s38
    %p35 = scmp.ge.s32.totalorder %s34, 4
    %s44 = sphi 0, %s46
    %s47 = sphi 0, %s44
    %s48 = sphi 0, %s47
    %s64 = sphi 0, %s48
    %s70 = sphi 0, %s72
    %s73 = sphi 0, %s70
    %s74 = sphi 0, %s73
    %s90 = sphi 0, %s74
    %s96 = sphi 0, %s98
    %s99 = sphi 0, %s96
    %s100 = sphi 0, %s99
    %s116 = sphi 0, %s100
    %s122 = sphi 0, %s124
    %s125 = sphi 0, %s122
    %s126 = sphi 0, %s125
    %s142 = sphi 0, %s126
    %s146 = sphi 0, %s146
    %s148 = sphi 0, %s146
    %s149 = sphi 0, %s148
    %s163 = sphi 0, %s149
    %s167 = sphi 0, %s167
    %s169 = sphi 0, %s167
    %s170 = sphi 0, %s169
    %s184 = sphi 0, %s170
    %s188 = sphi 0, %s188
    %s190 = sphi 0, %s188
    %s191 = sphi 0, %s190
    %s205 = sphi 0, %s191
    %s209 = sphi 0, %s209
    %s211 = sphi 0, %s209
    %s212 = sphi 0, %s211
    %s226 = sphi 0, %s212
    %s230 = sphi 0, %s230
    %s232 = sphi 0, %s230
    %s233 = sphi 0, %s232
    %s247 = sphi 0, %s233
    %s251 = sphi 0, %s251
    %s253 = sphi 0, %s251
    %s254 = sphi 0, %s253
    %s268 = sphi 0, %s254
    %s272 = sphi 0, %s272
    %s274 = sphi 0, %s272
    %s275 = sphi 0, %s274
    %s289 = sphi 0, %s275
    %s293 = sphi 0, %s293
    %s295 = sphi 0, %s293
    %s296 = sphi 0, %s295
    %s310 = sphi 0, %s296
    %s314 = sphi 0, %s314
    %s316 = sphi 0, %s314
    %s317 = sphi 0, %s316
    %s331 = sphi 0, %s317
    %s335 = sphi 0, %s335
    %s337 = sphi 0, %s335
    %s338 = sphi 0, %s337
    %s352 = sphi 0, %s338
    %s356 = sphi 0, %s356
    %s358 = sphi 0, %s356
    %s359 = sphi 0, %s358
    %s373 = sphi 0, %s359
    %s377 = sphi 0, %s377
    %s379 = sphi 0, %s377
    %s380 = sphi 0, %s379
    %s394 = sphi 0, %s380
    %s398 = sphi 0, %s398
    %s400 = sphi 0, %s398
    %s401 = sphi 0, %s400
    %s415 = sphi 0, %s401
    %s419 = sphi 0, %s419
    %s421 = sphi 0, %s419
    %s422 = sphi 0, %s421
    %s436 = sphi 0, %s422
    %s440 = sphi 0, %s440
    %s442 = sphi 0, %s440
    %s443 = sphi 0, %s442
    %s457 = sphi 0, %s443
    %s461 = sphi 0, %s461
    %s463 = sphi 0, %s461
    %s464 = sphi 0, %s463
    %s478 = sphi 0, %s464
    %s482 = sphi 0, %s482
    %s484 = sphi 0, %s482
    %s485 = sphi 0, %s484
    %s499 = sphi 0, %s485
    %s503 = sphi 0, %s503
    %s505 = sphi 0, %s503
    %s506 = sphi 0, %s505
    %s520 = sphi 0, %s506
    %s524 = sphi 0, %s524
    %s526 = sphi 0, %s524
    %s527 = sphi 0, %s526
    %s541 = sphi 0, %s527
    %s545 = sphi 0, %s545
    %s547 = sphi 0, %s545
    %s548 = sphi 0, %s547
    %s562 = sphi 0, %s548
    %s566 = sphi 0, %s566
    %s568 = sphi 0, %s566
    %s569 = sphi 0, %s568
    %s583 = sphi 0, %s569
    %s587 = sphi 0, %s587
    %s589 = sphi 0, %s587
    %s590 = sphi 0, %s589
    %s604 = sphi 0, %s590
    %s610 = sphi 0, %s612
    %s613 = sphi 0, %s610
    %s614 = sphi 0, %s613
    %s630 = sphi 0, %s614
  $region4: #{gin_gcn_forward.1} parent=0 // loop_header_branch
    %37 = sbr.rel (%p35) target = $region8
  $region5: #{gin_gcn_forward.1} parent=0 // loop_body
    %s39 = ssub.s32 %s34, 1
    %s40 = ssub.s32 %s34, 2
    %s41 = sadd.s32 %s34, 1
    %s42 = ssub.s32 %s34, %s41
    %p43 = scmp.eq.s32.totalorder %s42, 0
    %s45 = sadd.s32 %s44, 1
    %s46 = scalar_select %p43, %s44, %s45
    %p49 = pneg %p43
    %p50 = scmp.eq.s32.totalorder %s34, 1
    %p51 = por %p49, %p50
    %p52 = scmp.ne.s32.totalorder %s44, %s47
    %p53 = scmp.eq.s32.totalorder %s34, 0
    %p54 = por %p52, %p53
    %p55 = scmp.ne.s32.totalorder %s44, %s47
    %p56 = scmp.eq.s32.totalorder %s39, 1
    %p57 = por %p55, %p56
    %p58 = scmp.ne.s32.totalorder %s47, %s48
    %p59 = scmp.eq.s32.totalorder %s39, 0
    %p60 = por %p58, %p59
    %p61 = scmp.ne.s32.totalorder %s47, %s48
    %p62 = scmp.eq.s32.totalorder %s40, 1
    %p63 = por %p61, %p62
    %p65 = scmp.ne.s32.totalorder %s48, %s64
    %p66 = scmp.eq.s32.totalorder %s40, 0
    %p67 = por %p65, %p66
    %s68 = ssub.s32 %s34, %s41
    %p69 = scmp.eq.s32.totalorder %s68, 0
    %s71 = sadd.s32 %s70, 1
    %s72 = scalar_select %p69, %s70, %s71
    %p75 = pneg %p69
    %p76 = scmp.eq.s32.totalorder %s34, 1
    %p77 = por %p75, %p76
    %p78 = scmp.ne.s32.totalorder %s70, %s73
    %p79 = scmp.eq.s32.totalorder %s34, 0
    %p80 = por %p78, %p79
    %p81 = scmp.ne.s32.totalorder %s70, %s73
    %p82 = scmp.eq.s32.totalorder %s39, 1
    %p83 = por %p81, %p82
    %p84 = scmp.ne.s32.totalorder %s73, %s74
    %p85 = scmp.eq.s32.totalorder %s39, 0
    %p86 = por %p84, %p85
    %p87 = scmp.ne.s32.totalorder %s73, %s74
    %p88 = scmp.eq.s32.totalorder %s40, 1
    %p89 = por %p87, %p88
    %p91 = scmp.ne.s32.totalorder %s74, %s90
    %p92 = scmp.eq.s32.totalorder %s40, 0
    %p93 = por %p91, %p92
    %s94 = ssub.s32 %s34, %s41
    %p95 = scmp.eq.s32.totalorder %s94, 0
    %s97 = sadd.s32 %s96, 1
    %s98 = scalar_select %p95, %s96, %s97
    %p101 = pneg %p95
    %p102 = scmp.eq.s32.totalorder %s34, 1
    %p103 = por %p101, %p102
    %p104 = scmp.ne.s32.totalorder %s96, %s99
    %p105 = scmp.eq.s32.totalorder %s34, 0
    %p106 = por %p104, %p105
    %p107 = scmp.ne.s32.totalorder %s96, %s99
    %p108 = scmp.eq.s32.totalorder %s39, 1
    %p109 = por %p107, %p108
    %p110 = scmp.ne.s32.totalorder %s99, %s100
    %p111 = scmp.eq.s32.totalorder %s39, 0
    %p112 = por %p110, %p111
    %p113 = scmp.ne.s32.totalorder %s99, %s100
    %p114 = scmp.eq.s32.totalorder %s40, 1
    %p115 = por %p113, %p114
    %p117 = scmp.ne.s32.totalorder %s100, %s116
    %p118 = scmp.eq.s32.totalorder %s40, 0
    %p119 = por %p117, %p118
    %s120 = ssub.s32 %s34, %s41
    %p121 = scmp.eq.s32.totalorder %s120, 0
    %s123 = sadd.s32 %s122, 1
    %s124 = scalar_select %p121, %s122, %s123
    %p127 = pneg %p121
    %p128 = scmp.eq.s32.totalorder %s34, 1
    %p129 = por %p127, %p128
    %p130 = scmp.ne.s32.totalorder %s122, %s125
    %p131 = scmp.eq.s32.totalorder %s34, 0
    %p132 = por %p130, %p131
    %p133 = scmp.ne.s32.totalorder %s122, %s125
    %p134 = scmp.eq.s32.totalorder %s39, 1
    %p135 = por %p133, %p134
    %p136 = scmp.ne.s32.totalorder %s125, %s126
    %p137 = scmp.eq.s32.totalorder %s39, 0
    %p138 = por %p136, %p137
    %p139 = scmp.ne.s32.totalorder %s125, %s126
    %p140 = scmp.eq.s32.totalorder %s40, 1
    %p141 = por %p139, %p140
    %p143 = scmp.ne.s32.totalorder %s126, %s142
    %p144 = scmp.eq.s32.totalorder %s40, 0
    %p145 = por %p143, %p144
    %s147 = sadd.s32 %s146, 1
    %p150 = scmp.eq.s32.totalorder %s34, 1
    %p151 = scmp.ne.s32.totalorder %s146, %s148
    %p152 = scmp.eq.s32.totalorder %s34, 0
    %p153 = por %p151, %p152
    %p154 = scmp.ne.s32.totalorder %s146, %s148
    %p155 = scmp.eq.s32.totalorder %s39, 1
    %p156 = por %p154, %p155
    %p157 = scmp.ne.s32.totalorder %s148, %s149
    %p158 = scmp.eq.s32.totalorder %s39, 0
    %p159 = por %p157, %p158
    %p160 = scmp.ne.s32.totalorder %s148, %s149
    %p161 = scmp.eq.s32.totalorder %s40, 1
    %p162 = por %p160, %p161
    %p164 = scmp.ne.s32.totalorder %s149, %s163
    %p165 = scmp.eq.s32.totalorder %s40, 0
    %p166 = por %p164, %p165
    %s168 = sadd.s32 %s167, 1
    %p171 = scmp.eq.s32.totalorder %s34, 1
    %p172 = scmp.ne.s32.totalorder %s167, %s169
    %p173 = scmp.eq.s32.totalorder %s34, 0
    %p174 = por %p172, %p173
    %p175 = scmp.ne.s32.totalorder %s167, %s169
    %p176 = scmp.eq.s32.totalorder %s39, 1
    %p177 = por %p175, %p176
    %p178 = scmp.ne.s32.totalorder %s169, %s170
    %p179 = scmp.eq.s32.totalorder %s39, 0
    %p180 = por %p178, %p179
    %p181 = scmp.ne.s32.totalorder %s169, %s170
    %p182 = scmp.eq.s32.totalorder %s40, 1
    %p183 = por %p181, %p182
    %p185 = scmp.ne.s32.totalorder %s170, %s184
    %p186 = scmp.eq.s32.totalorder %s40, 0
    %p187 = por %p185, %p186
    %s189 = sadd.s32 %s188, 1
    %p192 = scmp.eq.s32.totalorder %s34, 1
    %p193 = scmp.ne.s32.totalorder %s188, %s190
    %p194 = scmp.eq.s32.totalorder %s34, 0
    %p195 = por %p193, %p194
    %p196 = scmp.ne.s32.totalorder %s188, %s190
    %p197 = scmp.eq.s32.totalorder %s39, 1
    %p198 = por %p196, %p197
    %p199 = scmp.ne.s32.totalorder %s190, %s191
    %p200 = scmp.eq.s32.totalorder %s39, 0
    %p201 = por %p199, %p200
    %p202 = scmp.ne.s32.totalorder %s190, %s191
    %p203 = scmp.eq.s32.totalorder %s40, 1
    %p204 = por %p202, %p203
    %p206 = scmp.ne.s32.totalorder %s191, %s205
    %p207 = scmp.eq.s32.totalorder %s40, 0
    %p208 = por %p206, %p207
    %s210 = sadd.s32 %s209, 1
    %p213 = scmp.eq.s32.totalorder %s34, 1
    %p214 = scmp.ne.s32.totalorder %s209, %s211
    %p215 = scmp.eq.s32.totalorder %s34, 0
    %p216 = por %p214, %p215
    %p217 = scmp.ne.s32.totalorder %s209, %s211
    %p218 = scmp.eq.s32.totalorder %s39, 1
    %p219 = por %p217, %p218
    %p220 = scmp.ne.s32.totalorder %s211, %s212
    %p221 = scmp.eq.s32.totalorder %s39, 0
    %p222 = por %p220, %p221
    %p223 = scmp.ne.s32.totalorder %s211, %s212
    %p224 = scmp.eq.s32.totalorder %s40, 1
    %p225 = por %p223, %p224
    %p227 = scmp.ne.s32.totalorder %s212, %s226
    %p228 = scmp.eq.s32.totalorder %s40, 0
    %p229 = por %p227, %p228
    %s231 = sadd.s32 %s230, 1
    %p234 = scmp.eq.s32.totalorder %s34, 1
    %p235 = scmp.ne.s32.totalorder %s230, %s232
    %p236 = scmp.eq.s32.totalorder %s34, 0
    %p237 = por %p235, %p236
    %p238 = scmp.ne.s32.totalorder %s230, %s232
    %p239 = scmp.eq.s32.totalorder %s39, 1
    %p240 = por %p238, %p239
    %p241 = scmp.ne.s32.totalorder %s232, %s233
    %p242 = scmp.eq.s32.totalorder %s39, 0
    %p243 = por %p241, %p242
    %p244 = scmp.ne.s32.totalorder %s232, %s233
    %p245 = scmp.eq.s32.totalorder %s40, 1
    %p246 = por %p244, %p245
    %p248 = scmp.ne.s32.totalorder %s233, %s247
    %p249 = scmp.eq.s32.totalorder %s40, 0
    %p250 = por %p248, %p249
    %s252 = sadd.s32 %s251, 1
    %p255 = scmp.eq.s32.totalorder %s34, 1
    %p256 = scmp.ne.s32.totalorder %s251, %s253
    %p257 = scmp.eq.s32.totalorder %s34, 0
    %p258 = por %p256, %p257
    %p259 = scmp.ne.s32.totalorder %s251, %s253
    %p260 = scmp.eq.s32.totalorder %s39, 1
    %p261 = por %p259, %p260
    %p262 = scmp.ne.s32.totalorder %s253, %s254
    %p263 = scmp.eq.s32.totalorder %s39, 0
    %p264 = por %p262, %p263
    %p265 = scmp.ne.s32.totalorder %s253, %s254
    %p266 = scmp.eq.s32.totalorder %s40, 1
    %p267 = por %p265, %p266
    %p269 = scmp.ne.s32.totalorder %s254, %s268
    %p270 = scmp.eq.s32.totalorder %s40, 0
    %p271 = por %p269, %p270
    %s273 = sadd.s32 %s272, 1
    %p276 = scmp.eq.s32.totalorder %s34, 1
    %p277 = scmp.ne.s32.totalorder %s272, %s274
    %p278 = scmp.eq.s32.totalorder %s34, 0
    %p279 = por %p277, %p278
    %p280 = scmp.ne.s32.totalorder %s272, %s274
    %p281 = scmp.eq.s32.totalorder %s39, 1
    %p282 = por %p280, %p281
    %p283 = scmp.ne.s32.totalorder %s274, %s275
    %p284 = scmp.eq.s32.totalorder %s39, 0
    %p285 = por %p283, %p284
    %p286 = scmp.ne.s32.totalorder %s274, %s275
    %p287 = scmp.eq.s32.totalorder %s40, 1
    %p288 = por %p286, %p287
    %p290 = scmp.ne.s32.totalorder %s275, %s289
    %p291 = scmp.eq.s32.totalorder %s40, 0
    %p292 = por %p290, %p291
    %s294 = sadd.s32 %s293, 1
    %p297 = scmp.eq.s32.totalorder %s34, 1
    %p298 = scmp.ne.s32.totalorder %s293, %s295
    %p299 = scmp.eq.s32.totalorder %s34, 0
    %p300 = por %p298, %p299
    %p301 = scmp.ne.s32.totalorder %s293, %s295
    %p302 = scmp.eq.s32.totalorder %s39, 1
    %p303 = por %p301, %p302
    %p304 = scmp.ne.s32.totalorder %s295, %s296
    %p305 = scmp.eq.s32.totalorder %s39, 0
    %p306 = por %p304, %p305
    %p307 = scmp.ne.s32.totalorder %s295, %s296
    %p308 = scmp.eq.s32.totalorder %s40, 1
    %p309 = por %p307, %p308
    %p311 = scmp.ne.s32.totalorder %s296, %s310
    %p312 = scmp.eq.s32.totalorder %s40, 0
    %p313 = por %p311, %p312
    %s315 = sadd.s32 %s314, 1
    %p318 = scmp.eq.s32.totalorder %s34, 1
    %p319 = scmp.ne.s32.totalorder %s314, %s316
    %p320 = scmp.eq.s32.totalorder %s34, 0
    %p321 = por %p319, %p320
    %p322 = scmp.ne.s32.totalorder %s314, %s316
    %p323 = scmp.eq.s32.totalorder %s39, 1
    %p324 = por %p322, %p323
    %p325 = scmp.ne.s32.totalorder %s316, %s317
    %p326 = scmp.eq.s32.totalorder %s39, 0
    %p327 = por %p325, %p326
    %p328 = scmp.ne.s32.totalorder %s316, %s317
    %p329 = scmp.eq.s32.totalorder %s40, 1
    %p330 = por %p328, %p329
    %p332 = scmp.ne.s32.totalorder %s317, %s331
    %p333 = scmp.eq.s32.totalorder %s40, 0
    %p334 = por %p332, %p333
    %s336 = sadd.s32 %s335, 1
    %p339 = scmp.eq.s32.totalorder %s34, 1
    %p340 = scmp.ne.s32.totalorder %s335, %s337
    %p341 = scmp.eq.s32.totalorder %s34, 0
    %p342 = por %p340, %p341
    %p343 = scmp.ne.s32.totalorder %s335, %s337
    %p344 = scmp.eq.s32.totalorder %s39, 1
    %p345 = por %p343, %p344
    %p346 = scmp.ne.s32.totalorder %s337, %s338
    %p347 = scmp.eq.s32.totalorder %s39, 0
    %p348 = por %p346, %p347
    %p349 = scmp.ne.s32.totalorder %s337, %s338
    %p350 = scmp.eq.s32.totalorder %s40, 1
    %p351 = por %p349, %p350
    %p353 = scmp.ne.s32.totalorder %s338, %s352
    %p354 = scmp.eq.s32.totalorder %s40, 0
    %p355 = por %p353, %p354
    %s357 = sadd.s32 %s356, 1
    %p360 = scmp.eq.s32.totalorder %s34, 1
    %p361 = scmp.ne.s32.totalorder %s356, %s358
    %p362 = scmp.eq.s32.totalorder %s34, 0
    %p363 = por %p361, %p362
    %p364 = scmp.ne.s32.totalorder %s356, %s358
    %p365 = scmp.eq.s32.totalorder %s39, 1
    %p366 = por %p364, %p365
    %p367 = scmp.ne.s32.totalorder %s358, %s359
    %p368 = scmp.eq.s32.totalorder %s39, 0
    %p369 = por %p367, %p368
    %p370 = scmp.ne.s32.totalorder %s358, %s359
    %p371 = scmp.eq.s32.totalorder %s40, 1
    %p372 = por %p370, %p371
    %p374 = scmp.ne.s32.totalorder %s359, %s373
    %p375 = scmp.eq.s32.totalorder %s40, 0
    %p376 = por %p374, %p375
    %s378 = sadd.s32 %s377, 1
    %p381 = scmp.eq.s32.totalorder %s34, 1
    %p382 = scmp.ne.s32.totalorder %s377, %s379
    %p383 = scmp.eq.s32.totalorder %s34, 0
    %p384 = por %p382, %p383
    %p385 = scmp.ne.s32.totalorder %s377, %s379
    %p386 = scmp.eq.s32.totalorder %s39, 1
    %p387 = por %p385, %p386
    %p388 = scmp.ne.s32.totalorder %s379, %s380
    %p389 = scmp.eq.s32.totalorder %s39, 0
    %p390 = por %p388, %p389
    %p391 = scmp.ne.s32.totalorder %s379, %s380
    %p392 = scmp.eq.s32.totalorder %s40, 1
    %p393 = por %p391, %p392
    %p395 = scmp.ne.s32.totalorder %s380, %s394
    %p396 = scmp.eq.s32.totalorder %s40, 0
    %p397 = por %p395, %p396
    %s399 = sadd.s32 %s398, 1
    %p402 = scmp.eq.s32.totalorder %s34, 1
    %p403 = scmp.ne.s32.totalorder %s398, %s400
    %p404 = scmp.eq.s32.totalorder %s34, 0
    %p405 = por %p403, %p404
    %p406 = scmp.ne.s32.totalorder %s398, %s400
    %p407 = scmp.eq.s32.totalorder %s39, 1
    %p408 = por %p406, %p407
    %p409 = scmp.ne.s32.totalorder %s400, %s401
    %p410 = scmp.eq.s32.totalorder %s39, 0
    %p411 = por %p409, %p410
    %p412 = scmp.ne.s32.totalorder %s400, %s401
    %p413 = scmp.eq.s32.totalorder %s40, 1
    %p414 = por %p412, %p413
    %p416 = scmp.ne.s32.totalorder %s401, %s415
    %p417 = scmp.eq.s32.totalorder %s40, 0
    %p418 = por %p416, %p417
    %s420 = sadd.s32 %s419, 1
    %p423 = scmp.eq.s32.totalorder %s34, 1
    %p424 = scmp.ne.s32.totalorder %s419, %s421
    %p425 = scmp.eq.s32.totalorder %s34, 0
    %p426 = por %p424, %p425
    %p427 = scmp.ne.s32.totalorder %s419, %s421
    %p428 = scmp.eq.s32.totalorder %s39, 1
    %p429 = por %p427, %p428
    %p430 = scmp.ne.s32.totalorder %s421, %s422
    %p431 = scmp.eq.s32.totalorder %s39, 0
    %p432 = por %p430, %p431
    %p433 = scmp.ne.s32.totalorder %s421, %s422
    %p434 = scmp.eq.s32.totalorder %s40, 1
    %p435 = por %p433, %p434
    %p437 = scmp.ne.s32.totalorder %s422, %s436
    %p438 = scmp.eq.s32.totalorder %s40, 0
    %p439 = por %p437, %p438
    %s441 = sadd.s32 %s440, 1
    %p444 = scmp.eq.s32.totalorder %s34, 1
    %p445 = scmp.ne.s32.totalorder %s440, %s442
    %p446 = scmp.eq.s32.totalorder %s34, 0
    %p447 = por %p445, %p446
    %p448 = scmp.ne.s32.totalorder %s440, %s442
    %p449 = scmp.eq.s32.totalorder %s39, 1
    %p450 = por %p448, %p449
    %p451 = scmp.ne.s32.totalorder %s442, %s443
    %p452 = scmp.eq.s32.totalorder %s39, 0
    %p453 = por %p451, %p452
    %p454 = scmp.ne.s32.totalorder %s442, %s443
    %p455 = scmp.eq.s32.totalorder %s40, 1
    %p456 = por %p454, %p455
    %p458 = scmp.ne.s32.totalorder %s443, %s457
    %p459 = scmp.eq.s32.totalorder %s40, 0
    %p460 = por %p458, %p459
    %s462 = sadd.s32 %s461, 1
    %p465 = scmp.eq.s32.totalorder %s34, 1
    %p466 = scmp.ne.s32.totalorder %s461, %s463
    %p467 = scmp.eq.s32.totalorder %s34, 0
    %p468 = por %p466, %p467
    %p469 = scmp.ne.s32.totalorder %s461, %s463
    %p470 = scmp.eq.s32.totalorder %s39, 1
    %p471 = por %p469, %p470
    %p472 = scmp.ne.s32.totalorder %s463, %s464
    %p473 = scmp.eq.s32.totalorder %s39, 0
    %p474 = por %p472, %p473
    %p475 = scmp.ne.s32.totalorder %s463, %s464
    %p476 = scmp.eq.s32.totalorder %s40, 1
    %p477 = por %p475, %p476
    %p479 = scmp.ne.s32.totalorder %s464, %s478
    %p480 = scmp.eq.s32.totalorder %s40, 0
    %p481 = por %p479, %p480
    %s483 = sadd.s32 %s482, 1
    %p486 = scmp.eq.s32.totalorder %s34, 1
    %p487 = scmp.ne.s32.totalorder %s482, %s484
    %p488 = scmp.eq.s32.totalorder %s34, 0
    %p489 = por %p487, %p488
    %p490 = scmp.ne.s32.totalorder %s482, %s484
    %p491 = scmp.eq.s32.totalorder %s39, 1
    %p492 = por %p490, %p491
    %p493 = scmp.ne.s32.totalorder %s484, %s485
    %p494 = scmp.eq.s32.totalorder %s39, 0
    %p495 = por %p493, %p494
    %p496 = scmp.ne.s32.totalorder %s484, %s485
    %p497 = scmp.eq.s32.totalorder %s40, 1
    %p498 = por %p496, %p497
    %p500 = scmp.ne.s32.totalorder %s485, %s499
    %p501 = scmp.eq.s32.totalorder %s40, 0
    %p502 = por %p500, %p501
    %s504 = sadd.s32 %s503, 1
    %p507 = scmp.eq.s32.totalorder %s34, 1
    %p508 = scmp.ne.s32.totalorder %s503, %s505
    %p509 = scmp.eq.s32.totalorder %s34, 0
    %p510 = por %p508, %p509
    %p511 = scmp.ne.s32.totalorder %s503, %s505
    %p512 = scmp.eq.s32.totalorder %s39, 1
    %p513 = por %p511, %p512
    %p514 = scmp.ne.s32.totalorder %s505, %s506
    %p515 = scmp.eq.s32.totalorder %s39, 0
    %p516 = por %p514, %p515
    %p517 = scmp.ne.s32.totalorder %s505, %s506
    %p518 = scmp.eq.s32.totalorder %s40, 1
    %p519 = por %p517, %p518
    %p521 = scmp.ne.s32.totalorder %s506, %s520
    %p522 = scmp.eq.s32.totalorder %s40, 0
    %p523 = por %p521, %p522
    %s525 = sadd.s32 %s524, 1
    %p528 = scmp.eq.s32.totalorder %s34, 1
    %p529 = scmp.ne.s32.totalorder %s524, %s526
    %p530 = scmp.eq.s32.totalorder %s34, 0
    %p531 = por %p529, %p530
    %p532 = scmp.ne.s32.totalorder %s524, %s526
    %p533 = scmp.eq.s32.totalorder %s39, 1
    %p534 = por %p532, %p533
    %p535 = scmp.ne.s32.totalorder %s526, %s527
    %p536 = scmp.eq.s32.totalorder %s39, 0
    %p537 = por %p535, %p536
    %p538 = scmp.ne.s32.totalorder %s526, %s527
    %p539 = scmp.eq.s32.totalorder %s40, 1
    %p540 = por %p538, %p539
    %p542 = scmp.ne.s32.totalorder %s527, %s541
    %p543 = scmp.eq.s32.totalorder %s40, 0
    %p544 = por %p542, %p543
    %s546 = sadd.s32 %s545, 1
    %p549 = scmp.eq.s32.totalorder %s34, 1
    %p550 = scmp.ne.s32.totalorder %s545, %s547
    %p551 = scmp.eq.s32.totalorder %s34, 0
    %p552 = por %p550, %p551
    %p553 = scmp.ne.s32.totalorder %s545, %s547
    %p554 = scmp.eq.s32.totalorder %s39, 1
    %p555 = por %p553, %p554
    %p556 = scmp.ne.s32.totalorder %s547, %s548
    %p557 = scmp.eq.s32.totalorder %s39, 0
    %p558 = por %p556, %p557
    %p559 = scmp.ne.s32.totalorder %s547, %s548
    %p560 = scmp.eq.s32.totalorder %s40, 1
    %p561 = por %p559, %p560
    %p563 = scmp.ne.s32.totalorder %s548, %s562
    %p564 = scmp.eq.s32.totalorder %s40, 0
    %p565 = por %p563, %p564
    %s567 = sadd.s32 %s566, 1
    %p570 = scmp.eq.s32.totalorder %s34, 1
    %p571 = scmp.ne.s32.totalorder %s566, %s568
    %p572 = scmp.eq.s32.totalorder %s34, 0
    %p573 = por %p571, %p572
    %p574 = scmp.ne.s32.totalorder %s566, %s568
    %p575 = scmp.eq.s32.totalorder %s39, 1
    %p576 = por %p574, %p575
    %p577 = scmp.ne.s32.totalorder %s568, %s569
    %p578 = scmp.eq.s32.totalorder %s39, 0
    %p579 = por %p577, %p578
    %p580 = scmp.ne.s32.totalorder %s568, %s569
    %p581 = scmp.eq.s32.totalorder %s40, 1
    %p582 = por %p580, %p581
    %p584 = scmp.ne.s32.totalorder %s569, %s583
    %p585 = scmp.eq.s32.totalorder %s40, 0
    %p586 = por %p584, %p585
    %s588 = sadd.s32 %s587, 1
    %p591 = scmp.eq.s32.totalorder %s34, 1
    %p592 = scmp.ne.s32.totalorder %s587, %s589
    %p593 = scmp.eq.s32.totalorder %s34, 0
    %p594 = por %p592, %p593
    %p595 = scmp.ne.s32.totalorder %s587, %s589
    %p596 = scmp.eq.s32.totalorder %s39, 1
    %p597 = por %p595, %p596
    %p598 = scmp.ne.s32.totalorder %s589, %s590
    %p599 = scmp.eq.s32.totalorder %s39, 0
    %p600 = por %p598, %p599
    %p601 = scmp.ne.s32.totalorder %s589, %s590
    %p602 = scmp.eq.s32.totalorder %s40, 1
    %p603 = por %p601, %p602
    %p605 = scmp.ne.s32.totalorder %s590, %s604
    %p606 = scmp.eq.s32.totalorder %s40, 0
    %p607 = por %p605, %p606
    %s608 = ssub.s32 %s34, %s41
    %p609 = scmp.eq.s32.totalorder %s608, 0
    %s611 = sadd.s32 %s610, 1
    %s612 = scalar_select %p609, %s610, %s611
    %p615 = pneg %p609
    %p616 = scmp.eq.s32.totalorder %s34, 1
    %p617 = por %p615, %p616
    %p618 = scmp.ne.s32.totalorder %s610, %s613
    %p619 = scmp.eq.s32.totalorder %s34, 0
    %p620 = por %p618, %p619
    %p621 = scmp.ne.s32.totalorder %s610, %s613
    %p622 = scmp.eq.s32.totalorder %s39, 1
    %p623 = por %p621, %p622
    %p624 = scmp.ne.s32.totalorder %s613, %s614
    %p625 = scmp.eq.s32.totalorder %s39, 0
    %p626 = por %p624, %p625
    %p627 = scmp.ne.s32.totalorder %s613, %s614
    %p628 = scmp.eq.s32.totalorder %s40, 1
    %p629 = por %p627, %p628
    %p631 = scmp.ne.s32.totalorder %s614, %s630
    %p632 = scmp.eq.s32.totalorder %s40, 0
    %p633 = por %p631, %p632
    %p634 = scmp.le.s32.totalorder 1, %s34
    %p635 = scmp.lt.s32.totalorder %s34, 3
    %p636 = pnand %p634, %p635
    %p637 = pneg %p636
    // Predicated region
    $region9: #{gin_gcn_forward.1} parent=5 // pred_check
      _
    $region10: #{gin_gcn_forward.1} parent=5 // pred_check_branch
      %639 = sbr.rel (%p636) target = $region12
    $region11: #{gin_gcn_forward.1} parent=5 // pred_region
      %s640 = ssub.s32 %s34, 1
      // Predicated region
      $region13: #{gin_gcn_forward.1} parent=11 // pred_check
        %p641 = pneg %p159
      $region14: #{gin_gcn_forward.1} parent=11 // pred_check_branch
        %643 = sbr.rel (%p641) target = $region16
      $region15: #{gin_gcn_forward.1} parent=11 // pred_region
        _
      $region16: #{gin_gcn_forward.1} parent=11 // pred_fallthru
        _
      // Predicated region
      $region17: #{gin_gcn_forward.1} parent=11 // pred_check
        %p644 = pneg %p180
      $region18: #{gin_gcn_forward.1} parent=11 // pred_check_branch
        %646 = sbr.rel (%p644) target = $region20
      $region19: #{gin_gcn_forward.1} parent=11 // pred_region
        _
      $region20: #{gin_gcn_forward.1} parent=11 // pred_fallthru
        _
      // Predicated region
      $region21: #{gin_gcn_forward.1} parent=11 // pred_check
        %p647 = pneg %p201
      $region22: #{gin_gcn_forward.1} parent=11 // pred_check_branch
        %649 = sbr.rel (%p647) target = $region24
      $region23: #{gin_gcn_forward.1} parent=11 // pred_region
        _
      $region24: #{gin_gcn_forward.1} parent=11 // pred_fallthru
        _
      // Predicated region
      $region25: #{gin_gcn_forward.1} parent=11 // pred_check
        %p650 = pneg %p222
      $region26: #{gin_gcn_forward.1} parent=11 // pred_check_branch
        %652 = sbr.rel (%p650) target = $region28
      $region27: #{gin_gcn_forward.1} parent=11 // pred_region
        _
      $region28: #{gin_gcn_forward.1} parent=11 // pred_fallthru
        _
      // Predicated region
      $region29: #{gin_gcn_forward.1} parent=11 // pred_check
        %p653 = pneg %p243
      $region30: #{gin_gcn_forward.1} parent=11 // pred_check_branch
        %655 = sbr.rel (%p653) target = $region32
      $region31: #{gin_gcn_forward.1} parent=11 // pred_region
        _
      $region32: #{gin_gcn_forward.1} parent=11 // pred_fallthru
        _
      // Predicated region
      $region33: #{gin_gcn_forward.1} parent=11 // pred_check
        %p656 = pneg %p264
      $region34: #{gin_gcn_forward.1} parent=11 // pred_check_branch
        %658 = sbr.rel (%p656) target = $region36
      $region35: #{gin_gcn_forward.1} parent=11 // pred_region
        _
      $region36: #{gin_gcn_forward.1} parent=11 // pred_fallthru
        _
      // Predicated region
      $region37: #{gin_gcn_forward.1} parent=11 // pred_check
        %p659 = pneg %p285
      $region38: #{gin_gcn_forward.1} parent=11 // pred_check_branch
        %661 = sbr.rel (%p659) target = $region40
      $region39: #{gin_gcn_forward.1} parent=11 // pred_region
        _
      $region40: #{gin_gcn_forward.1} parent=11 // pred_fallthru
        _
      // Predicated region
      $region41: #{gin_gcn_forward.1} parent=11 // pred_check
        %p662 = pneg %p306
      $region42: #{gin_gcn_forward.1} parent=11 // pred_check_branch
        %664 = sbr.rel (%p662) target = $region44
      $region43: #{gin_gcn_forward.1} parent=11 // pred_region
        _
      $region44: #{gin_gcn_forward.1} parent=11 // pred_fallthru
        _
      // Predicated region
      $region45: #{gin_gcn_forward.1} parent=11 // pred_check
        %p665 = pneg %p327
      $region46: #{gin_gcn_forward.1} parent=11 // pred_check_branch
        %667 = sbr.rel (%p665) target = $region48
      $region47: #{gin_gcn_forward.1} parent=11 // pred_region
        _
      $region48: #{gin_gcn_forward.1} parent=11 // pred_fallthru
        _
      // Predicated region
      $region49: #{gin_gcn_forward.1} parent=11 // pred_check
        %p668 = pneg %p348
      $region50: #{gin_gcn_forward.1} parent=11 // pred_check_branch
        %670 = sbr.rel (%p668) target = $region52
      $region51: #{gin_gcn_forward.1} parent=11 // pred_region
        _
      $region52: #{gin_gcn_forward.1} parent=11 // pred_fallthru
        _
      // Predicated region
      $region53: #{gin_gcn_forward.1} parent=11 // pred_check
        %p671 = pneg %p369
      $region54: #{gin_gcn_forward.1} parent=11 // pred_check_branch
        %673 = sbr.rel (%p671) target = $region56
      $region55: #{gin_gcn_forward.1} parent=11 // pred_region
        _
      $region56: #{gin_gcn_forward.1} parent=11 // pred_fallthru
        _
      // Predicated region
      $region57: #{gin_gcn_forward.1} parent=11 // pred_check
        %p674 = pneg %p390
      $region58: #{gin_gcn_forward.1} parent=11 // pred_check_branch
        %676 = sbr.rel (%p674) target = $region60
      $region59: #{gin_gcn_forward.1} parent=11 // pred_region
        _
      $region60: #{gin_gcn_forward.1} parent=11 // pred_fallthru
        _
      // Predicated region
      $region61: #{gin_gcn_forward.1} parent=11 // pred_check
        %p677 = pneg %p411
      $region62: #{gin_gcn_forward.1} parent=11 // pred_check_branch
        %679 = sbr.rel (%p677) target = $region64
      $region63: #{gin_gcn_forward.1} parent=11 // pred_region
        _
      $region64: #{gin_gcn_forward.1} parent=11 // pred_fallthru
        _
      // Predicated region
      $region65: #{gin_gcn_forward.1} parent=11 // pred_check
        %p680 = pneg %p432
      $region66: #{gin_gcn_forward.1} parent=11 // pred_check_branch
        %682 = sbr.rel (%p680) target = $region68
      $region67: #{gin_gcn_forward.1} parent=11 // pred_region
        _
      $region68: #{gin_gcn_forward.1} parent=11 // pred_fallthru
        _
      // Predicated region
      $region69: #{gin_gcn_forward.1} parent=11 // pred_check
        %p683 = pneg %p453
      $region70: #{gin_gcn_forward.1} parent=11 // pred_check_branch
        %685 = sbr.rel (%p683) target = $region72
      $region71: #{gin_gcn_forward.1} parent=11 // pred_region
        _
      $region72: #{gin_gcn_forward.1} parent=11 // pred_fallthru
        _
      // Predicated region
      $region73: #{gin_gcn_forward.1} parent=11 // pred_check
        %p686 = pneg %p474
      $region74: #{gin_gcn_forward.1} parent=11 // pred_check_branch
        %688 = sbr.rel (%p686) target = $region76
      $region75: #{gin_gcn_forward.1} parent=11 // pred_region
        _
      $region76: #{gin_gcn_forward.1} parent=11 // pred_fallthru
        _
      // Predicated region
      $region77: #{gin_gcn_forward.1} parent=11 // pred_check
        %p689 = pneg %p495
      $region78: #{gin_gcn_forward.1} parent=11 // pred_check_branch
        %691 = sbr.rel (%p689) target = $region80
      $region79: #{gin_gcn_forward.1} parent=11 // pred_region
        _
      $region80: #{gin_gcn_forward.1} parent=11 // pred_fallthru
        _
      // Predicated region
      $region81: #{gin_gcn_forward.1} parent=11 // pred_check
        %p692 = pneg %p516
      $region82: #{gin_gcn_forward.1} parent=11 // pred_check_branch
        %694 = sbr.rel (%p692) target = $region84
      $region83: #{gin_gcn_forward.1} parent=11 // pred_region
        _
      $region84: #{gin_gcn_forward.1} parent=11 // pred_fallthru
        _
      // Predicated region
      $region85: #{gin_gcn_forward.1} parent=11 // pred_check
        %p695 = pneg %p537
      $region86: #{gin_gcn_forward.1} parent=11 // pred_check_branch
        %697 = sbr.rel (%p695) target = $region88
      $region87: #{gin_gcn_forward.1} parent=11 // pred_region
        _
      $region88: #{gin_gcn_forward.1} parent=11 // pred_fallthru
        _
      // Predicated region
      $region89: #{gin_gcn_forward.1} parent=11 // pred_check
        %p698 = pneg %p558
      $region90: #{gin_gcn_forward.1} parent=11 // pred_check_branch
        %700 = sbr.rel (%p698) target = $region92
      $region91: #{gin_gcn_forward.1} parent=11 // pred_region
        _
      $region92: #{gin_gcn_forward.1} parent=11 // pred_fallthru
        _
      // Predicated region
      $region93: #{gin_gcn_forward.1} parent=11 // pred_check
        %p701 = pneg %p579
      $region94: #{gin_gcn_forward.1} parent=11 // pred_check_branch
        %703 = sbr.rel (%p701) target = $region96
      $region95: #{gin_gcn_forward.1} parent=11 // pred_region
        _
      $region96: #{gin_gcn_forward.1} parent=11 // pred_fallthru
        _
      // Predicated region
      $region97: #{gin_gcn_forward.1} parent=11 // pred_check
        %p704 = pneg %p600
      $region98: #{gin_gcn_forward.1} parent=11 // pred_check_branch
        %706 = sbr.rel (%p704) target = $region100
      $region99: #{gin_gcn_forward.1} parent=11 // pred_region
        _
      $region100: #{gin_gcn_forward.1} parent=11 // pred_fallthru
        _
    $region12: #{gin_gcn_forward.1} parent=5 // pred_fallthru
      _
    %p707 = scmp.lt.s32.totalorder %s34, 2
    // Predicated region
    $region101: #{gin_gcn_forward.1} parent=5 // pred_check
      %p708 = pneg %p707
    $region102: #{gin_gcn_forward.1} parent=5 // pred_check_branch
      %710 = sbr.rel (%p708) target = $region104
    $region103: #{gin_gcn_forward.1} parent=5 // pred_region
      // Predicated region
      $region105: #{gin_gcn_forward.1} parent=103 // pred_check
        %p711 = pneg %p54
      $region106: #{gin_gcn_forward.1} parent=103 // pred_check_branch
        %713 = sbr.rel (%p711) target = $region108
      $region107: #{gin_gcn_forward.1} parent=103 // pred_region
        %p714 = scmp.lt.s32.totalorder %s34, 1
        %s715 = scalar_select %p714, %s34, 1
        %s716 = smul.addr %s715, 16
        %s717 = smul.addr %s716, 4
        %s718 = scalar_lea.vmem %s0, %s717
      $region108: #{gin_gcn_forward.1} parent=103 // pred_fallthru
        _
      // Predicated region
      $region109: #{gin_gcn_forward.1} parent=103 // pred_check
        %p719 = pneg %p80
      $region110: #{gin_gcn_forward.1} parent=103 // pred_check_branch
        %721 = sbr.rel (%p719) target = $region112
      $region111: #{gin_gcn_forward.1} parent=103 // pred_region
        %p722 = scmp.lt.s32.totalorder %s34, 1
        %s723 = scalar_select %p722, %s34, 1
        %s724 = smul.addr %s723, 16
        %s725 = smul.addr %s724, 8
        %s726 = scalar_lea.vmem %s1, %s725
      $region112: #{gin_gcn_forward.1} parent=103 // pred_fallthru
        _
      // Predicated region
      $region113: #{gin_gcn_forward.1} parent=103 // pred_check
        %p727 = pneg %p106
      $region114: #{gin_gcn_forward.1} parent=103 // pred_check_branch
        %729 = sbr.rel (%p727) target = $region116
      $region115: #{gin_gcn_forward.1} parent=103 // pred_region
        %p730 = scmp.lt.s32.totalorder %s34, 1
        %s731 = scalar_select %p730, %s34, 1
        %s732 = smul.addr %s731, 16
        %s733 = smul.addr %s732, 4
        %s734 = scalar_lea.vmem %s2, %s733
      $region116: #{gin_gcn_forward.1} parent=103 // pred_fallthru
        _
      // Predicated region
      $region117: #{gin_gcn_forward.1} parent=103 // pred_check
        %p735 = pneg %p132
      $region118: #{gin_gcn_forward.1} parent=103 // pred_check_branch
        %737 = sbr.rel (%p735) target = $region120
      $region119: #{gin_gcn_forward.1} parent=103 // pred_region
        %p738 = scmp.lt.s32.totalorder %s34, 1
        %s739 = scalar_select %p738, %s34, 1
        %s740 = smul.addr %s739, 16
        %s741 = smul.addr %s740, 8
        %s742 = scalar_lea.vmem %s3, %s741
      $region120: #{gin_gcn_forward.1} parent=103 // pred_fallthru
        _
    $region104: #{gin_gcn_forward.1} parent=5 // pred_fallthru
      _
    %p743 = scmp.le.s32.totalorder 1, %s34
    %p744 = scmp.lt.s32.totalorder %s34, 3
    %p745 = pnand %p743, %p744
    %p746 = pneg %p745
    // Predicated region
    $region121: #{gin_gcn_forward.1} parent=5 // pred_check
      _
    $region122: #{gin_gcn_forward.1} parent=5 // pred_check_branch
      %748 = sbr.rel (%p745) target = $region124
    $region123: #{gin_gcn_forward.1} parent=5 // pred_region
      %s749 = ssub.s32 %s34, 1
      %p750 = scmp.lt.s32.totalorder %s39, 1
      %s751 = scalar_select %p750, %s39, 1
      %s752 = smul.addr %s751, 16
      %s753 = smul.addr %s752, 4
      %s754 = scalar_lea.vmem %s0, %s753
      %p755 = pneg %p60
      %p756 = pneg %p57
      %p757 = scmp.lt.s32.totalorder %s39, 1
      %s758 = scalar_select %p757, %s39, 1
      %s759 = smul.addr %s758, 16
      %s760 = smul.addr %s759, 8
      %s761 = scalar_lea.vmem %s1, %s760
      %p762 = pneg %p86
      %p763 = pneg %p83
      %p764 = scmp.lt.s32.totalorder %s39, 1
      %s765 = scalar_select %p764, %s39, 1
      %s766 = smul.addr %s765, 16
      %s767 = smul.addr %s766, 4
      %s768 = scalar_lea.vmem %s2, %s767
      %p769 = pneg %p112
      %p770 = pneg %p109
      %p771 = scmp.lt.s32.totalorder %s39, 1
      %s772 = scalar_select %p771, %s39, 1
      %s773 = smul.addr %s772, 16
      %s774 = smul.addr %s773, 8
      %s775 = scalar_lea.vmem %s3, %s774
      %p776 = pneg %p138
      %p777 = pneg %p135
      %p778 = pneg %p159
      %p779 = pneg %p156
      %p780 = pneg %p180
      %p781 = pneg %p177
      %p782 = pneg %p201
      %p783 = pneg %p198
      %p784 = pneg %p222
      %p785 = pneg %p219
      %p786 = pneg %p243
      %p787 = pneg %p240
      %p788 = pneg %p264
      %p789 = pneg %p261
      %p790 = pneg %p285
      %p791 = pneg %p282
      %p792 = pneg %p306
      %p793 = pneg %p303
      %p794 = pneg %p327
      %p795 = pneg %p324
      %p796 = pneg %p348
      %p797 = pneg %p345
      %p798 = pneg %p369
      %p799 = pneg %p366
      %p800 = pneg %p390
      %p801 = pneg %p387
      %p802 = pneg %p411
      %p803 = pneg %p408
      %p804 = pneg %p432
      %p805 = pneg %p429
      %p806 = pneg %p453
      %p807 = pneg %p450
      %p808 = pneg %p474
      %p809 = pneg %p471
      %p810 = pneg %p495
      %p811 = pneg %p492
      %p812 = pneg %p516
      %p813 = pneg %p513
      %p814 = pneg %p537
      %p815 = pneg %p534
      %p816 = pneg %p558
      %p817 = pneg %p555
      %p818 = pneg %p579
      %p819 = pneg %p576
      %p820 = pneg %p600
      %p821 = pneg %p597
      %p822 = pneg %p626
      %p823 = pneg %p623
      %s824 = smul.u32 2, %s39
      %p825 = scmp.lt.s32.totalorder %s824, 3
      %s826 = scalar_select %p825, %s824, 3
      %s827 = smul.addr %s826, 8
      %s828 = scalar_lea.vmem %s26, %s827
      %p829 = scmp.lt.s32.totalorder %s39, 1
      %s830 = scalar_select %p829, %s39, 1
      %s831 = smul.addr %s830, 16
      %s832 = smul.addr %s831, 4
      %s833 = scalar_lea.vmem %s0, %s832
      %p834 = scmp.lt.s32.totalorder %s39, 1
      %s835 = scalar_select %p834, %s39, 1
      %s836 = smul.addr %s835, 16
      %s837 = smul.addr %s836, 8
      %s838 = scalar_lea.vmem %s1, %s837
      %p839 = scmp.lt.s32.totalorder %s39, 1
      %s840 = scalar_select %p839, %s39, 1
      %s841 = smul.addr %s840, 16
      %s842 = smul.addr %s841, 4
      %s843 = scalar_lea.vmem %s2, %s842
      %p844 = scmp.lt.s32.totalorder %s39, 1
      %s845 = scalar_select %p844, %s39, 1
      %s846 = smul.addr %s845, 16
      %s847 = smul.addr %s846, 8
      %s848 = scalar_lea.vmem %s3, %s847
      %s849 = smul.u32 2, %s39
      %p850 = scmp.lt.s32.totalorder %s849, 3
      %s851 = scalar_select %p850, %s849, 3
      %s852 = smul.addr %s851, 8
      %s853 = scalar_lea.vmem %s26, %s852
      %s854 = smul.u32 2, %s39
      %v856 = vld [vmem:[%s833] sm:$0xf]
      %v857 = vld [vmem:[%s833 + $0x4] sm:$0xf]
      %v858 = vld [vmem:[%s833 + $0x8] sm:$0xf]
      %v859 = vld [vmem:[%s833 + $0xc] sm:$0xf]
      %v860 = vld [vmem:[%s833 + $0x10] sm:$0xf]
      %v861 = vld [vmem:[%s833 + $0x14] sm:$0xf]
      %v862 = vld [vmem:[%s833 + $0x18] sm:$0xf]
      %v863 = vld [vmem:[%s833 + $0x1c] sm:$0xf]
      %v864 = vld [vmem:[%s833 + $0x20] sm:$0xf]
      %v865 = vld [vmem:[%s833 + $0x24] sm:$0xf]
      %v866 = vld [vmem:[%s833 + $0x28] sm:$0xf]
      %v867 = vld [vmem:[%s833 + $0x2c] sm:$0xf]
      %v868 = vld [vmem:[%s833 + $0x30] sm:$0xf]
      %v869 = vld [vmem:[%s833 + $0x34] sm:$0xf]
      %v870 = vld [vmem:[%s833 + $0x38] sm:$0xf]
      %v871 = vld [vmem:[%s833 + $0x3c] sm:$0xf]
      %v872 = vld [vmem:[%s838] sm:$0xff]
      %v873 = vld [vmem:[%s838 + $0x8] sm:$0xff]
      %v874 = vld [vmem:[%s838 + $0x10] sm:$0xff]
      %v875 = vld [vmem:[%s838 + $0x18] sm:$0xff]
      %v876 = vld [vmem:[%s838 + $0x20] sm:$0xff]
      %v877 = vld [vmem:[%s838 + $0x28] sm:$0xff]
      %v878 = vld [vmem:[%s838 + $0x30] sm:$0xff]
      %v879 = vld [vmem:[%s838 + $0x38] sm:$0xff]
      %v880 = vld [vmem:[%s838 + $0x40] sm:$0xff]
      %v881 = vld [vmem:[%s838 + $0x48] sm:$0xff]
      %v882 = vld [vmem:[%s838 + $0x50] sm:$0xff]
      %v883 = vld [vmem:[%s838 + $0x58] sm:$0xff]
      %v884 = vld [vmem:[%s838 + $0x60] sm:$0xff]
      %v885 = vld [vmem:[%s838 + $0x68] sm:$0xff]
      %v886 = vld [vmem:[%s838 + $0x70] sm:$0xff]
      %v887 = vld [vmem:[%s838 + $0x78] sm:$0xff]
      %v888 = vld [vmem:[%s4] sm:$0xf]
      %v889 = vld [vmem:[%s4 + $0x4] sm:$0xf]
      %v890 = vld [vmem:[%s4 + $0x8] sm:$0xf]
      %v891 = vld [vmem:[%s4 + $0xc] sm:$0xf]
      %v892 = vld [vmem:[%s4 + $0x10] sm:$0xf]
      %v893 = vld [vmem:[%s4 + $0x14] sm:$0xf]
      %v894 = vld [vmem:[%s4 + $0x18] sm:$0xf]
      %v895 = vld [vmem:[%s4 + $0x1c] sm:$0xf]
      %v896 = vld [vmem:[%s4 + $0x20] sm:$0xf]
      %v897 = vld [vmem:[%s4 + $0x24] sm:$0x7]
      %v898 = vld [vmem:[%s5] sm:$0x1]
      %v899 = vld [vmem:[%s8] sm:$0xf]
      %v900 = vld [vmem:[%s8 + $0x4] sm:$0xf]
      %v901 = vld [vmem:[%s8 + $0x8] sm:$0xf]
      %v902 = vld [vmem:[%s8 + $0xc] sm:$0xf]
      %v903 = vld [vmem:[%s9] sm:$0x1]
      %v904 = vld [vmem:[%s10] sm:$0x1]
      %v905 = vld [vmem:[%s11] sm:$0x1]
      %v906 = vpack.c.bf16 %v873, %v872
      %v907 = vpack.c.bf16 %v875, %v874
      %v908 = vpack.c.bf16 %v877, %v876
      %v909 = vpack.c.bf16 %v879, %v878
      %v910 = vpack.c.bf16 %v881, %v880
      %v911 = vpack.c.bf16 %v883, %v882
      %v912 = vpack.c.bf16 %v885, %v884
      %v913 = vpack.c.bf16 %v887, %v886
      %v924 = vunpack.c.l.b16 %v888
      %v925 = vunpack.c.l.b16 %v889
      %v926 = vunpack.c.l.b16 %v890
      %v927 = vunpack.c.l.b16 %v891
      %v928 = vunpack.c.l.b16 %v892
      %v929 = vunpack.c.l.b16 %v893
      %v930 = vunpack.c.l.b16 %v894
      %v931 = vunpack.c.l.b16 %v895
      %v932 = vunpack.c.l.b16 %v896
      %v933 = vunpack.c.l.b16 %v897
      %v934 = vpack.c.b16 %v925, %v924
      %v935 = vpack.c.b16 %v927, %v926
      %v936 = vpack.c.b16 %v929, %v928
      %v937 = vpack.c.b16 %v931, %v930
      %v938 = vpack.c.b16 %v933, %v932
      %vm943 = vcmask 637952
      %v945 = vsel %vm943, %v906, 0
      %v948 = vsel %vm943, %v907, 0
      %v951 = vsel %vm943, %v908, 0
      %v954 = vsel %vm943, %v909, 0
      %v957 = vsel %vm943, %v910, 0
      %v960 = vsel %vm943, %v911, 0
      %v963 = vsel %vm943, %v912, 0
      %v966 = vsel %vm943, %v913, 0
      %vm968 = vcmask 1046528
      %v970 = vsel %vm968, %v938, 0
      %972 = vmatprep.subr.bf16.mxu0 0
      %973 = vmatpush1.bf16.msra.mxu0 0
      %974 = vmatprep.subr.bf16.mxu0 0
      %975 = vmatpush1.bf16.msra.mxu0 0
      %976 = vmatprep.subr.bf16.mxu0 0
      %977 = vmatpush1.bf16.msra.mxu0 0
      %978 = vmatprep.subr.bf16.mxu0 0
      %979 = vmatpush1.bf16.msra.mxu0 %v970
      %980 = vmatprep.subr.bf16.mxu0 0
      %981 = vmatpush1.bf16.msra.mxu0 %v937
      %982 = vmatprep.subr.bf16.mxu0 0
      %983 = vmatpush1.bf16.msra.mxu0 %v936
      %984 = vmatprep.subr.bf16.mxu0 0
      %985 = vmatpush1.bf16.msra.mxu0 %v935
      %986 = vmatprep.subr.bf16.mxu0 0
      %987 = vmatpush1.bf16.msra.mxu0 %v934
      %988 = vmatprep.subr.bf16.mxu0 0
      %989 = vmatpush2.bf16.msra.mxu0 0
      %990 = vmatprep.subr.bf16.mxu0 0
      %991 = vmatpush2.bf16.msra.mxu0 0
      %992 = vmatprep.subr.bf16.mxu0 0
      %993 = vmatpush2.bf16.msra.mxu0 0
      %994 = vmatprep.subr.bf16.mxu0 0
      %995 = vmatpush2.bf16.msra.mxu0 0
      %996 = vmatprep.subr.bf16.mxu0 0
      %997 = vmatpush2.bf16.msra.mxu0 0
      %998 = vmatprep.subr.bf16.mxu0 0
      %999 = vmatpush2.bf16.msra.mxu0 0
      %1000 = vmatprep.subr.bf16.mxu0 0
      %1001 = vmatpush2.bf16.msra.mxu0 0
      %1002 = vmatprep.subr.bf16.mxu0 0
      %1003 = vmatpush2.bf16.msra.mxu0 0
      %1004 = vmatprep.mubr.bf16.mxu0 0
      %1005 = vmatmul.mubr.bf16.gmra.mxu0 %v945
      %v1006 = vpop.f32.mrf.mxu0
      %v1007 = vadd.f32 0.0, %v1006
      %v1008 = vpop.f32.mrf.mxu0
      %v1009 = vpop.f32.mrf.mxu0
      %v1010 = vadd.f32 0.0, %v1009
      %v1011 = vpop.f32.mrf.mxu0
      %1012 = vmatprep.mubr.bf16.mxu0 0
      %1013 = vmatmul.mubr.bf16.gmra.mxu0 %v948
      %v1014 = vpop.f32.mrf.mxu0
      %v1015 = vadd.f32 0.0, %v1014
      %v1016 = vpop.f32.mrf.mxu0
      %v1017 = vpop.f32.mrf.mxu0
      %v1018 = vadd.f32 0.0, %v1017
      %v1019 = vpop.f32.mrf.mxu0
      %1020 = vmatprep.mubr.bf16.mxu0 0
      %1021 = vmatmul.mubr.bf16.gmra.mxu0 %v951
      %v1022 = vpop.f32.mrf.mxu0
      %v1023 = vadd.f32 0.0, %v1022
      %v1024 = vpop.f32.mrf.mxu0
      %v1025 = vpop.f32.mrf.mxu0
      %v1026 = vadd.f32 0.0, %v1025
      %v1027 = vpop.f32.mrf.mxu0
      %1028 = vmatprep.mubr.bf16.mxu0 0
      %1029 = vmatmul.mubr.bf16.gmra.mxu0 %v954
      %v1030 = vpop.f32.mrf.mxu0
      %v1031 = vadd.f32 0.0, %v1030
      %v1032 = vpop.f32.mrf.mxu0
      %v1033 = vpop.f32.mrf.mxu0
      %v1034 = vadd.f32 0.0, %v1033
      %v1035 = vpop.f32.mrf.mxu0
      %1036 = vmatprep.mubr.bf16.mxu0 0
      %1037 = vmatmul.mubr.bf16.gmra.mxu0 %v957
      %v1038 = vpop.f32.mrf.mxu0
      %v1039 = vadd.f32 0.0, %v1038
      %v1040 = vpop.f32.mrf.mxu0
      %v1041 = vpop.f32.mrf.mxu0
      %v1042 = vadd.f32 0.0, %v1041
      %v1043 = vpop.f32.mrf.mxu0
      %1044 = vmatprep.mubr.bf16.mxu0 0
      %1045 = vmatmul.mubr.bf16.gmra.mxu0 %v960
      %v1046 = vpop.f32.mrf.mxu0
      %v1047 = vadd.f32 0.0, %v1046
      %v1048 = vpop.f32.mrf.mxu0
      %v1049 = vpop.f32.mrf.mxu0
      %v1050 = vadd.f32 0.0, %v1049
      %v1051 = vpop.f32.mrf.mxu0
      %1052 = vmatprep.mubr.bf16.mxu0 0
      %1053 = vmatmul.mubr.bf16.gmra.mxu0 %v963
      %v1054 = vpop.f32.mrf.mxu0
      %v1055 = vadd.f32 0.0, %v1054
      %v1056 = vpop.f32.mrf.mxu0
      %v1057 = vpop.f32.mrf.mxu0
      %v1058 = vadd.f32 0.0, %v1057
      %v1059 = vpop.f32.mrf.mxu0
      %1060 = vmatprep.mubr.bf16.mxu0 0
      %1061 = vmatmul.mubr.bf16.gmra.mxu0 %v966
      %v1062 = vpop.f32.mrf.mxu0
      %v1063 = vadd.f32 0.0, %v1062
      %v1064 = vpop.f32.mrf.mxu0
      %v1065 = vpop.f32.mrf.mxu0
      %v1066 = vadd.f32 0.0, %v1065
      %v1067 = vpop.f32.mrf.mxu0
      %1068 = vdwg.mxu0
      %v1069 = vpack.c.bf16 %v1010, %v1007
      %v1070 = vpack.c.bf16 %v1018, %v1015
      %v1071 = vpack.c.bf16 %v1026, %v1023
      %v1072 = vpack.c.bf16 %v1034, %v1031
      %v1073 = vpack.c.bf16 %v1042, %v1039
      %v1074 = vpack.c.bf16 %v1050, %v1047
      %v1075 = vpack.c.bf16 %v1058, %v1055
      %v1076 = vpack.c.bf16 %v1066, %v1063
      %v1093 = vunpack.c.l.b16 %v856
      %v1094 = vunpack.c.l.b16 %v857
      %v1095 = vunpack.c.l.b16 %v858
      %v1096 = vunpack.c.l.b16 %v859
      %v1097 = vunpack.c.l.b16 %v860
      %v1098 = vunpack.c.l.b16 %v861
      %v1099 = vunpack.c.l.b16 %v862
      %v1100 = vunpack.c.l.b16 %v863
      %v1101 = vunpack.c.l.b16 %v864
      %v1102 = vunpack.c.l.b16 %v865
      %v1103 = vunpack.c.l.b16 %v866
      %v1104 = vunpack.c.l.b16 %v867
      %v1105 = vunpack.c.l.b16 %v868
      %v1106 = vunpack.c.l.b16 %v869
      %v1107 = vunpack.c.l.b16 %v870
      %v1108 = vunpack.c.l.b16 %v871
      %v1109 = vpack.c.b16 %v1094, %v1093
      %v1110 = vpack.c.b16 %v1096, %v1095
      %v1111 = vpack.c.b16 %v1098, %v1097
      %v1112 = vpack.c.b16 %v1100, %v1099
      %v1113 = vpack.c.b16 %v1102, %v1101
      %v1114 = vpack.c.b16 %v1104, %v1103
      %v1115 = vpack.c.b16 %v1106, %v1105
      %v1116 = vpack.c.b16 %v1108, %v1107
      %1125 = vmatprep.subr.bf16.mxu0 0
      %1126 = vmatpush1.bf16.msra.mxu0 %v1076
      %1127 = vmatprep.subr.bf16.mxu0 0
      %1128 = vmatpush1.bf16.msra.mxu0 %v1075
      %1129 = vmatprep.subr.bf16.mxu0 0
      %1130 = vmatpush1.bf16.msra.mxu0 %v1074
      %1131 = vmatprep.subr.bf16.mxu0 0
      %1132 = vmatpush1.bf16.msra.mxu0 %v1073
      %1133 = vmatprep.subr.bf16.mxu0 0
      %1134 = vmatpush1.bf16.msra.mxu0 %v1072
      %1135 = vmatprep.subr.bf16.mxu0 0
      %1136 = vmatpush1.bf16.msra.mxu0 %v1071
      %1137 = vmatprep.subr.bf16.mxu0 0
      %1138 = vmatpush1.bf16.msra.mxu0 %v1070
      %1139 = vmatprep.subr.bf16.mxu0 0
      %1140 = vmatpush1.bf16.msra.mxu0 %v1069
      %1141 = vmatprep.subr.bf16.mxu0 0
      %1142 = vmatpush2.bf16.msra.mxu0 0
      %1143 = vmatprep.subr.bf16.mxu0 0
      %1144 = vmatpush2.bf16.msra.mxu0 0
      %1145 = vmatprep.subr.bf16.mxu0 0
      %1146 = vmatpush2.bf16.msra.mxu0 0
      %1147 = vmatprep.subr.bf16.mxu0 0
      %1148 = vmatpush2.bf16.msra.mxu0 0
      %1149 = vmatprep.subr.bf16.mxu0 0
      %1150 = vmatpush2.bf16.msra.mxu0 0
      %1151 = vmatprep.subr.bf16.mxu0 0
      %1152 = vmatpush2.bf16.msra.mxu0 0
      %1153 = vmatprep.subr.bf16.mxu0 0
      %1154 = vmatpush2.bf16.msra.mxu0 0
      %1155 = vmatprep.subr.bf16.mxu0 0
      %1156 = vmatpush2.bf16.msra.mxu0 0
      %1157 = vmatprep.mubr.bf16.mxu0 0
      %1158 = vmatmul.mubr.bf16.gmra.mxu0 %v1109
      %v1159 = vpop.f32.mrf.mxu0
      %v1160 = vadd.f32 %v1007, %v1159
      %v1161 = vpop.f32.mrf.mxu0
      %v1162 = vpop.f32.mrf.mxu0
      %v1163 = vadd.f32 %v1010, %v1162
      %v1164 = vpop.f32.mrf.mxu0
      %1165 = vmatprep.mubr.bf16.mxu0 0
      %1166 = vmatmul.mubr.bf16.gmra.mxu0 %v1110
      %v1167 = vpop.f32.mrf.mxu0
      %v1168 = vadd.f32 %v1015, %v1167
      %v1169 = vpop.f32.mrf.mxu0
      %v1170 = vpop.f32.mrf.mxu0
      %v1171 = vadd.f32 %v1018, %v1170
      %v1172 = vpop.f32.mrf.mxu0
      %1173 = vmatprep.mubr.bf16.mxu0 0
      %1174 = vmatmul.mubr.bf16.gmra.mxu0 %v1111
      %v1175 = vpop.f32.mrf.mxu0
      %v1176 = vadd.f32 %v1023, %v1175
      %v1177 = vpop.f32.mrf.mxu0
      %v1178 = vpop.f32.mrf.mxu0
      %v1179 = vadd.f32 %v1026, %v1178
      %v1180 = vpop.f32.mrf.mxu0
      %1181 = vmatprep.mubr.bf16.mxu0 0
      %1182 = vmatmul.mubr.bf16.gmra.mxu0 %v1112
      %v1183 = vpop.f32.mrf.mxu0
      %v1184 = vadd.f32 %v1031, %v1183
      %v1185 = vpop.f32.mrf.mxu0
      %v1186 = vpop.f32.mrf.mxu0
      %v1187 = vadd.f32 %v1034, %v1186
      %v1188 = vpop.f32.mrf.mxu0
      %1189 = vmatprep.mubr.bf16.mxu0 0
      %1190 = vmatmul.mubr.bf16.gmra.mxu0 %v1113
      %v1191 = vpop.f32.mrf.mxu0
      %v1192 = vadd.f32 %v1039, %v1191
      %v1193 = vpop.f32.mrf.mxu0
      %v1194 = vpop.f32.mrf.mxu0
      %v1195 = vadd.f32 %v1042, %v1194
      %v1196 = vpop.f32.mrf.mxu0
      %1197 = vmatprep.mubr.bf16.mxu0 0
      %1198 = vmatmul.mubr.bf16.gmra.mxu0 %v1114
      %v1199 = vpop.f32.mrf.mxu0
      %v1200 = vadd.f32 %v1047, %v1199
      %v1201 = vpop.f32.mrf.mxu0
      %v1202 = vpop.f32.mrf.mxu0
      %v1203 = vadd.f32 %v1050, %v1202
      %v1204 = vpop.f32.mrf.mxu0
      %1205 = vmatprep.mubr.bf16.mxu0 0
      %1206 = vmatmul.mubr.bf16.gmra.mxu0 %v1115
      %v1207 = vpop.f32.mrf.mxu0
      %v1208 = vadd.f32 %v1055, %v1207
      %v1209 = vpop.f32.mrf.mxu0
      %v1210 = vpop.f32.mrf.mxu0
      %v1211 = vadd.f32 %v1058, %v1210
      %v1212 = vpop.f32.mrf.mxu0
      %1213 = vmatprep.mubr.bf16.mxu0 0
      %1214 = vmatmul.mubr.bf16.gmra.mxu0 %v1116
      %v1215 = vpop.f32.mrf.mxu0
      %v1216 = vadd.f32 %v1063, %v1215
      %v1217 = vpop.f32.mrf.mxu0
      %v1218 = vpop.f32.mrf.mxu0
      %v1219 = vadd.f32 %v1066, %v1218
      %v1220 = vpop.f32.mrf.mxu0
      %1221 = vdwg.mxu0
      %v1223 = vlaneseq
      %v1224 = vshrl.u32 %v1223, 7
      %v1225 = vsub.s32 0, %v1224
      %v1226 = vrot.slane %v898, %v1225
      %v1228 = vadd.f32 %v1160, %v1226
      %v1229 = vadd.f32 %v1163, %v1226
      %v1230 = vadd.f32 %v1168, %v1226
      %v1231 = vadd.f32 %v1171, %v1226
      %v1232 = vadd.f32 %v1176, %v1226
      %v1233 = vadd.f32 %v1179, %v1226
      %v1234 = vadd.f32 %v1184, %v1226
      %v1235 = vadd.f32 %v1187, %v1226
      %v1236 = vadd.f32 %v1192, %v1226
      %v1237 = vadd.f32 %v1195, %v1226
      %v1238 = vadd.f32 %v1200, %v1226
      %v1239 = vadd.f32 %v1203, %v1226
      %v1240 = vadd.f32 %v1208, %v1226
      %v1241 = vadd.f32 %v1211, %v1226
      %v1242 = vadd.f32 %v1216, %v1226
      %v1243 = vadd.f32 %v1219, %v1226
      %v1244 = vmax.f32 %v1228, 0.0
      %v1245 = vmax.f32 %v1229, 0.0
      %v1246 = vmax.f32 %v1230, 0.0
      %v1247 = vmax.f32 %v1231, 0.0
      %v1248 = vmax.f32 %v1232, 0.0
      %v1249 = vmax.f32 %v1233, 0.0
      %v1250 = vmax.f32 %v1234, 0.0
      %v1251 = vmax.f32 %v1235, 0.0
      %v1252 = vmax.f32 %v1236, 0.0
      %v1253 = vmax.f32 %v1237, 0.0
      %v1254 = vmax.f32 %v1238, 0.0
      %v1255 = vmax.f32 %v1239, 0.0
      %v1256 = vmax.f32 %v1240, 0.0
      %v1257 = vmax.f32 %v1241, 0.0
      %v1258 = vmax.f32 %v1242, 0.0
      %v1259 = vmax.f32 %v1243, 0.0
      %v1260 = vpack.c.bf16 %v1245, %v1244
      %v1261 = vpack.c.bf16 %v1247, %v1246
      %v1262 = vpack.c.bf16 %v1249, %v1248
      %v1263 = vpack.c.bf16 %v1251, %v1250
      %v1264 = vpack.c.bf16 %v1253, %v1252
      %v1265 = vpack.c.bf16 %v1255, %v1254
      %v1266 = vpack.c.bf16 %v1257, %v1256
      %v1267 = vpack.c.bf16 %v1259, %v1258
      %v1269 = vlaneseq
      %v1270 = vshrl.u32 %v1269, 7
      %v1271 = vsub.s32 0, %v1270
      %v1272 = vrot.slane %v903, %v1271
      %v1278 = vunpack.c.l.b16 %v899
      %v1279 = vunpack.c.l.b16 %v900
      %v1280 = vunpack.c.l.b16 %v901
      %v1281 = vunpack.c.l.b16 %v902
      %v1282 = vpack.c.b16 %v1279, %v1278
      %v1283 = vpack.c.b16 %v1281, %v1280
      %vm1286 = vcmask 261120
      %v1288 = vsel %vm1286, %v1260, 0
      %v1291 = vsel %vm1286, %v1261, 0
      %v1294 = vsel %vm1286, %v1262, 0
      %v1297 = vsel %vm1286, %v1263, 0
      %v1300 = vsel %vm1286, %v1264, 0
      %v1303 = vsel %vm1286, %v1265, 0
      %v1306 = vsel %vm1286, %v1266, 0
      %v1309 = vsel %vm1286, %v1267, 0
      %1311 = vmatprep.subr.bf16.mxu0 0
      %1312 = vmatpush1.bf16.msra.mxu0 0
      %1313 = vmatprep.subr.bf16.mxu0 0
      %1314 = vmatpush1.bf16.msra.mxu0 0
      %1315 = vmatprep.subr.bf16.mxu0 0
      %1316 = vmatpush1.bf16.msra.mxu0 0
      %1317 = vmatprep.subr.bf16.mxu0 0
      %1318 = vmatpush1.bf16.msra.mxu0 0
      %1319 = vmatprep.subr.bf16.mxu0 0
      %1320 = vmatpush1.bf16.msra.mxu0 0
      %1321 = vmatprep.subr.bf16.mxu0 0
      %1322 = vmatpush1.bf16.msra.mxu0 0
      %1323 = vmatprep.subr.bf16.mxu0 0
      %1324 = vmatpush1.bf16.msra.mxu0 %v1283
      %1325 = vmatprep.subr.bf16.mxu0 0
      %1326 = vmatpush1.bf16.msra.mxu0 %v1282
      %1327 = vmatprep.subr.bf16.mxu0 0
      %1328 = vmatpush2.bf16.msra.mxu0 0
      %1329 = vmatprep.subr.bf16.mxu0 0
      %1330 = vmatpush2.bf16.msra.mxu0 0
      %1331 = vmatprep.subr.bf16.mxu0 0
      %1332 = vmatpush2.bf16.msra.mxu0 0
      %1333 = vmatprep.subr.bf16.mxu0 0
      %1334 = vmatpush2.bf16.msra.mxu0 0
      %1335 = vmatprep.subr.bf16.mxu0 0
      %1336 = vmatpush2.bf16.msra.mxu0 0
      %1337 = vmatprep.subr.bf16.mxu0 0
      %1338 = vmatpush2.bf16.msra.mxu0 0
      %1339 = vmatprep.subr.bf16.mxu0 0
      %1340 = vmatpush2.bf16.msra.mxu0 0
      %1341 = vmatprep.subr.bf16.mxu0 0
      %1342 = vmatpush2.bf16.msra.mxu0 0
      %1343 = vmatprep.mubr.bf16.mxu0 0
      %1344 = vmatmul.mubr.bf16.gmra.mxu0 %v1288
      %v1345 = vpop.f32.mrf.mxu0
      %v1346 = vadd.f32 %v1272, %v1345
      %v1347 = vpop.f32.mrf.mxu0
      %v1348 = vpop.f32.mrf.mxu0
      %v1349 = vadd.f32 %v1272, %v1348
      %v1350 = vpop.f32.mrf.mxu0
      %1351 = vmatprep.mubr.bf16.mxu0 0
      %1352 = vmatmul.mubr.bf16.gmra.mxu0 %v1291
      %v1353 = vpop.f32.mrf.mxu0
      %v1354 = vadd.f32 %v1272, %v1353
      %v1355 = vpop.f32.mrf.mxu0
      %v1356 = vpop.f32.mrf.mxu0
      %v1357 = vadd.f32 %v1272, %v1356
      %v1358 = vpop.f32.mrf.mxu0
      %1359 = vmatprep.mubr.bf16.mxu0 0
      %1360 = vmatmul.mubr.bf16.gmra.mxu0 %v1294
      %v1361 = vpop.f32.mrf.mxu0
      %v1362 = vadd.f32 %v1272, %v1361
      %v1363 = vpop.f32.mrf.mxu0
      %v1364 = vpop.f32.mrf.mxu0
      %v1365 = vadd.f32 %v1272, %v1364
      %v1366 = vpop.f32.mrf.mxu0
      %1367 = vmatprep.mubr.bf16.mxu0 0
      %1368 = vmatmul.mubr.bf16.gmra.mxu0 %v1297
      %v1369 = vpop.f32.mrf.mxu0
      %v1370 = vadd.f32 %v1272, %v1369
      %v1371 = vpop.f32.mrf.mxu0
      %v1372 = vpop.f32.mrf.mxu0
      %v1373 = vadd.f32 %v1272, %v1372
      %v1374 = vpop.f32.mrf.mxu0
      %1375 = vmatprep.mubr.bf16.mxu0 0
      %1376 = vmatmul.mubr.bf16.gmra.mxu0 %v1300
      %v1377 = vpop.f32.mrf.mxu0
      %v1378 = vadd.f32 %v1272, %v1377
      %v1379 = vpop.f32.mrf.mxu0
      %v1380 = vpop.f32.mrf.mxu0
      %v1381 = vadd.f32 %v1272, %v1380
      %v1382 = vpop.f32.mrf.mxu0
      %1383 = vmatprep.mubr.bf16.mxu0 0
      %1384 = vmatmul.mubr.bf16.gmra.mxu0 %v1303
      %v1385 = vpop.f32.mrf.mxu0
      %v1386 = vadd.f32 %v1272, %v1385
      %v1387 = vpop.f32.mrf.mxu0
      %v1388 = vpop.f32.mrf.mxu0
      %v1389 = vadd.f32 %v1272, %v1388
      %v1390 = vpop.f32.mrf.mxu0
      %1391 = vmatprep.mubr.bf16.mxu0 0
      %1392 = vmatmul.mubr.bf16.gmra.mxu0 %v1306
      %v1393 = vpop.f32.mrf.mxu0
      %v1394 = vadd.f32 %v1272, %v1393
      %v1395 = vpop.f32.mrf.mxu0
      %v1396 = vpop.f32.mrf.mxu0
      %v1397 = vadd.f32 %v1272, %v1396
      %v1398 = vpop.f32.mrf.mxu0
      %1399 = vmatprep.mubr.bf16.mxu0 0
      %1400 = vmatmul.mubr.bf16.gmra.mxu0 %v1309
      %v1401 = vpop.f32.mrf.mxu0
      %v1402 = vadd.f32 %v1272, %v1401
      %v1403 = vpop.f32.mrf.mxu0
      %v1404 = vpop.f32.mrf.mxu0
      %v1405 = vadd.f32 %v1272, %v1404
      %v1406 = vpop.f32.mrf.mxu0
      %1407 = vdwg.mxu0
      %v1408 = vmax.f32 %v1346, 0.0
      %v1409 = vmax.f32 %v1349, 0.0
      %v1410 = vmax.f32 %v1354, 0.0
      %v1411 = vmax.f32 %v1357, 0.0
      %v1412 = vmax.f32 %v1362, 0.0
      %v1413 = vmax.f32 %v1365, 0.0
      %v1414 = vmax.f32 %v1370, 0.0
      %v1415 = vmax.f32 %v1373, 0.0
      %v1416 = vmax.f32 %v1378, 0.0
      %v1417 = vmax.f32 %v1381, 0.0
      %v1418 = vmax.f32 %v1386, 0.0
      %v1419 = vmax.f32 %v1389, 0.0
      %v1420 = vmax.f32 %v1394, 0.0
      %v1421 = vmax.f32 %v1397, 0.0
      %v1422 = vmax.f32 %v1402, 0.0
      %v1423 = vmax.f32 %v1405, 0.0
      %v1425 = vlaneseq
      %v1426 = vshrl.u32 %v1425, 7
      %v1427 = vsub.s32 0, %v1426
      %v1428 = vrot.slane %v904, %v1427
      %v1430 = vmul.f32 %v1408, %v1428
      %v1431 = vmul.f32 %v1409, %v1428
      %v1432 = vmul.f32 %v1410, %v1428
      %v1433 = vmul.f32 %v1411, %v1428
      %v1434 = vmul.f32 %v1412, %v1428
      %v1435 = vmul.f32 %v1413, %v1428
      %v1436 = vmul.f32 %v1414, %v1428
      %v1437 = vmul.f32 %v1415, %v1428
      %v1438 = vmul.f32 %v1416, %v1428
      %v1439 = vmul.f32 %v1417, %v1428
      %v1440 = vmul.f32 %v1418, %v1428
      %v1441 = vmul.f32 %v1419, %v1428
      %v1442 = vmul.f32 %v1420, %v1428
      %v1443 = vmul.f32 %v1421, %v1428
      %v1444 = vmul.f32 %v1422, %v1428
      %v1445 = vmul.f32 %v1423, %v1428
      %v1447 = vlaneseq
      %v1448 = vshrl.u32 %v1447, 7
      %v1449 = vsub.s32 0, %v1448
      %v1450 = vrot.slane %v905, %v1449
      %v1452 = vadd.f32 %v1430, %v1450
      %v1453 = vadd.f32 %v1431, %v1450
      %v1454 = vadd.f32 %v1432, %v1450
      %v1455 = vadd.f32 %v1433, %v1450
      %v1456 = vadd.f32 %v1434, %v1450
      %v1457 = vadd.f32 %v1435, %v1450
      %v1458 = vadd.f32 %v1436, %v1450
      %v1459 = vadd.f32 %v1437, %v1450
      %v1460 = vadd.f32 %v1438, %v1450
      %v1461 = vadd.f32 %v1439, %v1450
      %v1462 = vadd.f32 %v1440, %v1450
      %v1463 = vadd.f32 %v1441, %v1450
      %v1464 = vadd.f32 %v1442, %v1450
      %v1465 = vadd.f32 %v1443, %v1450
      %v1466 = vadd.f32 %v1444, %v1450
      %v1467 = vadd.f32 %v1445, %v1450
      %v1468 = vld [vmem:[%s6] sm:$0xf]
      %v1469 = vld [vmem:[%s6 + $0x4] sm:$0xf]
      %v1470 = vld [vmem:[%s6 + $0x8] sm:$0xf]
      %v1471 = vld [vmem:[%s6 + $0xc] sm:$0xf]
      %v1472 = vld [vmem:[%s7] sm:$0x1]
      %s1473 = scalar_lea.vmem %s8, 16
      %v1474 = vld [vmem:[%s1473] sm:$0xf]
      %v1475 = vld [vmem:[%s1473 + $0x4] sm:$0xf]
      %v1476 = vld [vmem:[%s1473 + $0x8] sm:$0xf]
      %v1477 = vld [vmem:[%s1473 + $0xc] sm:$0xf]
      %s1478 = scalar_lea.vmem %s9, 1
      %v1479 = vld [vmem:[%s1478] sm:$0x1]
      %s1480 = scalar_lea.vmem %s10, 1
      %v1481 = vld [vmem:[%s1480] sm:$0x1]
      %s1482 = scalar_lea.vmem %s11, 1
      %v1483 = vld [vmem:[%s1482] sm:$0x1]
      %v1484 = vpack.c.bf16 %v1453, %v1452
      %v1485 = vpack.c.bf16 %v1455, %v1454
      %v1486 = vpack.c.bf16 %v1457, %v1456
      %v1487 = vpack.c.bf16 %v1459, %v1458
      %v1488 = vpack.c.bf16 %v1461, %v1460
      %v1489 = vpack.c.bf16 %v1463, %v1462
      %v1490 = vpack.c.bf16 %v1465, %v1464
      %v1491 = vpack.c.bf16 %v1467, %v1466
      %v1496 = vunpack.c.l.b16 %v1468
      %v1497 = vunpack.c.l.b16 %v1469
      %v1498 = vunpack.c.l.b16 %v1470
      %v1499 = vunpack.c.l.b16 %v1471
      %v1500 = vpack.c.b16 %v1497, %v1496
      %v1501 = vpack.c.b16 %v1499, %v1498
      %v1505 = vsel %vm1286, %v1484, 0
      %v1508 = vsel %vm1286, %v1485, 0
      %v1511 = vsel %vm1286, %v1486, 0
      %v1514 = vsel %vm1286, %v1487, 0
      %v1517 = vsel %vm1286, %v1488, 0
      %v1520 = vsel %vm1286, %v1489, 0
      %v1523 = vsel %vm1286, %v1490, 0
      %v1526 = vsel %vm1286, %v1491, 0
      %1528 = vmatprep.subr.bf16.mxu0 0
      %1529 = vmatpush1.bf16.msra.mxu0 0
      %1530 = vmatprep.subr.bf16.mxu0 0
      %1531 = vmatpush1.bf16.msra.mxu0 0
      %1532 = vmatprep.subr.bf16.mxu0 0
      %1533 = vmatpush1.bf16.msra.mxu0 0
      %1534 = vmatprep.subr.bf16.mxu0 0
      %1535 = vmatpush1.bf16.msra.mxu0 0
      %1536 = vmatprep.subr.bf16.mxu0 0
      %1537 = vmatpush1.bf16.msra.mxu0 0
      %1538 = vmatprep.subr.bf16.mxu0 0
      %1539 = vmatpush1.bf16.msra.mxu0 0
      %1540 = vmatprep.subr.bf16.mxu0 0
      %1541 = vmatpush1.bf16.msra.mxu0 %v1501
      %1542 = vmatprep.subr.bf16.mxu0 0
      %1543 = vmatpush1.bf16.msra.mxu0 %v1500
      %1544 = vmatprep.subr.bf16.mxu0 0
      %1545 = vmatpush2.bf16.msra.mxu0 0
      %1546 = vmatprep.subr.bf16.mxu0 0
      %1547 = vmatpush2.bf16.msra.mxu0 0
      %1548 = vmatprep.subr.bf16.mxu0 0
      %1549 = vmatpush2.bf16.msra.mxu0 0
      %1550 = vmatprep.subr.bf16.mxu0 0
      %1551 = vmatpush2.bf16.msra.mxu0 0
      %1552 = vmatprep.subr.bf16.mxu0 0
      %1553 = vmatpush2.bf16.msra.mxu0 0
      %1554 = vmatprep.subr.bf16.mxu0 0
      %1555 = vmatpush2.bf16.msra.mxu0 0
      %1556 = vmatprep.subr.bf16.mxu0 0
      %1557 = vmatpush2.bf16.msra.mxu0 0
      %1558 = vmatprep.subr.bf16.mxu0 0
      %1559 = vmatpush2.bf16.msra.mxu0 0
      %1560 = vmatprep.mubr.bf16.mxu0 0
      %1561 = vmatmul.mubr.bf16.gmra.mxu0 %v1505
      %v1562 = vpop.f32.mrf.mxu0
      %v1563 = vadd.f32 0.0, %v1562
      %v1564 = vpop.f32.mrf.mxu0
      %v1565 = vpop.f32.mrf.mxu0
      %v1566 = vadd.f32 0.0, %v1565
      %v1567 = vpop.f32.mrf.mxu0
      %1568 = vmatprep.mubr.bf16.mxu0 0
      %1569 = vmatmul.mubr.bf16.gmra.mxu0 %v1508
      %v1570 = vpop.f32.mrf.mxu0
      %v1571 = vadd.f32 0.0, %v1570
      %v1572 = vpop.f32.mrf.mxu0
      %v1573 = vpop.f32.mrf.mxu0
      %v1574 = vadd.f32 0.0, %v1573
      %v1575 = vpop.f32.mrf.mxu0
      %1576 = vmatprep.mubr.bf16.mxu0 0
      %1577 = vmatmul.mubr.bf16.gmra.mxu0 %v1511
      %v1578 = vpop.f32.mrf.mxu0
      %v1579 = vadd.f32 0.0, %v1578
      %v1580 = vpop.f32.mrf.mxu0
      %v1581 = vpop.f32.mrf.mxu0
      %v1582 = vadd.f32 0.0, %v1581
      %v1583 = vpop.f32.mrf.mxu0
      %1584 = vmatprep.mubr.bf16.mxu0 0
      %1585 = vmatmul.mubr.bf16.gmra.mxu0 %v1514
      %v1586 = vpop.f32.mrf.mxu0
      %v1587 = vadd.f32 0.0, %v1586
      %v1588 = vpop.f32.mrf.mxu0
      %v1589 = vpop.f32.mrf.mxu0
      %v1590 = vadd.f32 0.0, %v1589
      %v1591 = vpop.f32.mrf.mxu0
      %1592 = vmatprep.mubr.bf16.mxu0 0
      %1593 = vmatmul.mubr.bf16.gmra.mxu0 %v1517
      %v1594 = vpop.f32.mrf.mxu0
      %v1595 = vadd.f32 0.0, %v1594
      %v1596 = vpop.f32.mrf.mxu0
      %v1597 = vpop.f32.mrf.mxu0
      %v1598 = vadd.f32 0.0, %v1597
      %v1599 = vpop.f32.mrf.mxu0
      %1600 = vmatprep.mubr.bf16.mxu0 0
      %1601 = vmatmul.mubr.bf16.gmra.mxu0 %v1520
      %v1602 = vpop.f32.mrf.mxu0
      %v1603 = vadd.f32 0.0, %v1602
      %v1604 = vpop.f32.mrf.mxu0
      %v1605 = vpop.f32.mrf.mxu0
      %v1606 = vadd.f32 0.0, %v1605
      %v1607 = vpop.f32.mrf.mxu0
      %1608 = vmatprep.mubr.bf16.mxu0 0
      %1609 = vmatmul.mubr.bf16.gmra.mxu0 %v1523
      %v1610 = vpop.f32.mrf.mxu0
      %v1611 = vadd.f32 0.0, %v1610
      %v1612 = vpop.f32.mrf.mxu0
      %v1613 = vpop.f32.mrf.mxu0
      %v1614 = vadd.f32 0.0, %v1613
      %v1615 = vpop.f32.mrf.mxu0
      %1616 = vmatprep.mubr.bf16.mxu0 0
      %1617 = vmatmul.mubr.bf16.gmra.mxu0 %v1526
      %v1618 = vpop.f32.mrf.mxu0
      %v1619 = vadd.f32 0.0, %v1618
      %v1620 = vpop.f32.mrf.mxu0
      %v1621 = vpop.f32.mrf.mxu0
      %v1622 = vadd.f32 0.0, %v1621
      %v1623 = vpop.f32.mrf.mxu0
      %1624 = vdwg.mxu0
      %v1625 = vpack.c.bf16 %v1566, %v1563
      %v1626 = vpack.c.bf16 %v1574, %v1571
      %v1627 = vpack.c.bf16 %v1582, %v1579
      %v1628 = vpack.c.bf16 %v1590, %v1587
      %v1629 = vpack.c.bf16 %v1598, %v1595
      %v1630 = vpack.c.bf16 %v1606, %v1603
      %v1631 = vpack.c.bf16 %v1614, %v1611
      %v1632 = vpack.c.bf16 %v1622, %v1619
      %1633 = vmatprep.subr.bf16.mxu0 0
      %1634 = vmatpush1.bf16.msra.mxu0 %v1632
      %1635 = vmatprep.subr.bf16.mxu0 0
      %1636 = vmatpush1.bf16.msra.mxu0 %v1631
      %1637 = vmatprep.subr.bf16.mxu0 0
      %1638 = vmatpush1.bf16.msra.mxu0 %v1630
      %1639 = vmatprep.subr.bf16.mxu0 0
      %1640 = vmatpush1.bf16.msra.mxu0 %v1629
      %1641 = vmatprep.subr.bf16.mxu0 0
      %1642 = vmatpush1.bf16.msra.mxu0 %v1628
      %1643 = vmatprep.subr.bf16.mxu0 0
      %1644 = vmatpush1.bf16.msra.mxu0 %v1627
      %1645 = vmatprep.subr.bf16.mxu0 0
      %1646 = vmatpush1.bf16.msra.mxu0 %v1626
      %1647 = vmatprep.subr.bf16.mxu0 0
      %1648 = vmatpush1.bf16.msra.mxu0 %v1625
      %1649 = vmatprep.subr.bf16.mxu0 0
      %1650 = vmatpush2.bf16.msra.mxu0 0
      %1651 = vmatprep.subr.bf16.mxu0 0
      %1652 = vmatpush2.bf16.msra.mxu0 0
      %1653 = vmatprep.subr.bf16.mxu0 0
      %1654 = vmatpush2.bf16.msra.mxu0 0
      %1655 = vmatprep.subr.bf16.mxu0 0
      %1656 = vmatpush2.bf16.msra.mxu0 0
      %1657 = vmatprep.subr.bf16.mxu0 0
      %1658 = vmatpush2.bf16.msra.mxu0 0
      %1659 = vmatprep.subr.bf16.mxu0 0
      %1660 = vmatpush2.bf16.msra.mxu0 0
      %1661 = vmatprep.subr.bf16.mxu0 0
      %1662 = vmatpush2.bf16.msra.mxu0 0
      %1663 = vmatprep.subr.bf16.mxu0 0
      %1664 = vmatpush2.bf16.msra.mxu0 0
      %1665 = vmatprep.mubr.bf16.mxu0 0
      %1666 = vmatmul.mubr.bf16.gmra.mxu0 %v1109
      %v1667 = vpop.f32.mrf.mxu0
      %v1668 = vadd.f32 %v1563, %v1667
      %v1669 = vpop.f32.mrf.mxu0
      %v1670 = vpop.f32.mrf.mxu0
      %v1671 = vadd.f32 %v1566, %v1670
      %v1672 = vpop.f32.mrf.mxu0
      %1673 = vmatprep.mubr.bf16.mxu0 0
      %1674 = vmatmul.mubr.bf16.gmra.mxu0 %v1110
      %v1675 = vpop.f32.mrf.mxu0
      %v1676 = vadd.f32 %v1571, %v1675
      %v1677 = vpop.f32.mrf.mxu0
      %v1678 = vpop.f32.mrf.mxu0
      %v1679 = vadd.f32 %v1574, %v1678
      %v1680 = vpop.f32.mrf.mxu0
      %1681 = vmatprep.mubr.bf16.mxu0 0
      %1682 = vmatmul.mubr.bf16.gmra.mxu0 %v1111
      %v1683 = vpop.f32.mrf.mxu0
      %v1684 = vadd.f32 %v1579, %v1683
      %v1685 = vpop.f32.mrf.mxu0
      %v1686 = vpop.f32.mrf.mxu0
      %v1687 = vadd.f32 %v1582, %v1686
      %v1688 = vpop.f32.mrf.mxu0
      %1689 = vmatprep.mubr.bf16.mxu0 0
      %1690 = vmatmul.mubr.bf16.gmra.mxu0 %v1112
      %v1691 = vpop.f32.mrf.mxu0
      %v1692 = vadd.f32 %v1587, %v1691
      %v1693 = vpop.f32.mrf.mxu0
      %v1694 = vpop.f32.mrf.mxu0
      %v1695 = vadd.f32 %v1590, %v1694
      %v1696 = vpop.f32.mrf.mxu0
      %1697 = vmatprep.mubr.bf16.mxu0 0
      %1698 = vmatmul.mubr.bf16.gmra.mxu0 %v1113
      %v1699 = vpop.f32.mrf.mxu0
      %v1700 = vadd.f32 %v1595, %v1699
      %v1701 = vpop.f32.mrf.mxu0
      %v1702 = vpop.f32.mrf.mxu0
      %v1703 = vadd.f32 %v1598, %v1702
      %v1704 = vpop.f32.mrf.mxu0
      %1705 = vmatprep.mubr.bf16.mxu0 0
      %1706 = vmatmul.mubr.bf16.gmra.mxu0 %v1114
      %v1707 = vpop.f32.mrf.mxu0
      %v1708 = vadd.f32 %v1603, %v1707
      %v1709 = vpop.f32.mrf.mxu0
      %v1710 = vpop.f32.mrf.mxu0
      %v1711 = vadd.f32 %v1606, %v1710
      %v1712 = vpop.f32.mrf.mxu0
      %1713 = vmatprep.mubr.bf16.mxu0 0
      %1714 = vmatmul.mubr.bf16.gmra.mxu0 %v1115
      %v1715 = vpop.f32.mrf.mxu0
      %v1716 = vadd.f32 %v1611, %v1715
      %v1717 = vpop.f32.mrf.mxu0
      %v1718 = vpop.f32.mrf.mxu0
      %v1719 = vadd.f32 %v1614, %v1718
      %v1720 = vpop.f32.mrf.mxu0
      %1721 = vmatprep.mubr.bf16.mxu0 0
      %1722 = vmatmul.mubr.bf16.gmra.mxu0 %v1116
      %v1723 = vpop.f32.mrf.mxu0
      %v1724 = vadd.f32 %v1619, %v1723
      %v1725 = vpop.f32.mrf.mxu0
      %v1726 = vpop.f32.mrf.mxu0
      %v1727 = vadd.f32 %v1622, %v1726
      %v1728 = vpop.f32.mrf.mxu0
      %1729 = vdwg.mxu0
      %v1731 = vlaneseq
      %v1732 = vshrl.u32 %v1731, 7
      %v1733 = vsub.s32 0, %v1732
      %v1734 = vrot.slane %v1472, %v1733
      %v1736 = vadd.f32 %v1668, %v1734
      %v1737 = vadd.f32 %v1671, %v1734
      %v1738 = vadd.f32 %v1676, %v1734
      %v1739 = vadd.f32 %v1679, %v1734
      %v1740 = vadd.f32 %v1684, %v1734
      %v1741 = vadd.f32 %v1687, %v1734
      %v1742 = vadd.f32 %v1692, %v1734
      %v1743 = vadd.f32 %v1695, %v1734
      %v1744 = vadd.f32 %v1700, %v1734
      %v1745 = vadd.f32 %v1703, %v1734
      %v1746 = vadd.f32 %v1708, %v1734
      %v1747 = vadd.f32 %v1711, %v1734
      %v1748 = vadd.f32 %v1716, %v1734
      %v1749 = vadd.f32 %v1719, %v1734
      %v1750 = vadd.f32 %v1724, %v1734
      %v1751 = vadd.f32 %v1727, %v1734
      %v1752 = vmax.f32 %v1736, 0.0
      %v1753 = vmax.f32 %v1737, 0.0
      %v1754 = vmax.f32 %v1738, 0.0
      %v1755 = vmax.f32 %v1739, 0.0
      %v1756 = vmax.f32 %v1740, 0.0
      %v1757 = vmax.f32 %v1741, 0.0
      %v1758 = vmax.f32 %v1742, 0.0
      %v1759 = vmax.f32 %v1743, 0.0
      %v1760 = vmax.f32 %v1744, 0.0
      %v1761 = vmax.f32 %v1745, 0.0
      %v1762 = vmax.f32 %v1746, 0.0
      %v1763 = vmax.f32 %v1747, 0.0
      %v1764 = vmax.f32 %v1748, 0.0
      %v1765 = vmax.f32 %v1749, 0.0
      %v1766 = vmax.f32 %v1750, 0.0
      %v1767 = vmax.f32 %v1751, 0.0
      %v1768 = vpack.c.bf16 %v1753, %v1752
      %v1769 = vpack.c.bf16 %v1755, %v1754
      %v1770 = vpack.c.bf16 %v1757, %v1756
      %v1771 = vpack.c.bf16 %v1759, %v1758
      %v1772 = vpack.c.bf16 %v1761, %v1760
      %v1773 = vpack.c.bf16 %v1763, %v1762
      %v1774 = vpack.c.bf16 %v1765, %v1764
      %v1775 = vpack.c.bf16 %v1767, %v1766
      %v1777 = vlaneseq
      %v1778 = vshrl.u32 %v1777, 7
      %v1779 = vsub.s32 0, %v1778
      %v1780 = vrot.slane %v1479, %v1779
      %v1786 = vunpack.c.l.b16 %v1474
      %v1787 = vunpack.c.l.b16 %v1475
      %v1788 = vunpack.c.l.b16 %v1476
      %v1789 = vunpack.c.l.b16 %v1477
      %v1790 = vpack.c.b16 %v1787, %v1786
      %v1791 = vpack.c.b16 %v1789, %v1788
      %v1795 = vsel %vm1286, %v1768, 0
      %v1798 = vsel %vm1286, %v1769, 0
      %v1801 = vsel %vm1286, %v1770, 0
      %v1804 = vsel %vm1286, %v1771, 0
      %v1807 = vsel %vm1286, %v1772, 0
      %v1810 = vsel %vm1286, %v1773, 0
      %v1813 = vsel %vm1286, %v1774, 0
      %v1816 = vsel %vm1286, %v1775, 0
      %1818 = vmatprep.subr.bf16.mxu0 0
      %1819 = vmatpush1.bf16.msra.mxu0 0
      %1820 = vmatprep.subr.bf16.mxu0 0
      %1821 = vmatpush1.bf16.msra.mxu0 0
      %1822 = vmatprep.subr.bf16.mxu0 0
      %1823 = vmatpush1.bf16.msra.mxu0 0
      %1824 = vmatprep.subr.bf16.mxu0 0
      %1825 = vmatpush1.bf16.msra.mxu0 0
      %1826 = vmatprep.subr.bf16.mxu0 0
      %1827 = vmatpush1.bf16.msra.mxu0 0
      %1828 = vmatprep.subr.bf16.mxu0 0
      %1829 = vmatpush1.bf16.msra.mxu0 0
      %1830 = vmatprep.subr.bf16.mxu0 0
      %1831 = vmatpush1.bf16.msra.mxu0 %v1791
      %1832 = vmatprep.subr.bf16.mxu0 0
      %1833 = vmatpush1.bf16.msra.mxu0 %v1790
      %1834 = vmatprep.subr.bf16.mxu0 0
      %1835 = vmatpush2.bf16.msra.mxu0 0
      %1836 = vmatprep.subr.bf16.mxu0 0
      %1837 = vmatpush2.bf16.msra.mxu0 0
      %1838 = vmatprep.subr.bf16.mxu0 0
      %1839 = vmatpush2.bf16.msra.mxu0 0
      %1840 = vmatprep.subr.bf16.mxu0 0
      %1841 = vmatpush2.bf16.msra.mxu0 0
      %1842 = vmatprep.subr.bf16.mxu0 0
      %1843 = vmatpush2.bf16.msra.mxu0 0
      %1844 = vmatprep.subr.bf16.mxu0 0
      %1845 = vmatpush2.bf16.msra.mxu0 0
      %1846 = vmatprep.subr.bf16.mxu0 0
      %1847 = vmatpush2.bf16.msra.mxu0 0
      %1848 = vmatprep.subr.bf16.mxu0 0
      %1849 = vmatpush2.bf16.msra.mxu0 0
      %1850 = vmatprep.mubr.bf16.mxu0 0
      %1851 = vmatmul.mubr.bf16.gmra.mxu0 %v1795
      %v1852 = vpop.f32.mrf.mxu0
      %v1853 = vadd.f32 %v1780, %v1852
      %v1854 = vpop.f32.mrf.mxu0
      %v1855 = vpop.f32.mrf.mxu0
      %v1856 = vadd.f32 %v1780, %v1855
      %v1857 = vpop.f32.mrf.mxu0
      %1858 = vmatprep.mubr.bf16.mxu0 0
      %1859 = vmatmul.mubr.bf16.gmra.mxu0 %v1798
      %v1860 = vpop.f32.mrf.mxu0
      %v1861 = vadd.f32 %v1780, %v1860
      %v1862 = vpop.f32.mrf.mxu0
      %v1863 = vpop.f32.mrf.mxu0
      %v1864 = vadd.f32 %v1780, %v1863
      %v1865 = vpop.f32.mrf.mxu0
      %1866 = vmatprep.mubr.bf16.mxu0 0
      %1867 = vmatmul.mubr.bf16.gmra.mxu0 %v1801
      %v1868 = vpop.f32.mrf.mxu0
      %v1869 = vadd.f32 %v1780, %v1868
      %v1870 = vpop.f32.mrf.mxu0
      %v1871 = vpop.f32.mrf.mxu0
      %v1872 = vadd.f32 %v1780, %v1871
      %v1873 = vpop.f32.mrf.mxu0
      %1874 = vmatprep.mubr.bf16.mxu0 0
      %1875 = vmatmul.mubr.bf16.gmra.mxu0 %v1804
      %v1876 = vpop.f32.mrf.mxu0
      %v1877 = vadd.f32 %v1780, %v1876
      %v1878 = vpop.f32.mrf.mxu0
      %v1879 = vpop.f32.mrf.mxu0
      %v1880 = vadd.f32 %v1780, %v1879
      %v1881 = vpop.f32.mrf.mxu0
      %1882 = vmatprep.mubr.bf16.mxu0 0
      %1883 = vmatmul.mubr.bf16.gmra.mxu0 %v1807
      %v1884 = vpop.f32.mrf.mxu0
      %v1885 = vadd.f32 %v1780, %v1884
      %v1886 = vpop.f32.mrf.mxu0
      %v1887 = vpop.f32.mrf.mxu0
      %v1888 = vadd.f32 %v1780, %v1887
      %v1889 = vpop.f32.mrf.mxu0
      %1890 = vmatprep.mubr.bf16.mxu0 0
      %1891 = vmatmul.mubr.bf16.gmra.mxu0 %v1810
      %v1892 = vpop.f32.mrf.mxu0
      %v1893 = vadd.f32 %v1780, %v1892
      %v1894 = vpop.f32.mrf.mxu0
      %v1895 = vpop.f32.mrf.mxu0
      %v1896 = vadd.f32 %v1780, %v1895
      %v1897 = vpop.f32.mrf.mxu0
      %1898 = vmatprep.mubr.bf16.mxu0 0
      %1899 = vmatmul.mubr.bf16.gmra.mxu0 %v1813
      %v1900 = vpop.f32.mrf.mxu0
      %v1901 = vadd.f32 %v1780, %v1900
      %v1902 = vpop.f32.mrf.mxu0
      %v1903 = vpop.f32.mrf.mxu0
      %v1904 = vadd.f32 %v1780, %v1903
      %v1905 = vpop.f32.mrf.mxu0
      %1906 = vmatprep.mubr.bf16.mxu0 0
      %1907 = vmatmul.mubr.bf16.gmra.mxu0 %v1816
      %v1908 = vpop.f32.mrf.mxu0
      %v1909 = vadd.f32 %v1780, %v1908
      %v1910 = vpop.f32.mrf.mxu0
      %v1911 = vpop.f32.mrf.mxu0
      %v1912 = vadd.f32 %v1780, %v1911
      %v1913 = vpop.f32.mrf.mxu0
      %1914 = vdwg.mxu0
      %v1915 = vmax.f32 %v1853, 0.0
      %v1916 = vmax.f32 %v1856, 0.0
      %v1917 = vmax.f32 %v1861, 0.0
      %v1918 = vmax.f32 %v1864, 0.0
      %v1919 = vmax.f32 %v1869, 0.0
      %v1920 = vmax.f32 %v1872, 0.0
      %v1921 = vmax.f32 %v1877, 0.0
      %v1922 = vmax.f32 %v1880, 0.0
      %v1923 = vmax.f32 %v1885, 0.0
      %v1924 = vmax.f32 %v1888, 0.0
      %v1925 = vmax.f32 %v1893, 0.0
      %v1926 = vmax.f32 %v1896, 0.0
      %v1927 = vmax.f32 %v1901, 0.0
      %v1928 = vmax.f32 %v1904, 0.0
      %v1929 = vmax.f32 %v1909, 0.0
      %v1930 = vmax.f32 %v1912, 0.0
      %v1932 = vlaneseq
      %v1933 = vshrl.u32 %v1932, 7
      %v1934 = vsub.s32 0, %v1933
      %v1935 = vrot.slane %v1481, %v1934
      %v1937 = vmul.f32 %v1915, %v1935
      %v1938 = vmul.f32 %v1916, %v1935
      %v1939 = vmul.f32 %v1917, %v1935
      %v1940 = vmul.f32 %v1918, %v1935
      %v1941 = vmul.f32 %v1919, %v1935
      %v1942 = vmul.f32 %v1920, %v1935
      %v1943 = vmul.f32 %v1921, %v1935
      %v1944 = vmul.f32 %v1922, %v1935
      %v1945 = vmul.f32 %v1923, %v1935
      %v1946 = vmul.f32 %v1924, %v1935
      %v1947 = vmul.f32 %v1925, %v1935
      %v1948 = vmul.f32 %v1926, %v1935
      %v1949 = vmul.f32 %v1927, %v1935
      %v1950 = vmul.f32 %v1928, %v1935
      %v1951 = vmul.f32 %v1929, %v1935
      %v1952 = vmul.f32 %v1930, %v1935
      %v1954 = vlaneseq
      %v1955 = vshrl.u32 %v1954, 7
      %v1956 = vsub.s32 0, %v1955
      %v1957 = vrot.slane %v1483, %v1956
      %v1959 = vadd.f32 %v1937, %v1957
      %v1960 = vadd.f32 %v1938, %v1957
      %v1961 = vadd.f32 %v1939, %v1957
      %v1962 = vadd.f32 %v1940, %v1957
      %v1963 = vadd.f32 %v1941, %v1957
      %v1964 = vadd.f32 %v1942, %v1957
      %v1965 = vadd.f32 %v1943, %v1957
      %v1966 = vadd.f32 %v1944, %v1957
      %v1967 = vadd.f32 %v1945, %v1957
      %v1968 = vadd.f32 %v1946, %v1957
      %v1969 = vadd.f32 %v1947, %v1957
      %v1970 = vadd.f32 %v1948, %v1957
      %v1971 = vadd.f32 %v1949, %v1957
      %v1972 = vadd.f32 %v1950, %v1957
      %v1973 = vadd.f32 %v1951, %v1957
      %v1974 = vadd.f32 %v1952, %v1957
      %s1975 = scalar_lea.vmem %s6, 16
      %v1976 = vld [vmem:[%s1975] sm:$0xf]
      %v1977 = vld [vmem:[%s1975 + $0x4] sm:$0xf]
      %v1978 = vld [vmem:[%s1975 + $0x8] sm:$0xf]
      %v1979 = vld [vmem:[%s1975 + $0xc] sm:$0xf]
      %s1980 = scalar_lea.vmem %s7, 1
      %v1981 = vld [vmem:[%s1980] sm:$0x1]
      %s1982 = scalar_lea.vmem %s8, 32
      %v1983 = vld [vmem:[%s1982] sm:$0xf]
      %v1984 = vld [vmem:[%s1982 + $0x4] sm:$0xf]
      %v1985 = vld [vmem:[%s1982 + $0x8] sm:$0xf]
      %v1986 = vld [vmem:[%s1982 + $0xc] sm:$0xf]
      %s1987 = scalar_lea.vmem %s9, 2
      %v1988 = vld [vmem:[%s1987] sm:$0x1]
      %s1989 = scalar_lea.vmem %s10, 2
      %v1990 = vld [vmem:[%s1989] sm:$0x1]
      %s1991 = scalar_lea.vmem %s11, 2
      %v1992 = vld [vmem:[%s1991] sm:$0x1]
      %v1993 = vpack.c.bf16 %v1960, %v1959
      %v1994 = vpack.c.bf16 %v1962, %v1961
      %v1995 = vpack.c.bf16 %v1964, %v1963
      %v1996 = vpack.c.bf16 %v1966, %v1965
      %v1997 = vpack.c.bf16 %v1968, %v1967
      %v1998 = vpack.c.bf16 %v1970, %v1969
      %v1999 = vpack.c.bf16 %v1972, %v1971
      %v2000 = vpack.c.bf16 %v1974, %v1973
      %v2005 = vunpack.c.l.b16 %v1976
      %v2006 = vunpack.c.l.b16 %v1977
      %v2007 = vunpack.c.l.b16 %v1978
      %v2008 = vunpack.c.l.b16 %v1979
      %v2009 = vpack.c.b16 %v2006, %v2005
      %v2010 = vpack.c.b16 %v2008, %v2007
      %v2014 = vsel %vm1286, %v1993, 0
      %v2017 = vsel %vm1286, %v1994, 0
      %v2020 = vsel %vm1286, %v1995, 0
      %v2023 = vsel %vm1286, %v1996, 0
      %v2026 = vsel %vm1286, %v1997, 0
      %v2029 = vsel %vm1286, %v1998, 0
      %v2032 = vsel %vm1286, %v1999, 0
      %v2035 = vsel %vm1286, %v2000, 0
      %2037 = vmatprep.subr.bf16.mxu0 0
      %2038 = vmatpush1.bf16.msra.mxu0 0
      %2039 = vmatprep.subr.bf16.mxu0 0
      %2040 = vmatpush1.bf16.msra.mxu0 0
      %2041 = vmatprep.subr.bf16.mxu0 0
      %2042 = vmatpush1.bf16.msra.mxu0 0
      %2043 = vmatprep.subr.bf16.mxu0 0
      %2044 = vmatpush1.bf16.msra.mxu0 0
      %2045 = vmatprep.subr.bf16.mxu0 0
      %2046 = vmatpush1.bf16.msra.mxu0 0
      %2047 = vmatprep.subr.bf16.mxu0 0
      %2048 = vmatpush1.bf16.msra.mxu0 0
      %2049 = vmatprep.subr.bf16.mxu0 0
      %2050 = vmatpush1.bf16.msra.mxu0 %v2010
      %2051 = vmatprep.subr.bf16.mxu0 0
      %2052 = vmatpush1.bf16.msra.mxu0 %v2009
      %2053 = vmatprep.subr.bf16.mxu0 0
      %2054 = vmatpush2.bf16.msra.mxu0 0
      %2055 = vmatprep.subr.bf16.mxu0 0
      %2056 = vmatpush2.bf16.msra.mxu0 0
      %2057 = vmatprep.subr.bf16.mxu0 0
      %2058 = vmatpush2.bf16.msra.mxu0 0
      %2059 = vmatprep.subr.bf16.mxu0 0
      %2060 = vmatpush2.bf16.msra.mxu0 0
      %2061 = vmatprep.subr.bf16.mxu0 0
      %2062 = vmatpush2.bf16.msra.mxu0 0
      %2063 = vmatprep.subr.bf16.mxu0 0
      %2064 = vmatpush2.bf16.msra.mxu0 0
      %2065 = vmatprep.subr.bf16.mxu0 0
      %2066 = vmatpush2.bf16.msra.mxu0 0
      %2067 = vmatprep.subr.bf16.mxu0 0
      %2068 = vmatpush2.bf16.msra.mxu0 0
      %2069 = vmatprep.mubr.bf16.mxu0 0
      %2070 = vmatmul.mubr.bf16.gmra.mxu0 %v2014
      %v2071 = vpop.f32.mrf.mxu0
      %v2072 = vadd.f32 0.0, %v2071
      %v2073 = vpop.f32.mrf.mxu0
      %v2074 = vpop.f32.mrf.mxu0
      %v2075 = vadd.f32 0.0, %v2074
      %v2076 = vpop.f32.mrf.mxu0
      %2077 = vmatprep.mubr.bf16.mxu0 0
      %2078 = vmatmul.mubr.bf16.gmra.mxu0 %v2017
      %v2079 = vpop.f32.mrf.mxu0
      %v2080 = vadd.f32 0.0, %v2079
      %v2081 = vpop.f32.mrf.mxu0
      %v2082 = vpop.f32.mrf.mxu0
      %v2083 = vadd.f32 0.0, %v2082
      %v2084 = vpop.f32.mrf.mxu0
      %2085 = vmatprep.mubr.bf16.mxu0 0
      %2086 = vmatmul.mubr.bf16.gmra.mxu0 %v2020
      %v2087 = vpop.f32.mrf.mxu0
      %v2088 = vadd.f32 0.0, %v2087
      %v2089 = vpop.f32.mrf.mxu0
      %v2090 = vpop.f32.mrf.mxu0
      %v2091 = vadd.f32 0.0, %v2090
      %v2092 = vpop.f32.mrf.mxu0
      %2093 = vmatprep.mubr.bf16.mxu0 0
      %2094 = vmatmul.mubr.bf16.gmra.mxu0 %v2023
      %v2095 = vpop.f32.mrf.mxu0
      %v2096 = vadd.f32 0.0, %v2095
      %v2097 = vpop.f32.mrf.mxu0
      %v2098 = vpop.f32.mrf.mxu0
      %v2099 = vadd.f32 0.0, %v2098
      %v2100 = vpop.f32.mrf.mxu0
      %2101 = vmatprep.mubr.bf16.mxu0 0
      %2102 = vmatmul.mubr.bf16.gmra.mxu0 %v2026
      %v2103 = vpop.f32.mrf.mxu0
      %v2104 = vadd.f32 0.0, %v2103
      %v2105 = vpop.f32.mrf.mxu0
      %v2106 = vpop.f32.mrf.mxu0
      %v2107 = vadd.f32 0.0, %v2106
      %v2108 = vpop.f32.mrf.mxu0
      %2109 = vmatprep.mubr.bf16.mxu0 0
      %2110 = vmatmul.mubr.bf16.gmra.mxu0 %v2029
      %v2111 = vpop.f32.mrf.mxu0
      %v2112 = vadd.f32 0.0, %v2111
      %v2113 = vpop.f32.mrf.mxu0
      %v2114 = vpop.f32.mrf.mxu0
      %v2115 = vadd.f32 0.0, %v2114
      %v2116 = vpop.f32.mrf.mxu0
      %2117 = vmatprep.mubr.bf16.mxu0 0
      %2118 = vmatmul.mubr.bf16.gmra.mxu0 %v2032
      %v2119 = vpop.f32.mrf.mxu0
      %v2120 = vadd.f32 0.0, %v2119
      %v2121 = vpop.f32.mrf.mxu0
      %v2122 = vpop.f32.mrf.mxu0
      %v2123 = vadd.f32 0.0, %v2122
      %v2124 = vpop.f32.mrf.mxu0
      %2125 = vmatprep.mubr.bf16.mxu0 0
      %2126 = vmatmul.mubr.bf16.gmra.mxu0 %v2035
      %v2127 = vpop.f32.mrf.mxu0
      %v2128 = vadd.f32 0.0, %v2127
      %v2129 = vpop.f32.mrf.mxu0
      %v2130 = vpop.f32.mrf.mxu0
      %v2131 = vadd.f32 0.0, %v2130
      %v2132 = vpop.f32.mrf.mxu0
      %2133 = vdwg.mxu0
      %v2134 = vpack.c.bf16 %v2075, %v2072
      %v2135 = vpack.c.bf16 %v2083, %v2080
      %v2136 = vpack.c.bf16 %v2091, %v2088
      %v2137 = vpack.c.bf16 %v2099, %v2096
      %v2138 = vpack.c.bf16 %v2107, %v2104
      %v2139 = vpack.c.bf16 %v2115, %v2112
      %v2140 = vpack.c.bf16 %v2123, %v2120
      %v2141 = vpack.c.bf16 %v2131, %v2128
      %2142 = vmatprep.subr.bf16.mxu0 0
      %2143 = vmatpush1.bf16.msra.mxu0 %v2141
      %2144 = vmatprep.subr.bf16.mxu0 0
      %2145 = vmatpush1.bf16.msra.mxu0 %v2140
      %2146 = vmatprep.subr.bf16.mxu0 0
      %2147 = vmatpush1.bf16.msra.mxu0 %v2139
      %2148 = vmatprep.subr.bf16.mxu0 0
      %2149 = vmatpush1.bf16.msra.mxu0 %v2138
      %2150 = vmatprep.subr.bf16.mxu0 0
      %2151 = vmatpush1.bf16.msra.mxu0 %v2137
      %2152 = vmatprep.subr.bf16.mxu0 0
      %2153 = vmatpush1.bf16.msra.mxu0 %v2136
      %2154 = vmatprep.subr.bf16.mxu0 0
      %2155 = vmatpush1.bf16.msra.mxu0 %v2135
      %2156 = vmatprep.subr.bf16.mxu0 0
      %2157 = vmatpush1.bf16.msra.mxu0 %v2134
      %2158 = vmatprep.subr.bf16.mxu0 0
      %2159 = vmatpush2.bf16.msra.mxu0 0
      %2160 = vmatprep.subr.bf16.mxu0 0
      %2161 = vmatpush2.bf16.msra.mxu0 0
      %2162 = vmatprep.subr.bf16.mxu0 0
      %2163 = vmatpush2.bf16.msra.mxu0 0
      %2164 = vmatprep.subr.bf16.mxu0 0
      %2165 = vmatpush2.bf16.msra.mxu0 0
      %2166 = vmatprep.subr.bf16.mxu0 0
      %2167 = vmatpush2.bf16.msra.mxu0 0
      %2168 = vmatprep.subr.bf16.mxu0 0
      %2169 = vmatpush2.bf16.msra.mxu0 0
      %2170 = vmatprep.subr.bf16.mxu0 0
      %2171 = vmatpush2.bf16.msra.mxu0 0
      %2172 = vmatprep.subr.bf16.mxu0 0
      %2173 = vmatpush2.bf16.msra.mxu0 0
      %2174 = vmatprep.mubr.bf16.mxu0 0
      %2175 = vmatmul.mubr.bf16.gmra.mxu0 %v1109
      %v2176 = vpop.f32.mrf.mxu0
      %v2177 = vadd.f32 %v2072, %v2176
      %v2178 = vpop.f32.mrf.mxu0
      %v2179 = vpop.f32.mrf.mxu0
      %v2180 = vadd.f32 %v2075, %v2179
      %v2181 = vpop.f32.mrf.mxu0
      %2182 = vmatprep.mubr.bf16.mxu0 0
      %2183 = vmatmul.mubr.bf16.gmra.mxu0 %v1110
      %v2184 = vpop.f32.mrf.mxu0
      %v2185 = vadd.f32 %v2080, %v2184
      %v2186 = vpop.f32.mrf.mxu0
      %v2187 = vpop.f32.mrf.mxu0
      %v2188 = vadd.f32 %v2083, %v2187
      %v2189 = vpop.f32.mrf.mxu0
      %2190 = vmatprep.mubr.bf16.mxu0 0
      %2191 = vmatmul.mubr.bf16.gmra.mxu0 %v1111
      %v2192 = vpop.f32.mrf.mxu0
      %v2193 = vadd.f32 %v2088, %v2192
      %v2194 = vpop.f32.mrf.mxu0
      %v2195 = vpop.f32.mrf.mxu0
      %v2196 = vadd.f32 %v2091, %v2195
      %v2197 = vpop.f32.mrf.mxu0
      %2198 = vmatprep.mubr.bf16.mxu0 0
      %2199 = vmatmul.mubr.bf16.gmra.mxu0 %v1112
      %v2200 = vpop.f32.mrf.mxu0
      %v2201 = vadd.f32 %v2096, %v2200
      %v2202 = vpop.f32.mrf.mxu0
      %v2203 = vpop.f32.mrf.mxu0
      %v2204 = vadd.f32 %v2099, %v2203
      %v2205 = vpop.f32.mrf.mxu0
      %2206 = vmatprep.mubr.bf16.mxu0 0
      %2207 = vmatmul.mubr.bf16.gmra.mxu0 %v1113
      %v2208 = vpop.f32.mrf.mxu0
      %v2209 = vadd.f32 %v2104, %v2208
      %v2210 = vpop.f32.mrf.mxu0
      %v2211 = vpop.f32.mrf.mxu0
      %v2212 = vadd.f32 %v2107, %v2211
      %v2213 = vpop.f32.mrf.mxu0
      %2214 = vmatprep.mubr.bf16.mxu0 0
      %2215 = vmatmul.mubr.bf16.gmra.mxu0 %v1114
      %v2216 = vpop.f32.mrf.mxu0
      %v2217 = vadd.f32 %v2112, %v2216
      %v2218 = vpop.f32.mrf.mxu0
      %v2219 = vpop.f32.mrf.mxu0
      %v2220 = vadd.f32 %v2115, %v2219
      %v2221 = vpop.f32.mrf.mxu0
      %2222 = vmatprep.mubr.bf16.mxu0 0
      %2223 = vmatmul.mubr.bf16.gmra.mxu0 %v1115
      %v2224 = vpop.f32.mrf.mxu0
      %v2225 = vadd.f32 %v2120, %v2224
      %v2226 = vpop.f32.mrf.mxu0
      %v2227 = vpop.f32.mrf.mxu0
      %v2228 = vadd.f32 %v2123, %v2227
      %v2229 = vpop.f32.mrf.mxu0
      %2230 = vmatprep.mubr.bf16.mxu0 0
      %2231 = vmatmul.mubr.bf16.gmra.mxu0 %v1116
      %v2232 = vpop.f32.mrf.mxu0
      %v2233 = vadd.f32 %v2128, %v2232
      %v2234 = vpop.f32.mrf.mxu0
      %v2235 = vpop.f32.mrf.mxu0
      %v2236 = vadd.f32 %v2131, %v2235
      %v2237 = vpop.f32.mrf.mxu0
      %2238 = vdwg.mxu0
      %v2240 = vlaneseq
      %v2241 = vshrl.u32 %v2240, 7
      %v2242 = vsub.s32 0, %v2241
      %v2243 = vrot.slane %v1981, %v2242
      %v2245 = vadd.f32 %v2177, %v2243
      %v2246 = vadd.f32 %v2180, %v2243
      %v2247 = vadd.f32 %v2185, %v2243
      %v2248 = vadd.f32 %v2188, %v2243
      %v2249 = vadd.f32 %v2193, %v2243
      %v2250 = vadd.f32 %v2196, %v2243
      %v2251 = vadd.f32 %v2201, %v2243
      %v2252 = vadd.f32 %v2204, %v2243
      %v2253 = vadd.f32 %v2209, %v2243
      %v2254 = vadd.f32 %v2212, %v2243
      %v2255 = vadd.f32 %v2217, %v2243
      %v2256 = vadd.f32 %v2220, %v2243
      %v2257 = vadd.f32 %v2225, %v2243
      %v2258 = vadd.f32 %v2228, %v2243
      %v2259 = vadd.f32 %v2233, %v2243
      %v2260 = vadd.f32 %v2236, %v2243
      %v2261 = vmax.f32 %v2245, 0.0
      %v2262 = vmax.f32 %v2246, 0.0
      %v2263 = vmax.f32 %v2247, 0.0
      %v2264 = vmax.f32 %v2248, 0.0
      %v2265 = vmax.f32 %v2249, 0.0
      %v2266 = vmax.f32 %v2250, 0.0
      %v2267 = vmax.f32 %v2251, 0.0
      %v2268 = vmax.f32 %v2252, 0.0
      %v2269 = vmax.f32 %v2253, 0.0
      %v2270 = vmax.f32 %v2254, 0.0
      %v2271 = vmax.f32 %v2255, 0.0
      %v2272 = vmax.f32 %v2256, 0.0
      %v2273 = vmax.f32 %v2257, 0.0
      %v2274 = vmax.f32 %v2258, 0.0
      %v2275 = vmax.f32 %v2259, 0.0
      %v2276 = vmax.f32 %v2260, 0.0
      %v2277 = vpack.c.bf16 %v2262, %v2261
      %v2278 = vpack.c.bf16 %v2264, %v2263
      %v2279 = vpack.c.bf16 %v2266, %v2265
      %v2280 = vpack.c.bf16 %v2268, %v2267
      %v2281 = vpack.c.bf16 %v2270, %v2269
      %v2282 = vpack.c.bf16 %v2272, %v2271
      %v2283 = vpack.c.bf16 %v2274, %v2273
      %v2284 = vpack.c.bf16 %v2276, %v2275
      %v2286 = vlaneseq
      %v2287 = vshrl.u32 %v2286, 7
      %v2288 = vsub.s32 0, %v2287
      %v2289 = vrot.slane %v1988, %v2288
      %v2295 = vunpack.c.l.b16 %v1983
      %v2296 = vunpack.c.l.b16 %v1984
      %v2297 = vunpack.c.l.b16 %v1985
      %v2298 = vunpack.c.l.b16 %v1986
      %v2299 = vpack.c.b16 %v2296, %v2295
      %v2300 = vpack.c.b16 %v2298, %v2297
      %v2304 = vsel %vm1286, %v2277, 0
      %v2307 = vsel %vm1286, %v2278, 0
      %v2310 = vsel %vm1286, %v2279, 0
      %v2313 = vsel %vm1286, %v2280, 0
      %v2316 = vsel %vm1286, %v2281, 0
      %v2319 = vsel %vm1286, %v2282, 0
      %v2322 = vsel %vm1286, %v2283, 0
      %v2325 = vsel %vm1286, %v2284, 0
      %2327 = vmatprep.subr.bf16.mxu0 0
      %2328 = vmatpush1.bf16.msra.mxu0 0
      %2329 = vmatprep.subr.bf16.mxu0 0
      %2330 = vmatpush1.bf16.msra.mxu0 0
      %2331 = vmatprep.subr.bf16.mxu0 0
      %2332 = vmatpush1.bf16.msra.mxu0 0
      %2333 = vmatprep.subr.bf16.mxu0 0
      %2334 = vmatpush1.bf16.msra.mxu0 0
      %2335 = vmatprep.subr.bf16.mxu0 0
      %2336 = vmatpush1.bf16.msra.mxu0 0
      %2337 = vmatprep.subr.bf16.mxu0 0
      %2338 = vmatpush1.bf16.msra.mxu0 0
      %2339 = vmatprep.subr.bf16.mxu0 0
      %2340 = vmatpush1.bf16.msra.mxu0 %v2300
      %2341 = vmatprep.subr.bf16.mxu0 0
      %2342 = vmatpush1.bf16.msra.mxu0 %v2299
      %2343 = vmatprep.subr.bf16.mxu0 0
      %2344 = vmatpush2.bf16.msra.mxu0 0
      %2345 = vmatprep.subr.bf16.mxu0 0
      %2346 = vmatpush2.bf16.msra.mxu0 0
      %2347 = vmatprep.subr.bf16.mxu0 0
      %2348 = vmatpush2.bf16.msra.mxu0 0
      %2349 = vmatprep.subr.bf16.mxu0 0
      %2350 = vmatpush2.bf16.msra.mxu0 0
      %2351 = vmatprep.subr.bf16.mxu0 0
      %2352 = vmatpush2.bf16.msra.mxu0 0
      %2353 = vmatprep.subr.bf16.mxu0 0
      %2354 = vmatpush2.bf16.msra.mxu0 0
      %2355 = vmatprep.subr.bf16.mxu0 0
      %2356 = vmatpush2.bf16.msra.mxu0 0
      %2357 = vmatprep.subr.bf16.mxu0 0
      %2358 = vmatpush2.bf16.msra.mxu0 0
      %2359 = vmatprep.mubr.bf16.mxu0 0
      %2360 = vmatmul.mubr.bf16.gmra.mxu0 %v2304
      %v2361 = vpop.f32.mrf.mxu0
      %v2362 = vadd.f32 %v2289, %v2361
      %v2363 = vpop.f32.mrf.mxu0
      %v2364 = vpop.f32.mrf.mxu0
      %v2365 = vadd.f32 %v2289, %v2364
      %v2366 = vpop.f32.mrf.mxu0
      %2367 = vmatprep.mubr.bf16.mxu0 0
      %2368 = vmatmul.mubr.bf16.gmra.mxu0 %v2307
      %v2369 = vpop.f32.mrf.mxu0
      %v2370 = vadd.f32 %v2289, %v2369
      %v2371 = vpop.f32.mrf.mxu0
      %v2372 = vpop.f32.mrf.mxu0
      %v2373 = vadd.f32 %v2289, %v2372
      %v2374 = vpop.f32.mrf.mxu0
      %2375 = vmatprep.mubr.bf16.mxu0 0
      %2376 = vmatmul.mubr.bf16.gmra.mxu0 %v2310
      %v2377 = vpop.f32.mrf.mxu0
      %v2378 = vadd.f32 %v2289, %v2377
      %v2379 = vpop.f32.mrf.mxu0
      %v2380 = vpop.f32.mrf.mxu0
      %v2381 = vadd.f32 %v2289, %v2380
      %v2382 = vpop.f32.mrf.mxu0
      %2383 = vmatprep.mubr.bf16.mxu0 0
      %2384 = vmatmul.mubr.bf16.gmra.mxu0 %v2313
      %v2385 = vpop.f32.mrf.mxu0
      %v2386 = vadd.f32 %v2289, %v2385
      %v2387 = vpop.f32.mrf.mxu0
      %v2388 = vpop.f32.mrf.mxu0
      %v2389 = vadd.f32 %v2289, %v2388
      %v2390 = vpop.f32.mrf.mxu0
      %2391 = vmatprep.mubr.bf16.mxu0 0
      %2392 = vmatmul.mubr.bf16.gmra.mxu0 %v2316
      %v2393 = vpop.f32.mrf.mxu0
      %v2394 = vadd.f32 %v2289, %v2393
      %v2395 = vpop.f32.mrf.mxu0
      %v2396 = vpop.f32.mrf.mxu0
      %v2397 = vadd.f32 %v2289, %v2396
      %v2398 = vpop.f32.mrf.mxu0
      %2399 = vmatprep.mubr.bf16.mxu0 0
      %2400 = vmatmul.mubr.bf16.gmra.mxu0 %v2319
      %v2401 = vpop.f32.mrf.mxu0
      %v2402 = vadd.f32 %v2289, %v2401
      %v2403 = vpop.f32.mrf.mxu0
      %v2404 = vpop.f32.mrf.mxu0
      %v2405 = vadd.f32 %v2289, %v2404
      %v2406 = vpop.f32.mrf.mxu0
      %2407 = vmatprep.mubr.bf16.mxu0 0
      %2408 = vmatmul.mubr.bf16.gmra.mxu0 %v2322
      %v2409 = vpop.f32.mrf.mxu0
      %v2410 = vadd.f32 %v2289, %v2409
      %v2411 = vpop.f32.mrf.mxu0
      %v2412 = vpop.f32.mrf.mxu0
      %v2413 = vadd.f32 %v2289, %v2412
      %v2414 = vpop.f32.mrf.mxu0
      %2415 = vmatprep.mubr.bf16.mxu0 0
      %2416 = vmatmul.mubr.bf16.gmra.mxu0 %v2325
      %v2417 = vpop.f32.mrf.mxu0
      %v2418 = vadd.f32 %v2289, %v2417
      %v2419 = vpop.f32.mrf.mxu0
      %v2420 = vpop.f32.mrf.mxu0
      %v2421 = vadd.f32 %v2289, %v2420
      %v2422 = vpop.f32.mrf.mxu0
      %2423 = vdwg.mxu0
      %v2424 = vmax.f32 %v2362, 0.0
      %v2425 = vmax.f32 %v2365, 0.0
      %v2426 = vmax.f32 %v2370, 0.0
      %v2427 = vmax.f32 %v2373, 0.0
      %v2428 = vmax.f32 %v2378, 0.0
      %v2429 = vmax.f32 %v2381, 0.0
      %v2430 = vmax.f32 %v2386, 0.0
      %v2431 = vmax.f32 %v2389, 0.0
      %v2432 = vmax.f32 %v2394, 0.0
      %v2433 = vmax.f32 %v2397, 0.0
      %v2434 = vmax.f32 %v2402, 0.0
      %v2435 = vmax.f32 %v2405, 0.0
      %v2436 = vmax.f32 %v2410, 0.0
      %v2437 = vmax.f32 %v2413, 0.0
      %v2438 = vmax.f32 %v2418, 0.0
      %v2439 = vmax.f32 %v2421, 0.0
      %v2441 = vlaneseq
      %v2442 = vshrl.u32 %v2441, 7
      %v2443 = vsub.s32 0, %v2442
      %v2444 = vrot.slane %v1990, %v2443
      %v2446 = vmul.f32 %v2424, %v2444
      %v2447 = vmul.f32 %v2425, %v2444
      %v2448 = vmul.f32 %v2426, %v2444
      %v2449 = vmul.f32 %v2427, %v2444
      %v2450 = vmul.f32 %v2428, %v2444
      %v2451 = vmul.f32 %v2429, %v2444
      %v2452 = vmul.f32 %v2430, %v2444
      %v2453 = vmul.f32 %v2431, %v2444
      %v2454 = vmul.f32 %v2432, %v2444
      %v2455 = vmul.f32 %v2433, %v2444
      %v2456 = vmul.f32 %v2434, %v2444
      %v2457 = vmul.f32 %v2435, %v2444
      %v2458 = vmul.f32 %v2436, %v2444
      %v2459 = vmul.f32 %v2437, %v2444
      %v2460 = vmul.f32 %v2438, %v2444
      %v2461 = vmul.f32 %v2439, %v2444
      %v2463 = vlaneseq
      %v2464 = vshrl.u32 %v2463, 7
      %v2465 = vsub.s32 0, %v2464
      %v2466 = vrot.slane %v1992, %v2465
      %v2468 = vadd.f32 %v2446, %v2466
      %v2469 = vadd.f32 %v2447, %v2466
      %v2470 = vadd.f32 %v2448, %v2466
      %v2471 = vadd.f32 %v2449, %v2466
      %v2472 = vadd.f32 %v2450, %v2466
      %v2473 = vadd.f32 %v2451, %v2466
      %v2474 = vadd.f32 %v2452, %v2466
      %v2475 = vadd.f32 %v2453, %v2466
      %v2476 = vadd.f32 %v2454, %v2466
      %v2477 = vadd.f32 %v2455, %v2466
      %v2478 = vadd.f32 %v2456, %v2466
      %v2479 = vadd.f32 %v2457, %v2466
      %v2480 = vadd.f32 %v2458, %v2466
      %v2481 = vadd.f32 %v2459, %v2466
      %v2482 = vadd.f32 %v2460, %v2466
      %v2483 = vadd.f32 %v2461, %v2466
      %s2484 = scalar_lea.vmem %s6, 32
      %v2485 = vld [vmem:[%s2484] sm:$0xf]
      %v2486 = vld [vmem:[%s2484 + $0x4] sm:$0xf]
      %v2487 = vld [vmem:[%s2484 + $0x8] sm:$0xf]
      %v2488 = vld [vmem:[%s2484 + $0xc] sm:$0xf]
      %s2489 = scalar_lea.vmem %s7, 2
      %v2490 = vld [vmem:[%s2489] sm:$0x1]
      %s2491 = scalar_lea.vmem %s8, 48
      %v2492 = vld [vmem:[%s2491] sm:$0xf]
      %v2493 = vld [vmem:[%s2491 + $0x4] sm:$0xf]
      %v2494 = vld [vmem:[%s2491 + $0x8] sm:$0xf]
      %v2495 = vld [vmem:[%s2491 + $0xc] sm:$0xf]
      %s2496 = scalar_lea.vmem %s9, 3
      %v2497 = vld [vmem:[%s2496] sm:$0x1]
      %s2498 = scalar_lea.vmem %s10, 3
      %v2499 = vld [vmem:[%s2498] sm:$0x1]
      %s2500 = scalar_lea.vmem %s11, 3
      %v2501 = vld [vmem:[%s2500] sm:$0x1]
      %v2502 = vpack.c.bf16 %v2469, %v2468
      %v2503 = vpack.c.bf16 %v2471, %v2470
      %v2504 = vpack.c.bf16 %v2473, %v2472
      %v2505 = vpack.c.bf16 %v2475, %v2474
      %v2506 = vpack.c.bf16 %v2477, %v2476
      %v2507 = vpack.c.bf16 %v2479, %v2478
      %v2508 = vpack.c.bf16 %v2481, %v2480
      %v2509 = vpack.c.bf16 %v2483, %v2482
      %v2514 = vunpack.c.l.b16 %v2485
      %v2515 = vunpack.c.l.b16 %v2486
      %v2516 = vunpack.c.l.b16 %v2487
      %v2517 = vunpack.c.l.b16 %v2488
      %v2518 = vpack.c.b16 %v2515, %v2514
      %v2519 = vpack.c.b16 %v2517, %v2516
      %v2523 = vsel %vm1286, %v2502, 0
      %v2526 = vsel %vm1286, %v2503, 0
      %v2529 = vsel %vm1286, %v2504, 0
      %v2532 = vsel %vm1286, %v2505, 0
      %v2535 = vsel %vm1286, %v2506, 0
      %v2538 = vsel %vm1286, %v2507, 0
      %v2541 = vsel %vm1286, %v2508, 0
      %v2544 = vsel %vm1286, %v2509, 0
      %2546 = vmatprep.subr.bf16.mxu0 0
      %2547 = vmatpush1.bf16.msra.mxu0 0
      %2548 = vmatprep.subr.bf16.mxu0 0
      %2549 = vmatpush1.bf16.msra.mxu0 0
      %2550 = vmatprep.subr.bf16.mxu0 0
      %2551 = vmatpush1.bf16.msra.mxu0 0
      %2552 = vmatprep.subr.bf16.mxu0 0
      %2553 = vmatpush1.bf16.msra.mxu0 0
      %2554 = vmatprep.subr.bf16.mxu0 0
      %2555 = vmatpush1.bf16.msra.mxu0 0
      %2556 = vmatprep.subr.bf16.mxu0 0
      %2557 = vmatpush1.bf16.msra.mxu0 0
      %2558 = vmatprep.subr.bf16.mxu0 0
      %2559 = vmatpush1.bf16.msra.mxu0 %v2519
      %2560 = vmatprep.subr.bf16.mxu0 0
      %2561 = vmatpush1.bf16.msra.mxu0 %v2518
      %2562 = vmatprep.subr.bf16.mxu0 0
      %2563 = vmatpush2.bf16.msra.mxu0 0
      %2564 = vmatprep.subr.bf16.mxu0 0
      %2565 = vmatpush2.bf16.msra.mxu0 0
      %2566 = vmatprep.subr.bf16.mxu0 0
      %2567 = vmatpush2.bf16.msra.mxu0 0
      %2568 = vmatprep.subr.bf16.mxu0 0
      %2569 = vmatpush2.bf16.msra.mxu0 0
      %2570 = vmatprep.subr.bf16.mxu0 0
      %2571 = vmatpush2.bf16.msra.mxu0 0
      %2572 = vmatprep.subr.bf16.mxu0 0
      %2573 = vmatpush2.bf16.msra.mxu0 0
      %2574 = vmatprep.subr.bf16.mxu0 0
      %2575 = vmatpush2.bf16.msra.mxu0 0
      %2576 = vmatprep.subr.bf16.mxu0 0
      %2577 = vmatpush2.bf16.msra.mxu0 0
      %2578 = vmatprep.mubr.bf16.mxu0 0
      %2579 = vmatmul.mubr.bf16.gmra.mxu0 %v2523
      %v2580 = vpop.f32.mrf.mxu0
      %v2581 = vadd.f32 0.0, %v2580
      %v2582 = vpop.f32.mrf.mxu0
      %v2583 = vpop.f32.mrf.mxu0
      %v2584 = vadd.f32 0.0, %v2583
      %v2585 = vpop.f32.mrf.mxu0
      %2586 = vmatprep.mubr.bf16.mxu0 0
      %2587 = vmatmul.mubr.bf16.gmra.mxu0 %v2526
      %v2588 = vpop.f32.mrf.mxu0
      %v2589 = vadd.f32 0.0, %v2588
      %v2590 = vpop.f32.mrf.mxu0
      %v2591 = vpop.f32.mrf.mxu0
      %v2592 = vadd.f32 0.0, %v2591
      %v2593 = vpop.f32.mrf.mxu0
      %2594 = vmatprep.mubr.bf16.mxu0 0
      %2595 = vmatmul.mubr.bf16.gmra.mxu0 %v2529
      %v2596 = vpop.f32.mrf.mxu0
      %v2597 = vadd.f32 0.0, %v2596
      %v2598 = vpop.f32.mrf.mxu0
      %v2599 = vpop.f32.mrf.mxu0
      %v2600 = vadd.f32 0.0, %v2599
      %v2601 = vpop.f32.mrf.mxu0
      %2602 = vmatprep.mubr.bf16.mxu0 0
      %2603 = vmatmul.mubr.bf16.gmra.mxu0 %v2532
      %v2604 = vpop.f32.mrf.mxu0
      %v2605 = vadd.f32 0.0, %v2604
      %v2606 = vpop.f32.mrf.mxu0
      %v2607 = vpop.f32.mrf.mxu0
      %v2608 = vadd.f32 0.0, %v2607
      %v2609 = vpop.f32.mrf.mxu0
      %2610 = vmatprep.mubr.bf16.mxu0 0
      %2611 = vmatmul.mubr.bf16.gmra.mxu0 %v2535
      %v2612 = vpop.f32.mrf.mxu0
      %v2613 = vadd.f32 0.0, %v2612
      %v2614 = vpop.f32.mrf.mxu0
      %v2615 = vpop.f32.mrf.mxu0
      %v2616 = vadd.f32 0.0, %v2615
      %v2617 = vpop.f32.mrf.mxu0
      %2618 = vmatprep.mubr.bf16.mxu0 0
      %2619 = vmatmul.mubr.bf16.gmra.mxu0 %v2538
      %v2620 = vpop.f32.mrf.mxu0
      %v2621 = vadd.f32 0.0, %v2620
      %v2622 = vpop.f32.mrf.mxu0
      %v2623 = vpop.f32.mrf.mxu0
      %v2624 = vadd.f32 0.0, %v2623
      %v2625 = vpop.f32.mrf.mxu0
      %2626 = vmatprep.mubr.bf16.mxu0 0
      %2627 = vmatmul.mubr.bf16.gmra.mxu0 %v2541
      %v2628 = vpop.f32.mrf.mxu0
      %v2629 = vadd.f32 0.0, %v2628
      %v2630 = vpop.f32.mrf.mxu0
      %v2631 = vpop.f32.mrf.mxu0
      %v2632 = vadd.f32 0.0, %v2631
      %v2633 = vpop.f32.mrf.mxu0
      %2634 = vmatprep.mubr.bf16.mxu0 0
      %2635 = vmatmul.mubr.bf16.gmra.mxu0 %v2544
      %v2636 = vpop.f32.mrf.mxu0
      %v2637 = vadd.f32 0.0, %v2636
      %v2638 = vpop.f32.mrf.mxu0
      %v2639 = vpop.f32.mrf.mxu0
      %v2640 = vadd.f32 0.0, %v2639
      %v2641 = vpop.f32.mrf.mxu0
      %2642 = vdwg.mxu0
      %v2643 = vpack.c.bf16 %v2584, %v2581
      %v2644 = vpack.c.bf16 %v2592, %v2589
      %v2645 = vpack.c.bf16 %v2600, %v2597
      %v2646 = vpack.c.bf16 %v2608, %v2605
      %v2647 = vpack.c.bf16 %v2616, %v2613
      %v2648 = vpack.c.bf16 %v2624, %v2621
      %v2649 = vpack.c.bf16 %v2632, %v2629
      %v2650 = vpack.c.bf16 %v2640, %v2637
      %2651 = vmatprep.subr.bf16.mxu0 0
      %2652 = vmatpush1.bf16.msra.mxu0 %v2650
      %2653 = vmatprep.subr.bf16.mxu0 0
      %2654 = vmatpush1.bf16.msra.mxu0 %v2649
      %2655 = vmatprep.subr.bf16.mxu0 0
      %2656 = vmatpush1.bf16.msra.mxu0 %v2648
      %2657 = vmatprep.subr.bf16.mxu0 0
      %2658 = vmatpush1.bf16.msra.mxu0 %v2647
      %2659 = vmatprep.subr.bf16.mxu0 0
      %2660 = vmatpush1.bf16.msra.mxu0 %v2646
      %2661 = vmatprep.subr.bf16.mxu0 0
      %2662 = vmatpush1.bf16.msra.mxu0 %v2645
      %2663 = vmatprep.subr.bf16.mxu0 0
      %2664 = vmatpush1.bf16.msra.mxu0 %v2644
      %2665 = vmatprep.subr.bf16.mxu0 0
      %2666 = vmatpush1.bf16.msra.mxu0 %v2643
      %2667 = vmatprep.subr.bf16.mxu0 0
      %2668 = vmatpush2.bf16.msra.mxu0 0
      %2669 = vmatprep.subr.bf16.mxu0 0
      %2670 = vmatpush2.bf16.msra.mxu0 0
      %2671 = vmatprep.subr.bf16.mxu0 0
      %2672 = vmatpush2.bf16.msra.mxu0 0
      %2673 = vmatprep.subr.bf16.mxu0 0
      %2674 = vmatpush2.bf16.msra.mxu0 0
      %2675 = vmatprep.subr.bf16.mxu0 0
      %2676 = vmatpush2.bf16.msra.mxu0 0
      %2677 = vmatprep.subr.bf16.mxu0 0
      %2678 = vmatpush2.bf16.msra.mxu0 0
      %2679 = vmatprep.subr.bf16.mxu0 0
      %2680 = vmatpush2.bf16.msra.mxu0 0
      %2681 = vmatprep.subr.bf16.mxu0 0
      %2682 = vmatpush2.bf16.msra.mxu0 0
      %2683 = vmatprep.mubr.bf16.mxu0 0
      %2684 = vmatmul.mubr.bf16.gmra.mxu0 %v1109
      %v2685 = vpop.f32.mrf.mxu0
      %v2686 = vadd.f32 %v2581, %v2685
      %v2687 = vpop.f32.mrf.mxu0
      %v2688 = vpop.f32.mrf.mxu0
      %v2689 = vadd.f32 %v2584, %v2688
      %v2690 = vpop.f32.mrf.mxu0
      %2691 = vmatprep.mubr.bf16.mxu0 0
      %2692 = vmatmul.mubr.bf16.gmra.mxu0 %v1110
      %v2693 = vpop.f32.mrf.mxu0
      %v2694 = vadd.f32 %v2589, %v2693
      %v2695 = vpop.f32.mrf.mxu0
      %v2696 = vpop.f32.mrf.mxu0
      %v2697 = vadd.f32 %v2592, %v2696
      %v2698 = vpop.f32.mrf.mxu0
      %2699 = vmatprep.mubr.bf16.mxu0 0
      %2700 = vmatmul.mubr.bf16.gmra.mxu0 %v1111
      %v2701 = vpop.f32.mrf.mxu0
      %v2702 = vadd.f32 %v2597, %v2701
      %v2703 = vpop.f32.mrf.mxu0
      %v2704 = vpop.f32.mrf.mxu0
      %v2705 = vadd.f32 %v2600, %v2704
      %v2706 = vpop.f32.mrf.mxu0
      %2707 = vmatprep.mubr.bf16.mxu0 0
      %2708 = vmatmul.mubr.bf16.gmra.mxu0 %v1112
      %v2709 = vpop.f32.mrf.mxu0
      %v2710 = vadd.f32 %v2605, %v2709
      %v2711 = vpop.f32.mrf.mxu0
      %v2712 = vpop.f32.mrf.mxu0
      %v2713 = vadd.f32 %v2608, %v2712
      %v2714 = vpop.f32.mrf.mxu0
      %2715 = vmatprep.mubr.bf16.mxu0 0
      %2716 = vmatmul.mubr.bf16.gmra.mxu0 %v1113
      %v2717 = vpop.f32.mrf.mxu0
      %v2718 = vadd.f32 %v2613, %v2717
      %v2719 = vpop.f32.mrf.mxu0
      %v2720 = vpop.f32.mrf.mxu0
      %v2721 = vadd.f32 %v2616, %v2720
      %v2722 = vpop.f32.mrf.mxu0
      %2723 = vmatprep.mubr.bf16.mxu0 0
      %2724 = vmatmul.mubr.bf16.gmra.mxu0 %v1114
      %v2725 = vpop.f32.mrf.mxu0
      %v2726 = vadd.f32 %v2621, %v2725
      %v2727 = vpop.f32.mrf.mxu0
      %v2728 = vpop.f32.mrf.mxu0
      %v2729 = vadd.f32 %v2624, %v2728
      %v2730 = vpop.f32.mrf.mxu0
      %2731 = vmatprep.mubr.bf16.mxu0 0
      %2732 = vmatmul.mubr.bf16.gmra.mxu0 %v1115
      %v2733 = vpop.f32.mrf.mxu0
      %v2734 = vadd.f32 %v2629, %v2733
      %v2735 = vpop.f32.mrf.mxu0
      %v2736 = vpop.f32.mrf.mxu0
      %v2737 = vadd.f32 %v2632, %v2736
      %v2738 = vpop.f32.mrf.mxu0
      %2739 = vmatprep.mubr.bf16.mxu0 0
      %2740 = vmatmul.mubr.bf16.gmra.mxu0 %v1116
      %v2741 = vpop.f32.mrf.mxu0
      %v2742 = vadd.f32 %v2637, %v2741
      %v2743 = vpop.f32.mrf.mxu0
      %v2744 = vpop.f32.mrf.mxu0
      %v2745 = vadd.f32 %v2640, %v2744
      %v2746 = vpop.f32.mrf.mxu0
      %2747 = vdwg.mxu0
      %v2749 = vlaneseq
      %v2750 = vshrl.u32 %v2749, 7
      %v2751 = vsub.s32 0, %v2750
      %v2752 = vrot.slane %v2490, %v2751
      %v2754 = vadd.f32 %v2686, %v2752
      %v2755 = vadd.f32 %v2689, %v2752
      %v2756 = vadd.f32 %v2694, %v2752
      %v2757 = vadd.f32 %v2697, %v2752
      %v2758 = vadd.f32 %v2702, %v2752
      %v2759 = vadd.f32 %v2705, %v2752
      %v2760 = vadd.f32 %v2710, %v2752
      %v2761 = vadd.f32 %v2713, %v2752
      %v2762 = vadd.f32 %v2718, %v2752
      %v2763 = vadd.f32 %v2721, %v2752
      %v2764 = vadd.f32 %v2726, %v2752
      %v2765 = vadd.f32 %v2729, %v2752
      %v2766 = vadd.f32 %v2734, %v2752
      %v2767 = vadd.f32 %v2737, %v2752
      %v2768 = vadd.f32 %v2742, %v2752
      %v2769 = vadd.f32 %v2745, %v2752
      %v2770 = vmax.f32 %v2754, 0.0
      %v2771 = vmax.f32 %v2755, 0.0
      %v2772 = vmax.f32 %v2756, 0.0
      %v2773 = vmax.f32 %v2757, 0.0
      %v2774 = vmax.f32 %v2758, 0.0
      %v2775 = vmax.f32 %v2759, 0.0
      %v2776 = vmax.f32 %v2760, 0.0
      %v2777 = vmax.f32 %v2761, 0.0
      %v2778 = vmax.f32 %v2762, 0.0
      %v2779 = vmax.f32 %v2763, 0.0
      %v2780 = vmax.f32 %v2764, 0.0
      %v2781 = vmax.f32 %v2765, 0.0
      %v2782 = vmax.f32 %v2766, 0.0
      %v2783 = vmax.f32 %v2767, 0.0
      %v2784 = vmax.f32 %v2768, 0.0
      %v2785 = vmax.f32 %v2769, 0.0
      %v2786 = vpack.c.bf16 %v2771, %v2770
      %v2787 = vpack.c.bf16 %v2773, %v2772
      %v2788 = vpack.c.bf16 %v2775, %v2774
      %v2789 = vpack.c.bf16 %v2777, %v2776
      %v2790 = vpack.c.bf16 %v2779, %v2778
      %v2791 = vpack.c.bf16 %v2781, %v2780
      %v2792 = vpack.c.bf16 %v2783, %v2782
      %v2793 = vpack.c.bf16 %v2785, %v2784
      %v2795 = vlaneseq
      %v2796 = vshrl.u32 %v2795, 7
      %v2797 = vsub.s32 0, %v2796
      %v2798 = vrot.slane %v2497, %v2797
      %v2804 = vunpack.c.l.b16 %v2492
      %v2805 = vunpack.c.l.b16 %v2493
      %v2806 = vunpack.c.l.b16 %v2494
      %v2807 = vunpack.c.l.b16 %v2495
      %v2808 = vpack.c.b16 %v2805, %v2804
      %v2809 = vpack.c.b16 %v2807, %v2806
      %v2813 = vsel %vm1286, %v2786, 0
      %v2816 = vsel %vm1286, %v2787, 0
      %v2819 = vsel %vm1286, %v2788, 0
      %v2822 = vsel %vm1286, %v2789, 0
      %v2825 = vsel %vm1286, %v2790, 0
      %v2828 = vsel %vm1286, %v2791, 0
      %v2831 = vsel %vm1286, %v2792, 0
      %v2834 = vsel %vm1286, %v2793, 0
      %2836 = vmatprep.subr.bf16.mxu0 0
      %2837 = vmatpush1.bf16.msra.mxu0 0
      %2838 = vmatprep.subr.bf16.mxu0 0
      %2839 = vmatpush1.bf16.msra.mxu0 0
      %2840 = vmatprep.subr.bf16.mxu0 0
      %2841 = vmatpush1.bf16.msra.mxu0 0
      %2842 = vmatprep.subr.bf16.mxu0 0
      %2843 = vmatpush1.bf16.msra.mxu0 0
      %2844 = vmatprep.subr.bf16.mxu0 0
      %2845 = vmatpush1.bf16.msra.mxu0 0
      %2846 = vmatprep.subr.bf16.mxu0 0
      %2847 = vmatpush1.bf16.msra.mxu0 0
      %2848 = vmatprep.subr.bf16.mxu0 0
      %2849 = vmatpush1.bf16.msra.mxu0 %v2809
      %2850 = vmatprep.subr.bf16.mxu0 0
      %2851 = vmatpush1.bf16.msra.mxu0 %v2808
      %2852 = vmatprep.subr.bf16.mxu0 0
      %2853 = vmatpush2.bf16.msra.mxu0 0
      %2854 = vmatprep.subr.bf16.mxu0 0
      %2855 = vmatpush2.bf16.msra.mxu0 0
      %2856 = vmatprep.subr.bf16.mxu0 0
      %2857 = vmatpush2.bf16.msra.mxu0 0
      %2858 = vmatprep.subr.bf16.mxu0 0
      %2859 = vmatpush2.bf16.msra.mxu0 0
      %2860 = vmatprep.subr.bf16.mxu0 0
      %2861 = vmatpush2.bf16.msra.mxu0 0
      %2862 = vmatprep.subr.bf16.mxu0 0
      %2863 = vmatpush2.bf16.msra.mxu0 0
      %2864 = vmatprep.subr.bf16.mxu0 0
      %2865 = vmatpush2.bf16.msra.mxu0 0
      %2866 = vmatprep.subr.bf16.mxu0 0
      %2867 = vmatpush2.bf16.msra.mxu0 0
      %2868 = vmatprep.mubr.bf16.mxu0 0
      %2869 = vmatmul.mubr.bf16.gmra.mxu0 %v2813
      %v2870 = vpop.f32.mrf.mxu0
      %v2871 = vadd.f32 %v2798, %v2870
      %v2872 = vpop.f32.mrf.mxu0
      %v2873 = vpop.f32.mrf.mxu0
      %v2874 = vadd.f32 %v2798, %v2873
      %v2875 = vpop.f32.mrf.mxu0
      %2876 = vmatprep.mubr.bf16.mxu0 0
      %2877 = vmatmul.mubr.bf16.gmra.mxu0 %v2816
      %v2878 = vpop.f32.mrf.mxu0
      %v2879 = vadd.f32 %v2798, %v2878
      %v2880 = vpop.f32.mrf.mxu0
      %v2881 = vpop.f32.mrf.mxu0
      %v2882 = vadd.f32 %v2798, %v2881
      %v2883 = vpop.f32.mrf.mxu0
      %2884 = vmatprep.mubr.bf16.mxu0 0
      %2885 = vmatmul.mubr.bf16.gmra.mxu0 %v2819
      %v2886 = vpop.f32.mrf.mxu0
      %v2887 = vadd.f32 %v2798, %v2886
      %v2888 = vpop.f32.mrf.mxu0
      %v2889 = vpop.f32.mrf.mxu0
      %v2890 = vadd.f32 %v2798, %v2889
      %v2891 = vpop.f32.mrf.mxu0
      %2892 = vmatprep.mubr.bf16.mxu0 0
      %2893 = vmatmul.mubr.bf16.gmra.mxu0 %v2822
      %v2894 = vpop.f32.mrf.mxu0
      %v2895 = vadd.f32 %v2798, %v2894
      %v2896 = vpop.f32.mrf.mxu0
      %v2897 = vpop.f32.mrf.mxu0
      %v2898 = vadd.f32 %v2798, %v2897
      %v2899 = vpop.f32.mrf.mxu0
      %2900 = vmatprep.mubr.bf16.mxu0 0
      %2901 = vmatmul.mubr.bf16.gmra.mxu0 %v2825
      %v2902 = vpop.f32.mrf.mxu0
      %v2903 = vadd.f32 %v2798, %v2902
      %v2904 = vpop.f32.mrf.mxu0
      %v2905 = vpop.f32.mrf.mxu0
      %v2906 = vadd.f32 %v2798, %v2905
      %v2907 = vpop.f32.mrf.mxu0
      %2908 = vmatprep.mubr.bf16.mxu0 0
      %2909 = vmatmul.mubr.bf16.gmra.mxu0 %v2828
      %v2910 = vpop.f32.mrf.mxu0
      %v2911 = vadd.f32 %v2798, %v2910
      %v2912 = vpop.f32.mrf.mxu0
      %v2913 = vpop.f32.mrf.mxu0
      %v2914 = vadd.f32 %v2798, %v2913
      %v2915 = vpop.f32.mrf.mxu0
      %2916 = vmatprep.mubr.bf16.mxu0 0
      %2917 = vmatmul.mubr.bf16.gmra.mxu0 %v2831
      %v2918 = vpop.f32.mrf.mxu0
      %v2919 = vadd.f32 %v2798, %v2918
      %v2920 = vpop.f32.mrf.mxu0
      %v2921 = vpop.f32.mrf.mxu0
      %v2922 = vadd.f32 %v2798, %v2921
      %v2923 = vpop.f32.mrf.mxu0
      %2924 = vmatprep.mubr.bf16.mxu0 0
      %2925 = vmatmul.mubr.bf16.gmra.mxu0 %v2834
      %v2926 = vpop.f32.mrf.mxu0
      %v2927 = vadd.f32 %v2798, %v2926
      %v2928 = vpop.f32.mrf.mxu0
      %v2929 = vpop.f32.mrf.mxu0
      %v2930 = vadd.f32 %v2798, %v2929
      %v2931 = vpop.f32.mrf.mxu0
      %2932 = vdwg.mxu0
      %v2933 = vmax.f32 %v2871, 0.0
      %v2934 = vmax.f32 %v2874, 0.0
      %v2935 = vmax.f32 %v2879, 0.0
      %v2936 = vmax.f32 %v2882, 0.0
      %v2937 = vmax.f32 %v2887, 0.0
      %v2938 = vmax.f32 %v2890, 0.0
      %v2939 = vmax.f32 %v2895, 0.0
      %v2940 = vmax.f32 %v2898, 0.0
      %v2941 = vmax.f32 %v2903, 0.0
      %v2942 = vmax.f32 %v2906, 0.0
      %v2943 = vmax.f32 %v2911, 0.0
      %v2944 = vmax.f32 %v2914, 0.0
      %v2945 = vmax.f32 %v2919, 0.0
      %v2946 = vmax.f32 %v2922, 0.0
      %v2947 = vmax.f32 %v2927, 0.0
      %v2948 = vmax.f32 %v2930, 0.0
      %v2950 = vlaneseq
      %v2951 = vshrl.u32 %v2950, 7
      %v2952 = vsub.s32 0, %v2951
      %v2953 = vrot.slane %v2499, %v2952
      %v2955 = vmul.f32 %v2933, %v2953
      %v2956 = vmul.f32 %v2934, %v2953
      %v2957 = vmul.f32 %v2935, %v2953
      %v2958 = vmul.f32 %v2936, %v2953
      %v2959 = vmul.f32 %v2937, %v2953
      %v2960 = vmul.f32 %v2938, %v2953
      %v2961 = vmul.f32 %v2939, %v2953
      %v2962 = vmul.f32 %v2940, %v2953
      %v2963 = vmul.f32 %v2941, %v2953
      %v2964 = vmul.f32 %v2942, %v2953
      %v2965 = vmul.f32 %v2943, %v2953
      %v2966 = vmul.f32 %v2944, %v2953
      %v2967 = vmul.f32 %v2945, %v2953
      %v2968 = vmul.f32 %v2946, %v2953
      %v2969 = vmul.f32 %v2947, %v2953
      %v2970 = vmul.f32 %v2948, %v2953
      %v2972 = vlaneseq
      %v2973 = vshrl.u32 %v2972, 7
      %v2974 = vsub.s32 0, %v2973
      %v2975 = vrot.slane %v2501, %v2974
      %v2977 = vadd.f32 %v2955, %v2975
      %v2978 = vadd.f32 %v2956, %v2975
      %v2979 = vadd.f32 %v2957, %v2975
      %v2980 = vadd.f32 %v2958, %v2975
      %v2981 = vadd.f32 %v2959, %v2975
      %v2982 = vadd.f32 %v2960, %v2975
      %v2983 = vadd.f32 %v2961, %v2975
      %v2984 = vadd.f32 %v2962, %v2975
      %v2985 = vadd.f32 %v2963, %v2975
      %v2986 = vadd.f32 %v2964, %v2975
      %v2987 = vadd.f32 %v2965, %v2975
      %v2988 = vadd.f32 %v2966, %v2975
      %v2989 = vadd.f32 %v2967, %v2975
      %v2990 = vadd.f32 %v2968, %v2975
      %v2991 = vadd.f32 %v2969, %v2975
      %v2992 = vadd.f32 %v2970, %v2975
      %s2993 = scalar_lea.vmem %s6, 48
      %v2994 = vld [vmem:[%s2993] sm:$0xf]
      %v2995 = vld [vmem:[%s2993 + $0x4] sm:$0xf]
      %v2996 = vld [vmem:[%s2993 + $0x8] sm:$0xf]
      %v2997 = vld [vmem:[%s2993 + $0xc] sm:$0xf]
      %s2998 = scalar_lea.vmem %s7, 3
      %v2999 = vld [vmem:[%s2998] sm:$0x1]
      %s3000 = scalar_lea.vmem %s8, 64
      %v3001 = vld [vmem:[%s3000] sm:$0xf]
      %v3002 = vld [vmem:[%s3000 + $0x4] sm:$0xf]
      %v3003 = vld [vmem:[%s3000 + $0x8] sm:$0xf]
      %v3004 = vld [vmem:[%s3000 + $0xc] sm:$0xf]
      %s3005 = scalar_lea.vmem %s9, 4
      %v3006 = vld [vmem:[%s3005] sm:$0x1]
      %s3007 = scalar_lea.vmem %s10, 4
      %v3008 = vld [vmem:[%s3007] sm:$0x1]
      %s3009 = scalar_lea.vmem %s11, 4
      %v3010 = vld [vmem:[%s3009] sm:$0x1]
      %v3011 = vpack.c.bf16 %v2978, %v2977
      %v3012 = vpack.c.bf16 %v2980, %v2979
      %v3013 = vpack.c.bf16 %v2982, %v2981
      %v3014 = vpack.c.bf16 %v2984, %v2983
      %v3015 = vpack.c.bf16 %v2986, %v2985
      %v3016 = vpack.c.bf16 %v2988, %v2987
      %v3017 = vpack.c.bf16 %v2990, %v2989
      %v3018 = vpack.c.bf16 %v2992, %v2991
      %v3023 = vunpack.c.l.b16 %v2994
      %v3024 = vunpack.c.l.b16 %v2995
      %v3025 = vunpack.c.l.b16 %v2996
      %v3026 = vunpack.c.l.b16 %v2997
      %v3027 = vpack.c.b16 %v3024, %v3023
      %v3028 = vpack.c.b16 %v3026, %v3025
      %v3032 = vsel %vm1286, %v3011, 0
      %v3035 = vsel %vm1286, %v3012, 0
      %v3038 = vsel %vm1286, %v3013, 0
      %v3041 = vsel %vm1286, %v3014, 0
      %v3044 = vsel %vm1286, %v3015, 0
      %v3047 = vsel %vm1286, %v3016, 0
      %v3050 = vsel %vm1286, %v3017, 0
      %v3053 = vsel %vm1286, %v3018, 0
      %3055 = vmatprep.subr.bf16.mxu0 0
      %3056 = vmatpush1.bf16.msra.mxu0 0
      %3057 = vmatprep.subr.bf16.mxu0 0
      %3058 = vmatpush1.bf16.msra.mxu0 0
      %3059 = vmatprep.subr.bf16.mxu0 0
      %3060 = vmatpush1.bf16.msra.mxu0 0
      %3061 = vmatprep.subr.bf16.mxu0 0
      %3062 = vmatpush1.bf16.msra.mxu0 0
      %3063 = vmatprep.subr.bf16.mxu0 0
      %3064 = vmatpush1.bf16.msra.mxu0 0
      %3065 = vmatprep.subr.bf16.mxu0 0
      %3066 = vmatpush1.bf16.msra.mxu0 0
      %3067 = vmatprep.subr.bf16.mxu0 0
      %3068 = vmatpush1.bf16.msra.mxu0 %v3028
      %3069 = vmatprep.subr.bf16.mxu0 0
      %3070 = vmatpush1.bf16.msra.mxu0 %v3027
      %3071 = vmatprep.subr.bf16.mxu0 0
      %3072 = vmatpush2.bf16.msra.mxu0 0
      %3073 = vmatprep.subr.bf16.mxu0 0
      %3074 = vmatpush2.bf16.msra.mxu0 0
      %3075 = vmatprep.subr.bf16.mxu0 0
      %3076 = vmatpush2.bf16.msra.mxu0 0
      %3077 = vmatprep.subr.bf16.mxu0 0
      %3078 = vmatpush2.bf16.msra.mxu0 0
      %3079 = vmatprep.subr.bf16.mxu0 0
      %3080 = vmatpush2.bf16.msra.mxu0 0
      %3081 = vmatprep.subr.bf16.mxu0 0
      %3082 = vmatpush2.bf16.msra.mxu0 0
      %3083 = vmatprep.subr.bf16.mxu0 0
      %3084 = vmatpush2.bf16.msra.mxu0 0
      %3085 = vmatprep.subr.bf16.mxu0 0
      %3086 = vmatpush2.bf16.msra.mxu0 0
      %3087 = vmatprep.mubr.bf16.mxu0 0
      %3088 = vmatmul.mubr.bf16.gmra.mxu0 %v3032
      %v3089 = vpop.f32.mrf.mxu0
      %v3090 = vadd.f32 0.0, %v3089
      %v3091 = vpop.f32.mrf.mxu0
      %v3092 = vpop.f32.mrf.mxu0
      %v3093 = vadd.f32 0.0, %v3092
      %v3094 = vpop.f32.mrf.mxu0
      %3095 = vmatprep.mubr.bf16.mxu0 0
      %3096 = vmatmul.mubr.bf16.gmra.mxu0 %v3035
      %v3097 = vpop.f32.mrf.mxu0
      %v3098 = vadd.f32 0.0, %v3097
      %v3099 = vpop.f32.mrf.mxu0
      %v3100 = vpop.f32.mrf.mxu0
      %v3101 = vadd.f32 0.0, %v3100
      %v3102 = vpop.f32.mrf.mxu0
      %3103 = vmatprep.mubr.bf16.mxu0 0
      %3104 = vmatmul.mubr.bf16.gmra.mxu0 %v3038
      %v3105 = vpop.f32.mrf.mxu0
      %v3106 = vadd.f32 0.0, %v3105
      %v3107 = vpop.f32.mrf.mxu0
      %v3108 = vpop.f32.mrf.mxu0
      %v3109 = vadd.f32 0.0, %v3108
      %v3110 = vpop.f32.mrf.mxu0
      %3111 = vmatprep.mubr.bf16.mxu0 0
      %3112 = vmatmul.mubr.bf16.gmra.mxu0 %v3041
      %v3113 = vpop.f32.mrf.mxu0
      %v3114 = vadd.f32 0.0, %v3113
      %v3115 = vpop.f32.mrf.mxu0
      %v3116 = vpop.f32.mrf.mxu0
      %v3117 = vadd.f32 0.0, %v3116
      %v3118 = vpop.f32.mrf.mxu0
      %3119 = vmatprep.mubr.bf16.mxu0 0
      %3120 = vmatmul.mubr.bf16.gmra.mxu0 %v3044
      %v3121 = vpop.f32.mrf.mxu0
      %v3122 = vadd.f32 0.0, %v3121
      %v3123 = vpop.f32.mrf.mxu0
      %v3124 = vpop.f32.mrf.mxu0
      %v3125 = vadd.f32 0.0, %v3124
      %v3126 = vpop.f32.mrf.mxu0
      %3127 = vmatprep.mubr.bf16.mxu0 0
      %3128 = vmatmul.mubr.bf16.gmra.mxu0 %v3047
      %v3129 = vpop.f32.mrf.mxu0
      %v3130 = vadd.f32 0.0, %v3129
      %v3131 = vpop.f32.mrf.mxu0
      %v3132 = vpop.f32.mrf.mxu0
      %v3133 = vadd.f32 0.0, %v3132
      %v3134 = vpop.f32.mrf.mxu0
      %3135 = vmatprep.mubr.bf16.mxu0 0
      %3136 = vmatmul.mubr.bf16.gmra.mxu0 %v3050
      %v3137 = vpop.f32.mrf.mxu0
      %v3138 = vadd.f32 0.0, %v3137
      %v3139 = vpop.f32.mrf.mxu0
      %v3140 = vpop.f32.mrf.mxu0
      %v3141 = vadd.f32 0.0, %v3140
      %v3142 = vpop.f32.mrf.mxu0
      %3143 = vmatprep.mubr.bf16.mxu0 0
      %3144 = vmatmul.mubr.bf16.gmra.mxu0 %v3053
      %v3145 = vpop.f32.mrf.mxu0
      %v3146 = vadd.f32 0.0, %v3145
      %v3147 = vpop.f32.mrf.mxu0
      %v3148 = vpop.f32.mrf.mxu0
      %v3149 = vadd.f32 0.0, %v3148
      %v3150 = vpop.f32.mrf.mxu0
      %3151 = vdwg.mxu0
      %v3152 = vpack.c.bf16 %v3093, %v3090
      %v3153 = vpack.c.bf16 %v3101, %v3098
      %v3154 = vpack.c.bf16 %v3109, %v3106
      %v3155 = vpack.c.bf16 %v3117, %v3114
      %v3156 = vpack.c.bf16 %v3125, %v3122
      %v3157 = vpack.c.bf16 %v3133, %v3130
      %v3158 = vpack.c.bf16 %v3141, %v3138
      %v3159 = vpack.c.bf16 %v3149, %v3146
      %3160 = vmatprep.subr.bf16.mxu0 0
      %3161 = vmatpush1.bf16.msra.mxu0 %v3159
      %3162 = vmatprep.subr.bf16.mxu0 0
      %3163 = vmatpush1.bf16.msra.mxu0 %v3158
      %3164 = vmatprep.subr.bf16.mxu0 0
      %3165 = vmatpush1.bf16.msra.mxu0 %v3157
      %3166 = vmatprep.subr.bf16.mxu0 0
      %3167 = vmatpush1.bf16.msra.mxu0 %v3156
      %3168 = vmatprep.subr.bf16.mxu0 0
      %3169 = vmatpush1.bf16.msra.mxu0 %v3155
      %3170 = vmatprep.subr.bf16.mxu0 0
      %3171 = vmatpush1.bf16.msra.mxu0 %v3154
      %3172 = vmatprep.subr.bf16.mxu0 0
      %3173 = vmatpush1.bf16.msra.mxu0 %v3153
      %3174 = vmatprep.subr.bf16.mxu0 0
      %3175 = vmatpush1.bf16.msra.mxu0 %v3152
      %3176 = vmatprep.subr.bf16.mxu0 0
      %3177 = vmatpush2.bf16.msra.mxu0 0
      %3178 = vmatprep.subr.bf16.mxu0 0
      %3179 = vmatpush2.bf16.msra.mxu0 0
      %3180 = vmatprep.subr.bf16.mxu0 0
      %3181 = vmatpush2.bf16.msra.mxu0 0
      %3182 = vmatprep.subr.bf16.mxu0 0
      %3183 = vmatpush2.bf16.msra.mxu0 0
      %3184 = vmatprep.subr.bf16.mxu0 0
      %3185 = vmatpush2.bf16.msra.mxu0 0
      %3186 = vmatprep.subr.bf16.mxu0 0
      %3187 = vmatpush2.bf16.msra.mxu0 0
      %3188 = vmatprep.subr.bf16.mxu0 0
      %3189 = vmatpush2.bf16.msra.mxu0 0
      %3190 = vmatprep.subr.bf16.mxu0 0
      %3191 = vmatpush2.bf16.msra.mxu0 0
      %3192 = vmatprep.mubr.bf16.mxu0 0
      %3193 = vmatmul.mubr.bf16.gmra.mxu0 %v1109
      %v3194 = vpop.f32.mrf.mxu0
      %v3195 = vadd.f32 %v3090, %v3194
      %v3196 = vpop.f32.mrf.mxu0
      %v3197 = vpop.f32.mrf.mxu0
      %v3198 = vadd.f32 %v3093, %v3197
      %v3199 = vpop.f32.mrf.mxu0
      %3200 = vmatprep.mubr.bf16.mxu0 0
      %3201 = vmatmul.mubr.bf16.gmra.mxu0 %v1110
      %v3202 = vpop.f32.mrf.mxu0
      %v3203 = vadd.f32 %v3098, %v3202
      %v3204 = vpop.f32.mrf.mxu0
      %v3205 = vpop.f32.mrf.mxu0
      %v3206 = vadd.f32 %v3101, %v3205
      %v3207 = vpop.f32.mrf.mxu0
      %3208 = vmatprep.mubr.bf16.mxu0 0
      %3209 = vmatmul.mubr.bf16.gmra.mxu0 %v1111
      %v3210 = vpop.f32.mrf.mxu0
      %v3211 = vadd.f32 %v3106, %v3210
      %v3212 = vpop.f32.mrf.mxu0
      %v3213 = vpop.f32.mrf.mxu0
      %v3214 = vadd.f32 %v3109, %v3213
      %v3215 = vpop.f32.mrf.mxu0
      %3216 = vmatprep.mubr.bf16.mxu0 0
      %3217 = vmatmul.mubr.bf16.gmra.mxu0 %v1112
      %v3218 = vpop.f32.mrf.mxu0
      %v3219 = vadd.f32 %v3114, %v3218
      %v3220 = vpop.f32.mrf.mxu0
      %v3221 = vpop.f32.mrf.mxu0
      %v3222 = vadd.f32 %v3117, %v3221
      %v3223 = vpop.f32.mrf.mxu0
      %3224 = vmatprep.mubr.bf16.mxu0 0
      %3225 = vmatmul.mubr.bf16.gmra.mxu0 %v1113
      %v3226 = vpop.f32.mrf.mxu0
      %v3227 = vadd.f32 %v3122, %v3226
      %v3228 = vpop.f32.mrf.mxu0
      %v3229 = vpop.f32.mrf.mxu0
      %v3230 = vadd.f32 %v3125, %v3229
      %v3231 = vpop.f32.mrf.mxu0
      %3232 = vmatprep.mubr.bf16.mxu0 0
      %3233 = vmatmul.mubr.bf16.gmra.mxu0 %v1114
      %v3234 = vpop.f32.mrf.mxu0
      %v3235 = vadd.f32 %v3130, %v3234
      %v3236 = vpop.f32.mrf.mxu0
      %v3237 = vpop.f32.mrf.mxu0
      %v3238 = vadd.f32 %v3133, %v3237
      %v3239 = vpop.f32.mrf.mxu0
      %3240 = vmatprep.mubr.bf16.mxu0 0
      %3241 = vmatmul.mubr.bf16.gmra.mxu0 %v1115
      %v3242 = vpop.f32.mrf.mxu0
      %v3243 = vadd.f32 %v3138, %v3242
      %v3244 = vpop.f32.mrf.mxu0
      %v3245 = vpop.f32.mrf.mxu0
      %v3246 = vadd.f32 %v3141, %v3245
      %v3247 = vpop.f32.mrf.mxu0
      %3248 = vmatprep.mubr.bf16.mxu0 0
      %3249 = vmatmul.mubr.bf16.gmra.mxu0 %v1116
      %v3250 = vpop.f32.mrf.mxu0
      %v3251 = vadd.f32 %v3146, %v3250
      %v3252 = vpop.f32.mrf.mxu0
      %v3253 = vpop.f32.mrf.mxu0
      %v3254 = vadd.f32 %v3149, %v3253
      %v3255 = vpop.f32.mrf.mxu0
      %3256 = vdwg.mxu0
      %v3258 = vlaneseq
      %v3259 = vshrl.u32 %v3258, 7
      %v3260 = vsub.s32 0, %v3259
      %v3261 = vrot.slane %v2999, %v3260
      %v3263 = vadd.f32 %v3195, %v3261
      %v3264 = vadd.f32 %v3198, %v3261
      %v3265 = vadd.f32 %v3203, %v3261
      %v3266 = vadd.f32 %v3206, %v3261
      %v3267 = vadd.f32 %v3211, %v3261
      %v3268 = vadd.f32 %v3214, %v3261
      %v3269 = vadd.f32 %v3219, %v3261
      %v3270 = vadd.f32 %v3222, %v3261
      %v3271 = vadd.f32 %v3227, %v3261
      %v3272 = vadd.f32 %v3230, %v3261
      %v3273 = vadd.f32 %v3235, %v3261
      %v3274 = vadd.f32 %v3238, %v3261
      %v3275 = vadd.f32 %v3243, %v3261
      %v3276 = vadd.f32 %v3246, %v3261
      %v3277 = vadd.f32 %v3251, %v3261
      %v3278 = vadd.f32 %v3254, %v3261
      %v3279 = vmax.f32 %v3263, 0.0
      %v3280 = vmax.f32 %v3264, 0.0
      %v3281 = vmax.f32 %v3265, 0.0
      %v3282 = vmax.f32 %v3266, 0.0
      %v3283 = vmax.f32 %v3267, 0.0
      %v3284 = vmax.f32 %v3268, 0.0
      %v3285 = vmax.f32 %v3269, 0.0
      %v3286 = vmax.f32 %v3270, 0.0
      %v3287 = vmax.f32 %v3271, 0.0
      %v3288 = vmax.f32 %v3272, 0.0
      %v3289 = vmax.f32 %v3273, 0.0
      %v3290 = vmax.f32 %v3274, 0.0
      %v3291 = vmax.f32 %v3275, 0.0
      %v3292 = vmax.f32 %v3276, 0.0
      %v3293 = vmax.f32 %v3277, 0.0
      %v3294 = vmax.f32 %v3278, 0.0
      %v3295 = vpack.c.bf16 %v3280, %v3279
      %v3296 = vpack.c.bf16 %v3282, %v3281
      %v3297 = vpack.c.bf16 %v3284, %v3283
      %v3298 = vpack.c.bf16 %v3286, %v3285
      %v3299 = vpack.c.bf16 %v3288, %v3287
      %v3300 = vpack.c.bf16 %v3290, %v3289
      %v3301 = vpack.c.bf16 %v3292, %v3291
      %v3302 = vpack.c.bf16 %v3294, %v3293
      %v3304 = vlaneseq
      %v3305 = vshrl.u32 %v3304, 7
      %v3306 = vsub.s32 0, %v3305
      %v3307 = vrot.slane %v3006, %v3306
      %v3313 = vunpack.c.l.b16 %v3001
      %v3314 = vunpack.c.l.b16 %v3002
      %v3315 = vunpack.c.l.b16 %v3003
      %v3316 = vunpack.c.l.b16 %v3004
      %v3317 = vpack.c.b16 %v3314, %v3313
      %v3318 = vpack.c.b16 %v3316, %v3315
      %v3322 = vsel %vm1286, %v3295, 0
      %v3325 = vsel %vm1286, %v3296, 0
      %v3328 = vsel %vm1286, %v3297, 0
      %v3331 = vsel %vm1286, %v3298, 0
      %v3334 = vsel %vm1286, %v3299, 0
      %v3337 = vsel %vm1286, %v3300, 0
      %v3340 = vsel %vm1286, %v3301, 0
      %v3343 = vsel %vm1286, %v3302, 0
      %3345 = vmatprep.subr.bf16.mxu0 0
      %3346 = vmatpush1.bf16.msra.mxu0 0
      %3347 = vmatprep.subr.bf16.mxu0 0
      %3348 = vmatpush1.bf16.msra.mxu0 0
      %3349 = vmatprep.subr.bf16.mxu0 0
      %3350 = vmatpush1.bf16.msra.mxu0 0
      %3351 = vmatprep.subr.bf16.mxu0 0
      %3352 = vmatpush1.bf16.msra.mxu0 0
      %3353 = vmatprep.subr.bf16.mxu0 0
      %3354 = vmatpush1.bf16.msra.mxu0 0
      %3355 = vmatprep.subr.bf16.mxu0 0
      %3356 = vmatpush1.bf16.msra.mxu0 0
      %3357 = vmatprep.subr.bf16.mxu0 0
      %3358 = vmatpush1.bf16.msra.mxu0 %v3318
      %3359 = vmatprep.subr.bf16.mxu0 0
      %3360 = vmatpush1.bf16.msra.mxu0 %v3317
      %3361 = vmatprep.subr.bf16.mxu0 0
      %3362 = vmatpush2.bf16.msra.mxu0 0
      %3363 = vmatprep.subr.bf16.mxu0 0
      %3364 = vmatpush2.bf16.msra.mxu0 0
      %3365 = vmatprep.subr.bf16.mxu0 0
      %3366 = vmatpush2.bf16.msra.mxu0 0
      %3367 = vmatprep.subr.bf16.mxu0 0
      %3368 = vmatpush2.bf16.msra.mxu0 0
      %3369 = vmatprep.subr.bf16.mxu0 0
      %3370 = vmatpush2.bf16.msra.mxu0 0
      %3371 = vmatprep.subr.bf16.mxu0 0
      %3372 = vmatpush2.bf16.msra.mxu0 0
      %3373 = vmatprep.subr.bf16.mxu0 0
      %3374 = vmatpush2.bf16.msra.mxu0 0
      %3375 = vmatprep.subr.bf16.mxu0 0
      %3376 = vmatpush2.bf16.msra.mxu0 0
      %3377 = vmatprep.mubr.bf16.mxu0 0
      %3378 = vmatmul.mubr.bf16.gmra.mxu0 %v3322
      %v3379 = vpop.f32.mrf.mxu0
      %v3380 = vadd.f32 %v3307, %v3379
      %v3381 = vpop.f32.mrf.mxu0
      %v3382 = vpop.f32.mrf.mxu0
      %v3383 = vadd.f32 %v3307, %v3382
      %v3384 = vpop.f32.mrf.mxu0
      %3385 = vmatprep.mubr.bf16.mxu0 0
      %3386 = vmatmul.mubr.bf16.gmra.mxu0 %v3325
      %v3387 = vpop.f32.mrf.mxu0
      %v3388 = vadd.f32 %v3307, %v3387
      %v3389 = vpop.f32.mrf.mxu0
      %v3390 = vpop.f32.mrf.mxu0
      %v3391 = vadd.f32 %v3307, %v3390
      %v3392 = vpop.f32.mrf.mxu0
      %3393 = vmatprep.mubr.bf16.mxu0 0
      %3394 = vmatmul.mubr.bf16.gmra.mxu0 %v3328
      %v3395 = vpop.f32.mrf.mxu0
      %v3396 = vadd.f32 %v3307, %v3395
      %v3397 = vpop.f32.mrf.mxu0
      %v3398 = vpop.f32.mrf.mxu0
      %v3399 = vadd.f32 %v3307, %v3398
      %v3400 = vpop.f32.mrf.mxu0
      %3401 = vmatprep.mubr.bf16.mxu0 0
      %3402 = vmatmul.mubr.bf16.gmra.mxu0 %v3331
      %v3403 = vpop.f32.mrf.mxu0
      %v3404 = vadd.f32 %v3307, %v3403
      %v3405 = vpop.f32.mrf.mxu0
      %v3406 = vpop.f32.mrf.mxu0
      %v3407 = vadd.f32 %v3307, %v3406
      %v3408 = vpop.f32.mrf.mxu0
      %3409 = vmatprep.mubr.bf16.mxu0 0
      %3410 = vmatmul.mubr.bf16.gmra.mxu0 %v3334
      %v3411 = vpop.f32.mrf.mxu0
      %v3412 = vadd.f32 %v3307, %v3411
      %v3413 = vpop.f32.mrf.mxu0
      %v3414 = vpop.f32.mrf.mxu0
      %v3415 = vadd.f32 %v3307, %v3414
      %v3416 = vpop.f32.mrf.mxu0
      %3417 = vmatprep.mubr.bf16.mxu0 0
      %3418 = vmatmul.mubr.bf16.gmra.mxu0 %v3337
      %v3419 = vpop.f32.mrf.mxu0
      %v3420 = vadd.f32 %v3307, %v3419
      %v3421 = vpop.f32.mrf.mxu0
      %v3422 = vpop.f32.mrf.mxu0
      %v3423 = vadd.f32 %v3307, %v3422
      %v3424 = vpop.f32.mrf.mxu0
      %3425 = vmatprep.mubr.bf16.mxu0 0
      %3426 = vmatmul.mubr.bf16.gmra.mxu0 %v3340
      %v3427 = vpop.f32.mrf.mxu0
      %v3428 = vadd.f32 %v3307, %v3427
      %v3429 = vpop.f32.mrf.mxu0
      %v3430 = vpop.f32.mrf.mxu0
      %v3431 = vadd.f32 %v3307, %v3430
      %v3432 = vpop.f32.mrf.mxu0
      %3433 = vmatprep.mubr.bf16.mxu0 0
      %3434 = vmatmul.mubr.bf16.gmra.mxu0 %v3343
      %v3435 = vpop.f32.mrf.mxu0
      %v3436 = vadd.f32 %v3307, %v3435
      %v3437 = vpop.f32.mrf.mxu0
      %v3438 = vpop.f32.mrf.mxu0
      %v3439 = vadd.f32 %v3307, %v3438
      %v3440 = vpop.f32.mrf.mxu0
      %3441 = vdwg.mxu0
      %v3442 = vmax.f32 %v3380, 0.0
      %v3443 = vmax.f32 %v3383, 0.0
      %v3444 = vmax.f32 %v3388, 0.0
      %v3445 = vmax.f32 %v3391, 0.0
      %v3446 = vmax.f32 %v3396, 0.0
      %v3447 = vmax.f32 %v3399, 0.0
      %v3448 = vmax.f32 %v3404, 0.0
      %v3449 = vmax.f32 %v3407, 0.0
      %v3450 = vmax.f32 %v3412, 0.0
      %v3451 = vmax.f32 %v3415, 0.0
      %v3452 = vmax.f32 %v3420, 0.0
      %v3453 = vmax.f32 %v3423, 0.0
      %v3454 = vmax.f32 %v3428, 0.0
      %v3455 = vmax.f32 %v3431, 0.0
      %v3456 = vmax.f32 %v3436, 0.0
      %v3457 = vmax.f32 %v3439, 0.0
      %v3459 = vlaneseq
      %v3460 = vshrl.u32 %v3459, 7
      %v3461 = vsub.s32 0, %v3460
      %v3462 = vrot.slane %v3008, %v3461
      %v3464 = vmul.f32 %v3442, %v3462
      %v3465 = vmul.f32 %v3443, %v3462
      %v3466 = vmul.f32 %v3444, %v3462
      %v3467 = vmul.f32 %v3445, %v3462
      %v3468 = vmul.f32 %v3446, %v3462
      %v3469 = vmul.f32 %v3447, %v3462
      %v3470 = vmul.f32 %v3448, %v3462
      %v3471 = vmul.f32 %v3449, %v3462
      %v3472 = vmul.f32 %v3450, %v3462
      %v3473 = vmul.f32 %v3451, %v3462
      %v3474 = vmul.f32 %v3452, %v3462
      %v3475 = vmul.f32 %v3453, %v3462
      %v3476 = vmul.f32 %v3454, %v3462
      %v3477 = vmul.f32 %v3455, %v3462
      %v3478 = vmul.f32 %v3456, %v3462
      %v3479 = vmul.f32 %v3457, %v3462
      %v3481 = vlaneseq
      %v3482 = vshrl.u32 %v3481, 7
      %v3483 = vsub.s32 0, %v3482
      %v3484 = vrot.slane %v3010, %v3483
      %v3486 = vadd.f32 %v3464, %v3484
      %v3487 = vadd.f32 %v3465, %v3484
      %v3488 = vadd.f32 %v3466, %v3484
      %v3489 = vadd.f32 %v3467, %v3484
      %v3490 = vadd.f32 %v3468, %v3484
      %v3491 = vadd.f32 %v3469, %v3484
      %v3492 = vadd.f32 %v3470, %v3484
      %v3493 = vadd.f32 %v3471, %v3484
      %v3494 = vadd.f32 %v3472, %v3484
      %v3495 = vadd.f32 %v3473, %v3484
      %v3496 = vadd.f32 %v3474, %v3484
      %v3497 = vadd.f32 %v3475, %v3484
      %v3498 = vadd.f32 %v3476, %v3484
      %v3499 = vadd.f32 %v3477, %v3484
      %v3500 = vadd.f32 %v3478, %v3484
      %v3501 = vadd.f32 %v3479, %v3484
      %v3502 = vsel %vm1286, %v3486, 0.0
      %v3503 = vrot.slane %v3502, 4
      %v3504 = vadd.f32 %v3502, %v3503
      %v3505 = vrot.slane %v3504, 2
      %v3506 = vadd.f32 %v3504, %v3505
      %v3507 = vrot.slane %v3506, 1
      %v3508 = vadd.f32 %v3506, %v3507
      %v3509 = vsel %vm1286, %v3487, 0.0
      %v3510 = vrot.slane %v3509, 4
      %v3511 = vadd.f32 %v3509, %v3510
      %v3512 = vrot.slane %v3511, 2
      %v3513 = vadd.f32 %v3511, %v3512
      %v3514 = vrot.slane %v3513, 1
      %v3515 = vadd.f32 %v3513, %v3514
      %v3516 = vsel %vm1286, %v3488, 0.0
      %v3517 = vrot.slane %v3516, 4
      %v3518 = vadd.f32 %v3516, %v3517
      %v3519 = vrot.slane %v3518, 2
      %v3520 = vadd.f32 %v3518, %v3519
      %v3521 = vrot.slane %v3520, 1
      %v3522 = vadd.f32 %v3520, %v3521
      %v3523 = vsel %vm1286, %v3489, 0.0
      %v3524 = vrot.slane %v3523, 4
      %v3525 = vadd.f32 %v3523, %v3524
      %v3526 = vrot.slane %v3525, 2
      %v3527 = vadd.f32 %v3525, %v3526
      %v3528 = vrot.slane %v3527, 1
      %v3529 = vadd.f32 %v3527, %v3528
      %v3530 = vsel %vm1286, %v3490, 0.0
      %v3531 = vrot.slane %v3530, 4
      %v3532 = vadd.f32 %v3530, %v3531
      %v3533 = vrot.slane %v3532, 2
      %v3534 = vadd.f32 %v3532, %v3533
      %v3535 = vrot.slane %v3534, 1
      %v3536 = vadd.f32 %v3534, %v3535
      %v3537 = vsel %vm1286, %v3491, 0.0
      %v3538 = vrot.slane %v3537, 4
      %v3539 = vadd.f32 %v3537, %v3538
      %v3540 = vrot.slane %v3539, 2
      %v3541 = vadd.f32 %v3539, %v3540
      %v3542 = vrot.slane %v3541, 1
      %v3543 = vadd.f32 %v3541, %v3542
      %v3544 = vsel %vm1286, %v3492, 0.0
      %v3545 = vrot.slane %v3544, 4
      %v3546 = vadd.f32 %v3544, %v3545
      %v3547 = vrot.slane %v3546, 2
      %v3548 = vadd.f32 %v3546, %v3547
      %v3549 = vrot.slane %v3548, 1
      %v3550 = vadd.f32 %v3548, %v3549
      %v3551 = vsel %vm1286, %v3493, 0.0
      %v3552 = vrot.slane %v3551, 4
      %v3553 = vadd.f32 %v3551, %v3552
      %v3554 = vrot.slane %v3553, 2
      %v3555 = vadd.f32 %v3553, %v3554
      %v3556 = vrot.slane %v3555, 1
      %v3557 = vadd.f32 %v3555, %v3556
      %v3558 = vsel %vm1286, %v3494, 0.0
      %v3559 = vrot.slane %v3558, 4
      %v3560 = vadd.f32 %v3558, %v3559
      %v3561 = vrot.slane %v3560, 2
      %v3562 = vadd.f32 %v3560, %v3561
      %v3563 = vrot.slane %v3562, 1
      %v3564 = vadd.f32 %v3562, %v3563
      %v3565 = vsel %vm1286, %v3495, 0.0
      %v3566 = vrot.slane %v3565, 4
      %v3567 = vadd.f32 %v3565, %v3566
      %v3568 = vrot.slane %v3567, 2
      %v3569 = vadd.f32 %v3567, %v3568
      %v3570 = vrot.slane %v3569, 1
      %v3571 = vadd.f32 %v3569, %v3570
      %v3572 = vsel %vm1286, %v3496, 0.0
      %v3573 = vrot.slane %v3572, 4
      %v3574 = vadd.f32 %v3572, %v3573
      %v3575 = vrot.slane %v3574, 2
      %v3576 = vadd.f32 %v3574, %v3575
      %v3577 = vrot.slane %v3576, 1
      %v3578 = vadd.f32 %v3576, %v3577
      %v3579 = vsel %vm1286, %v3497, 0.0
      %v3580 = vrot.slane %v3579, 4
      %v3581 = vadd.f32 %v3579, %v3580
      %v3582 = vrot.slane %v3581, 2
      %v3583 = vadd.f32 %v3581, %v3582
      %v3584 = vrot.slane %v3583, 1
      %v3585 = vadd.f32 %v3583, %v3584
      %v3586 = vsel %vm1286, %v3498, 0.0
      %v3587 = vrot.slane %v3586, 4
      %v3588 = vadd.f32 %v3586, %v3587
      %v3589 = vrot.slane %v3588, 2
      %v3590 = vadd.f32 %v3588, %v3589
      %v3591 = vrot.slane %v3590, 1
      %v3592 = vadd.f32 %v3590, %v3591
      %v3593 = vsel %vm1286, %v3499, 0.0
      %v3594 = vrot.slane %v3593, 4
      %v3595 = vadd.f32 %v3593, %v3594
      %v3596 = vrot.slane %v3595, 2
      %v3597 = vadd.f32 %v3595, %v3596
      %v3598 = vrot.slane %v3597, 1
      %v3599 = vadd.f32 %v3597, %v3598
      %v3600 = vsel %vm1286, %v3500, 0.0
      %v3601 = vrot.slane %v3600, 4
      %v3602 = vadd.f32 %v3600, %v3601
      %v3603 = vrot.slane %v3602, 2
      %v3604 = vadd.f32 %v3602, %v3603
      %v3605 = vrot.slane %v3604, 1
      %v3606 = vadd.f32 %v3604, %v3605
      %v3607 = vsel %vm1286, %v3501, 0.0
      %v3608 = vrot.slane %v3607, 4
      %v3609 = vadd.f32 %v3607, %v3608
      %v3610 = vrot.slane %v3609, 2
      %v3611 = vadd.f32 %v3609, %v3610
      %v3612 = vrot.slane %v3611, 1
      %v3613 = vadd.f32 %v3611, %v3612
      %v3614 = vpack.c.bf16 %v3508, %v3508
      %v3615 = vpack.c.bf16 %v3515, %v3515
      %v3616 = vpack.c.bf16 %v3522, %v3522
      %v3617 = vpack.c.bf16 %v3529, %v3529
      %v3618 = vpack.c.bf16 %v3536, %v3536
      %v3619 = vpack.c.bf16 %v3543, %v3543
      %v3620 = vpack.c.bf16 %v3550, %v3550
      %v3621 = vpack.c.bf16 %v3557, %v3557
      %v3622 = vpack.c.bf16 %v3564, %v3564
      %v3623 = vpack.c.bf16 %v3571, %v3571
      %v3624 = vpack.c.bf16 %v3578, %v3578
      %v3625 = vpack.c.bf16 %v3585, %v3585
      %v3626 = vpack.c.bf16 %v3592, %v3592
      %v3627 = vpack.c.bf16 %v3599, %v3599
      %v3628 = vpack.c.bf16 %v3606, %v3606
      %v3629 = vpack.c.bf16 %v3613, %v3613
      %v3630 = vld [vmem:[%s12] sm:$0xf]
      %v3631 = vld [vmem:[%s12 + $0x4] sm:$0xf]
      %v3632 = vld [vmem:[%s12 + $0x8] sm:$0xf]
      %v3633 = vld [vmem:[%s12 + $0xc] sm:$0xf]
      %v3634 = vld [vmem:[%s13] sm:$0x1]
      %v3636 = vlaneseq
      %v3637 = vshrl.u32 %v3636, 7
      %v3638 = vsub.s32 0, %v3637
      %v3639 = vrot.slane %v3634, %v3638
      %v3657 = vunpack.c.l.b16 %v3614
      %v3658 = vunpack.c.l.b16 %v3615
      %v3659 = vunpack.c.l.b16 %v3616
      %v3660 = vunpack.c.l.b16 %v3617
      %v3661 = vunpack.c.l.b16 %v3618
      %v3662 = vunpack.c.l.b16 %v3619
      %v3663 = vunpack.c.l.b16 %v3620
      %v3664 = vunpack.c.l.b16 %v3621
      %v3665 = vunpack.c.l.b16 %v3622
      %v3666 = vunpack.c.l.b16 %v3623
      %v3667 = vunpack.c.l.b16 %v3624
      %v3668 = vunpack.c.l.b16 %v3625
      %v3669 = vunpack.c.l.b16 %v3626
      %v3670 = vunpack.c.l.b16 %v3627
      %v3671 = vunpack.c.l.b16 %v3628
      %v3672 = vunpack.c.l.b16 %v3629
      %vm3673 = vcmask 1041409
      %v3674 = vsel %vm3673, %v3658, %v3657
      %vm3675 = vcmask 1042434
      %v3676 = vsel %vm3675, %v3659, %v3674
      %vm3677 = vcmask 1043459
      %v3678 = vsel %vm3677, %v3660, %v3676
      %vm3679 = vcmask 1044484
      %v3680 = vsel %vm3679, %v3661, %v3678
      %vm3681 = vcmask 1045509
      %v3682 = vsel %vm3681, %v3662, %v3680
      %vm3683 = vcmask 1046534
      %v3684 = vsel %vm3683, %v3663, %v3682
      %vm3685 = vcmask 1047559
      %v3686 = vsel %vm3685, %v3664, %v3684
      %v3687 = vsel %vm3673, %v3666, %v3665
      %v3688 = vsel %vm3675, %v3667, %v3687
      %v3689 = vsel %vm3677, %v3668, %v3688
      %v3690 = vsel %vm3679, %v3669, %v3689
      %v3691 = vsel %vm3681, %v3670, %v3690
      %v3692 = vsel %vm3683, %v3671, %v3691
      %v3693 = vsel %vm3685, %v3672, %v3692
      %v3694 = vpack.c.b16 %v3693, %v3686
      %v3699 = vunpack.c.l.b16 %v3630
      %v3700 = vunpack.c.l.b16 %v3631
      %v3701 = vunpack.c.l.b16 %v3632
      %v3702 = vunpack.c.l.b16 %v3633
      %v3703 = vpack.c.b16 %v3700, %v3699
      %v3704 = vpack.c.b16 %v3702, %v3701
      %v3708 = vsel %vm1286, %v3694, 0
      %3710 = vmatprep.subr.bf16.mxu0 0
      %3711 = vmatpush1.bf16.msra.mxu0 0
      %3712 = vmatprep.subr.bf16.mxu0 0
      %3713 = vmatpush1.bf16.msra.mxu0 0
      %3714 = vmatprep.subr.bf16.mxu0 0
      %3715 = vmatpush1.bf16.msra.mxu0 0
      %3716 = vmatprep.subr.bf16.mxu0 0
      %3717 = vmatpush1.bf16.msra.mxu0 0
      %3718 = vmatprep.subr.bf16.mxu0 0
      %3719 = vmatpush1.bf16.msra.mxu0 0
      %3720 = vmatprep.subr.bf16.mxu0 0
      %3721 = vmatpush1.bf16.msra.mxu0 0
      %3722 = vmatprep.subr.bf16.mxu0 0
      %3723 = vmatpush1.bf16.msra.mxu0 %v3704
      %3724 = vmatprep.subr.bf16.mxu0 0
      %3725 = vmatpush1.bf16.msra.mxu0 %v3703
      %3726 = vmatprep.subr.bf16.mxu0 0
      %3727 = vmatpush2.bf16.msra.mxu0 0
      %3728 = vmatprep.subr.bf16.mxu0 0
      %3729 = vmatpush2.bf16.msra.mxu0 0
      %3730 = vmatprep.subr.bf16.mxu0 0
      %3731 = vmatpush2.bf16.msra.mxu0 0
      %3732 = vmatprep.subr.bf16.mxu0 0
      %3733 = vmatpush2.bf16.msra.mxu0 0
      %3734 = vmatprep.subr.bf16.mxu0 0
      %3735 = vmatpush2.bf16.msra.mxu0 0
      %3736 = vmatprep.subr.bf16.mxu0 0
      %3737 = vmatpush2.bf16.msra.mxu0 0
      %3738 = vmatprep.subr.bf16.mxu0 0
      %3739 = vmatpush2.bf16.msra.mxu0 0
      %3740 = vmatprep.subr.bf16.mxu0 0
      %3741 = vmatpush2.bf16.msra.mxu0 0
      %3742 = vmatprep.mubr.bf16.mxu0 0
      %3743 = vmatmul.mubr.bf16.gmra.mxu0 %v3708
      %v3744 = vpop.f32.mrf.mxu0
      %v3745 = vadd.f32 %v3639, %v3744
      %v3746 = vpop.f32.mrf.mxu0
      %v3747 = vpop.f32.mrf.mxu0
      %v3748 = vadd.f32 %v3639, %v3747
      %v3749 = vpop.f32.mrf.mxu0
      %3750 = vdwg.mxu0
      %v3751 = vmax.f32 %v3745, 0.0
      %v3752 = vmax.f32 %v3748, 0.0
      %v3753 = vld [vmem:[%s843] sm:$0xf]
      %v3754 = vld [vmem:[%s843 + $0x4] sm:$0xf]
      %v3755 = vld [vmem:[%s843 + $0x8] sm:$0xf]
      %v3756 = vld [vmem:[%s843 + $0xc] sm:$0xf]
      %v3757 = vld [vmem:[%s843 + $0x10] sm:$0xf]
      %v3758 = vld [vmem:[%s843 + $0x14] sm:$0xf]
      %v3759 = vld [vmem:[%s843 + $0x18] sm:$0xf]
      %v3760 = vld [vmem:[%s843 + $0x1c] sm:$0xf]
      %v3761 = vld [vmem:[%s843 + $0x20] sm:$0xf]
      %v3762 = vld [vmem:[%s843 + $0x24] sm:$0xf]
      %v3763 = vld [vmem:[%s843 + $0x28] sm:$0xf]
      %v3764 = vld [vmem:[%s843 + $0x2c] sm:$0xf]
      %v3765 = vld [vmem:[%s843 + $0x30] sm:$0xf]
      %v3766 = vld [vmem:[%s843 + $0x34] sm:$0xf]
      %v3767 = vld [vmem:[%s843 + $0x38] sm:$0xf]
      %v3768 = vld [vmem:[%s843 + $0x3c] sm:$0xf]
      %v3769 = vld [vmem:[%s848] sm:$0xff]
      %v3770 = vld [vmem:[%s848 + $0x8] sm:$0xff]
      %v3771 = vld [vmem:[%s848 + $0x10] sm:$0xff]
      %v3772 = vld [vmem:[%s848 + $0x18] sm:$0xff]
      %v3773 = vld [vmem:[%s848 + $0x20] sm:$0xff]
      %v3774 = vld [vmem:[%s848 + $0x28] sm:$0xff]
      %v3775 = vld [vmem:[%s848 + $0x30] sm:$0xff]
      %v3776 = vld [vmem:[%s848 + $0x38] sm:$0xff]
      %v3777 = vld [vmem:[%s848 + $0x40] sm:$0xff]
      %v3778 = vld [vmem:[%s848 + $0x48] sm:$0xff]
      %v3779 = vld [vmem:[%s848 + $0x50] sm:$0xff]
      %v3780 = vld [vmem:[%s848 + $0x58] sm:$0xff]
      %v3781 = vld [vmem:[%s848 + $0x60] sm:$0xff]
      %v3782 = vld [vmem:[%s848 + $0x68] sm:$0xff]
      %v3783 = vld [vmem:[%s848 + $0x70] sm:$0xff]
      %v3784 = vld [vmem:[%s848 + $0x78] sm:$0xff]
      %v3785 = vunpack.c.l.bf16 %v3753
      %v3786 = vunpack.c.l.bf16 %v3754
      %v3787 = vunpack.c.l.bf16 %v3755
      %v3788 = vunpack.c.l.bf16 %v3756
      %v3789 = vunpack.c.l.bf16 %v3757
      %v3790 = vunpack.c.l.bf16 %v3758
      %v3791 = vunpack.c.l.bf16 %v3759
      %v3792 = vunpack.c.l.bf16 %v3760
      %v3793 = vunpack.c.l.bf16 %v3761
      %v3794 = vunpack.c.l.bf16 %v3762
      %v3795 = vunpack.c.l.bf16 %v3763
      %v3796 = vunpack.c.l.bf16 %v3764
      %v3797 = vunpack.c.l.bf16 %v3765
      %v3798 = vunpack.c.l.bf16 %v3766
      %v3799 = vunpack.c.l.bf16 %v3767
      %v3800 = vunpack.c.l.bf16 %v3768
      %3801 = vadd.xlane.f32.xlu0 %v3785
      %v3802 = vpop.xlane.xlu0 %3801
      %3803 = vadd.xlane.f32.xlu0 %v3786
      %v3804 = vpop.xlane.xlu0 %3803
      %3805 = vadd.xlane.f32.xlu0 %v3787
      %v3806 = vpop.xlane.xlu0 %3805
      %3807 = vadd.xlane.f32.xlu0 %v3788
      %v3808 = vpop.xlane.xlu0 %3807
      %3809 = vadd.xlane.f32.xlu0 %v3789
      %v3810 = vpop.xlane.xlu0 %3809
      %3811 = vadd.xlane.f32.xlu0 %v3790
      %v3812 = vpop.xlane.xlu0 %3811
      %3813 = vadd.xlane.f32.xlu0 %v3791
      %v3814 = vpop.xlane.xlu0 %3813
      %3815 = vadd.xlane.f32.xlu0 %v3792
      %v3816 = vpop.xlane.xlu0 %3815
      %3817 = vadd.xlane.f32.xlu0 %v3793
      %v3818 = vpop.xlane.xlu0 %3817
      %3819 = vadd.xlane.f32.xlu0 %v3794
      %v3820 = vpop.xlane.xlu0 %3819
      %3821 = vadd.xlane.f32.xlu0 %v3795
      %v3822 = vpop.xlane.xlu0 %3821
      %3823 = vadd.xlane.f32.xlu0 %v3796
      %v3824 = vpop.xlane.xlu0 %3823
      %3825 = vadd.xlane.f32.xlu0 %v3797
      %v3826 = vpop.xlane.xlu0 %3825
      %3827 = vadd.xlane.f32.xlu0 %v3798
      %v3828 = vpop.xlane.xlu0 %3827
      %3829 = vadd.xlane.f32.xlu0 %v3799
      %v3830 = vpop.xlane.xlu0 %3829
      %3831 = vadd.xlane.f32.xlu0 %v3800
      %v3832 = vpop.xlane.xlu0 %3831
      %v3833 = vadd.f32 %v3802, 1.0
      %v3834 = vadd.f32 %v3804, 1.0
      %v3835 = vadd.f32 %v3806, 1.0
      %v3836 = vadd.f32 %v3808, 1.0
      %v3837 = vadd.f32 %v3810, 1.0
      %v3838 = vadd.f32 %v3812, 1.0
      %v3839 = vadd.f32 %v3814, 1.0
      %v3840 = vadd.f32 %v3816, 1.0
      %v3841 = vadd.f32 %v3818, 1.0
      %v3842 = vadd.f32 %v3820, 1.0
      %v3843 = vadd.f32 %v3822, 1.0
      %v3844 = vadd.f32 %v3824, 1.0
      %v3845 = vadd.f32 %v3826, 1.0
      %v3846 = vadd.f32 %v3828, 1.0
      %v3847 = vadd.f32 %v3830, 1.0
      %v3848 = vadd.f32 %v3832, 1.0
      %v3849 = vrsqrt.pop %v3833
      %v3850 = vrsqrt.pop %v3834
      %v3851 = vrsqrt.pop %v3835
      %v3852 = vrsqrt.pop %v3836
      %v3853 = vrsqrt.pop %v3837
      %v3854 = vrsqrt.pop %v3838
      %v3855 = vrsqrt.pop %v3839
      %v3856 = vrsqrt.pop %v3840
      %v3857 = vrsqrt.pop %v3841
      %v3858 = vrsqrt.pop %v3842
      %v3859 = vrsqrt.pop %v3843
      %v3860 = vrsqrt.pop %v3844
      %v3861 = vrsqrt.pop %v3845
      %v3862 = vrsqrt.pop %v3846
      %v3863 = vrsqrt.pop %v3847
      %v3864 = vrsqrt.pop %v3848
      %v3865 = vld [vmem:[%s14] sm:$0xf]
      %v3866 = vld [vmem:[%s14 + $0x4] sm:$0xf]
      %v3867 = vld [vmem:[%s14 + $0x8] sm:$0xf]
      %v3868 = vld [vmem:[%s14 + $0xc] sm:$0x1]
      %v3869 = vld [vmem:[%s15] sm:$0x1]
      %v3870 = vpack.c.bf16 %v3770, %v3769
      %v3871 = vpack.c.bf16 %v3772, %v3771
      %v3872 = vpack.c.bf16 %v3774, %v3773
      %v3873 = vpack.c.bf16 %v3776, %v3775
      %v3874 = vpack.c.bf16 %v3778, %v3777
      %v3875 = vpack.c.bf16 %v3780, %v3779
      %v3876 = vpack.c.bf16 %v3782, %v3781
      %v3877 = vpack.c.bf16 %v3784, %v3783
      %v3882 = vunpack.c.l.b16 %v3865
      %v3883 = vunpack.c.l.b16 %v3866
      %v3884 = vunpack.c.l.b16 %v3867
      %v3885 = vunpack.c.l.b16 %v3868
      %v3886 = vpack.c.b16 %v3883, %v3882
      %v3887 = vpack.c.b16 %v3885, %v3884
      %vm3889 = vcmask 203776
      %v3891 = vsel %vm3889, %v3870, 0
      %v3894 = vsel %vm3889, %v3871, 0
      %v3897 = vsel %vm3889, %v3872, 0
      %v3900 = vsel %vm3889, %v3873, 0
      %v3903 = vsel %vm3889, %v3874, 0
      %v3906 = vsel %vm3889, %v3875, 0
      %v3909 = vsel %vm3889, %v3876, 0
      %v3912 = vsel %vm3889, %v3877, 0
      %vm3914 = vcmask 1043456
      %vm3915 = vcmask 1044480
      %v3916 = vsel %vm3914, 4294967295, 65535
      %v3917 = vsel %vm3915, %v3916, 0
      %v3919 = vand.u32 %v3887, %v3917
      %3921 = vmatprep.subr.bf16.mxu0 0
      %3922 = vmatpush1.bf16.msra.mxu0 0
      %3923 = vmatprep.subr.bf16.mxu0 0
      %3924 = vmatpush1.bf16.msra.mxu0 0
      %3925 = vmatprep.subr.bf16.mxu0 0
      %3926 = vmatpush1.bf16.msra.mxu0 0
      %3927 = vmatprep.subr.bf16.mxu0 0
      %3928 = vmatpush1.bf16.msra.mxu0 0
      %3929 = vmatprep.subr.bf16.mxu0 0
      %3930 = vmatpush1.bf16.msra.mxu0 0
      %3931 = vmatprep.subr.bf16.mxu0 0
      %3932 = vmatpush1.bf16.msra.mxu0 0
      %3933 = vmatprep.subr.bf16.mxu0 0
      %3934 = vmatpush1.bf16.msra.mxu0 %v3919
      %3935 = vmatprep.subr.bf16.mxu0 0
      %3936 = vmatpush1.bf16.msra.mxu0 %v3886
      %3937 = vmatprep.subr.bf16.mxu0 0
      %3938 = vmatpush2.bf16.msra.mxu0 0
      %3939 = vmatprep.subr.bf16.mxu0 0
      %3940 = vmatpush2.bf16.msra.mxu0 0
      %3941 = vmatprep.subr.bf16.mxu0 0
      %3942 = vmatpush2.bf16.msra.mxu0 0
      %3943 = vmatprep.subr.bf16.mxu0 0
      %3944 = vmatpush2.bf16.msra.mxu0 0
      %3945 = vmatprep.subr.bf16.mxu0 0
      %3946 = vmatpush2.bf16.msra.mxu0 0
      %3947 = vmatprep.subr.bf16.mxu0 0
      %3948 = vmatpush2.bf16.msra.mxu0 0
      %3949 = vmatprep.subr.bf16.mxu0 0
      %3950 = vmatpush2.bf16.msra.mxu0 0
      %3951 = vmatprep.subr.bf16.mxu0 0
      %3952 = vmatpush2.bf16.msra.mxu0 0
      %3953 = vmatprep.mubr.bf16.mxu0 0
      %3954 = vmatmul.mubr.bf16.gmra.mxu0 %v3891
      %v3955 = vpop.f32.mrf.mxu0
      %v3956 = vadd.f32 0.0, %v3955
      %v3957 = vpop.f32.mrf.mxu0
      %v3958 = vpop.f32.mrf.mxu0
      %v3959 = vadd.f32 0.0, %v3958
      %v3960 = vpop.f32.mrf.mxu0
      %3961 = vmatprep.mubr.bf16.mxu0 0
      %3962 = vmatmul.mubr.bf16.gmra.mxu0 %v3894
      %v3963 = vpop.f32.mrf.mxu0
      %v3964 = vadd.f32 0.0, %v3963
      %v3965 = vpop.f32.mrf.mxu0
      %v3966 = vpop.f32.mrf.mxu0
      %v3967 = vadd.f32 0.0, %v3966
      %v3968 = vpop.f32.mrf.mxu0
      %3969 = vmatprep.mubr.bf16.mxu0 0
      %3970 = vmatmul.mubr.bf16.gmra.mxu0 %v3897
      %v3971 = vpop.f32.mrf.mxu0
      %v3972 = vadd.f32 0.0, %v3971
      %v3973 = vpop.f32.mrf.mxu0
      %v3974 = vpop.f32.mrf.mxu0
      %v3975 = vadd.f32 0.0, %v3974
      %v3976 = vpop.f32.mrf.mxu0
      %3977 = vmatprep.mubr.bf16.mxu0 0
      %3978 = vmatmul.mubr.bf16.gmra.mxu0 %v3900
      %v3979 = vpop.f32.mrf.mxu0
      %v3980 = vadd.f32 0.0, %v3979
      %v3981 = vpop.f32.mrf.mxu0
      %v3982 = vpop.f32.mrf.mxu0
      %v3983 = vadd.f32 0.0, %v3982
      %v3984 = vpop.f32.mrf.mxu0
      %3985 = vmatprep.mubr.bf16.mxu0 0
      %3986 = vmatmul.mubr.bf16.gmra.mxu0 %v3903
      %v3987 = vpop.f32.mrf.mxu0
      %v3988 = vadd.f32 0.0, %v3987
      %v3989 = vpop.f32.mrf.mxu0
      %v3990 = vpop.f32.mrf.mxu0
      %v3991 = vadd.f32 0.0, %v3990
      %v3992 = vpop.f32.mrf.mxu0
      %3993 = vmatprep.mubr.bf16.mxu0 0
      %3994 = vmatmul.mubr.bf16.gmra.mxu0 %v3906
      %v3995 = vpop.f32.mrf.mxu0
      %v3996 = vadd.f32 0.0, %v3995
      %v3997 = vpop.f32.mrf.mxu0
      %v3998 = vpop.f32.mrf.mxu0
      %v3999 = vadd.f32 0.0, %v3998
      %v4000 = vpop.f32.mrf.mxu0
      %4001 = vmatprep.mubr.bf16.mxu0 0
      %4002 = vmatmul.mubr.bf16.gmra.mxu0 %v3909
      %v4003 = vpop.f32.mrf.mxu0
      %v4004 = vadd.f32 0.0, %v4003
      %v4005 = vpop.f32.mrf.mxu0
      %v4006 = vpop.f32.mrf.mxu0
      %v4007 = vadd.f32 0.0, %v4006
      %v4008 = vpop.f32.mrf.mxu0
      %4009 = vmatprep.mubr.bf16.mxu0 0
      %4010 = vmatmul.mubr.bf16.gmra.mxu0 %v3912
      %v4011 = vpop.f32.mrf.mxu0
      %v4012 = vadd.f32 0.0, %v4011
      %v4013 = vpop.f32.mrf.mxu0
      %v4014 = vpop.f32.mrf.mxu0
      %v4015 = vadd.f32 0.0, %v4014
      %v4016 = vpop.f32.mrf.mxu0
      %4017 = vdwg.mxu0
      %v4018 = vmul.f32 %v3849, %v3956
      %v4019 = vmul.f32 %v3850, %v3959
      %v4020 = vmul.f32 %v3851, %v3964
      %v4021 = vmul.f32 %v3852, %v3967
      %v4022 = vmul.f32 %v3853, %v3972
      %v4023 = vmul.f32 %v3854, %v3975
      %v4024 = vmul.f32 %v3855, %v3980
      %v4025 = vmul.f32 %v3856, %v3983
      %v4026 = vmul.f32 %v3857, %v3988
      %v4027 = vmul.f32 %v3858, %v3991
      %v4028 = vmul.f32 %v3859, %v3996
      %v4029 = vmul.f32 %v3860, %v3999
      %v4030 = vmul.f32 %v3861, %v4004
      %v4031 = vmul.f32 %v3862, %v4007
      %v4032 = vmul.f32 %v3863, %v4012
      %v4033 = vmul.f32 %v3864, %v4015
      %v4034 = vpack.c.bf16 %v4019, %v4018
      %v4035 = vpack.c.bf16 %v4021, %v4020
      %v4036 = vpack.c.bf16 %v4023, %v4022
      %v4037 = vpack.c.bf16 %v4025, %v4024
      %v4038 = vpack.c.bf16 %v4027, %v4026
      %v4039 = vpack.c.bf16 %v4029, %v4028
      %v4040 = vpack.c.bf16 %v4031, %v4030
      %v4041 = vpack.c.bf16 %v4033, %v4032
      %v4058 = vunpack.c.l.b16 %v3753
      %v4059 = vunpack.c.l.b16 %v3754
      %v4060 = vunpack.c.l.b16 %v3755
      %v4061 = vunpack.c.l.b16 %v3756
      %v4062 = vunpack.c.l.b16 %v3757
      %v4063 = vunpack.c.l.b16 %v3758
      %v4064 = vunpack.c.l.b16 %v3759
      %v4065 = vunpack.c.l.b16 %v3760
      %v4066 = vunpack.c.l.b16 %v3761
      %v4067 = vunpack.c.l.b16 %v3762
      %v4068 = vunpack.c.l.b16 %v3763
      %v4069 = vunpack.c.l.b16 %v3764
      %v4070 = vunpack.c.l.b16 %v3765
      %v4071 = vunpack.c.l.b16 %v3766
      %v4072 = vunpack.c.l.b16 %v3767
      %v4073 = vunpack.c.l.b16 %v3768
      %v4074 = vpack.c.b16 %v4059, %v4058
      %v4075 = vpack.c.b16 %v4061, %v4060
      %v4076 = vpack.c.b16 %v4063, %v4062
      %v4077 = vpack.c.b16 %v4065, %v4064
      %v4078 = vpack.c.b16 %v4067, %v4066
      %v4079 = vpack.c.b16 %v4069, %v4068
      %v4080 = vpack.c.b16 %v4071, %v4070
      %v4081 = vpack.c.b16 %v4073, %v4072
      %4090 = vmatprep.subr.bf16.mxu0 0
      %4091 = vmatpush1.bf16.msra.mxu0 %v4041
      %4092 = vmatprep.subr.bf16.mxu0 0
      %4093 = vmatpush1.bf16.msra.mxu0 %v4040
      %4094 = vmatprep.subr.bf16.mxu0 0
      %4095 = vmatpush1.bf16.msra.mxu0 %v4039
      %4096 = vmatprep.subr.bf16.mxu0 0
      %4097 = vmatpush1.bf16.msra.mxu0 %v4038
      %4098 = vmatprep.subr.bf16.mxu0 0
      %4099 = vmatpush1.bf16.msra.mxu0 %v4037
      %4100 = vmatprep.subr.bf16.mxu0 0
      %4101 = vmatpush1.bf16.msra.mxu0 %v4036
      %4102 = vmatprep.subr.bf16.mxu0 0
      %4103 = vmatpush1.bf16.msra.mxu0 %v4035
      %4104 = vmatprep.subr.bf16.mxu0 0
      %4105 = vmatpush1.bf16.msra.mxu0 %v4034
      %4106 = vmatprep.subr.bf16.mxu0 0
      %4107 = vmatpush2.bf16.msra.mxu0 0
      %4108 = vmatprep.subr.bf16.mxu0 0
      %4109 = vmatpush2.bf16.msra.mxu0 0
      %4110 = vmatprep.subr.bf16.mxu0 0
      %4111 = vmatpush2.bf16.msra.mxu0 0
      %4112 = vmatprep.subr.bf16.mxu0 0
      %4113 = vmatpush2.bf16.msra.mxu0 0
      %4114 = vmatprep.subr.bf16.mxu0 0
      %4115 = vmatpush2.bf16.msra.mxu0 0
      %4116 = vmatprep.subr.bf16.mxu0 0
      %4117 = vmatpush2.bf16.msra.mxu0 0
      %4118 = vmatprep.subr.bf16.mxu0 0
      %4119 = vmatpush2.bf16.msra.mxu0 0
      %4120 = vmatprep.subr.bf16.mxu0 0
      %4121 = vmatpush2.bf16.msra.mxu0 0
      %4122 = vmatprep.mubr.bf16.mxu0 0
      %4123 = vmatmul.mubr.bf16.gmra.mxu0 %v4074
      %v4124 = vpop.f32.mrf.mxu0
      %v4125 = vadd.f32 %v4018, %v4124
      %v4126 = vpop.f32.mrf.mxu0
      %v4127 = vpop.f32.mrf.mxu0
      %v4128 = vadd.f32 %v4019, %v4127
      %v4129 = vpop.f32.mrf.mxu0
      %4130 = vmatprep.mubr.bf16.mxu0 0
      %4131 = vmatmul.mubr.bf16.gmra.mxu0 %v4075
      %v4132 = vpop.f32.mrf.mxu0
      %v4133 = vadd.f32 %v4020, %v4132
      %v4134 = vpop.f32.mrf.mxu0
      %v4135 = vpop.f32.mrf.mxu0
      %v4136 = vadd.f32 %v4021, %v4135
      %v4137 = vpop.f32.mrf.mxu0
      %4138 = vmatprep.mubr.bf16.mxu0 0
      %4139 = vmatmul.mubr.bf16.gmra.mxu0 %v4076
      %v4140 = vpop.f32.mrf.mxu0
      %v4141 = vadd.f32 %v4022, %v4140
      %v4142 = vpop.f32.mrf.mxu0
      %v4143 = vpop.f32.mrf.mxu0
      %v4144 = vadd.f32 %v4023, %v4143
      %v4145 = vpop.f32.mrf.mxu0
      %4146 = vmatprep.mubr.bf16.mxu0 0
      %4147 = vmatmul.mubr.bf16.gmra.mxu0 %v4077
      %v4148 = vpop.f32.mrf.mxu0
      %v4149 = vadd.f32 %v4024, %v4148
      %v4150 = vpop.f32.mrf.mxu0
      %v4151 = vpop.f32.mrf.mxu0
      %v4152 = vadd.f32 %v4025, %v4151
      %v4153 = vpop.f32.mrf.mxu0
      %4154 = vmatprep.mubr.bf16.mxu0 0
      %4155 = vmatmul.mubr.bf16.gmra.mxu0 %v4078
      %v4156 = vpop.f32.mrf.mxu0
      %v4157 = vadd.f32 %v4026, %v4156
      %v4158 = vpop.f32.mrf.mxu0
      %v4159 = vpop.f32.mrf.mxu0
      %v4160 = vadd.f32 %v4027, %v4159
      %v4161 = vpop.f32.mrf.mxu0
      %4162 = vmatprep.mubr.bf16.mxu0 0
      %4163 = vmatmul.mubr.bf16.gmra.mxu0 %v4079
      %v4164 = vpop.f32.mrf.mxu0
      %v4165 = vadd.f32 %v4028, %v4164
      %v4166 = vpop.f32.mrf.mxu0
      %v4167 = vpop.f32.mrf.mxu0
      %v4168 = vadd.f32 %v4029, %v4167
      %v4169 = vpop.f32.mrf.mxu0
      %4170 = vmatprep.mubr.bf16.mxu0 0
      %4171 = vmatmul.mubr.bf16.gmra.mxu0 %v4080
      %v4172 = vpop.f32.mrf.mxu0
      %v4173 = vadd.f32 %v4030, %v4172
      %v4174 = vpop.f32.mrf.mxu0
      %v4175 = vpop.f32.mrf.mxu0
      %v4176 = vadd.f32 %v4031, %v4175
      %v4177 = vpop.f32.mrf.mxu0
      %4178 = vmatprep.mubr.bf16.mxu0 0
      %4179 = vmatmul.mubr.bf16.gmra.mxu0 %v4081
      %v4180 = vpop.f32.mrf.mxu0
      %v4181 = vadd.f32 %v4032, %v4180
      %v4182 = vpop.f32.mrf.mxu0
      %v4183 = vpop.f32.mrf.mxu0
      %v4184 = vadd.f32 %v4033, %v4183
      %v4185 = vpop.f32.mrf.mxu0
      %4186 = vdwg.mxu0
      %v4187 = vmul.f32 %v3849, %v4125
      %v4188 = vmul.f32 %v3850, %v4128
      %v4189 = vmul.f32 %v3851, %v4133
      %v4190 = vmul.f32 %v3852, %v4136
      %v4191 = vmul.f32 %v3853, %v4141
      %v4192 = vmul.f32 %v3854, %v4144
      %v4193 = vmul.f32 %v3855, %v4149
      %v4194 = vmul.f32 %v3856, %v4152
      %v4195 = vmul.f32 %v3857, %v4157
      %v4196 = vmul.f32 %v3858, %v4160
      %v4197 = vmul.f32 %v3859, %v4165
      %v4198 = vmul.f32 %v3860, %v4168
      %v4199 = vmul.f32 %v3861, %v4173
      %v4200 = vmul.f32 %v3862, %v4176
      %v4201 = vmul.f32 %v3863, %v4181
      %v4202 = vmul.f32 %v3864, %v4184
      %v4204 = vlaneseq
      %v4205 = vshrl.u32 %v4204, 7
      %v4206 = vsub.s32 0, %v4205
      %v4207 = vrot.slane %v3869, %v4206
      %v4209 = vadd.f32 %v4187, %v4207
      %v4210 = vadd.f32 %v4188, %v4207
      %v4211 = vadd.f32 %v4189, %v4207
      %v4212 = vadd.f32 %v4190, %v4207
      %v4213 = vadd.f32 %v4191, %v4207
      %v4214 = vadd.f32 %v4192, %v4207
      %v4215 = vadd.f32 %v4193, %v4207
      %v4216 = vadd.f32 %v4194, %v4207
      %v4217 = vadd.f32 %v4195, %v4207
      %v4218 = vadd.f32 %v4196, %v4207
      %v4219 = vadd.f32 %v4197, %v4207
      %v4220 = vadd.f32 %v4198, %v4207
      %v4221 = vadd.f32 %v4199, %v4207
      %v4222 = vadd.f32 %v4200, %v4207
      %v4223 = vadd.f32 %v4201, %v4207
      %v4224 = vadd.f32 %v4202, %v4207
      %v4225 = vmax.f32 %v4209, 0.0
      %v4226 = vmax.f32 %v4210, 0.0
      %v4227 = vmax.f32 %v4211, 0.0
      %v4228 = vmax.f32 %v4212, 0.0
      %v4229 = vmax.f32 %v4213, 0.0
      %v4230 = vmax.f32 %v4214, 0.0
      %v4231 = vmax.f32 %v4215, 0.0
      %v4232 = vmax.f32 %v4216, 0.0
      %v4233 = vmax.f32 %v4217, 0.0
      %v4234 = vmax.f32 %v4218, 0.0
      %v4235 = vmax.f32 %v4219, 0.0
      %v4236 = vmax.f32 %v4220, 0.0
      %v4237 = vmax.f32 %v4221, 0.0
      %v4238 = vmax.f32 %v4222, 0.0
      %v4239 = vmax.f32 %v4223, 0.0
      %v4240 = vmax.f32 %v4224, 0.0
      %v4241 = vld [vmem:[%s16] sm:$0xf]
      %v4242 = vld [vmem:[%s16 + $0x4] sm:$0xf]
      %v4243 = vld [vmem:[%s16 + $0x8] sm:$0xf]
      %v4244 = vld [vmem:[%s16 + $0xc] sm:$0x1]
      %v4245 = vld [vmem:[%s17] sm:$0x1]
      %v4246 = vpack.c.bf16 %v4226, %v4225
      %v4247 = vpack.c.bf16 %v4228, %v4227
      %v4248 = vpack.c.bf16 %v4230, %v4229
      %v4249 = vpack.c.bf16 %v4232, %v4231
      %v4250 = vpack.c.bf16 %v4234, %v4233
      %v4251 = vpack.c.bf16 %v4236, %v4235
      %v4252 = vpack.c.bf16 %v4238, %v4237
      %v4253 = vpack.c.bf16 %v4240, %v4239
      %v4258 = vunpack.c.l.b16 %v4241
      %v4259 = vunpack.c.l.b16 %v4242
      %v4260 = vunpack.c.l.b16 %v4243
      %v4261 = vunpack.c.l.b16 %v4244
      %v4262 = vpack.c.b16 %v4259, %v4258
      %v4263 = vpack.c.b16 %v4261, %v4260
      %v4266 = vsel %vm3889, %v4246, 0
      %v4269 = vsel %vm3889, %v4247, 0
      %v4272 = vsel %vm3889, %v4248, 0
      %v4275 = vsel %vm3889, %v4249, 0
      %v4278 = vsel %vm3889, %v4250, 0
      %v4281 = vsel %vm3889, %v4251, 0
      %v4284 = vsel %vm3889, %v4252, 0
      %v4287 = vsel %vm3889, %v4253, 0
      %v4290 = vand.u32 %v4263, %v3917
      %4292 = vmatprep.subr.bf16.mxu0 0
      %4293 = vmatpush1.bf16.msra.mxu0 0
      %4294 = vmatprep.subr.bf16.mxu0 0
      %4295 = vmatpush1.bf16.msra.mxu0 0
      %4296 = vmatprep.subr.bf16.mxu0 0
      %4297 = vmatpush1.bf16.msra.mxu0 0
      %4298 = vmatprep.subr.bf16.mxu0 0
      %4299 = vmatpush1.bf16.msra.mxu0 0
      %4300 = vmatprep.subr.bf16.mxu0 0
      %4301 = vmatpush1.bf16.msra.mxu0 0
      %4302 = vmatprep.subr.bf16.mxu0 0
      %4303 = vmatpush1.bf16.msra.mxu0 0
      %4304 = vmatprep.subr.bf16.mxu0 0
      %4305 = vmatpush1.bf16.msra.mxu0 %v4290
      %4306 = vmatprep.subr.bf16.mxu0 0
      %4307 = vmatpush1.bf16.msra.mxu0 %v4262
      %4308 = vmatprep.subr.bf16.mxu0 0
      %4309 = vmatpush2.bf16.msra.mxu0 0
      %4310 = vmatprep.subr.bf16.mxu0 0
      %4311 = vmatpush2.bf16.msra.mxu0 0
      %4312 = vmatprep.subr.bf16.mxu0 0
      %4313 = vmatpush2.bf16.msra.mxu0 0
      %4314 = vmatprep.subr.bf16.mxu0 0
      %4315 = vmatpush2.bf16.msra.mxu0 0
      %4316 = vmatprep.subr.bf16.mxu0 0
      %4317 = vmatpush2.bf16.msra.mxu0 0
      %4318 = vmatprep.subr.bf16.mxu0 0
      %4319 = vmatpush2.bf16.msra.mxu0 0
      %4320 = vmatprep.subr.bf16.mxu0 0
      %4321 = vmatpush2.bf16.msra.mxu0 0
      %4322 = vmatprep.subr.bf16.mxu0 0
      %4323 = vmatpush2.bf16.msra.mxu0 0
      %4324 = vmatprep.mubr.bf16.mxu0 0
      %4325 = vmatmul.mubr.bf16.gmra.mxu0 %v4266
      %v4326 = vpop.f32.mrf.mxu0
      %v4327 = vadd.f32 0.0, %v4326
      %v4328 = vpop.f32.mrf.mxu0
      %v4329 = vpop.f32.mrf.mxu0
      %v4330 = vadd.f32 0.0, %v4329
      %v4331 = vpop.f32.mrf.mxu0
      %4332 = vmatprep.mubr.bf16.mxu0 0
      %4333 = vmatmul.mubr.bf16.gmra.mxu0 %v4269
      %v4334 = vpop.f32.mrf.mxu0
      %v4335 = vadd.f32 0.0, %v4334
      %v4336 = vpop.f32.mrf.mxu0
      %v4337 = vpop.f32.mrf.mxu0
      %v4338 = vadd.f32 0.0, %v4337
      %v4339 = vpop.f32.mrf.mxu0
      %4340 = vmatprep.mubr.bf16.mxu0 0
      %4341 = vmatmul.mubr.bf16.gmra.mxu0 %v4272
      %v4342 = vpop.f32.mrf.mxu0
      %v4343 = vadd.f32 0.0, %v4342
      %v4344 = vpop.f32.mrf.mxu0
      %v4345 = vpop.f32.mrf.mxu0
      %v4346 = vadd.f32 0.0, %v4345
      %v4347 = vpop.f32.mrf.mxu0
      %4348 = vmatprep.mubr.bf16.mxu0 0
      %4349 = vmatmul.mubr.bf16.gmra.mxu0 %v4275
      %v4350 = vpop.f32.mrf.mxu0
      %v4351 = vadd.f32 0.0, %v4350
      %v4352 = vpop.f32.mrf.mxu0
      %v4353 = vpop.f32.mrf.mxu0
      %v4354 = vadd.f32 0.0, %v4353
      %v4355 = vpop.f32.mrf.mxu0
      %4356 = vmatprep.mubr.bf16.mxu0 0
      %4357 = vmatmul.mubr.bf16.gmra.mxu0 %v4278
      %v4358 = vpop.f32.mrf.mxu0
      %v4359 = vadd.f32 0.0, %v4358
      %v4360 = vpop.f32.mrf.mxu0
      %v4361 = vpop.f32.mrf.mxu0
      %v4362 = vadd.f32 0.0, %v4361
      %v4363 = vpop.f32.mrf.mxu0
      %4364 = vmatprep.mubr.bf16.mxu0 0
      %4365 = vmatmul.mubr.bf16.gmra.mxu0 %v4281
      %v4366 = vpop.f32.mrf.mxu0
      %v4367 = vadd.f32 0.0, %v4366
      %v4368 = vpop.f32.mrf.mxu0
      %v4369 = vpop.f32.mrf.mxu0
      %v4370 = vadd.f32 0.0, %v4369
      %v4371 = vpop.f32.mrf.mxu0
      %4372 = vmatprep.mubr.bf16.mxu0 0
      %4373 = vmatmul.mubr.bf16.gmra.mxu0 %v4284
      %v4374 = vpop.f32.mrf.mxu0
      %v4375 = vadd.f32 0.0, %v4374
      %v4376 = vpop.f32.mrf.mxu0
      %v4377 = vpop.f32.mrf.mxu0
      %v4378 = vadd.f32 0.0, %v4377
      %v4379 = vpop.f32.mrf.mxu0
      %4380 = vmatprep.mubr.bf16.mxu0 0
      %4381 = vmatmul.mubr.bf16.gmra.mxu0 %v4287
      %v4382 = vpop.f32.mrf.mxu0
      %v4383 = vadd.f32 0.0, %v4382
      %v4384 = vpop.f32.mrf.mxu0
      %v4385 = vpop.f32.mrf.mxu0
      %v4386 = vadd.f32 0.0, %v4385
      %v4387 = vpop.f32.mrf.mxu0
      %4388 = vdwg.mxu0
      %v4389 = vmul.f32 %v3849, %v4327
      %v4390 = vmul.f32 %v3850, %v4330
      %v4391 = vmul.f32 %v3851, %v4335
      %v4392 = vmul.f32 %v3852, %v4338
      %v4393 = vmul.f32 %v3853, %v4343
      %v4394 = vmul.f32 %v3854, %v4346
      %v4395 = vmul.f32 %v3855, %v4351
      %v4396 = vmul.f32 %v3856, %v4354
      %v4397 = vmul.f32 %v3857, %v4359
      %v4398 = vmul.f32 %v3858, %v4362
      %v4399 = vmul.f32 %v3859, %v4367
      %v4400 = vmul.f32 %v3860, %v4370
      %v4401 = vmul.f32 %v3861, %v4375
      %v4402 = vmul.f32 %v3862, %v4378
      %v4403 = vmul.f32 %v3863, %v4383
      %v4404 = vmul.f32 %v3864, %v4386
      %v4405 = vpack.c.bf16 %v4390, %v4389
      %v4406 = vpack.c.bf16 %v4392, %v4391
      %v4407 = vpack.c.bf16 %v4394, %v4393
      %v4408 = vpack.c.bf16 %v4396, %v4395
      %v4409 = vpack.c.bf16 %v4398, %v4397
      %v4410 = vpack.c.bf16 %v4400, %v4399
      %v4411 = vpack.c.bf16 %v4402, %v4401
      %v4412 = vpack.c.bf16 %v4404, %v4403
      %4413 = vmatprep.subr.bf16.mxu0 0
      %4414 = vmatpush1.bf16.msra.mxu0 %v4412
      %4415 = vmatprep.subr.bf16.mxu0 0
      %4416 = vmatpush1.bf16.msra.mxu0 %v4411
      %4417 = vmatprep.subr.bf16.mxu0 0
      %4418 = vmatpush1.bf16.msra.mxu0 %v4410
      %4419 = vmatprep.subr.bf16.mxu0 0
      %4420 = vmatpush1.bf16.msra.mxu0 %v4409
      %4421 = vmatprep.subr.bf16.mxu0 0
      %4422 = vmatpush1.bf16.msra.mxu0 %v4408
      %4423 = vmatprep.subr.bf16.mxu0 0
      %4424 = vmatpush1.bf16.msra.mxu0 %v4407
      %4425 = vmatprep.subr.bf16.mxu0 0
      %4426 = vmatpush1.bf16.msra.mxu0 %v4406
      %4427 = vmatprep.subr.bf16.mxu0 0
      %4428 = vmatpush1.bf16.msra.mxu0 %v4405
      %4429 = vmatprep.subr.bf16.mxu0 0
      %4430 = vmatpush2.bf16.msra.mxu0 0
      %4431 = vmatprep.subr.bf16.mxu0 0
      %4432 = vmatpush2.bf16.msra.mxu0 0
      %4433 = vmatprep.subr.bf16.mxu0 0
      %4434 = vmatpush2.bf16.msra.mxu0 0
      %4435 = vmatprep.subr.bf16.mxu0 0
      %4436 = vmatpush2.bf16.msra.mxu0 0
      %4437 = vmatprep.subr.bf16.mxu0 0
      %4438 = vmatpush2.bf16.msra.mxu0 0
      %4439 = vmatprep.subr.bf16.mxu0 0
      %4440 = vmatpush2.bf16.msra.mxu0 0
      %4441 = vmatprep.subr.bf16.mxu0 0
      %4442 = vmatpush2.bf16.msra.mxu0 0
      %4443 = vmatprep.subr.bf16.mxu0 0
      %4444 = vmatpush2.bf16.msra.mxu0 0
      %4445 = vmatprep.mubr.bf16.mxu0 0
      %4446 = vmatmul.mubr.bf16.gmra.mxu0 %v4074
      %v4447 = vpop.f32.mrf.mxu0
      %v4448 = vadd.f32 %v4389, %v4447
      %v4449 = vpop.f32.mrf.mxu0
      %v4450 = vpop.f32.mrf.mxu0
      %v4451 = vadd.f32 %v4390, %v4450
      %v4452 = vpop.f32.mrf.mxu0
      %4453 = vmatprep.mubr.bf16.mxu0 0
      %4454 = vmatmul.mubr.bf16.gmra.mxu0 %v4075
      %v4455 = vpop.f32.mrf.mxu0
      %v4456 = vadd.f32 %v4391, %v4455
      %v4457 = vpop.f32.mrf.mxu0
      %v4458 = vpop.f32.mrf.mxu0
      %v4459 = vadd.f32 %v4392, %v4458
      %v4460 = vpop.f32.mrf.mxu0
      %4461 = vmatprep.mubr.bf16.mxu0 0
      %4462 = vmatmul.mubr.bf16.gmra.mxu0 %v4076
      %v4463 = vpop.f32.mrf.mxu0
      %v4464 = vadd.f32 %v4393, %v4463
      %v4465 = vpop.f32.mrf.mxu0
      %v4466 = vpop.f32.mrf.mxu0
      %v4467 = vadd.f32 %v4394, %v4466
      %v4468 = vpop.f32.mrf.mxu0
      %4469 = vmatprep.mubr.bf16.mxu0 0
      %4470 = vmatmul.mubr.bf16.gmra.mxu0 %v4077
      %v4471 = vpop.f32.mrf.mxu0
      %v4472 = vadd.f32 %v4395, %v4471
      %v4473 = vpop.f32.mrf.mxu0
      %v4474 = vpop.f32.mrf.mxu0
      %v4475 = vadd.f32 %v4396, %v4474
      %v4476 = vpop.f32.mrf.mxu0
      %4477 = vmatprep.mubr.bf16.mxu0 0
      %4478 = vmatmul.mubr.bf16.gmra.mxu0 %v4078
      %v4479 = vpop.f32.mrf.mxu0
      %v4480 = vadd.f32 %v4397, %v4479
      %v4481 = vpop.f32.mrf.mxu0
      %v4482 = vpop.f32.mrf.mxu0
      %v4483 = vadd.f32 %v4398, %v4482
      %v4484 = vpop.f32.mrf.mxu0
      %4485 = vmatprep.mubr.bf16.mxu0 0
      %4486 = vmatmul.mubr.bf16.gmra.mxu0 %v4079
      %v4487 = vpop.f32.mrf.mxu0
      %v4488 = vadd.f32 %v4399, %v4487
      %v4489 = vpop.f32.mrf.mxu0
      %v4490 = vpop.f32.mrf.mxu0
      %v4491 = vadd.f32 %v4400, %v4490
      %v4492 = vpop.f32.mrf.mxu0
      %4493 = vmatprep.mubr.bf16.mxu0 0
      %4494 = vmatmul.mubr.bf16.gmra.mxu0 %v4080
      %v4495 = vpop.f32.mrf.mxu0
      %v4496 = vadd.f32 %v4401, %v4495
      %v4497 = vpop.f32.mrf.mxu0
      %v4498 = vpop.f32.mrf.mxu0
      %v4499 = vadd.f32 %v4402, %v4498
      %v4500 = vpop.f32.mrf.mxu0
      %4501 = vmatprep.mubr.bf16.mxu0 0
      %4502 = vmatmul.mubr.bf16.gmra.mxu0 %v4081
      %v4503 = vpop.f32.mrf.mxu0
      %v4504 = vadd.f32 %v4403, %v4503
      %v4505 = vpop.f32.mrf.mxu0
      %v4506 = vpop.f32.mrf.mxu0
      %v4507 = vadd.f32 %v4404, %v4506
      %v4508 = vpop.f32.mrf.mxu0
      %4509 = vdwg.mxu0
      %v4510 = vmul.f32 %v3849, %v4448
      %v4511 = vmul.f32 %v3850, %v4451
      %v4512 = vmul.f32 %v3851, %v4456
      %v4513 = vmul.f32 %v3852, %v4459
      %v4514 = vmul.f32 %v3853, %v4464
      %v4515 = vmul.f32 %v3854, %v4467
      %v4516 = vmul.f32 %v3855, %v4472
      %v4517 = vmul.f32 %v3856, %v4475
      %v4518 = vmul.f32 %v3857, %v4480
      %v4519 = vmul.f32 %v3858, %v4483
      %v4520 = vmul.f32 %v3859, %v4488
      %v4521 = vmul.f32 %v3860, %v4491
      %v4522 = vmul.f32 %v3861, %v4496
      %v4523 = vmul.f32 %v3862, %v4499
      %v4524 = vmul.f32 %v3863, %v4504
      %v4525 = vmul.f32 %v3864, %v4507
      %v4527 = vlaneseq
      %v4528 = vshrl.u32 %v4527, 7
      %v4529 = vsub.s32 0, %v4528
      %v4530 = vrot.slane %v4245, %v4529
      %v4532 = vadd.f32 %v4510, %v4530
      %v4533 = vadd.f32 %v4511, %v4530
      %v4534 = vadd.f32 %v4512, %v4530
      %v4535 = vadd.f32 %v4513, %v4530
      %v4536 = vadd.f32 %v4514, %v4530
      %v4537 = vadd.f32 %v4515, %v4530
      %v4538 = vadd.f32 %v4516, %v4530
      %v4539 = vadd.f32 %v4517, %v4530
      %v4540 = vadd.f32 %v4518, %v4530
      %v4541 = vadd.f32 %v4519, %v4530
      %v4542 = vadd.f32 %v4520, %v4530
      %v4543 = vadd.f32 %v4521, %v4530
      %v4544 = vadd.f32 %v4522, %v4530
      %v4545 = vadd.f32 %v4523, %v4530
      %v4546 = vadd.f32 %v4524, %v4530
      %v4547 = vadd.f32 %v4525, %v4530
      %v4548 = vmax.f32 %v4532, 0.0
      %v4549 = vmax.f32 %v4533, 0.0
      %v4550 = vmax.f32 %v4534, 0.0
      %v4551 = vmax.f32 %v4535, 0.0
      %v4552 = vmax.f32 %v4536, 0.0
      %v4553 = vmax.f32 %v4537, 0.0
      %v4554 = vmax.f32 %v4538, 0.0
      %v4555 = vmax.f32 %v4539, 0.0
      %v4556 = vmax.f32 %v4540, 0.0
      %v4557 = vmax.f32 %v4541, 0.0
      %v4558 = vmax.f32 %v4542, 0.0
      %v4559 = vmax.f32 %v4543, 0.0
      %v4560 = vmax.f32 %v4544, 0.0
      %v4561 = vmax.f32 %v4545, 0.0
      %v4562 = vmax.f32 %v4546, 0.0
      %v4563 = vmax.f32 %v4547, 0.0
      %vm4564 = vcmask 523264
      %v4565 = vsel %vm4564, %v4548, -inf
      %v4566 = vrot.slane %v4565, 4
      %v4567 = vmax.f32 %v4565, %v4566
      %v4568 = vrot.slane %v4567, 2
      %v4569 = vmax.f32 %v4567, %v4568
      %v4570 = vrot.slane %v4569, 1
      %v4571 = vmax.f32 %v4569, %v4570
      %v4572 = vsel %vm4564, %v4549, -inf
      %v4573 = vrot.slane %v4572, 4
      %v4574 = vmax.f32 %v4572, %v4573
      %v4575 = vrot.slane %v4574, 2
      %v4576 = vmax.f32 %v4574, %v4575
      %v4577 = vrot.slane %v4576, 1
      %v4578 = vmax.f32 %v4576, %v4577
      %v4579 = vsel %vm4564, %v4550, -inf
      %v4580 = vrot.slane %v4579, 4
      %v4581 = vmax.f32 %v4579, %v4580
      %v4582 = vrot.slane %v4581, 2
      %v4583 = vmax.f32 %v4581, %v4582
      %v4584 = vrot.slane %v4583, 1
      %v4585 = vmax.f32 %v4583, %v4584
      %v4586 = vsel %vm4564, %v4551, -inf
      %v4587 = vrot.slane %v4586, 4
      %v4588 = vmax.f32 %v4586, %v4587
      %v4589 = vrot.slane %v4588, 2
      %v4590 = vmax.f32 %v4588, %v4589
      %v4591 = vrot.slane %v4590, 1
      %v4592 = vmax.f32 %v4590, %v4591
      %v4593 = vsel %vm4564, %v4552, -inf
      %v4594 = vrot.slane %v4593, 4
      %v4595 = vmax.f32 %v4593, %v4594
      %v4596 = vrot.slane %v4595, 2
      %v4597 = vmax.f32 %v4595, %v4596
      %v4598 = vrot.slane %v4597, 1
      %v4599 = vmax.f32 %v4597, %v4598
      %v4600 = vsel %vm4564, %v4553, -inf
      %v4601 = vrot.slane %v4600, 4
      %v4602 = vmax.f32 %v4600, %v4601
      %v4603 = vrot.slane %v4602, 2
      %v4604 = vmax.f32 %v4602, %v4603
      %v4605 = vrot.slane %v4604, 1
      %v4606 = vmax.f32 %v4604, %v4605
      %v4607 = vsel %vm4564, %v4554, -inf
      %v4608 = vrot.slane %v4607, 4
      %v4609 = vmax.f32 %v4607, %v4608
      %v4610 = vrot.slane %v4609, 2
      %v4611 = vmax.f32 %v4609, %v4610
      %v4612 = vrot.slane %v4611, 1
      %v4613 = vmax.f32 %v4611, %v4612
      %v4614 = vsel %vm4564, %v4555, -inf
      %v4615 = vrot.slane %v4614, 4
      %v4616 = vmax.f32 %v4614, %v4615
      %v4617 = vrot.slane %v4616, 2
      %v4618 = vmax.f32 %v4616, %v4617
      %v4619 = vrot.slane %v4618, 1
      %v4620 = vmax.f32 %v4618, %v4619
      %v4621 = vsel %vm4564, %v4556, -inf
      %v4622 = vrot.slane %v4621, 4
      %v4623 = vmax.f32 %v4621, %v4622
      %v4624 = vrot.slane %v4623, 2
      %v4625 = vmax.f32 %v4623, %v4624
      %v4626 = vrot.slane %v4625, 1
      %v4627 = vmax.f32 %v4625, %v4626
      %v4628 = vsel %vm4564, %v4557, -inf
      %v4629 = vrot.slane %v4628, 4
      %v4630 = vmax.f32 %v4628, %v4629
      %v4631 = vrot.slane %v4630, 2
      %v4632 = vmax.f32 %v4630, %v4631
      %v4633 = vrot.slane %v4632, 1
      %v4634 = vmax.f32 %v4632, %v4633
      %v4635 = vsel %vm4564, %v4558, -inf
      %v4636 = vrot.slane %v4635, 4
      %v4637 = vmax.f32 %v4635, %v4636
      %v4638 = vrot.slane %v4637, 2
      %v4639 = vmax.f32 %v4637, %v4638
      %v4640 = vrot.slane %v4639, 1
      %v4641 = vmax.f32 %v4639, %v4640
      %v4642 = vsel %vm4564, %v4559, -inf
      %v4643 = vrot.slane %v4642, 4
      %v4644 = vmax.f32 %v4642, %v4643
      %v4645 = vrot.slane %v4644, 2
      %v4646 = vmax.f32 %v4644, %v4645
      %v4647 = vrot.slane %v4646, 1
      %v4648 = vmax.f32 %v4646, %v4647
      %v4649 = vsel %vm4564, %v4560, -inf
      %v4650 = vrot.slane %v4649, 4
      %v4651 = vmax.f32 %v4649, %v4650
      %v4652 = vrot.slane %v4651, 2
      %v4653 = vmax.f32 %v4651, %v4652
      %v4654 = vrot.slane %v4653, 1
      %v4655 = vmax.f32 %v4653, %v4654
      %v4656 = vsel %vm4564, %v4561, -inf
      %v4657 = vrot.slane %v4656, 4
      %v4658 = vmax.f32 %v4656, %v4657
      %v4659 = vrot.slane %v4658, 2
      %v4660 = vmax.f32 %v4658, %v4659
      %v4661 = vrot.slane %v4660, 1
      %v4662 = vmax.f32 %v4660, %v4661
      %v4663 = vsel %vm4564, %v4562, -inf
      %v4664 = vrot.slane %v4663, 4
      %v4665 = vmax.f32 %v4663, %v4664
      %v4666 = vrot.slane %v4665, 2
      %v4667 = vmax.f32 %v4665, %v4666
      %v4668 = vrot.slane %v4667, 1
      %v4669 = vmax.f32 %v4667, %v4668
      %v4670 = vsel %vm4564, %v4563, -inf
      %v4671 = vrot.slane %v4670, 4
      %v4672 = vmax.f32 %v4670, %v4671
      %v4673 = vrot.slane %v4672, 2
      %v4674 = vmax.f32 %v4672, %v4673
      %v4675 = vrot.slane %v4674, 1
      %v4676 = vmax.f32 %v4674, %v4675
      %v4677 = vpack.c.bf16 %v4571, %v4571
      %v4678 = vpack.c.bf16 %v4578, %v4578
      %v4679 = vpack.c.bf16 %v4585, %v4585
      %v4680 = vpack.c.bf16 %v4592, %v4592
      %v4681 = vpack.c.bf16 %v4599, %v4599
      %v4682 = vpack.c.bf16 %v4606, %v4606
      %v4683 = vpack.c.bf16 %v4613, %v4613
      %v4684 = vpack.c.bf16 %v4620, %v4620
      %v4685 = vpack.c.bf16 %v4627, %v4627
      %v4686 = vpack.c.bf16 %v4634, %v4634
      %v4687 = vpack.c.bf16 %v4641, %v4641
      %v4688 = vpack.c.bf16 %v4648, %v4648
      %v4689 = vpack.c.bf16 %v4655, %v4655
      %v4690 = vpack.c.bf16 %v4662, %v4662
      %v4691 = vpack.c.bf16 %v4669, %v4669
      %v4692 = vpack.c.bf16 %v4676, %v4676
      %v4693 = vld [vmem:[%s18] sm:$0xf]
      %v4694 = vld [vmem:[%s18 + $0x4] sm:$0xf]
      %v4695 = vld [vmem:[%s18 + $0x8] sm:$0xf]
      %v4696 = vld [vmem:[%s18 + $0xc] sm:$0xf]
      %v4697 = vld [vmem:[%s18 + $0x10] sm:$0xf]
      %v4698 = vld [vmem:[%s18 + $0x14] sm:$0xf]
      %v4699 = vld [vmem:[%s18 + $0x18] sm:$0xf]
      %v4700 = vld [vmem:[%s18 + $0x1c] sm:$0xf]
      %v4701 = vld [vmem:[%s19] sm:$0x1]
      %v4703 = vlaneseq
      %v4704 = vshrl.u32 %v4703, 7
      %v4705 = vsub.s32 0, %v4704
      %v4706 = vrot.slane %v4701, %v4705
      %v4724 = vunpack.c.l.b16 %v4677
      %v4725 = vunpack.c.l.b16 %v4678
      %v4726 = vunpack.c.l.b16 %v4679
      %v4727 = vunpack.c.l.b16 %v4680
      %v4728 = vunpack.c.l.b16 %v4681
      %v4729 = vunpack.c.l.b16 %v4682
      %v4730 = vunpack.c.l.b16 %v4683
      %v4731 = vunpack.c.l.b16 %v4684
      %v4732 = vunpack.c.l.b16 %v4685
      %v4733 = vunpack.c.l.b16 %v4686
      %v4734 = vunpack.c.l.b16 %v4687
      %v4735 = vunpack.c.l.b16 %v4688
      %v4736 = vunpack.c.l.b16 %v4689
      %v4737 = vunpack.c.l.b16 %v4690
      %v4738 = vunpack.c.l.b16 %v4691
      %v4739 = vunpack.c.l.b16 %v4692
      %v4740 = vsel %vm3673, %v4725, %v4724
      %v4741 = vsel %vm3675, %v4726, %v4740
      %v4742 = vsel %vm3677, %v4727, %v4741
      %v4743 = vsel %vm3679, %v4728, %v4742
      %v4744 = vsel %vm3681, %v4729, %v4743
      %v4745 = vsel %vm3683, %v4730, %v4744
      %v4746 = vsel %vm3685, %v4731, %v4745
      %v4747 = vsel %vm3673, %v4733, %v4732
      %v4748 = vsel %vm3675, %v4734, %v4747
      %v4749 = vsel %vm3677, %v4735, %v4748
      %v4750 = vsel %vm3679, %v4736, %v4749
      %v4751 = vsel %vm3681, %v4737, %v4750
      %v4752 = vsel %vm3683, %v4738, %v4751
      %v4753 = vsel %vm3685, %v4739, %v4752
      %v4754 = vpack.c.b16 %v4753, %v4746
      %v4763 = vunpack.c.l.b16 %v4693
      %v4764 = vunpack.c.l.b16 %v4694
      %v4765 = vunpack.c.l.b16 %v4695
      %v4766 = vunpack.c.l.b16 %v4696
      %v4767 = vunpack.c.l.b16 %v4697
      %v4768 = vunpack.c.l.b16 %v4698
      %v4769 = vunpack.c.l.b16 %v4699
      %v4770 = vunpack.c.l.b16 %v4700
      %v4771 = vpack.c.b16 %v4764, %v4763
      %v4772 = vpack.c.b16 %v4766, %v4765
      %v4773 = vpack.c.b16 %v4768, %v4767
      %v4774 = vpack.c.b16 %v4770, %v4769
      %v4780 = vsel %vm4564, %v4754, 0
      %4782 = vmatprep.subr.bf16.mxu0 0
      %4783 = vmatpush1.bf16.msra.mxu0 0
      %4784 = vmatprep.subr.bf16.mxu0 0
      %4785 = vmatpush1.bf16.msra.mxu0 0
      %4786 = vmatprep.subr.bf16.mxu0 0
      %4787 = vmatpush1.bf16.msra.mxu0 0
      %4788 = vmatprep.subr.bf16.mxu0 0
      %4789 = vmatpush1.bf16.msra.mxu0 0
      %4790 = vmatprep.subr.bf16.mxu0 0
      %4791 = vmatpush1.bf16.msra.mxu0 %v4774
      %4792 = vmatprep.subr.bf16.mxu0 0
      %4793 = vmatpush1.bf16.msra.mxu0 %v4773
      %4794 = vmatprep.subr.bf16.mxu0 0
      %4795 = vmatpush1.bf16.msra.mxu0 %v4772
      %4796 = vmatprep.subr.bf16.mxu0 0
      %4797 = vmatpush1.bf16.msra.mxu0 %v4771
      %4798 = vmatprep.subr.bf16.mxu0 0
      %4799 = vmatpush2.bf16.msra.mxu0 0
      %4800 = vmatprep.subr.bf16.mxu0 0
      %4801 = vmatpush2.bf16.msra.mxu0 0
      %4802 = vmatprep.subr.bf16.mxu0 0
      %4803 = vmatpush2.bf16.msra.mxu0 0
      %4804 = vmatprep.subr.bf16.mxu0 0
      %4805 = vmatpush2.bf16.msra.mxu0 0
      %4806 = vmatprep.subr.bf16.mxu0 0
      %4807 = vmatpush2.bf16.msra.mxu0 0
      %4808 = vmatprep.subr.bf16.mxu0 0
      %4809 = vmatpush2.bf16.msra.mxu0 0
      %4810 = vmatprep.subr.bf16.mxu0 0
      %4811 = vmatpush2.bf16.msra.mxu0 0
      %4812 = vmatprep.subr.bf16.mxu0 0
      %4813 = vmatpush2.bf16.msra.mxu0 0
      %4814 = vmatprep.mubr.bf16.mxu0 0
      %4815 = vmatmul.mubr.bf16.gmra.mxu0 %v4780
      %v4816 = vpop.f32.mrf.mxu0
      %v4817 = vadd.f32 %v4706, %v4816
      %v4818 = vpop.f32.mrf.mxu0
      %v4819 = vpop.f32.mrf.mxu0
      %v4820 = vadd.f32 %v4706, %v4819
      %v4821 = vpop.f32.mrf.mxu0
      %4822 = vdwg.mxu0
      %v4823 = vmax.f32 %v4817, 0.0
      %v4824 = vmax.f32 %v4820, 0.0
      %v4825 = vpack.c.bf16 %v3752, %v3751
      %v4826 = vpack.c.bf16 %v4824, %v4823
      %v4827 = vld [vmem:[%s20] sm:$0xff]
      %v4828 = vld [vmem:[%s20 + $0x8] sm:$0xff]
      %v4829 = vld [vmem:[%s20 + $0x10] sm:$0xff]
      %v4830 = vld [vmem:[%s20 + $0x18] sm:$0xff]
      %v4831 = vld [vmem:[%s20 + $0x20] sm:$0xff]
      %v4832 = vld [vmem:[%s20 + $0x28] sm:$0xff]
      %v4833 = vld [vmem:[%s20 + $0x30] sm:$0xff]
      %v4834 = vld [vmem:[%s20 + $0x38] sm:$0xff]
      %v4835 = vld [vmem:[%s20 + $0x40] sm:$0xff]
      %v4836 = vld [vmem:[%s20 + $0x48] sm:$0xff]
      %v4837 = vld [vmem:[%s20 + $0x50] sm:$0xff]
      %v4838 = vld [vmem:[%s20 + $0x58] sm:$0xff]
      %v4839 = vld [vmem:[%s20 + $0x60] sm:$0xff]
      %v4840 = vld [vmem:[%s20 + $0x68] sm:$0xff]
      %v4841 = vld [vmem:[%s20 + $0x70] sm:$0xff]
      %v4842 = vld [vmem:[%s20 + $0x78] sm:$0xff]
      %v4843 = vld [vmem:[%s20 + $0x80] sm:$0xff]
      %v4844 = vld [vmem:[%s20 + $0x88] sm:$0xff]
      %v4845 = vld [vmem:[%s20 + $0x90] sm:$0xff]
      %v4846 = vld [vmem:[%s20 + $0x98] sm:$0xff]
      %v4847 = vld [vmem:[%s20 + $0xa0] sm:$0xff]
      %v4848 = vld [vmem:[%s20 + $0xa8] sm:$0xff]
      %v4849 = vld [vmem:[%s20 + $0xb0] sm:$0xff]
      %v4850 = vld [vmem:[%s20 + $0xb8] sm:$0xff]
      %v4851 = vld [vmem:[%s20 + $0xc0] sm:$0xff]
      %v4852 = vld [vmem:[%s20 + $0xc8] sm:$0xff]
      %v4853 = vld [vmem:[%s20 + $0xd0] sm:$0xff]
      %v4854 = vld [vmem:[%s20 + $0xd8] sm:$0xff]
      %v4855 = vld [vmem:[%s20 + $0xe0] sm:$0xff]
      %v4856 = vld [vmem:[%s20 + $0xe8] sm:$0xff]
      %v4857 = vld [vmem:[%s20 + $0xf0] sm:$0xff]
      %v4858 = vld [vmem:[%s20 + $0xf8] sm:$0xff]
      %v4859 = vld [vmem:[%s20 + $0x100] sm:$0xff]
      %v4860 = vld [vmem:[%s20 + $0x108] sm:$0xff]
      %v4861 = vld [vmem:[%s20 + $0x110] sm:$0xff]
      %v4862 = vld [vmem:[%s20 + $0x118] sm:$0xff]
      %v4863 = vld [vmem:[%s20 + $0x120] sm:$0xff]
      %v4864 = vld [vmem:[%s20 + $0x128] sm:$0xff]
      %v4865 = vld [vmem:[%s20 + $0x130] sm:$0xff]
      %v4866 = vld [vmem:[%s20 + $0x138] sm:$0xff]
      %v4867 = vld [vmem:[%s20 + $0x140] sm:$0xff]
      %v4868 = vld [vmem:[%s20 + $0x148] sm:$0xff]
      %v4869 = vld [vmem:[%s20 + $0x150] sm:$0xff]
      %v4870 = vld [vmem:[%s20 + $0x158] sm:$0xff]
      %v4871 = vld [vmem:[%s20 + $0x160] sm:$0xff]
      %v4872 = vld [vmem:[%s20 + $0x168] sm:$0xff]
      %v4873 = vld [vmem:[%s20 + $0x170] sm:$0xff]
      %v4874 = vld [vmem:[%s20 + $0x178] sm:$0xff]
      %v4875 = vld [vmem:[%s20 + $0x180] sm:$0xff]
      %v4876 = vld [vmem:[%s20 + $0x188] sm:$0xff]
      %v4877 = vld [vmem:[%s20 + $0x190] sm:$0xff]
      %v4878 = vld [vmem:[%s20 + $0x198] sm:$0xff]
      %v4879 = vld [vmem:[%s20 + $0x1a0] sm:$0xff]
      %v4880 = vld [vmem:[%s20 + $0x1a8] sm:$0xff]
      %v4881 = vld [vmem:[%s20 + $0x1b0] sm:$0xff]
      %v4882 = vld [vmem:[%s20 + $0x1b8] sm:$0xff]
      %v4883 = vld [vmem:[%s20 + $0x1c0] sm:$0xff]
      %v4884 = vld [vmem:[%s20 + $0x1c8] sm:$0xff]
      %v4885 = vld [vmem:[%s20 + $0x1d0] sm:$0xff]
      %v4886 = vld [vmem:[%s20 + $0x1d8] sm:$0xff]
      %v4887 = vld [vmem:[%s20 + $0x1e0] sm:$0xff]
      %v4888 = vld [vmem:[%s20 + $0x1e8] sm:$0xff]
      %v4889 = vld [vmem:[%s20 + $0x1f0] sm:$0xff]
      %v4890 = vld [vmem:[%s20 + $0x1f8] sm:$0xff]
      %v4891 = vld [vmem:[%s20 + $0x200] sm:$0xff]
      %v4892 = vld [vmem:[%s20 + $0x208] sm:$0xff]
      %v4893 = vld [vmem:[%s20 + $0x210] sm:$0xff]
      %v4894 = vld [vmem:[%s20 + $0x218] sm:$0xff]
      %v4895 = vld [vmem:[%s20 + $0x220] sm:$0xff]
      %v4896 = vld [vmem:[%s20 + $0x228] sm:$0xff]
      %v4897 = vld [vmem:[%s20 + $0x230] sm:$0xff]
      %v4898 = vld [vmem:[%s20 + $0x238] sm:$0xff]
      %v4899 = vld [vmem:[%s20 + $0x240] sm:$0xff]
      %v4900 = vld [vmem:[%s20 + $0x248] sm:$0xff]
      %v4901 = vld [vmem:[%s20 + $0x250] sm:$0xff]
      %v4902 = vld [vmem:[%s20 + $0x258] sm:$0xff]
      %v4903 = vld [vmem:[%s20 + $0x260] sm:$0xff]
      %v4904 = vld [vmem:[%s20 + $0x268] sm:$0xff]
      %v4905 = vld [vmem:[%s20 + $0x270] sm:$0xff]
      %v4906 = vld [vmem:[%s20 + $0x278] sm:$0xff]
      %v4907 = vld [vmem:[%s20 + $0x280] sm:$0xff]
      %v4908 = vld [vmem:[%s20 + $0x288] sm:$0xff]
      %v4909 = vld [vmem:[%s20 + $0x290] sm:$0xff]
      %v4910 = vld [vmem:[%s20 + $0x298] sm:$0xff]
      %v4911 = vld [vmem:[%s20 + $0x2a0] sm:$0xff]
      %v4912 = vld [vmem:[%s20 + $0x2a8] sm:$0xff]
      %v4913 = vld [vmem:[%s20 + $0x2b0] sm:$0xff]
      %v4914 = vld [vmem:[%s20 + $0x2b8] sm:$0xff]
      %v4915 = vld [vmem:[%s20 + $0x2c0] sm:$0xff]
      %v4916 = vld [vmem:[%s20 + $0x2c8] sm:$0xff]
      %v4917 = vld [vmem:[%s20 + $0x2d0] sm:$0xff]
      %v4918 = vld [vmem:[%s20 + $0x2d8] sm:$0xff]
      %v4919 = vld [vmem:[%s20 + $0x2e0] sm:$0xff]
      %v4920 = vld [vmem:[%s20 + $0x2e8] sm:$0xff]
      %v4921 = vld [vmem:[%s20 + $0x2f0] sm:$0xff]
      %v4922 = vld [vmem:[%s20 + $0x2f8] sm:$0xff]
      %v4923 = vld [vmem:[%s20 + $0x300] sm:$0xff]
      %v4924 = vld [vmem:[%s20 + $0x308] sm:$0xff]
      %v4925 = vld [vmem:[%s20 + $0x310] sm:$0xff]
      %v4926 = vld [vmem:[%s20 + $0x318] sm:$0xff]
      %v4927 = vld [vmem:[%s20 + $0x320] sm:$0xff]
      %v4928 = vld [vmem:[%s20 + $0x328] sm:$0xff]
      %v4929 = vld [vmem:[%s20 + $0x330] sm:$0xff]
      %v4930 = vld [vmem:[%s20 + $0x338] sm:$0xff]
      %v4931 = vld [vmem:[%s20 + $0x340] sm:$0xff]
      %v4932 = vld [vmem:[%s20 + $0x348] sm:$0xff]
      %v4933 = vld [vmem:[%s20 + $0x350] sm:$0xff]
      %v4934 = vld [vmem:[%s20 + $0x358] sm:$0xff]
      %v4935 = vld [vmem:[%s20 + $0x360] sm:$0xff]
      %v4936 = vld [vmem:[%s20 + $0x368] sm:$0xff]
      %v4937 = vld [vmem:[%s20 + $0x370] sm:$0xff]
      %v4938 = vld [vmem:[%s20 + $0x378] sm:$0xff]
      %v4939 = vld [vmem:[%s20 + $0x380] sm:$0xff]
      %v4940 = vld [vmem:[%s20 + $0x388] sm:$0xff]
      %v4941 = vld [vmem:[%s20 + $0x390] sm:$0xff]
      %v4942 = vld [vmem:[%s20 + $0x398] sm:$0xff]
      %v4943 = vld [vmem:[%s20 + $0x3a0] sm:$0xff]
      %v4944 = vld [vmem:[%s20 + $0x3a8] sm:$0xff]
      %v4945 = vld [vmem:[%s20 + $0x3b0] sm:$0xff]
      %v4946 = vld [vmem:[%s20 + $0x3b8] sm:$0xff]
      %v4947 = vld [vmem:[%s20 + $0x3c0] sm:$0xff]
      %v4948 = vld [vmem:[%s20 + $0x3c8] sm:$0xff]
      %v4949 = vld [vmem:[%s20 + $0x3d0] sm:$0xff]
      %v4950 = vld [vmem:[%s20 + $0x3d8] sm:$0xff]
      %v4951 = vld [vmem:[%s20 + $0x3e0] sm:$0xff]
      %v4952 = vld [vmem:[%s20 + $0x3e8] sm:$0xff]
      %v4953 = vld [vmem:[%s20 + $0x3f0] sm:$0xff]
      %v4954 = vld [vmem:[%s20 + $0x3f8] sm:$0xff]
      %v4955 = vld [vmem:[%s21] sm:$0xff]
      %v4957 = vlaneseq
      %v4958 = vshrl.u32 %v4957, 7
      %v4959 = vsub.s32 0, %v4958
      %v4960 = vrot.slane %v4955, %v4959
      %v4961 = vlaneseq
      %v4962 = vshrl.u32 %v4961, 7
      %v4963 = vsub.s32 1, %v4962
      %v4964 = vrot.slane %v4955, %v4963
      %v4965 = vlaneseq
      %v4966 = vshrl.u32 %v4965, 7
      %v4967 = vsub.s32 2, %v4966
      %v4968 = vrot.slane %v4955, %v4967
      %v4969 = vlaneseq
      %v4970 = vshrl.u32 %v4969, 7
      %v4971 = vsub.s32 3, %v4970
      %v4972 = vrot.slane %v4955, %v4971
      %v4973 = vlaneseq
      %v4974 = vshrl.u32 %v4973, 7
      %v4975 = vsub.s32 4, %v4974
      %v4976 = vrot.slane %v4955, %v4975
      %v4977 = vlaneseq
      %v4978 = vshrl.u32 %v4977, 7
      %v4979 = vsub.s32 5, %v4978
      %v4980 = vrot.slane %v4955, %v4979
      %v4981 = vlaneseq
      %v4982 = vshrl.u32 %v4981, 7
      %v4983 = vsub.s32 6, %v4982
      %v4984 = vrot.slane %v4955, %v4983
      %v4985 = vlaneseq
      %v4986 = vshrl.u32 %v4985, 7
      %v4987 = vsub.s32 7, %v4986
      %v4988 = vrot.slane %v4955, %v4987
      %v5125 = vunpack.c.l.b16 %v4827
      %v5126 = vunpack.c.h.b16 %v4827
      %v5127 = vunpack.c.l.b16 %v4828
      %v5128 = vunpack.c.h.b16 %v4828
      %v5129 = vunpack.c.l.b16 %v4829
      %v5130 = vunpack.c.h.b16 %v4829
      %v5131 = vunpack.c.l.b16 %v4830
      %v5132 = vunpack.c.h.b16 %v4830
      %v5133 = vunpack.c.l.b16 %v4831
      %v5134 = vunpack.c.h.b16 %v4831
      %v5135 = vunpack.c.l.b16 %v4832
      %v5136 = vunpack.c.h.b16 %v4832
      %v5137 = vunpack.c.l.b16 %v4833
      %v5138 = vunpack.c.h.b16 %v4833
      %v5139 = vunpack.c.l.b16 %v4834
      %v5140 = vunpack.c.h.b16 %v4834
      %v5141 = vunpack.c.l.b16 %v4835
      %v5142 = vunpack.c.h.b16 %v4835
      %v5143 = vunpack.c.l.b16 %v4836
      %v5144 = vunpack.c.h.b16 %v4836
      %v5145 = vunpack.c.l.b16 %v4837
      %v5146 = vunpack.c.h.b16 %v4837
      %v5147 = vunpack.c.l.b16 %v4838
      %v5148 = vunpack.c.h.b16 %v4838
      %v5149 = vunpack.c.l.b16 %v4839
      %v5150 = vunpack.c.h.b16 %v4839
      %v5151 = vunpack.c.l.b16 %v4840
      %v5152 = vunpack.c.h.b16 %v4840
      %v5153 = vunpack.c.l.b16 %v4841
      %v5154 = vunpack.c.h.b16 %v4841
      %v5155 = vunpack.c.l.b16 %v4842
      %v5156 = vunpack.c.h.b16 %v4842
      %v5157 = vunpack.c.l.b16 %v4843
      %v5158 = vunpack.c.h.b16 %v4843
      %v5159 = vunpack.c.l.b16 %v4844
      %v5160 = vunpack.c.h.b16 %v4844
      %v5161 = vunpack.c.l.b16 %v4845
      %v5162 = vunpack.c.h.b16 %v4845
      %v5163 = vunpack.c.l.b16 %v4846
      %v5164 = vunpack.c.h.b16 %v4846
      %v5165 = vunpack.c.l.b16 %v4847
      %v5166 = vunpack.c.h.b16 %v4847
      %v5167 = vunpack.c.l.b16 %v4848
      %v5168 = vunpack.c.h.b16 %v4848
      %v5169 = vunpack.c.l.b16 %v4849
      %v5170 = vunpack.c.h.b16 %v4849
      %v5171 = vunpack.c.l.b16 %v4850
      %v5172 = vunpack.c.h.b16 %v4850
      %v5173 = vunpack.c.l.b16 %v4851
      %v5174 = vunpack.c.h.b16 %v4851
      %v5175 = vunpack.c.l.b16 %v4852
      %v5176 = vunpack.c.h.b16 %v4852
      %v5177 = vunpack.c.l.b16 %v4853
      %v5178 = vunpack.c.h.b16 %v4853
      %v5179 = vunpack.c.l.b16 %v4854
      %v5180 = vunpack.c.h.b16 %v4854
      %v5181 = vunpack.c.l.b16 %v4855
      %v5182 = vunpack.c.h.b16 %v4855
      %v5183 = vunpack.c.l.b16 %v4856
      %v5184 = vunpack.c.h.b16 %v4856
      %v5185 = vunpack.c.l.b16 %v4857
      %v5186 = vunpack.c.h.b16 %v4857
      %v5187 = vunpack.c.l.b16 %v4858
      %v5188 = vunpack.c.h.b16 %v4858
      %v5189 = vunpack.c.l.b16 %v4859
      %v5190 = vunpack.c.h.b16 %v4859
      %v5191 = vunpack.c.l.b16 %v4860
      %v5192 = vunpack.c.h.b16 %v4860
      %v5193 = vunpack.c.l.b16 %v4861
      %v5194 = vunpack.c.h.b16 %v4861
      %v5195 = vunpack.c.l.b16 %v4862
      %v5196 = vunpack.c.h.b16 %v4862
      %v5197 = vunpack.c.l.b16 %v4863
      %v5198 = vunpack.c.h.b16 %v4863
      %v5199 = vunpack.c.l.b16 %v4864
      %v5200 = vunpack.c.h.b16 %v4864
      %v5201 = vunpack.c.l.b16 %v4865
      %v5202 = vunpack.c.h.b16 %v4865
      %v5203 = vunpack.c.l.b16 %v4866
      %v5204 = vunpack.c.h.b16 %v4866
      %v5205 = vunpack.c.l.b16 %v4867
      %v5206 = vunpack.c.h.b16 %v4867
      %v5207 = vunpack.c.l.b16 %v4868
      %v5208 = vunpack.c.h.b16 %v4868
      %v5209 = vunpack.c.l.b16 %v4869
      %v5210 = vunpack.c.h.b16 %v4869
      %v5211 = vunpack.c.l.b16 %v4870
      %v5212 = vunpack.c.h.b16 %v4870
      %v5213 = vunpack.c.l.b16 %v4871
      %v5214 = vunpack.c.h.b16 %v4871
      %v5215 = vunpack.c.l.b16 %v4872
      %v5216 = vunpack.c.h.b16 %v4872
      %v5217 = vunpack.c.l.b16 %v4873
      %v5218 = vunpack.c.h.b16 %v4873
      %v5219 = vunpack.c.l.b16 %v4874
      %v5220 = vunpack.c.h.b16 %v4874
      %v5221 = vunpack.c.l.b16 %v4875
      %v5222 = vunpack.c.h.b16 %v4875
      %v5223 = vunpack.c.l.b16 %v4876
      %v5224 = vunpack.c.h.b16 %v4876
      %v5225 = vunpack.c.l.b16 %v4877
      %v5226 = vunpack.c.h.b16 %v4877
      %v5227 = vunpack.c.l.b16 %v4878
      %v5228 = vunpack.c.h.b16 %v4878
      %v5229 = vunpack.c.l.b16 %v4879
      %v5230 = vunpack.c.h.b16 %v4879
      %v5231 = vunpack.c.l.b16 %v4880
      %v5232 = vunpack.c.h.b16 %v4880
      %v5233 = vunpack.c.l.b16 %v4881
      %v5234 = vunpack.c.h.b16 %v4881
      %v5235 = vunpack.c.l.b16 %v4882
      %v5236 = vunpack.c.h.b16 %v4882
      %v5237 = vunpack.c.l.b16 %v4883
      %v5238 = vunpack.c.h.b16 %v4883
      %v5239 = vunpack.c.l.b16 %v4884
      %v5240 = vunpack.c.h.b16 %v4884
      %v5241 = vunpack.c.l.b16 %v4885
      %v5242 = vunpack.c.h.b16 %v4885
      %v5243 = vunpack.c.l.b16 %v4886
      %v5244 = vunpack.c.h.b16 %v4886
      %v5245 = vunpack.c.l.b16 %v4887
      %v5246 = vunpack.c.h.b16 %v4887
      %v5247 = vunpack.c.l.b16 %v4888
      %v5248 = vunpack.c.h.b16 %v4888
      %v5249 = vunpack.c.l.b16 %v4889
      %v5250 = vunpack.c.h.b16 %v4889
      %v5251 = vunpack.c.l.b16 %v4890
      %v5252 = vunpack.c.h.b16 %v4890
      %v5253 = vunpack.c.l.b16 %v4891
      %v5254 = vunpack.c.h.b16 %v4891
      %v5255 = vunpack.c.l.b16 %v4892
      %v5256 = vunpack.c.h.b16 %v4892
      %v5257 = vunpack.c.l.b16 %v4893
      %v5258 = vunpack.c.h.b16 %v4893
      %v5259 = vunpack.c.l.b16 %v4894
      %v5260 = vunpack.c.h.b16 %v4894
      %v5261 = vunpack.c.l.b16 %v4895
      %v5262 = vunpack.c.h.b16 %v4895
      %v5263 = vunpack.c.l.b16 %v4896
      %v5264 = vunpack.c.h.b16 %v4896
      %v5265 = vunpack.c.l.b16 %v4897
      %v5266 = vunpack.c.h.b16 %v4897
      %v5267 = vunpack.c.l.b16 %v4898
      %v5268 = vunpack.c.h.b16 %v4898
      %v5269 = vunpack.c.l.b16 %v4899
      %v5270 = vunpack.c.h.b16 %v4899
      %v5271 = vunpack.c.l.b16 %v4900
      %v5272 = vunpack.c.h.b16 %v4900
      %v5273 = vunpack.c.l.b16 %v4901
      %v5274 = vunpack.c.h.b16 %v4901
      %v5275 = vunpack.c.l.b16 %v4902
      %v5276 = vunpack.c.h.b16 %v4902
      %v5277 = vunpack.c.l.b16 %v4903
      %v5278 = vunpack.c.h.b16 %v4903
      %v5279 = vunpack.c.l.b16 %v4904
      %v5280 = vunpack.c.h.b16 %v4904
      %v5281 = vunpack.c.l.b16 %v4905
      %v5282 = vunpack.c.h.b16 %v4905
      %v5283 = vunpack.c.l.b16 %v4906
      %v5284 = vunpack.c.h.b16 %v4906
      %v5285 = vunpack.c.l.b16 %v4907
      %v5286 = vunpack.c.h.b16 %v4907
      %v5287 = vunpack.c.l.b16 %v4908
      %v5288 = vunpack.c.h.b16 %v4908
      %v5289 = vunpack.c.l.b16 %v4909
      %v5290 = vunpack.c.h.b16 %v4909
      %v5291 = vunpack.c.l.b16 %v4910
      %v5292 = vunpack.c.h.b16 %v4910
      %v5293 = vunpack.c.l.b16 %v4911
      %v5294 = vunpack.c.h.b16 %v4911
      %v5295 = vunpack.c.l.b16 %v4912
      %v5296 = vunpack.c.h.b16 %v4912
      %v5297 = vunpack.c.l.b16 %v4913
      %v5298 = vunpack.c.h.b16 %v4913
      %v5299 = vunpack.c.l.b16 %v4914
      %v5300 = vunpack.c.h.b16 %v4914
      %v5301 = vunpack.c.l.b16 %v4915
      %v5302 = vunpack.c.h.b16 %v4915
      %v5303 = vunpack.c.l.b16 %v4916
      %v5304 = vunpack.c.h.b16 %v4916
      %v5305 = vunpack.c.l.b16 %v4917
      %v5306 = vunpack.c.h.b16 %v4917
      %v5307 = vunpack.c.l.b16 %v4918
      %v5308 = vunpack.c.h.b16 %v4918
      %v5309 = vunpack.c.l.b16 %v4919
      %v5310 = vunpack.c.h.b16 %v4919
      %v5311 = vunpack.c.l.b16 %v4920
      %v5312 = vunpack.c.h.b16 %v4920
      %v5313 = vunpack.c.l.b16 %v4921
      %v5314 = vunpack.c.h.b16 %v4921
      %v5315 = vunpack.c.l.b16 %v4922
      %v5316 = vunpack.c.h.b16 %v4922
      %v5317 = vunpack.c.l.b16 %v4923
      %v5318 = vunpack.c.h.b16 %v4923
      %v5319 = vunpack.c.l.b16 %v4924
      %v5320 = vunpack.c.h.b16 %v4924
      %v5321 = vunpack.c.l.b16 %v4925
      %v5322 = vunpack.c.h.b16 %v4925
      %v5323 = vunpack.c.l.b16 %v4926
      %v5324 = vunpack.c.h.b16 %v4926
      %v5325 = vunpack.c.l.b16 %v4927
      %v5326 = vunpack.c.h.b16 %v4927
      %v5327 = vunpack.c.l.b16 %v4928
      %v5328 = vunpack.c.h.b16 %v4928
      %v5329 = vunpack.c.l.b16 %v4929
      %v5330 = vunpack.c.h.b16 %v4929
      %v5331 = vunpack.c.l.b16 %v4930
      %v5332 = vunpack.c.h.b16 %v4930
      %v5333 = vunpack.c.l.b16 %v4931
      %v5334 = vunpack.c.h.b16 %v4931
      %v5335 = vunpack.c.l.b16 %v4932
      %v5336 = vunpack.c.h.b16 %v4932
      %v5337 = vunpack.c.l.b16 %v4933
      %v5338 = vunpack.c.h.b16 %v4933
      %v5339 = vunpack.c.l.b16 %v4934
      %v5340 = vunpack.c.h.b16 %v4934
      %v5341 = vunpack.c.l.b16 %v4935
      %v5342 = vunpack.c.h.b16 %v4935
      %v5343 = vunpack.c.l.b16 %v4936
      %v5344 = vunpack.c.h.b16 %v4936
      %v5345 = vunpack.c.l.b16 %v4937
      %v5346 = vunpack.c.h.b16 %v4937
      %v5347 = vunpack.c.l.b16 %v4938
      %v5348 = vunpack.c.h.b16 %v4938
      %v5349 = vunpack.c.l.b16 %v4939
      %v5350 = vunpack.c.h.b16 %v4939
      %v5351 = vunpack.c.l.b16 %v4940
      %v5352 = vunpack.c.h.b16 %v4940
      %v5353 = vunpack.c.l.b16 %v4941
      %v5354 = vunpack.c.h.b16 %v4941
      %v5355 = vunpack.c.l.b16 %v4942
      %v5356 = vunpack.c.h.b16 %v4942
      %v5357 = vunpack.c.l.b16 %v4943
      %v5358 = vunpack.c.h.b16 %v4943
      %v5359 = vunpack.c.l.b16 %v4944
      %v5360 = vunpack.c.h.b16 %v4944
      %v5361 = vunpack.c.l.b16 %v4945
      %v5362 = vunpack.c.h.b16 %v4945
      %v5363 = vunpack.c.l.b16 %v4946
      %v5364 = vunpack.c.h.b16 %v4946
      %v5365 = vunpack.c.l.b16 %v4947
      %v5366 = vunpack.c.h.b16 %v4947
      %v5367 = vunpack.c.l.b16 %v4948
      %v5368 = vunpack.c.h.b16 %v4948
      %v5369 = vunpack.c.l.b16 %v4949
      %v5370 = vunpack.c.h.b16 %v4949
      %v5371 = vunpack.c.l.b16 %v4950
      %v5372 = vunpack.c.h.b16 %v4950
      %v5373 = vunpack.c.l.b16 %v4951
      %v5374 = vunpack.c.h.b16 %v4951
      %v5375 = vunpack.c.l.b16 %v4952
      %v5376 = vunpack.c.h.b16 %v4952
      %v5377 = vunpack.c.l.b16 %v4953
      %v5378 = vunpack.c.h.b16 %v4953
      %v5379 = vunpack.c.l.b16 %v4954
      %v5380 = vunpack.c.h.b16 %v4954
      %v5381 = vpack.c.b16 %v5133, %v5125
      %v5382 = vpack.c.b16 %v5134, %v5126
      %v5383 = vpack.c.b16 %v5135, %v5127
      %v5384 = vpack.c.b16 %v5136, %v5128
      %v5385 = vpack.c.b16 %v5137, %v5129
      %v5386 = vpack.c.b16 %v5138, %v5130
      %v5387 = vpack.c.b16 %v5139, %v5131
      %v5388 = vpack.c.b16 %v5140, %v5132
      %v5389 = vpack.c.b16 %v5149, %v5141
      %v5390 = vpack.c.b16 %v5150, %v5142
      %v5391 = vpack.c.b16 %v5151, %v5143
      %v5392 = vpack.c.b16 %v5152, %v5144
      %v5393 = vpack.c.b16 %v5153, %v5145
      %v5394 = vpack.c.b16 %v5154, %v5146
      %v5395 = vpack.c.b16 %v5155, %v5147
      %v5396 = vpack.c.b16 %v5156, %v5148
      %v5397 = vpack.c.b16 %v5165, %v5157
      %v5398 = vpack.c.b16 %v5166, %v5158
      %v5399 = vpack.c.b16 %v5167, %v5159
      %v5400 = vpack.c.b16 %v5168, %v5160
      %v5401 = vpack.c.b16 %v5169, %v5161
      %v5402 = vpack.c.b16 %v5170, %v5162
      %v5403 = vpack.c.b16 %v5171, %v5163
      %v5404 = vpack.c.b16 %v5172, %v5164
      %v5405 = vpack.c.b16 %v5181, %v5173
      %v5406 = vpack.c.b16 %v5182, %v5174
      %v5407 = vpack.c.b16 %v5183, %v5175
      %v5408 = vpack.c.b16 %v5184, %v5176
      %v5409 = vpack.c.b16 %v5185, %v5177
      %v5410 = vpack.c.b16 %v5186, %v5178
      %v5411 = vpack.c.b16 %v5187, %v5179
      %v5412 = vpack.c.b16 %v5188, %v5180
      %v5413 = vpack.c.b16 %v5197, %v5189
      %v5414 = vpack.c.b16 %v5198, %v5190
      %v5415 = vpack.c.b16 %v5199, %v5191
      %v5416 = vpack.c.b16 %v5200, %v5192
      %v5417 = vpack.c.b16 %v5201, %v5193
      %v5418 = vpack.c.b16 %v5202, %v5194
      %v5419 = vpack.c.b16 %v5203, %v5195
      %v5420 = vpack.c.b16 %v5204, %v5196
      %v5421 = vpack.c.b16 %v5213, %v5205
      %v5422 = vpack.c.b16 %v5214, %v5206
      %v5423 = vpack.c.b16 %v5215, %v5207
      %v5424 = vpack.c.b16 %v5216, %v5208
      %v5425 = vpack.c.b16 %v5217, %v5209
      %v5426 = vpack.c.b16 %v5218, %v5210
      %v5427 = vpack.c.b16 %v5219, %v5211
      %v5428 = vpack.c.b16 %v5220, %v5212
      %v5429 = vpack.c.b16 %v5229, %v5221
      %v5430 = vpack.c.b16 %v5230, %v5222
      %v5431 = vpack.c.b16 %v5231, %v5223
      %v5432 = vpack.c.b16 %v5232, %v5224
      %v5433 = vpack.c.b16 %v5233, %v5225
      %v5434 = vpack.c.b16 %v5234, %v5226
      %v5435 = vpack.c.b16 %v5235, %v5227
      %v5436 = vpack.c.b16 %v5236, %v5228
      %v5437 = vpack.c.b16 %v5245, %v5237
      %v5438 = vpack.c.b16 %v5246, %v5238
      %v5439 = vpack.c.b16 %v5247, %v5239
      %v5440 = vpack.c.b16 %v5248, %v5240
      %v5441 = vpack.c.b16 %v5249, %v5241
      %v5442 = vpack.c.b16 %v5250, %v5242
      %v5443 = vpack.c.b16 %v5251, %v5243
      %v5444 = vpack.c.b16 %v5252, %v5244
      %v5445 = vpack.c.b16 %v5261, %v5253
      %v5446 = vpack.c.b16 %v5262, %v5254
      %v5447 = vpack.c.b16 %v5263, %v5255
      %v5448 = vpack.c.b16 %v5264, %v5256
      %v5449 = vpack.c.b16 %v5265, %v5257
      %v5450 = vpack.c.b16 %v5266, %v5258
      %v5451 = vpack.c.b16 %v5267, %v5259
      %v5452 = vpack.c.b16 %v5268, %v5260
      %v5453 = vpack.c.b16 %v5277, %v5269
      %v5454 = vpack.c.b16 %v5278, %v5270
      %v5455 = vpack.c.b16 %v5279, %v5271
      %v5456 = vpack.c.b16 %v5280, %v5272
      %v5457 = vpack.c.b16 %v5281, %v5273
      %v5458 = vpack.c.b16 %v5282, %v5274
      %v5459 = vpack.c.b16 %v5283, %v5275
      %v5460 = vpack.c.b16 %v5284, %v5276
      %v5461 = vpack.c.b16 %v5293, %v5285
      %v5462 = vpack.c.b16 %v5294, %v5286
      %v5463 = vpack.c.b16 %v5295, %v5287
      %v5464 = vpack.c.b16 %v5296, %v5288
      %v5465 = vpack.c.b16 %v5297, %v5289
      %v5466 = vpack.c.b16 %v5298, %v5290
      %v5467 = vpack.c.b16 %v5299, %v5291
      %v5468 = vpack.c.b16 %v5300, %v5292
      %v5469 = vpack.c.b16 %v5309, %v5301
      %v5470 = vpack.c.b16 %v5310, %v5302
      %v5471 = vpack.c.b16 %v5311, %v5303
      %v5472 = vpack.c.b16 %v5312, %v5304
      %v5473 = vpack.c.b16 %v5313, %v5305
      %v5474 = vpack.c.b16 %v5314, %v5306
      %v5475 = vpack.c.b16 %v5315, %v5307
      %v5476 = vpack.c.b16 %v5316, %v5308
      %v5477 = vpack.c.b16 %v5325, %v5317
      %v5478 = vpack.c.b16 %v5326, %v5318
      %v5479 = vpack.c.b16 %v5327, %v5319
      %v5480 = vpack.c.b16 %v5328, %v5320
      %v5481 = vpack.c.b16 %v5329, %v5321
      %v5482 = vpack.c.b16 %v5330, %v5322
      %v5483 = vpack.c.b16 %v5331, %v5323
      %v5484 = vpack.c.b16 %v5332, %v5324
      %v5485 = vpack.c.b16 %v5341, %v5333
      %v5486 = vpack.c.b16 %v5342, %v5334
      %v5487 = vpack.c.b16 %v5343, %v5335
      %v5488 = vpack.c.b16 %v5344, %v5336
      %v5489 = vpack.c.b16 %v5345, %v5337
      %v5490 = vpack.c.b16 %v5346, %v5338
      %v5491 = vpack.c.b16 %v5347, %v5339
      %v5492 = vpack.c.b16 %v5348, %v5340
      %v5493 = vpack.c.b16 %v5357, %v5349
      %v5494 = vpack.c.b16 %v5358, %v5350
      %v5495 = vpack.c.b16 %v5359, %v5351
      %v5496 = vpack.c.b16 %v5360, %v5352
      %v5497 = vpack.c.b16 %v5361, %v5353
      %v5498 = vpack.c.b16 %v5362, %v5354
      %v5499 = vpack.c.b16 %v5363, %v5355
      %v5500 = vpack.c.b16 %v5364, %v5356
      %v5501 = vpack.c.b16 %v5373, %v5365
      %v5502 = vpack.c.b16 %v5374, %v5366
      %v5503 = vpack.c.b16 %v5375, %v5367
      %v5504 = vpack.c.b16 %v5376, %v5368
      %v5505 = vpack.c.b16 %v5377, %v5369
      %v5506 = vpack.c.b16 %v5378, %v5370
      %v5507 = vpack.c.b16 %v5379, %v5371
      %v5508 = vpack.c.b16 %v5380, %v5372
      %5637 = vmatprep.subr.bf16.mxu0 %v5438
      %5638 = vmatpush1.bf16.msra.mxu0 %v5437
      %5639 = vmatprep.subr.bf16.mxu0 %v5430
      %5640 = vmatpush1.bf16.msra.mxu0 %v5429
      %5641 = vmatprep.subr.bf16.mxu0 %v5422
      %5642 = vmatpush1.bf16.msra.mxu0 %v5421
      %5643 = vmatprep.subr.bf16.mxu0 %v5414
      %5644 = vmatpush1.bf16.msra.mxu0 %v5413
      %5645 = vmatprep.subr.bf16.mxu0 %v5406
      %5646 = vmatpush1.bf16.msra.mxu0 %v5405
      %5647 = vmatprep.subr.bf16.mxu0 %v5398
      %5648 = vmatpush1.bf16.msra.mxu0 %v5397
      %5649 = vmatprep.subr.bf16.mxu0 %v5390
      %5650 = vmatpush1.bf16.msra.mxu0 %v5389
      %5651 = vmatprep.subr.bf16.mxu0 %v5382
      %5652 = vmatpush1.bf16.msra.mxu0 %v5381
      %5653 = vmatprep.subr.bf16.mxu0 %v5502
      %5654 = vmatpush2.bf16.msra.mxu0 %v5501
      %5655 = vmatprep.subr.bf16.mxu0 %v5494
      %5656 = vmatpush2.bf16.msra.mxu0 %v5493
      %5657 = vmatprep.subr.bf16.mxu0 %v5486
      %5658 = vmatpush2.bf16.msra.mxu0 %v5485
      %5659 = vmatprep.subr.bf16.mxu0 %v5478
      %5660 = vmatpush2.bf16.msra.mxu0 %v5477
      %5661 = vmatprep.subr.bf16.mxu0 %v5470
      %5662 = vmatpush2.bf16.msra.mxu0 %v5469
      %5663 = vmatprep.subr.bf16.mxu0 %v5462
      %5664 = vmatpush2.bf16.msra.mxu0 %v5461
      %5665 = vmatprep.subr.bf16.mxu0 %v5454
      %5666 = vmatpush2.bf16.msra.mxu0 %v5453
      %5667 = vmatprep.subr.bf16.mxu0 %v5446
      %5668 = vmatpush2.bf16.msra.mxu0 %v5445
      %5669 = vmatprep.mubr.bf16.mxu0 %v4826
      %5670 = vmatmul.mubr.bf16.gmra.mxu0 %v4825
      %v5671 = vpop.f32.mrf.mxu0
      %v5672 = vadd.f32 %v4960, %v5671
      %v5673 = vpop.f32.mrf.mxu0
      %v5674 = vadd.f32 %v4964, %v5673
      %v5675 = vpop.f32.mrf.mxu0
      %v5676 = vadd.f32 %v4960, %v5675
      %v5677 = vpop.f32.mrf.mxu0
      %v5678 = vadd.f32 %v4964, %v5677
      %5679 = vdwg.mxu0
      %5680 = vmatprep.subr.bf16.mxu0 %v5440
      %5681 = vmatpush1.bf16.msra.mxu0 %v5439
      %5682 = vmatprep.subr.bf16.mxu0 %v5432
      %5683 = vmatpush1.bf16.msra.mxu0 %v5431
      %5684 = vmatprep.subr.bf16.mxu0 %v5424
      %5685 = vmatpush1.bf16.msra.mxu0 %v5423
      %5686 = vmatprep.subr.bf16.mxu0 %v5416
      %5687 = vmatpush1.bf16.msra.mxu0 %v5415
      %5688 = vmatprep.subr.bf16.mxu0 %v5408
      %5689 = vmatpush1.bf16.msra.mxu0 %v5407
      %5690 = vmatprep.subr.bf16.mxu0 %v5400
      %5691 = vmatpush1.bf16.msra.mxu0 %v5399
      %5692 = vmatprep.subr.bf16.mxu0 %v5392
      %5693 = vmatpush1.bf16.msra.mxu0 %v5391
      %5694 = vmatprep.subr.bf16.mxu0 %v5384
      %5695 = vmatpush1.bf16.msra.mxu0 %v5383
      %5696 = vmatprep.subr.bf16.mxu0 %v5504
      %5697 = vmatpush2.bf16.msra.mxu0 %v5503
      %5698 = vmatprep.subr.bf16.mxu0 %v5496
      %5699 = vmatpush2.bf16.msra.mxu0 %v5495
      %5700 = vmatprep.subr.bf16.mxu0 %v5488
      %5701 = vmatpush2.bf16.msra.mxu0 %v5487
      %5702 = vmatprep.subr.bf16.mxu0 %v5480
      %5703 = vmatpush2.bf16.msra.mxu0 %v5479
      %5704 = vmatprep.subr.bf16.mxu0 %v5472
      %5705 = vmatpush2.bf16.msra.mxu0 %v5471
      %5706 = vmatprep.subr.bf16.mxu0 %v5464
      %5707 = vmatpush2.bf16.msra.mxu0 %v5463
      %5708 = vmatprep.subr.bf16.mxu0 %v5456
      %5709 = vmatpush2.bf16.msra.mxu0 %v5455
      %5710 = vmatprep.subr.bf16.mxu0 %v5448
      %5711 = vmatpush2.bf16.msra.mxu0 %v5447
      %5712 = vmatprep.mubr.bf16.mxu0 %v4826
      %5713 = vmatmul.mubr.bf16.gmra.mxu0 %v4825
      %v5714 = vpop.f32.mrf.mxu0
      %v5715 = vadd.f32 %v4968, %v5714
      %v5716 = vpop.f32.mrf.mxu0
      %v5717 = vadd.f32 %v4972, %v5716
      %v5718 = vpop.f32.mrf.mxu0
      %v5719 = vadd.f32 %v4968, %v5718
      %v5720 = vpop.f32.mrf.mxu0
      %v5721 = vadd.f32 %v4972, %v5720
      %5722 = vdwg.mxu0
      %5723 = vmatprep.subr.bf16.mxu0 %v5442
      %5724 = vmatpush1.bf16.msra.mxu0 %v5441
      %5725 = vmatprep.subr.bf16.mxu0 %v5434
      %5726 = vmatpush1.bf16.msra.mxu0 %v5433
      %5727 = vmatprep.subr.bf16.mxu0 %v5426
      %5728 = vmatpush1.bf16.msra.mxu0 %v5425
      %5729 = vmatprep.subr.bf16.mxu0 %v5418
      %5730 = vmatpush1.bf16.msra.mxu0 %v5417
      %5731 = vmatprep.subr.bf16.mxu0 %v5410
      %5732 = vmatpush1.bf16.msra.mxu0 %v5409
      %5733 = vmatprep.subr.bf16.mxu0 %v5402
      %5734 = vmatpush1.bf16.msra.mxu0 %v5401
      %5735 = vmatprep.subr.bf16.mxu0 %v5394
      %5736 = vmatpush1.bf16.msra.mxu0 %v5393
      %5737 = vmatprep.subr.bf16.mxu0 %v5386
      %5738 = vmatpush1.bf16.msra.mxu0 %v5385
      %5739 = vmatprep.subr.bf16.mxu0 %v5506
      %5740 = vmatpush2.bf16.msra.mxu0 %v5505
      %5741 = vmatprep.subr.bf16.mxu0 %v5498
      %5742 = vmatpush2.bf16.msra.mxu0 %v5497
      %5743 = vmatprep.subr.bf16.mxu0 %v5490
      %5744 = vmatpush2.bf16.msra.mxu0 %v5489
      %5745 = vmatprep.subr.bf16.mxu0 %v5482
      %5746 = vmatpush2.bf16.msra.mxu0 %v5481
      %5747 = vmatprep.subr.bf16.mxu0 %v5474
      %5748 = vmatpush2.bf16.msra.mxu0 %v5473
      %5749 = vmatprep.subr.bf16.mxu0 %v5466
      %5750 = vmatpush2.bf16.msra.mxu0 %v5465
      %5751 = vmatprep.subr.bf16.mxu0 %v5458
      %5752 = vmatpush2.bf16.msra.mxu0 %v5457
      %5753 = vmatprep.subr.bf16.mxu0 %v5450
      %5754 = vmatpush2.bf16.msra.mxu0 %v5449
      %5755 = vmatprep.mubr.bf16.mxu0 %v4826
      %5756 = vmatmul.mubr.bf16.gmra.mxu0 %v4825
      %v5757 = vpop.f32.mrf.mxu0
      %v5758 = vadd.f32 %v4976, %v5757
      %v5759 = vpop.f32.mrf.mxu0
      %v5760 = vadd.f32 %v4980, %v5759
      %v5761 = vpop.f32.mrf.mxu0
      %v5762 = vadd.f32 %v4976, %v5761
      %v5763 = vpop.f32.mrf.mxu0
      %v5764 = vadd.f32 %v4980, %v5763
      %5765 = vdwg.mxu0
      %5766 = vmatprep.subr.bf16.mxu0 %v5444
      %5767 = vmatpush1.bf16.msra.mxu0 %v5443
      %5768 = vmatprep.subr.bf16.mxu0 %v5436
      %5769 = vmatpush1.bf16.msra.mxu0 %v5435
      %5770 = vmatprep.subr.bf16.mxu0 %v5428
      %5771 = vmatpush1.bf16.msra.mxu0 %v5427
      %5772 = vmatprep.subr.bf16.mxu0 %v5420
      %5773 = vmatpush1.bf16.msra.mxu0 %v5419
      %5774 = vmatprep.subr.bf16.mxu0 %v5412
      %5775 = vmatpush1.bf16.msra.mxu0 %v5411
      %5776 = vmatprep.subr.bf16.mxu0 %v5404
      %5777 = vmatpush1.bf16.msra.mxu0 %v5403
      %5778 = vmatprep.subr.bf16.mxu0 %v5396
      %5779 = vmatpush1.bf16.msra.mxu0 %v5395
      %5780 = vmatprep.subr.bf16.mxu0 %v5388
      %5781 = vmatpush1.bf16.msra.mxu0 %v5387
      %5782 = vmatprep.subr.bf16.mxu0 %v5508
      %5783 = vmatpush2.bf16.msra.mxu0 %v5507
      %5784 = vmatprep.subr.bf16.mxu0 %v5500
      %5785 = vmatpush2.bf16.msra.mxu0 %v5499
      %5786 = vmatprep.subr.bf16.mxu0 %v5492
      %5787 = vmatpush2.bf16.msra.mxu0 %v5491
      %5788 = vmatprep.subr.bf16.mxu0 %v5484
      %5789 = vmatpush2.bf16.msra.mxu0 %v5483
      %5790 = vmatprep.subr.bf16.mxu0 %v5476
      %5791 = vmatpush2.bf16.msra.mxu0 %v5475
      %5792 = vmatprep.subr.bf16.mxu0 %v5468
      %5793 = vmatpush2.bf16.msra.mxu0 %v5467
      %5794 = vmatprep.subr.bf16.mxu0 %v5460
      %5795 = vmatpush2.bf16.msra.mxu0 %v5459
      %5796 = vmatprep.subr.bf16.mxu0 %v5452
      %5797 = vmatpush2.bf16.msra.mxu0 %v5451
      %5798 = vmatprep.mubr.bf16.mxu0 %v4826
      %5799 = vmatmul.mubr.bf16.gmra.mxu0 %v4825
      %v5800 = vpop.f32.mrf.mxu0
      %v5801 = vadd.f32 %v4984, %v5800
      %v5802 = vpop.f32.mrf.mxu0
      %v5803 = vadd.f32 %v4988, %v5802
      %v5804 = vpop.f32.mrf.mxu0
      %v5805 = vadd.f32 %v4984, %v5804
      %v5806 = vpop.f32.mrf.mxu0
      %v5807 = vadd.f32 %v4988, %v5806
      %5808 = vdwg.mxu0
      %v5809 = vmax.f32 %v5672, 0.0
      %v5810 = vmax.f32 %v5674, 0.0
      %v5811 = vmax.f32 %v5715, 0.0
      %v5812 = vmax.f32 %v5717, 0.0
      %v5813 = vmax.f32 %v5758, 0.0
      %v5814 = vmax.f32 %v5760, 0.0
      %v5815 = vmax.f32 %v5801, 0.0
      %v5816 = vmax.f32 %v5803, 0.0
      %v5817 = vmax.f32 %v5676, 0.0
      %v5818 = vmax.f32 %v5678, 0.0
      %v5819 = vmax.f32 %v5719, 0.0
      %v5820 = vmax.f32 %v5721, 0.0
      %v5821 = vmax.f32 %v5762, 0.0
      %v5822 = vmax.f32 %v5764, 0.0
      %v5823 = vmax.f32 %v5805, 0.0
      %v5824 = vmax.f32 %v5807, 0.0
      %v5825 = vpack.c.bf16 %v5817, %v5809
      %v5826 = vpack.c.bf16 %v5818, %v5810
      %v5827 = vpack.c.bf16 %v5819, %v5811
      %v5828 = vpack.c.bf16 %v5820, %v5812
      %v5829 = vpack.c.bf16 %v5821, %v5813
      %v5830 = vpack.c.bf16 %v5822, %v5814
      %v5831 = vpack.c.bf16 %v5823, %v5815
      %v5832 = vpack.c.bf16 %v5824, %v5816
      %v5833 = vld [vmem:[%s22] sm:$0xff]
      %v5834 = vld [vmem:[%s22 + $0x8] sm:$0xff]
      %v5835 = vld [vmem:[%s22 + $0x10] sm:$0xff]
      %v5836 = vld [vmem:[%s22 + $0x18] sm:$0xff]
      %v5837 = vld [vmem:[%s22 + $0x20] sm:$0xff]
      %v5838 = vld [vmem:[%s22 + $0x28] sm:$0xff]
      %v5839 = vld [vmem:[%s22 + $0x30] sm:$0xff]
      %v5840 = vld [vmem:[%s22 + $0x38] sm:$0xff]
      %v5841 = vld [vmem:[%s22 + $0x40] sm:$0xff]
      %v5842 = vld [vmem:[%s22 + $0x48] sm:$0xff]
      %v5843 = vld [vmem:[%s22 + $0x50] sm:$0xff]
      %v5844 = vld [vmem:[%s22 + $0x58] sm:$0xff]
      %v5845 = vld [vmem:[%s22 + $0x60] sm:$0xff]
      %v5846 = vld [vmem:[%s22 + $0x68] sm:$0xff]
      %v5847 = vld [vmem:[%s22 + $0x70] sm:$0xff]
      %v5848 = vld [vmem:[%s22 + $0x78] sm:$0xff]
      %v5849 = vld [vmem:[%s22 + $0x80] sm:$0xff]
      %v5850 = vld [vmem:[%s22 + $0x88] sm:$0xff]
      %v5851 = vld [vmem:[%s22 + $0x90] sm:$0xff]
      %v5852 = vld [vmem:[%s22 + $0x98] sm:$0xff]
      %v5853 = vld [vmem:[%s22 + $0xa0] sm:$0xff]
      %v5854 = vld [vmem:[%s22 + $0xa8] sm:$0xff]
      %v5855 = vld [vmem:[%s22 + $0xb0] sm:$0xff]
      %v5856 = vld [vmem:[%s22 + $0xb8] sm:$0xff]
      %v5857 = vld [vmem:[%s22 + $0xc0] sm:$0xff]
      %v5858 = vld [vmem:[%s22 + $0xc8] sm:$0xff]
      %v5859 = vld [vmem:[%s22 + $0xd0] sm:$0xff]
      %v5860 = vld [vmem:[%s22 + $0xd8] sm:$0xff]
      %v5861 = vld [vmem:[%s22 + $0xe0] sm:$0xff]
      %v5862 = vld [vmem:[%s22 + $0xe8] sm:$0xff]
      %v5863 = vld [vmem:[%s22 + $0xf0] sm:$0xff]
      %v5864 = vld [vmem:[%s22 + $0xf8] sm:$0xff]
      %v5865 = vld [vmem:[%s22 + $0x100] sm:$0xff]
      %v5866 = vld [vmem:[%s22 + $0x108] sm:$0xff]
      %v5867 = vld [vmem:[%s22 + $0x110] sm:$0xff]
      %v5868 = vld [vmem:[%s22 + $0x118] sm:$0xff]
      %v5869 = vld [vmem:[%s22 + $0x120] sm:$0xff]
      %v5870 = vld [vmem:[%s22 + $0x128] sm:$0xff]
      %v5871 = vld [vmem:[%s22 + $0x130] sm:$0xff]
      %v5872 = vld [vmem:[%s22 + $0x138] sm:$0xff]
      %v5873 = vld [vmem:[%s22 + $0x140] sm:$0xff]
      %v5874 = vld [vmem:[%s22 + $0x148] sm:$0xff]
      %v5875 = vld [vmem:[%s22 + $0x150] sm:$0xff]
      %v5876 = vld [vmem:[%s22 + $0x158] sm:$0xff]
      %v5877 = vld [vmem:[%s22 + $0x160] sm:$0xff]
      %v5878 = vld [vmem:[%s22 + $0x168] sm:$0xff]
      %v5879 = vld [vmem:[%s22 + $0x170] sm:$0xff]
      %v5880 = vld [vmem:[%s22 + $0x178] sm:$0xff]
      %v5881 = vld [vmem:[%s22 + $0x180] sm:$0xff]
      %v5882 = vld [vmem:[%s22 + $0x188] sm:$0xff]
      %v5883 = vld [vmem:[%s22 + $0x190] sm:$0xff]
      %v5884 = vld [vmem:[%s22 + $0x198] sm:$0xff]
      %v5885 = vld [vmem:[%s22 + $0x1a0] sm:$0xff]
      %v5886 = vld [vmem:[%s22 + $0x1a8] sm:$0xff]
      %v5887 = vld [vmem:[%s22 + $0x1b0] sm:$0xff]
      %v5888 = vld [vmem:[%s22 + $0x1b8] sm:$0xff]
      %v5889 = vld [vmem:[%s22 + $0x1c0] sm:$0xff]
      %v5890 = vld [vmem:[%s22 + $0x1c8] sm:$0xff]
      %v5891 = vld [vmem:[%s22 + $0x1d0] sm:$0xff]
      %v5892 = vld [vmem:[%s22 + $0x1d8] sm:$0xff]
      %v5893 = vld [vmem:[%s22 + $0x1e0] sm:$0xff]
      %v5894 = vld [vmem:[%s22 + $0x1e8] sm:$0xff]
      %v5895 = vld [vmem:[%s22 + $0x1f0] sm:$0xff]
      %v5896 = vld [vmem:[%s22 + $0x1f8] sm:$0xff]
      %v5897 = vld [vmem:[%s22 + $0x200] sm:$0xff]
      %v5898 = vld [vmem:[%s22 + $0x208] sm:$0xff]
      %v5899 = vld [vmem:[%s22 + $0x210] sm:$0xff]
      %v5900 = vld [vmem:[%s22 + $0x218] sm:$0xff]
      %v5901 = vld [vmem:[%s22 + $0x220] sm:$0xff]
      %v5902 = vld [vmem:[%s22 + $0x228] sm:$0xff]
      %v5903 = vld [vmem:[%s22 + $0x230] sm:$0xff]
      %v5904 = vld [vmem:[%s22 + $0x238] sm:$0xff]
      %v5905 = vld [vmem:[%s22 + $0x240] sm:$0xff]
      %v5906 = vld [vmem:[%s22 + $0x248] sm:$0xff]
      %v5907 = vld [vmem:[%s22 + $0x250] sm:$0xff]
      %v5908 = vld [vmem:[%s22 + $0x258] sm:$0xff]
      %v5909 = vld [vmem:[%s22 + $0x260] sm:$0xff]
      %v5910 = vld [vmem:[%s22 + $0x268] sm:$0xff]
      %v5911 = vld [vmem:[%s22 + $0x270] sm:$0xff]
      %v5912 = vld [vmem:[%s22 + $0x278] sm:$0xff]
      %v5913 = vld [vmem:[%s22 + $0x280] sm:$0xff]
      %v5914 = vld [vmem:[%s22 + $0x288] sm:$0xff]
      %v5915 = vld [vmem:[%s22 + $0x290] sm:$0xff]
      %v5916 = vld [vmem:[%s22 + $0x298] sm:$0xff]
      %v5917 = vld [vmem:[%s22 + $0x2a0] sm:$0xff]
      %v5918 = vld [vmem:[%s22 + $0x2a8] sm:$0xff]
      %v5919 = vld [vmem:[%s22 + $0x2b0] sm:$0xff]
      %v5920 = vld [vmem:[%s22 + $0x2b8] sm:$0xff]
      %v5921 = vld [vmem:[%s22 + $0x2c0] sm:$0xff]
      %v5922 = vld [vmem:[%s22 + $0x2c8] sm:$0xff]
      %v5923 = vld [vmem:[%s22 + $0x2d0] sm:$0xff]
      %v5924 = vld [vmem:[%s22 + $0x2d8] sm:$0xff]
      %v5925 = vld [vmem:[%s22 + $0x2e0] sm:$0xff]
      %v5926 = vld [vmem:[%s22 + $0x2e8] sm:$0xff]
      %v5927 = vld [vmem:[%s22 + $0x2f0] sm:$0xff]
      %v5928 = vld [vmem:[%s22 + $0x2f8] sm:$0xff]
      %v5929 = vld [vmem:[%s22 + $0x300] sm:$0xff]
      %v5930 = vld [vmem:[%s22 + $0x308] sm:$0xff]
      %v5931 = vld [vmem:[%s22 + $0x310] sm:$0xff]
      %v5932 = vld [vmem:[%s22 + $0x318] sm:$0xff]
      %v5933 = vld [vmem:[%s22 + $0x320] sm:$0xff]
      %v5934 = vld [vmem:[%s22 + $0x328] sm:$0xff]
      %v5935 = vld [vmem:[%s22 + $0x330] sm:$0xff]
      %v5936 = vld [vmem:[%s22 + $0x338] sm:$0xff]
      %v5937 = vld [vmem:[%s22 + $0x340] sm:$0xff]
      %v5938 = vld [vmem:[%s22 + $0x348] sm:$0xff]
      %v5939 = vld [vmem:[%s22 + $0x350] sm:$0xff]
      %v5940 = vld [vmem:[%s22 + $0x358] sm:$0xff]
      %v5941 = vld [vmem:[%s22 + $0x360] sm:$0xff]
      %v5942 = vld [vmem:[%s22 + $0x368] sm:$0xff]
      %v5943 = vld [vmem:[%s22 + $0x370] sm:$0xff]
      %v5944 = vld [vmem:[%s22 + $0x378] sm:$0xff]
      %v5945 = vld [vmem:[%s22 + $0x380] sm:$0xff]
      %v5946 = vld [vmem:[%s22 + $0x388] sm:$0xff]
      %v5947 = vld [vmem:[%s22 + $0x390] sm:$0xff]
      %v5948 = vld [vmem:[%s22 + $0x398] sm:$0xff]
      %v5949 = vld [vmem:[%s22 + $0x3a0] sm:$0xff]
      %v5950 = vld [vmem:[%s22 + $0x3a8] sm:$0xff]
      %v5951 = vld [vmem:[%s22 + $0x3b0] sm:$0xff]
      %v5952 = vld [vmem:[%s22 + $0x3b8] sm:$0xff]
      %v5953 = vld [vmem:[%s22 + $0x3c0] sm:$0xff]
      %v5954 = vld [vmem:[%s22 + $0x3c8] sm:$0xff]
      %v5955 = vld [vmem:[%s22 + $0x3d0] sm:$0xff]
      %v5956 = vld [vmem:[%s22 + $0x3d8] sm:$0xff]
      %v5957 = vld [vmem:[%s22 + $0x3e0] sm:$0xff]
      %v5958 = vld [vmem:[%s22 + $0x3e8] sm:$0xff]
      %v5959 = vld [vmem:[%s22 + $0x3f0] sm:$0xff]
      %v5960 = vld [vmem:[%s22 + $0x3f8] sm:$0xff]
      %v5961 = vld [vmem:[%s23] sm:$0x3]
      %v5963 = vlaneseq
      %v5964 = vshrl.u32 %v5963, 7
      %v5965 = vsub.s32 0, %v5964
      %v5966 = vrot.slane %v5961, %v5965
      %v5967 = vlaneseq
      %v5968 = vshrl.u32 %v5967, 7
      %v5969 = vsub.s32 1, %v5968
      %v5970 = vrot.slane %v5961, %v5969
      %v6101 = vunpack.c.l.b16 %v5833
      %v6102 = vunpack.c.h.b16 %v5833
      %v6103 = vunpack.c.l.b16 %v5834
      %v6104 = vunpack.c.h.b16 %v5834
      %v6105 = vunpack.c.l.b16 %v5835
      %v6106 = vunpack.c.h.b16 %v5835
      %v6107 = vunpack.c.l.b16 %v5836
      %v6108 = vunpack.c.h.b16 %v5836
      %v6109 = vunpack.c.l.b16 %v5837
      %v6110 = vunpack.c.h.b16 %v5837
      %v6111 = vunpack.c.l.b16 %v5838
      %v6112 = vunpack.c.h.b16 %v5838
      %v6113 = vunpack.c.l.b16 %v5839
      %v6114 = vunpack.c.h.b16 %v5839
      %v6115 = vunpack.c.l.b16 %v5840
      %v6116 = vunpack.c.h.b16 %v5840
      %v6117 = vunpack.c.l.b16 %v5841
      %v6118 = vunpack.c.h.b16 %v5841
      %v6119 = vunpack.c.l.b16 %v5842
      %v6120 = vunpack.c.h.b16 %v5842
      %v6121 = vunpack.c.l.b16 %v5843
      %v6122 = vunpack.c.h.b16 %v5843
      %v6123 = vunpack.c.l.b16 %v5844
      %v6124 = vunpack.c.h.b16 %v5844
      %v6125 = vunpack.c.l.b16 %v5845
      %v6126 = vunpack.c.h.b16 %v5845
      %v6127 = vunpack.c.l.b16 %v5846
      %v6128 = vunpack.c.h.b16 %v5846
      %v6129 = vunpack.c.l.b16 %v5847
      %v6130 = vunpack.c.h.b16 %v5847
      %v6131 = vunpack.c.l.b16 %v5848
      %v6132 = vunpack.c.h.b16 %v5848
      %v6133 = vunpack.c.l.b16 %v5849
      %v6134 = vunpack.c.h.b16 %v5849
      %v6135 = vunpack.c.l.b16 %v5850
      %v6136 = vunpack.c.h.b16 %v5850
      %v6137 = vunpack.c.l.b16 %v5851
      %v6138 = vunpack.c.h.b16 %v5851
      %v6139 = vunpack.c.l.b16 %v5852
      %v6140 = vunpack.c.h.b16 %v5852
      %v6141 = vunpack.c.l.b16 %v5853
      %v6142 = vunpack.c.h.b16 %v5853
      %v6143 = vunpack.c.l.b16 %v5854
      %v6144 = vunpack.c.h.b16 %v5854
      %v6145 = vunpack.c.l.b16 %v5855
      %v6146 = vunpack.c.h.b16 %v5855
      %v6147 = vunpack.c.l.b16 %v5856
      %v6148 = vunpack.c.h.b16 %v5856
      %v6149 = vunpack.c.l.b16 %v5857
      %v6150 = vunpack.c.h.b16 %v5857
      %v6151 = vunpack.c.l.b16 %v5858
      %v6152 = vunpack.c.h.b16 %v5858
      %v6153 = vunpack.c.l.b16 %v5859
      %v6154 = vunpack.c.h.b16 %v5859
      %v6155 = vunpack.c.l.b16 %v5860
      %v6156 = vunpack.c.h.b16 %v5860
      %v6157 = vunpack.c.l.b16 %v5861
      %v6158 = vunpack.c.h.b16 %v5861
      %v6159 = vunpack.c.l.b16 %v5862
      %v6160 = vunpack.c.h.b16 %v5862
      %v6161 = vunpack.c.l.b16 %v5863
      %v6162 = vunpack.c.h.b16 %v5863
      %v6163 = vunpack.c.l.b16 %v5864
      %v6164 = vunpack.c.h.b16 %v5864
      %v6165 = vunpack.c.l.b16 %v5865
      %v6166 = vunpack.c.h.b16 %v5865
      %v6167 = vunpack.c.l.b16 %v5866
      %v6168 = vunpack.c.h.b16 %v5866
      %v6169 = vunpack.c.l.b16 %v5867
      %v6170 = vunpack.c.h.b16 %v5867
      %v6171 = vunpack.c.l.b16 %v5868
      %v6172 = vunpack.c.h.b16 %v5868
      %v6173 = vunpack.c.l.b16 %v5869
      %v6174 = vunpack.c.h.b16 %v5869
      %v6175 = vunpack.c.l.b16 %v5870
      %v6176 = vunpack.c.h.b16 %v5870
      %v6177 = vunpack.c.l.b16 %v5871
      %v6178 = vunpack.c.h.b16 %v5871
      %v6179 = vunpack.c.l.b16 %v5872
      %v6180 = vunpack.c.h.b16 %v5872
      %v6181 = vunpack.c.l.b16 %v5873
      %v6182 = vunpack.c.h.b16 %v5873
      %v6183 = vunpack.c.l.b16 %v5874
      %v6184 = vunpack.c.h.b16 %v5874
      %v6185 = vunpack.c.l.b16 %v5875
      %v6186 = vunpack.c.h.b16 %v5875
      %v6187 = vunpack.c.l.b16 %v5876
      %v6188 = vunpack.c.h.b16 %v5876
      %v6189 = vunpack.c.l.b16 %v5877
      %v6190 = vunpack.c.h.b16 %v5877
      %v6191 = vunpack.c.l.b16 %v5878
      %v6192 = vunpack.c.h.b16 %v5878
      %v6193 = vunpack.c.l.b16 %v5879
      %v6194 = vunpack.c.h.b16 %v5879
      %v6195 = vunpack.c.l.b16 %v5880
      %v6196 = vunpack.c.h.b16 %v5880
      %v6197 = vunpack.c.l.b16 %v5881
      %v6198 = vunpack.c.h.b16 %v5881
      %v6199 = vunpack.c.l.b16 %v5882
      %v6200 = vunpack.c.h.b16 %v5882
      %v6201 = vunpack.c.l.b16 %v5883
      %v6202 = vunpack.c.h.b16 %v5883
      %v6203 = vunpack.c.l.b16 %v5884
      %v6204 = vunpack.c.h.b16 %v5884
      %v6205 = vunpack.c.l.b16 %v5885
      %v6206 = vunpack.c.h.b16 %v5885
      %v6207 = vunpack.c.l.b16 %v5886
      %v6208 = vunpack.c.h.b16 %v5886
      %v6209 = vunpack.c.l.b16 %v5887
      %v6210 = vunpack.c.h.b16 %v5887
      %v6211 = vunpack.c.l.b16 %v5888
      %v6212 = vunpack.c.h.b16 %v5888
      %v6213 = vunpack.c.l.b16 %v5889
      %v6214 = vunpack.c.h.b16 %v5889
      %v6215 = vunpack.c.l.b16 %v5890
      %v6216 = vunpack.c.h.b16 %v5890
      %v6217 = vunpack.c.l.b16 %v5891
      %v6218 = vunpack.c.h.b16 %v5891
      %v6219 = vunpack.c.l.b16 %v5892
      %v6220 = vunpack.c.h.b16 %v5892
      %v6221 = vunpack.c.l.b16 %v5893
      %v6222 = vunpack.c.h.b16 %v5893
      %v6223 = vunpack.c.l.b16 %v5894
      %v6224 = vunpack.c.h.b16 %v5894
      %v6225 = vunpack.c.l.b16 %v5895
      %v6226 = vunpack.c.h.b16 %v5895
      %v6227 = vunpack.c.l.b16 %v5896
      %v6228 = vunpack.c.h.b16 %v5896
      %v6229 = vunpack.c.l.b16 %v5897
      %v6230 = vunpack.c.h.b16 %v5897
      %v6231 = vunpack.c.l.b16 %v5898
      %v6232 = vunpack.c.h.b16 %v5898
      %v6233 = vunpack.c.l.b16 %v5899
      %v6234 = vunpack.c.h.b16 %v5899
      %v6235 = vunpack.c.l.b16 %v5900
      %v6236 = vunpack.c.h.b16 %v5900
      %v6237 = vunpack.c.l.b16 %v5901
      %v6238 = vunpack.c.h.b16 %v5901
      %v6239 = vunpack.c.l.b16 %v5902
      %v6240 = vunpack.c.h.b16 %v5902
      %v6241 = vunpack.c.l.b16 %v5903
      %v6242 = vunpack.c.h.b16 %v5903
      %v6243 = vunpack.c.l.b16 %v5904
      %v6244 = vunpack.c.h.b16 %v5904
      %v6245 = vunpack.c.l.b16 %v5905
      %v6246 = vunpack.c.h.b16 %v5905
      %v6247 = vunpack.c.l.b16 %v5906
      %v6248 = vunpack.c.h.b16 %v5906
      %v6249 = vunpack.c.l.b16 %v5907
      %v6250 = vunpack.c.h.b16 %v5907
      %v6251 = vunpack.c.l.b16 %v5908
      %v6252 = vunpack.c.h.b16 %v5908
      %v6253 = vunpack.c.l.b16 %v5909
      %v6254 = vunpack.c.h.b16 %v5909
      %v6255 = vunpack.c.l.b16 %v5910
      %v6256 = vunpack.c.h.b16 %v5910
      %v6257 = vunpack.c.l.b16 %v5911
      %v6258 = vunpack.c.h.b16 %v5911
      %v6259 = vunpack.c.l.b16 %v5912
      %v6260 = vunpack.c.h.b16 %v5912
      %v6261 = vunpack.c.l.b16 %v5913
      %v6262 = vunpack.c.h.b16 %v5913
      %v6263 = vunpack.c.l.b16 %v5914
      %v6264 = vunpack.c.h.b16 %v5914
      %v6265 = vunpack.c.l.b16 %v5915
      %v6266 = vunpack.c.h.b16 %v5915
      %v6267 = vunpack.c.l.b16 %v5916
      %v6268 = vunpack.c.h.b16 %v5916
      %v6269 = vunpack.c.l.b16 %v5917
      %v6270 = vunpack.c.h.b16 %v5917
      %v6271 = vunpack.c.l.b16 %v5918
      %v6272 = vunpack.c.h.b16 %v5918
      %v6273 = vunpack.c.l.b16 %v5919
      %v6274 = vunpack.c.h.b16 %v5919
      %v6275 = vunpack.c.l.b16 %v5920
      %v6276 = vunpack.c.h.b16 %v5920
      %v6277 = vunpack.c.l.b16 %v5921
      %v6278 = vunpack.c.h.b16 %v5921
      %v6279 = vunpack.c.l.b16 %v5922
      %v6280 = vunpack.c.h.b16 %v5922
      %v6281 = vunpack.c.l.b16 %v5923
      %v6282 = vunpack.c.h.b16 %v5923
      %v6283 = vunpack.c.l.b16 %v5924
      %v6284 = vunpack.c.h.b16 %v5924
      %v6285 = vunpack.c.l.b16 %v5925
      %v6286 = vunpack.c.h.b16 %v5925
      %v6287 = vunpack.c.l.b16 %v5926
      %v6288 = vunpack.c.h.b16 %v5926
      %v6289 = vunpack.c.l.b16 %v5927
      %v6290 = vunpack.c.h.b16 %v5927
      %v6291 = vunpack.c.l.b16 %v5928
      %v6292 = vunpack.c.h.b16 %v5928
      %v6293 = vunpack.c.l.b16 %v5929
      %v6294 = vunpack.c.h.b16 %v5929
      %v6295 = vunpack.c.l.b16 %v5930
      %v6296 = vunpack.c.h.b16 %v5930
      %v6297 = vunpack.c.l.b16 %v5931
      %v6298 = vunpack.c.h.b16 %v5931
      %v6299 = vunpack.c.l.b16 %v5932
      %v6300 = vunpack.c.h.b16 %v5932
      %v6301 = vunpack.c.l.b16 %v5933
      %v6302 = vunpack.c.h.b16 %v5933
      %v6303 = vunpack.c.l.b16 %v5934
      %v6304 = vunpack.c.h.b16 %v5934
      %v6305 = vunpack.c.l.b16 %v5935
      %v6306 = vunpack.c.h.b16 %v5935
      %v6307 = vunpack.c.l.b16 %v5936
      %v6308 = vunpack.c.h.b16 %v5936
      %v6309 = vunpack.c.l.b16 %v5937
      %v6310 = vunpack.c.h.b16 %v5937
      %v6311 = vunpack.c.l.b16 %v5938
      %v6312 = vunpack.c.h.b16 %v5938
      %v6313 = vunpack.c.l.b16 %v5939
      %v6314 = vunpack.c.h.b16 %v5939
      %v6315 = vunpack.c.l.b16 %v5940
      %v6316 = vunpack.c.h.b16 %v5940
      %v6317 = vunpack.c.l.b16 %v5941
      %v6318 = vunpack.c.h.b16 %v5941
      %v6319 = vunpack.c.l.b16 %v5942
      %v6320 = vunpack.c.h.b16 %v5942
      %v6321 = vunpack.c.l.b16 %v5943
      %v6322 = vunpack.c.h.b16 %v5943
      %v6323 = vunpack.c.l.b16 %v5944
      %v6324 = vunpack.c.h.b16 %v5944
      %v6325 = vunpack.c.l.b16 %v5945
      %v6326 = vunpack.c.h.b16 %v5945
      %v6327 = vunpack.c.l.b16 %v5946
      %v6328 = vunpack.c.h.b16 %v5946
      %v6329 = vunpack.c.l.b16 %v5947
      %v6330 = vunpack.c.h.b16 %v5947
      %v6331 = vunpack.c.l.b16 %v5948
      %v6332 = vunpack.c.h.b16 %v5948
      %v6333 = vunpack.c.l.b16 %v5949
      %v6334 = vunpack.c.h.b16 %v5949
      %v6335 = vunpack.c.l.b16 %v5950
      %v6336 = vunpack.c.h.b16 %v5950
      %v6337 = vunpack.c.l.b16 %v5951
      %v6338 = vunpack.c.h.b16 %v5951
      %v6339 = vunpack.c.l.b16 %v5952
      %v6340 = vunpack.c.h.b16 %v5952
      %v6341 = vunpack.c.l.b16 %v5953
      %v6342 = vunpack.c.h.b16 %v5953
      %v6343 = vunpack.c.l.b16 %v5954
      %v6344 = vunpack.c.h.b16 %v5954
      %v6345 = vunpack.c.l.b16 %v5955
      %v6346 = vunpack.c.h.b16 %v5955
      %v6347 = vunpack.c.l.b16 %v5956
      %v6348 = vunpack.c.h.b16 %v5956
      %v6349 = vunpack.c.l.b16 %v5957
      %v6350 = vunpack.c.h.b16 %v5957
      %v6351 = vunpack.c.l.b16 %v5958
      %v6352 = vunpack.c.h.b16 %v5958
      %v6353 = vunpack.c.l.b16 %v5959
      %v6354 = vunpack.c.h.b16 %v5959
      %v6355 = vunpack.c.l.b16 %v5960
      %v6356 = vunpack.c.h.b16 %v5960
      %v6357 = vpack.c.b16 %v6103, %v6101
      %v6358 = vpack.c.b16 %v6104, %v6102
      %v6359 = vpack.c.b16 %v6107, %v6105
      %v6360 = vpack.c.b16 %v6108, %v6106
      %v6361 = vpack.c.b16 %v6111, %v6109
      %v6362 = vpack.c.b16 %v6112, %v6110
      %v6363 = vpack.c.b16 %v6115, %v6113
      %v6364 = vpack.c.b16 %v6116, %v6114
      %v6365 = vpack.c.b16 %v6119, %v6117
      %v6366 = vpack.c.b16 %v6120, %v6118
      %v6367 = vpack.c.b16 %v6123, %v6121
      %v6368 = vpack.c.b16 %v6124, %v6122
      %v6369 = vpack.c.b16 %v6127, %v6125
      %v6370 = vpack.c.b16 %v6128, %v6126
      %v6371 = vpack.c.b16 %v6131, %v6129
      %v6372 = vpack.c.b16 %v6132, %v6130
      %v6373 = vpack.c.b16 %v6135, %v6133
      %v6374 = vpack.c.b16 %v6136, %v6134
      %v6375 = vpack.c.b16 %v6139, %v6137
      %v6376 = vpack.c.b16 %v6140, %v6138
      %v6377 = vpack.c.b16 %v6143, %v6141
      %v6378 = vpack.c.b16 %v6144, %v6142
      %v6379 = vpack.c.b16 %v6147, %v6145
      %v6380 = vpack.c.b16 %v6148, %v6146
      %v6381 = vpack.c.b16 %v6151, %v6149
      %v6382 = vpack.c.b16 %v6152, %v6150
      %v6383 = vpack.c.b16 %v6155, %v6153
      %v6384 = vpack.c.b16 %v6156, %v6154
      %v6385 = vpack.c.b16 %v6159, %v6157
      %v6386 = vpack.c.b16 %v6160, %v6158
      %v6387 = vpack.c.b16 %v6163, %v6161
      %v6388 = vpack.c.b16 %v6164, %v6162
      %v6389 = vpack.c.b16 %v6167, %v6165
      %v6390 = vpack.c.b16 %v6168, %v6166
      %v6391 = vpack.c.b16 %v6171, %v6169
      %v6392 = vpack.c.b16 %v6172, %v6170
      %v6393 = vpack.c.b16 %v6175, %v6173
      %v6394 = vpack.c.b16 %v6176, %v6174
      %v6395 = vpack.c.b16 %v6179, %v6177
      %v6396 = vpack.c.b16 %v6180, %v6178
      %v6397 = vpack.c.b16 %v6183, %v6181
      %v6398 = vpack.c.b16 %v6184, %v6182
      %v6399 = vpack.c.b16 %v6187, %v6185
      %v6400 = vpack.c.b16 %v6188, %v6186
      %v6401 = vpack.c.b16 %v6191, %v6189
      %v6402 = vpack.c.b16 %v6192, %v6190
      %v6403 = vpack.c.b16 %v6195, %v6193
      %v6404 = vpack.c.b16 %v6196, %v6194
      %v6405 = vpack.c.b16 %v6199, %v6197
      %v6406 = vpack.c.b16 %v6200, %v6198
      %v6407 = vpack.c.b16 %v6203, %v6201
      %v6408 = vpack.c.b16 %v6204, %v6202
      %v6409 = vpack.c.b16 %v6207, %v6205
      %v6410 = vpack.c.b16 %v6208, %v6206
      %v6411 = vpack.c.b16 %v6211, %v6209
      %v6412 = vpack.c.b16 %v6212, %v6210
      %v6413 = vpack.c.b16 %v6215, %v6213
      %v6414 = vpack.c.b16 %v6216, %v6214
      %v6415 = vpack.c.b16 %v6219, %v6217
      %v6416 = vpack.c.b16 %v6220, %v6218
      %v6417 = vpack.c.b16 %v6223, %v6221
      %v6418 = vpack.c.b16 %v6224, %v6222
      %v6419 = vpack.c.b16 %v6227, %v6225
      %v6420 = vpack.c.b16 %v6228, %v6226
      %v6421 = vpack.c.b16 %v6231, %v6229
      %v6422 = vpack.c.b16 %v6232, %v6230
      %v6423 = vpack.c.b16 %v6235, %v6233
      %v6424 = vpack.c.b16 %v6236, %v6234
      %v6425 = vpack.c.b16 %v6239, %v6237
      %v6426 = vpack.c.b16 %v6240, %v6238
      %v6427 = vpack.c.b16 %v6243, %v6241
      %v6428 = vpack.c.b16 %v6244, %v6242
      %v6429 = vpack.c.b16 %v6247, %v6245
      %v6430 = vpack.c.b16 %v6248, %v6246
      %v6431 = vpack.c.b16 %v6251, %v6249
      %v6432 = vpack.c.b16 %v6252, %v6250
      %v6433 = vpack.c.b16 %v6255, %v6253
      %v6434 = vpack.c.b16 %v6256, %v6254
      %v6435 = vpack.c.b16 %v6259, %v6257
      %v6436 = vpack.c.b16 %v6260, %v6258
      %v6437 = vpack.c.b16 %v6263, %v6261
      %v6438 = vpack.c.b16 %v6264, %v6262
      %v6439 = vpack.c.b16 %v6267, %v6265
      %v6440 = vpack.c.b16 %v6268, %v6266
      %v6441 = vpack.c.b16 %v6271, %v6269
      %v6442 = vpack.c.b16 %v6272, %v6270
      %v6443 = vpack.c.b16 %v6275, %v6273
      %v6444 = vpack.c.b16 %v6276, %v6274
      %v6445 = vpack.c.b16 %v6279, %v6277
      %v6446 = vpack.c.b16 %v6280, %v6278
      %v6447 = vpack.c.b16 %v6283, %v6281
      %v6448 = vpack.c.b16 %v6284, %v6282
      %v6449 = vpack.c.b16 %v6287, %v6285
      %v6450 = vpack.c.b16 %v6288, %v6286
      %v6451 = vpack.c.b16 %v6291, %v6289
      %v6452 = vpack.c.b16 %v6292, %v6290
      %v6453 = vpack.c.b16 %v6295, %v6293
      %v6454 = vpack.c.b16 %v6296, %v6294
      %v6455 = vpack.c.b16 %v6299, %v6297
      %v6456 = vpack.c.b16 %v6300, %v6298
      %v6457 = vpack.c.b16 %v6303, %v6301
      %v6458 = vpack.c.b16 %v6304, %v6302
      %v6459 = vpack.c.b16 %v6307, %v6305
      %v6460 = vpack.c.b16 %v6308, %v6306
      %v6461 = vpack.c.b16 %v6311, %v6309
      %v6462 = vpack.c.b16 %v6312, %v6310
      %v6463 = vpack.c.b16 %v6315, %v6313
      %v6464 = vpack.c.b16 %v6316, %v6314
      %v6465 = vpack.c.b16 %v6319, %v6317
      %v6466 = vpack.c.b16 %v6320, %v6318
      %v6467 = vpack.c.b16 %v6323, %v6321
      %v6468 = vpack.c.b16 %v6324, %v6322
      %v6469 = vpack.c.b16 %v6327, %v6325
      %v6470 = vpack.c.b16 %v6328, %v6326
      %v6471 = vpack.c.b16 %v6331, %v6329
      %v6472 = vpack.c.b16 %v6332, %v6330
      %v6473 = vpack.c.b16 %v6335, %v6333
      %v6474 = vpack.c.b16 %v6336, %v6334
      %v6475 = vpack.c.b16 %v6339, %v6337
      %v6476 = vpack.c.b16 %v6340, %v6338
      %v6477 = vpack.c.b16 %v6343, %v6341
      %v6478 = vpack.c.b16 %v6344, %v6342
      %v6479 = vpack.c.b16 %v6347, %v6345
      %v6480 = vpack.c.b16 %v6348, %v6346
      %v6481 = vpack.c.b16 %v6351, %v6349
      %v6482 = vpack.c.b16 %v6352, %v6350
      %v6483 = vpack.c.b16 %v6355, %v6353
      %v6484 = vpack.c.b16 %v6356, %v6354
      %6613 = vmatprep.subr.bf16.mxu0 %v6372
      %6614 = vmatpush1.bf16.msra.mxu0 %v6371
      %6615 = vmatprep.subr.bf16.mxu0 %v6370
      %6616 = vmatpush1.bf16.msra.mxu0 %v6369
      %6617 = vmatprep.subr.bf16.mxu0 %v6368
      %6618 = vmatpush1.bf16.msra.mxu0 %v6367
      %6619 = vmatprep.subr.bf16.mxu0 %v6366
      %6620 = vmatpush1.bf16.msra.mxu0 %v6365
      %6621 = vmatprep.subr.bf16.mxu0 %v6364
      %6622 = vmatpush1.bf16.msra.mxu0 %v6363
      %6623 = vmatprep.subr.bf16.mxu0 %v6362
      %6624 = vmatpush1.bf16.msra.mxu0 %v6361
      %6625 = vmatprep.subr.bf16.mxu0 %v6360
      %6626 = vmatpush1.bf16.msra.mxu0 %v6359
      %6627 = vmatprep.subr.bf16.mxu0 %v6358
      %6628 = vmatpush1.bf16.msra.mxu0 %v6357
      %6629 = vmatprep.subr.bf16.mxu0 %v6388
      %6630 = vmatpush2.bf16.msra.mxu0 %v6387
      %6631 = vmatprep.subr.bf16.mxu0 %v6386
      %6632 = vmatpush2.bf16.msra.mxu0 %v6385
      %6633 = vmatprep.subr.bf16.mxu0 %v6384
      %6634 = vmatpush2.bf16.msra.mxu0 %v6383
      %6635 = vmatprep.subr.bf16.mxu0 %v6382
      %6636 = vmatpush2.bf16.msra.mxu0 %v6381
      %6637 = vmatprep.subr.bf16.mxu0 %v6380
      %6638 = vmatpush2.bf16.msra.mxu0 %v6379
      %6639 = vmatprep.subr.bf16.mxu0 %v6378
      %6640 = vmatpush2.bf16.msra.mxu0 %v6377
      %6641 = vmatprep.subr.bf16.mxu0 %v6376
      %6642 = vmatpush2.bf16.msra.mxu0 %v6375
      %6643 = vmatprep.subr.bf16.mxu0 %v6374
      %6644 = vmatpush2.bf16.msra.mxu0 %v6373
      %6645 = vmatprep.mubr.bf16.mxu0 %v5826
      %6646 = vmatmul.mubr.bf16.gmra.mxu0 %v5825
      %v6647 = vpop.f32.mrf.mxu0
      %v6648 = vadd.f32 %v5966, %v6647
      %v6649 = vpop.f32.mrf.mxu0
      %v6650 = vadd.f32 %v5970, %v6649
      %v6651 = vpop.f32.mrf.mxu0
      %v6652 = vadd.f32 %v5966, %v6651
      %v6653 = vpop.f32.mrf.mxu0
      %v6654 = vadd.f32 %v5970, %v6653
      %6655 = vdwg.mxu0
      %6656 = vmatprep.subr.bf16.mxu0 %v6404
      %6657 = vmatpush1.bf16.msra.mxu0 %v6403
      %6658 = vmatprep.subr.bf16.mxu0 %v6402
      %6659 = vmatpush1.bf16.msra.mxu0 %v6401
      %6660 = vmatprep.subr.bf16.mxu0 %v6400
      %6661 = vmatpush1.bf16.msra.mxu0 %v6399
      %6662 = vmatprep.subr.bf16.mxu0 %v6398
      %6663 = vmatpush1.bf16.msra.mxu0 %v6397
      %6664 = vmatprep.subr.bf16.mxu0 %v6396
      %6665 = vmatpush1.bf16.msra.mxu0 %v6395
      %6666 = vmatprep.subr.bf16.mxu0 %v6394
      %6667 = vmatpush1.bf16.msra.mxu0 %v6393
      %6668 = vmatprep.subr.bf16.mxu0 %v6392
      %6669 = vmatpush1.bf16.msra.mxu0 %v6391
      %6670 = vmatprep.subr.bf16.mxu0 %v6390
      %6671 = vmatpush1.bf16.msra.mxu0 %v6389
      %6672 = vmatprep.subr.bf16.mxu0 %v6420
      %6673 = vmatpush2.bf16.msra.mxu0 %v6419
      %6674 = vmatprep.subr.bf16.mxu0 %v6418
      %6675 = vmatpush2.bf16.msra.mxu0 %v6417
      %6676 = vmatprep.subr.bf16.mxu0 %v6416
      %6677 = vmatpush2.bf16.msra.mxu0 %v6415
      %6678 = vmatprep.subr.bf16.mxu0 %v6414
      %6679 = vmatpush2.bf16.msra.mxu0 %v6413
      %6680 = vmatprep.subr.bf16.mxu0 %v6412
      %6681 = vmatpush2.bf16.msra.mxu0 %v6411
      %6682 = vmatprep.subr.bf16.mxu0 %v6410
      %6683 = vmatpush2.bf16.msra.mxu0 %v6409
      %6684 = vmatprep.subr.bf16.mxu0 %v6408
      %6685 = vmatpush2.bf16.msra.mxu0 %v6407
      %6686 = vmatprep.subr.bf16.mxu0 %v6406
      %6687 = vmatpush2.bf16.msra.mxu0 %v6405
      %6688 = vmatprep.mubr.bf16.mxu0 %v5828
      %6689 = vmatmul.mubr.bf16.gmra.mxu0 %v5827
      %v6690 = vpop.f32.mrf.mxu0
      %v6691 = vadd.f32 %v6648, %v6690
      %v6692 = vpop.f32.mrf.mxu0
      %v6693 = vadd.f32 %v6650, %v6692
      %v6694 = vpop.f32.mrf.mxu0
      %v6695 = vadd.f32 %v6652, %v6694
      %v6696 = vpop.f32.mrf.mxu0
      %v6697 = vadd.f32 %v6654, %v6696
      %6698 = vdwg.mxu0
      %6699 = vmatprep.subr.bf16.mxu0 %v6436
      %6700 = vmatpush1.bf16.msra.mxu0 %v6435
      %6701 = vmatprep.subr.bf16.mxu0 %v6434
      %6702 = vmatpush1.bf16.msra.mxu0 %v6433
      %6703 = vmatprep.subr.bf16.mxu0 %v6432
      %6704 = vmatpush1.bf16.msra.mxu0 %v6431
      %6705 = vmatprep.subr.bf16.mxu0 %v6430
      %6706 = vmatpush1.bf16.msra.mxu0 %v6429
      %6707 = vmatprep.subr.bf16.mxu0 %v6428
      %6708 = vmatpush1.bf16.msra.mxu0 %v6427
      %6709 = vmatprep.subr.bf16.mxu0 %v6426
      %6710 = vmatpush1.bf16.msra.mxu0 %v6425
      %6711 = vmatprep.subr.bf16.mxu0 %v6424
      %6712 = vmatpush1.bf16.msra.mxu0 %v6423
      %6713 = vmatprep.subr.bf16.mxu0 %v6422
      %6714 = vmatpush1.bf16.msra.mxu0 %v6421
      %6715 = vmatprep.subr.bf16.mxu0 %v6452
      %6716 = vmatpush2.bf16.msra.mxu0 %v6451
      %6717 = vmatprep.subr.bf16.mxu0 %v6450
      %6718 = vmatpush2.bf16.msra.mxu0 %v6449
      %6719 = vmatprep.subr.bf16.mxu0 %v6448
      %6720 = vmatpush2.bf16.msra.mxu0 %v6447
      %6721 = vmatprep.subr.bf16.mxu0 %v6446
      %6722 = vmatpush2.bf16.msra.mxu0 %v6445
      %6723 = vmatprep.subr.bf16.mxu0 %v6444
      %6724 = vmatpush2.bf16.msra.mxu0 %v6443
      %6725 = vmatprep.subr.bf16.mxu0 %v6442
      %6726 = vmatpush2.bf16.msra.mxu0 %v6441
      %6727 = vmatprep.subr.bf16.mxu0 %v6440
      %6728 = vmatpush2.bf16.msra.mxu0 %v6439
      %6729 = vmatprep.subr.bf16.mxu0 %v6438
      %6730 = vmatpush2.bf16.msra.mxu0 %v6437
      %6731 = vmatprep.mubr.bf16.mxu0 %v5830
      %6732 = vmatmul.mubr.bf16.gmra.mxu0 %v5829
      %v6733 = vpop.f32.mrf.mxu0
      %v6734 = vadd.f32 %v6691, %v6733
      %v6735 = vpop.f32.mrf.mxu0
      %v6736 = vadd.f32 %v6693, %v6735
      %v6737 = vpop.f32.mrf.mxu0
      %v6738 = vadd.f32 %v6695, %v6737
      %v6739 = vpop.f32.mrf.mxu0
      %v6740 = vadd.f32 %v6697, %v6739
      %6741 = vdwg.mxu0
      %6742 = vmatprep.subr.bf16.mxu0 %v6468
      %6743 = vmatpush1.bf16.msra.mxu0 %v6467
      %6744 = vmatprep.subr.bf16.mxu0 %v6466
      %6745 = vmatpush1.bf16.msra.mxu0 %v6465
      %6746 = vmatprep.subr.bf16.mxu0 %v6464
      %6747 = vmatpush1.bf16.msra.mxu0 %v6463
      %6748 = vmatprep.subr.bf16.mxu0 %v6462
      %6749 = vmatpush1.bf16.msra.mxu0 %v6461
      %6750 = vmatprep.subr.bf16.mxu0 %v6460
      %6751 = vmatpush1.bf16.msra.mxu0 %v6459
      %6752 = vmatprep.subr.bf16.mxu0 %v6458
      %6753 = vmatpush1.bf16.msra.mxu0 %v6457
      %6754 = vmatprep.subr.bf16.mxu0 %v6456
      %6755 = vmatpush1.bf16.msra.mxu0 %v6455
      %6756 = vmatprep.subr.bf16.mxu0 %v6454
      %6757 = vmatpush1.bf16.msra.mxu0 %v6453
      %6758 = vmatprep.subr.bf16.mxu0 %v6484
      %6759 = vmatpush2.bf16.msra.mxu0 %v6483
      %6760 = vmatprep.subr.bf16.mxu0 %v6482
      %6761 = vmatpush2.bf16.msra.mxu0 %v6481
      %6762 = vmatprep.subr.bf16.mxu0 %v6480
      %6763 = vmatpush2.bf16.msra.mxu0 %v6479
      %6764 = vmatprep.subr.bf16.mxu0 %v6478
      %6765 = vmatpush2.bf16.msra.mxu0 %v6477
      %6766 = vmatprep.subr.bf16.mxu0 %v6476
      %6767 = vmatpush2.bf16.msra.mxu0 %v6475
      %6768 = vmatprep.subr.bf16.mxu0 %v6474
      %6769 = vmatpush2.bf16.msra.mxu0 %v6473
      %6770 = vmatprep.subr.bf16.mxu0 %v6472
      %6771 = vmatpush2.bf16.msra.mxu0 %v6471
      %6772 = vmatprep.subr.bf16.mxu0 %v6470
      %6773 = vmatpush2.bf16.msra.mxu0 %v6469
      %6774 = vmatprep.mubr.bf16.mxu0 %v5832
      %6775 = vmatmul.mubr.bf16.gmra.mxu0 %v5831
      %v6776 = vpop.f32.mrf.mxu0
      %v6777 = vadd.f32 %v6734, %v6776
      %v6778 = vpop.f32.mrf.mxu0
      %v6779 = vadd.f32 %v6736, %v6778
      %v6780 = vpop.f32.mrf.mxu0
      %v6781 = vadd.f32 %v6738, %v6780
      %v6782 = vpop.f32.mrf.mxu0
      %v6783 = vadd.f32 %v6740, %v6782
      %6784 = vdwg.mxu0
      %v6785 = vmax.f32 %v6777, 0.0
      %v6786 = vmax.f32 %v6779, 0.0
      %v6787 = vmax.f32 %v6781, 0.0
      %v6788 = vmax.f32 %v6783, 0.0
      %v6789 = vpack.c.bf16 %v6787, %v6785
      %v6790 = vpack.c.bf16 %v6788, %v6786
      %v6791 = vld [vmem:[%s24] sm:$0xf]
      %v6792 = vld [vmem:[%s24 + $0x4] sm:$0xf]
      %v6793 = vld [vmem:[%s24 + $0x8] sm:$0xf]
      %v6794 = vld [vmem:[%s24 + $0xc] sm:$0xf]
      %v6795 = vld [vmem:[%s24 + $0x10] sm:$0xf]
      %v6796 = vld [vmem:[%s24 + $0x14] sm:$0xf]
      %v6797 = vld [vmem:[%s24 + $0x18] sm:$0xf]
      %v6798 = vld [vmem:[%s24 + $0x1c] sm:$0xf]
      %v6799 = vld [vmem:[%s24 + $0x20] sm:$0xf]
      %v6800 = vld [vmem:[%s24 + $0x24] sm:$0xf]
      %v6801 = vld [vmem:[%s24 + $0x28] sm:$0xf]
      %v6802 = vld [vmem:[%s24 + $0x2c] sm:$0xf]
      %v6803 = vld [vmem:[%s24 + $0x30] sm:$0xf]
      %v6804 = vld [vmem:[%s24 + $0x34] sm:$0xf]
      %v6805 = vld [vmem:[%s24 + $0x38] sm:$0xf]
      %v6806 = vld [vmem:[%s24 + $0x3c] sm:$0xf]
      %v6807 = vld [vmem:[%s24 + $0x40] sm:$0xf]
      %v6808 = vld [vmem:[%s24 + $0x44] sm:$0xf]
      %v6809 = vld [vmem:[%s24 + $0x48] sm:$0xf]
      %v6810 = vld [vmem:[%s24 + $0x4c] sm:$0xf]
      %v6811 = vld [vmem:[%s24 + $0x50] sm:$0xf]
      %v6812 = vld [vmem:[%s24 + $0x54] sm:$0xf]
      %v6813 = vld [vmem:[%s24 + $0x58] sm:$0xf]
      %v6814 = vld [vmem:[%s24 + $0x5c] sm:$0xf]
      %v6815 = vld [vmem:[%s24 + $0x60] sm:$0xf]
      %v6816 = vld [vmem:[%s24 + $0x64] sm:$0xf]
      %v6817 = vld [vmem:[%s24 + $0x68] sm:$0xf]
      %v6818 = vld [vmem:[%s24 + $0x6c] sm:$0xf]
      %v6819 = vld [vmem:[%s24 + $0x70] sm:$0xf]
      %v6820 = vld [vmem:[%s24 + $0x74] sm:$0xf]
      %v6821 = vld [vmem:[%s24 + $0x78] sm:$0xf]
      %v6822 = vld [vmem:[%s24 + $0x7c] sm:$0xf]
      %v6823 = vld [vmem:[#allocation2] sm:$0x1]
      %v6825 = vlaneseq
      %v6826 = vshrl.u32 %v6825, 7
      %v6827 = vsub.s32 0, %v6826
      %v6828 = vrot.slane %v6823, %v6827
      %v6862 = vunpack.c.l.b16 %v6791
      %v6863 = vunpack.c.l.b16 %v6792
      %v6864 = vunpack.c.l.b16 %v6793
      %v6865 = vunpack.c.l.b16 %v6794
      %v6866 = vunpack.c.l.b16 %v6795
      %v6867 = vunpack.c.l.b16 %v6796
      %v6868 = vunpack.c.l.b16 %v6797
      %v6869 = vunpack.c.l.b16 %v6798
      %v6870 = vunpack.c.l.b16 %v6799
      %v6871 = vunpack.c.l.b16 %v6800
      %v6872 = vunpack.c.l.b16 %v6801
      %v6873 = vunpack.c.l.b16 %v6802
      %v6874 = vunpack.c.l.b16 %v6803
      %v6875 = vunpack.c.l.b16 %v6804
      %v6876 = vunpack.c.l.b16 %v6805
      %v6877 = vunpack.c.l.b16 %v6806
      %v6878 = vunpack.c.l.b16 %v6807
      %v6879 = vunpack.c.l.b16 %v6808
      %v6880 = vunpack.c.l.b16 %v6809
      %v6881 = vunpack.c.l.b16 %v6810
      %v6882 = vunpack.c.l.b16 %v6811
      %v6883 = vunpack.c.l.b16 %v6812
      %v6884 = vunpack.c.l.b16 %v6813
      %v6885 = vunpack.c.l.b16 %v6814
      %v6886 = vunpack.c.l.b16 %v6815
      %v6887 = vunpack.c.l.b16 %v6816
      %v6888 = vunpack.c.l.b16 %v6817
      %v6889 = vunpack.c.l.b16 %v6818
      %v6890 = vunpack.c.l.b16 %v6819
      %v6891 = vunpack.c.l.b16 %v6820
      %v6892 = vunpack.c.l.b16 %v6821
      %v6893 = vunpack.c.l.b16 %v6822
      %v6894 = vpack.c.b16 %v6863, %v6862
      %v6895 = vpack.c.b16 %v6865, %v6864
      %v6896 = vpack.c.b16 %v6867, %v6866
      %v6897 = vpack.c.b16 %v6869, %v6868
      %v6898 = vpack.c.b16 %v6871, %v6870
      %v6899 = vpack.c.b16 %v6873, %v6872
      %v6900 = vpack.c.b16 %v6875, %v6874
      %v6901 = vpack.c.b16 %v6877, %v6876
      %v6902 = vpack.c.b16 %v6879, %v6878
      %v6903 = vpack.c.b16 %v6881, %v6880
      %v6904 = vpack.c.b16 %v6883, %v6882
      %v6905 = vpack.c.b16 %v6885, %v6884
      %v6906 = vpack.c.b16 %v6887, %v6886
      %v6907 = vpack.c.b16 %v6889, %v6888
      %v6908 = vpack.c.b16 %v6891, %v6890
      %v6909 = vpack.c.b16 %v6893, %v6892
      %6926 = vmatprep.subr.bf16.mxu0 0
      %6927 = vmatpush1.bf16.msra.mxu0 %v6901
      %6928 = vmatprep.subr.bf16.mxu0 0
      %6929 = vmatpush1.bf16.msra.mxu0 %v6900
      %6930 = vmatprep.subr.bf16.mxu0 0
      %6931 = vmatpush1.bf16.msra.mxu0 %v6899
      %6932 = vmatprep.subr.bf16.mxu0 0
      %6933 = vmatpush1.bf16.msra.mxu0 %v6898
      %6934 = vmatprep.subr.bf16.mxu0 0
      %6935 = vmatpush1.bf16.msra.mxu0 %v6897
      %6936 = vmatprep.subr.bf16.mxu0 0
      %6937 = vmatpush1.bf16.msra.mxu0 %v6896
      %6938 = vmatprep.subr.bf16.mxu0 0
      %6939 = vmatpush1.bf16.msra.mxu0 %v6895
      %6940 = vmatprep.subr.bf16.mxu0 0
      %6941 = vmatpush1.bf16.msra.mxu0 %v6894
      %6942 = vmatprep.subr.bf16.mxu0 0
      %6943 = vmatpush2.bf16.msra.mxu0 %v6909
      %6944 = vmatprep.subr.bf16.mxu0 0
      %6945 = vmatpush2.bf16.msra.mxu0 %v6908
      %6946 = vmatprep.subr.bf16.mxu0 0
      %6947 = vmatpush2.bf16.msra.mxu0 %v6907
      %6948 = vmatprep.subr.bf16.mxu0 0
      %6949 = vmatpush2.bf16.msra.mxu0 %v6906
      %6950 = vmatprep.subr.bf16.mxu0 0
      %6951 = vmatpush2.bf16.msra.mxu0 %v6905
      %6952 = vmatprep.subr.bf16.mxu0 0
      %6953 = vmatpush2.bf16.msra.mxu0 %v6904
      %6954 = vmatprep.subr.bf16.mxu0 0
      %6955 = vmatpush2.bf16.msra.mxu0 %v6903
      %6956 = vmatprep.subr.bf16.mxu0 0
      %6957 = vmatpush2.bf16.msra.mxu0 %v6902
      %6958 = vmatprep.mubr.bf16.mxu0 %v6790
      %6959 = vmatmul.mubr.bf16.gmra.mxu0 %v6789
      %v6960 = vpop.f32.mrf.mxu0
      %v6961 = vadd.f32 %v6828, %v6960
      %v6962 = vpop.f32.mrf.mxu0
      %v6963 = vpop.f32.mrf.mxu0
      %v6964 = vadd.f32 %v6828, %v6963
      %v6965 = vpop.f32.mrf.mxu0
      %6966 = vdwg.mxu0
      %vm6967 = vcmask 7168
      %6968 = vst.msk [vmem:[%s853] sm:$0xff] %vm6967, %v6961
      %6969 = vst.msk [vmem:[%s853 + $0x8] sm:$0xff] %vm6967, %v6964
      %s6970 = smul.u32 2, %s39
      %p6971 = scmp.lt.s32.totalorder %s6970, 3
      %s6972 = scalar_select %p6971, %s6970, 3
      %s6973 = smul.addr %s6972, 8
      %s6974 = scalar_lea.vmem %s26, %s6973
      // Predicated region
      $region125: #{gin_gcn_forward.1} parent=123 // pred_check
        %p6975 = pneg %p623
      $region126: #{gin_gcn_forward.1} parent=123 // pred_check_branch
        %6977 = sbr.rel (%p6975) target = $region128
      $region127: #{gin_gcn_forward.1} parent=123 // pred_region
        %s6978 = smul.u32 2, %s39
      $region128: #{gin_gcn_forward.1} parent=123 // pred_fallthru
        _
    $region124: #{gin_gcn_forward.1} parent=5 // pred_fallthru
      _
    %p6979 = scmp.le.s32.totalorder 2, %s34
    // Predicated region
    $region129: #{gin_gcn_forward.1} parent=5 // pred_check
      %p6980 = pneg %p6979
    $region130: #{gin_gcn_forward.1} parent=5 // pred_check_branch
      %6982 = sbr.rel (%p6980) target = $region132
    $region131: #{gin_gcn_forward.1} parent=5 // pred_region
      %s6983 = ssub.s32 %s34, 2
      // Predicated region
      $region133: #{gin_gcn_forward.1} parent=131 // pred_check
        %p6984 = pneg %p629
      $region134: #{gin_gcn_forward.1} parent=131 // pred_check_branch
        %6986 = sbr.rel (%p6984) target = $region136
      $region135: #{gin_gcn_forward.1} parent=131 // pred_region
        %s6987 = smul.u32 2, %s40
        %p6988 = scmp.lt.s32.totalorder %s6987, 3
        %s6989 = scalar_select %p6988, %s6987, 3
        %s6990 = smul.addr %s6989, 8
        %s6991 = scalar_lea.vmem %s26, %s6990
      $region136: #{gin_gcn_forward.1} parent=131 // pred_fallthru
        _
    $region132: #{gin_gcn_forward.1} parent=5 // pred_fallthru
      _
  $region6: #{gin_gcn_forward.1} parent=0 // loop_footer
    %s38 = sadd.s32 1, %s34
  $region7: #{gin_gcn_forward.1} parent=0 // loop_footer_branch
    %33 = sbr.rel target = $region3
  $region8: #{gin_gcn_forward.1} parent=0 // loop_exit
    _

</llo_original>
